<compile_context>
chip_gen: v5e
topology: v5e:2x2
jax: 0.10.0
libtpu: 0.0.40
codegen_flags: <defaults>
</compile_context>

<pallas_src>
import functools

import numpy as np
import jax
import jax.numpy as jnp
from jax.experimental import pallas as pl
from jax.experimental.pallas import tpu as pltpu

# ----------------------------- configuration -------------------------------
B, T_IN = 2, 20            # batch, raw input time steps
INPUT_DIM = 8              # input feature dim
EMBED_DIM = 16             # conformer model dim
FFN_DIM = 32               # feed-forward hidden dim
NUM_HEADS = 4
NUM_LAYERS = 2
KSIZE = 3                  # depthwise_conv_kernel_size (odd)
VOCAB = 11                 # CTC vocab size
VOCAB_PAD = 128            # lane-dense padded CTC head width
LN_EPS = 1e-5
BN_EPS = 1e-5
NEG_INF = -1e30


# --------------------------- fused forward kernel ---------------------------
def _make_fused_kernel(treedef, n_leaves):
    """Build the single fused kernel; params arrive as flattened refs."""

    def dot(a, b):
        return jnp.dot(a, b, preferred_element_type=jnp.float32)

    def layernorm(x, g_ref, b_ref):
        mu = jnp.mean(x, axis=-1, keepdims=True)
        var = jnp.mean((x - mu) ** 2, axis=-1, keepdims=True)
        return (x - mu) * jax.lax.rsqrt(var + LN_EPS) * g_ref[...] + b_ref[...]

    def silu(x):
        return x * jax.nn.sigmoid(x)

    def ffn(x, p):
        y = layernorm(x, p["ln_g"], p["ln_b"])
        y = silu(dot(y, p["w1"][...]) + p["b1"][...])
        return dot(y, p["w2"][...]) + p["b2"][...]

    def attention(x, p, attn_bias):
        y = layernorm(x, p["ln_g"], p["ln_b"])
        num_heads = p["wq"].shape[0]
        scale = float(p["wq"].shape[-1]) ** -0.5
        acc = None
        for h in range(num_heads):                      # static unroll over heads
            q = dot(y, p["wq"][h]) + p["bq"][h]         # (M, dh)
            k = dot(y, p["wk"][h]) + p["bk"][h]
            v = dot(y, p["wv"][h]) + p["bv"][h]
            s = dot(q, k.T) * scale + attn_bias         # (M, M) masked scores
            s = s - jnp.max(s, axis=-1, keepdims=True)
            w = jnp.exp(s)
            w = w * pl.reciprocal(jnp.sum(w, axis=-1, keepdims=True), approx=True)
            contrib = dot(dot(w, v), p["wo"][h])        # accumulate into out-proj
            acc = contrib if acc is None else acc + contrib
        return acc + p["out_b"][...]

    def conv_module(x, p, shifts):
        y = layernorm(x, p["ln_g"], p["ln_b"])
        a = dot(y, p["pw1_wa"][...]) + p["pw1_ba"][...]   # GLU value half
        g = dot(y, p["pw1_wb"][...]) + p["pw1_bb"][...]   # GLU gate half
        y = a * jax.nn.sigmoid(g)
        acc = None
        for k, s_mat in enumerate(shifts):                # depthwise conv, K taps
            contrib = dot(s_mat, y) * p["dw_w"][k]
            acc = contrib if acc is None else acc + contrib
        y = silu(acc + p["dw_b"][...])                    # BatchNorm(eval) folded in
        return dot(y, p["pw2_w"][...]) + p["pw2_b"][...]

    def kernel(x_ref, bias_ref, shifts_ref, *rest):
        param_refs = rest[:n_leaves]
        o_ref = rest[n_leaves]
        p = jax.tree_util.tree_unflatten(treedef, list(param_refs))

        x = x_ref[...]                                    # (M, input_dim)
        attn_bias = bias_ref[...]                         # (M, M)
        shifts = [shifts_ref[k] for k in range(shifts_ref.shape[0])]

        # subsample Conv1d(input_dim -> embed_dim, K, pad) as K shifted matmuls
        h = None
        for k, s_mat in enumerate(shifts):
            contrib = dot(dot(s_mat, x), p["sub_w"][k])
            h = contrib if h is None else h + contrib
        h = h + p["sub_b"][...]
        # linear_layer
        h = dot(h, p["lin_w"][...]) + p["lin_b"][...]

        for lp in p["layers"]:
            h = h + 0.5 * ffn(h, lp["ffn1"])
            h = h + attention(h, lp["attn"], attn_bias)
            h = h + conv_module(h, lp["conv"], shifts)
            h = h + 0.5 * ffn(h, lp["ffn2"])
            h = layernorm(h, lp["final_ln_g"], lp["final_ln_b"])

        # lane-dense (padded to 128) CTC head — single HBM store of the kernel
        o_ref[...] = dot(h, p["out_w"][...]) + p["out_b"][...]

    return kernel


# ------------------------------ parameters ----------------------------------
def init_params(seed=0):
    key = jax.random.PRNGKey(seed)
    cnt = [0]

    def nrm(shape, scale=0.05):
        cnt[0] += 1
        return (scale * jax.random.normal(jax.random.fold_in(key, cnt[0]), shape)
                ).astype(jnp.float32)

    D, F, K = EMBED_DIM, FFN_DIM, KSIZE

    def ffn_p():
        return {"ln_g": 1.0 + nrm((D,)), "ln_b": nrm((D,)),
                "w1": nrm((D, F)), "b1": nrm((F,)),
                "w2": nrm((F, D)), "b2": nrm((D,))}

    params = {
        "sub_w": nrm((K * INPUT_DIM, D)), "sub_b": nrm((D,)),
        "lin_w": nrm((D, D)), "lin_b": nrm((D,)),
        "out_w": nrm((D, VOCAB)), "out_b": nrm((VOCAB,)),
        "layers": [],
    }
    for _ in range(NUM_LAYERS):
        params["layers"].append({
            "ffn1": ffn_p(),
            "attn": {"ln_g": 1.0 + nrm((D,)), "ln_b": nrm((D,)),
                     "in_w": nrm((D, 3 * D)), "in_b": nrm((3 * D,)),
                     "out_w": nrm((D, D)), "out_b": nrm((D,))},
            "conv": {"ln_g": 1.0 + nrm((D,)), "ln_b": nrm((D,)),
                     "pw1_w": nrm((D, 2 * D)), "pw1_b": nrm((2 * D,)),
                     "dw_w": nrm((K, D)), "dw_b": nrm((D,)),
                     "bn_g": 1.0 + nrm((D,)), "bn_b": nrm((D,)),
                     "pw2_w": nrm((D, D)), "pw2_b": nrm((D,))},
            "ffn2": ffn_p(),
            "final_ln_g": 1.0 + nrm((D,)), "final_ln_b": nrm((D,)),
        })
    return params


def prep_params(raw):
    """Host-side prep: split GLU / per-head weights, fold BN, 2-D biases,
    lane-pad CTC head."""
    D, K, H = EMBED_DIM, KSIZE, NUM_HEADS
    dh = D // H

    def row(v):
        return jnp.asarray(v, jnp.float32).reshape(1, -1)

    def ffn_p(q):
        return {"ln_g": row(q["ln_g"]), "ln_b": row(q["ln_b"]),
                "w1": q["w1"], "b1": row(q["b1"]),
                "w2": q["w2"], "b2": row(q["b2"])}

    layers = []
    for lr in raw["layers"]:
        a = lr["attn"]
        in_w, in_b, ow = a["in_w"], a["in_b"], a["out_w"]

        def head_w(base, _w=in_w):
            return jnp.stack([_w[:, base + h * dh: base + (h + 1) * dh]
                              for h in range(H)], axis=0)          # (H, D, dh)

        def head_b(base, _b=in_b):
            return jnp.stack([_b[base + h * dh: base + (h + 1) * dh].reshape(1, dh)
                              for h in range(H)], axis=0)          # (H, 1, dh)

        attn_p = {"ln_g": row(a["ln_g"]), "ln_b": row(a["ln_b"]),
                  "wq": head_w(0), "wk": head_w(D), "wv": head_w(2 * D),
                  "bq": head_b(0), "bk": head_b(D), "bv": head_b(2 * D),
                  "wo": jnp.stack([ow[h * dh:(h + 1) * dh, :]
                                   for h in range(H)], axis=0),     # (H, dh, D)
                  "out_b": row(a["out_b"])}

        c = lr["conv"]
        # BatchNorm1d eval with running_mean=0, running_var=1, folded into dw conv
        bn_scale = c["bn_g"] / jnp.sqrt(1.0 + BN_EPS)
        conv_p = {"ln_g": row(c["ln_g"]), "ln_b": row(c["ln_b"]),
                  "pw1_wa": c["pw1_w"][:, :D], "pw1_ba": row(c["pw1_b"][:D]),
                  "pw1_wb": c["pw1_w"][:, D:], "pw1_bb": row(c["pw1_b"][D:]),
                  "dw_w": jnp.stack([(c["dw_w"][k] * bn_scale).reshape(1, D)
                                     for k in range(K)], axis=0),   # (K, 1, D)
                  "dw_b": row(c["dw_b"] * bn_scale + c["bn_b"]),
                  "pw2_w": c["pw2_w"], "pw2_b": row(c["pw2_b"])}

        layers.append({"ffn1": ffn_p(lr["ffn1"]), "attn": attn_p, "conv": conv_p,
                       "ffn2": ffn_p(lr["ffn2"]),
                       "final_ln_g": row(lr["final_ln_g"]),
                       "final_ln_b": row(lr["final_ln_b"])})

    # subsample conv taps stacked as (K, input_dim, D)
    sub_w = jnp.stack([raw["sub_w"][k * INPUT_DIM:(k + 1) * INPUT_DIM, :]
                       for k in range(K)], axis=0)
    # lane-dense CTC head (pad VOCAB -> 128)
    out_w = jnp.zeros((D, VOCAB_PAD), jnp.float32).at[:, :VOCAB].set(raw["out_w"])
    out_b = jnp.zeros((1, VOCAB_PAD), jnp.float32).at[0, :VOCAB].set(raw["out_b"])

    return {"sub_w": sub_w, "sub_b": row(raw["sub_b"]),
            "lin_w": raw["lin_w"], "lin_b": row(raw["lin_b"]),
            "out_w": out_w, "out_b": out_b, "layers": layers}


# ------------------------------ forward wrapper ------------------------------
def make_forward(raw_params):
    prep = prep_params(raw_params)
    leaves, treedef = jax.tree_util.tree_flatten(prep)
    kernel = _make_fused_kernel(treedef, len(leaves))

    @jax.jit
    def forward(x, lengths):
        """x: (B, T, input_dim) already sliced to T = max(lengths)."""
        bsz, t, din = x.shape
        m = bsz * t
        x2d = x.reshape(m, din).astype(jnp.float32)

        # additive attention bias: key must be in the same utterance AND < length
        idx = jnp.arange(m)
        b_of = idx // t
        t_of = idx % t
        key_ok = t_of < lengths[b_of]
        same = b_of[:, None] == b_of[None, :]
        attn_bias = jnp.where(same & key_ok[None, :], 0.0, NEG_INF
                              ).astype(jnp.float32)                 # (M, M)

        # static utterance-local time-shift matrices for the conv taps
        ri = np.arange(m)[:, None]
        ci = np.arange(m)[None, :]
        same_np = (ri // t) == (ci // t)
        shifts = np.stack([((ci == ri + (k - KSIZE // 2)) & same_np
                            ).astype(np.float32) for k in range(KSIZE)], axis=0)
        shifts = jnp.asarray(shifts)                                # (K, M, M)

        logits_pad = pl.pallas_call(
            kernel,
            out_shape=jax.ShapeDtypeStruct((m, VOCAB_PAD), jnp.float32),
            compiler_params=pltpu.CompilerParams(
                vmem_limit_bytes=16 * 1024 * 1024),
        )(x2d, attn_bias, shifts, *leaves)

        return logits_pad[:, :VOCAB].reshape(bsz, t, VOCAB)

    return forward


# --------------------------------- main --------------------------------------
if __name__ == "__main__":
    key = jax.random.PRNGKey(0)
    x = jax.random.normal(key, (B, T_IN, INPUT_DIM), jnp.float32)
    lengths = jnp.array([16, 12], dtype=jnp.int32)
    raw_params = init_params(0)

    # x[:, :max(lengths), :] — max(lengths) is concrete, slice eagerly
    t_max = int(jnp.max(lengths))
    x_sliced = x[:, :t_max, :]

    fwd = make_forward(raw_params)
    logits = fwd(x_sliced, lengths)
    jax.block_until_ready(logits)

    assert logits.shape == (B, t_max, VOCAB), logits.shape
    assert bool(jnp.all(jnp.isfinite(logits)))
    print("KERNEL_OK")
</pallas_src>

<mosaic_0001>
module attributes {stable_mosaic.version = 11 : i64} {
  func.func @kernel(%arg0: memref<32x8xf32, #tpu.memory_space<vmem>>, %arg1: memref<32x32xf32, #tpu.memory_space<vmem>>, %arg2: memref<3x32x32xf32, #tpu.memory_space<vmem>>, %arg3: memref<4x1x4xf32, #tpu.memory_space<vmem>>, %arg4: memref<4x1x4xf32, #tpu.memory_space<vmem>>, %arg5: memref<4x1x4xf32, #tpu.memory_space<vmem>>, %arg6: memref<1x16xf32, #tpu.memory_space<vmem>>, %arg7: memref<1x16xf32, #tpu.memory_space<vmem>>, %arg8: memref<1x16xf32, #tpu.memory_space<vmem>>, %arg9: memref<4x16x4xf32, #tpu.memory_space<vmem>>, %arg10: memref<4x4x16xf32, #tpu.memory_space<vmem>>, %arg11: memref<4x16x4xf32, #tpu.memory_space<vmem>>, %arg12: memref<4x16x4xf32, #tpu.memory_space<vmem>>, %arg13: memref<1x16xf32, #tpu.memory_space<vmem>>, %arg14: memref<3x1x16xf32, #tpu.memory_space<vmem>>, %arg15: memref<1x16xf32, #tpu.memory_space<vmem>>, %arg16: memref<1x16xf32, #tpu.memory_space<vmem>>, %arg17: memref<1x16xf32, #tpu.memory_space<vmem>>, %arg18: memref<1x16xf32, #tpu.memory_space<vmem>>, %arg19: memref<16x16xf32, #tpu.memory_space<vmem>>, %arg20: memref<16x16xf32, #tpu.memory_space<vmem>>, %arg21: memref<1x16xf32, #tpu.memory_space<vmem>>, %arg22: memref<16x16xf32, #tpu.memory_space<vmem>>, %arg23: memref<1x32xf32, #tpu.memory_space<vmem>>, %arg24: memref<1x16xf32, #tpu.memory_space<vmem>>, %arg25: memref<1x16xf32, #tpu.memory_space<vmem>>, %arg26: memref<1x16xf32, #tpu.memory_space<vmem>>, %arg27: memref<16x32xf32, #tpu.memory_space<vmem>>, %arg28: memref<32x16xf32, #tpu.memory_space<vmem>>, %arg29: memref<1x32xf32, #tpu.memory_space<vmem>>, %arg30: memref<1x16xf32, #tpu.memory_space<vmem>>, %arg31: memref<1x16xf32, #tpu.memory_space<vmem>>, %arg32: memref<1x16xf32, #tpu.memory_space<vmem>>, %arg33: memref<16x32xf32, #tpu.memory_space<vmem>>, %arg34: memref<32x16xf32, #tpu.memory_space<vmem>>, %arg35: memref<1x16xf32, #tpu.memory_space<vmem>>, %arg36: memref<1x16xf32, #tpu.memory_space<vmem>>, %arg37: memref<4x1x4xf32, #tpu.memory_space<vmem>>, %arg38: memref<4x1x4xf32, #tpu.memory_space<vmem>>, %arg39: memref<4x1x4xf32, #tpu.memory_space<vmem>>, %arg40: memref<1x16xf32, #tpu.memory_space<vmem>>, %arg41: memref<1x16xf32, #tpu.memory_space<vmem>>, %arg42: memref<1x16xf32, #tpu.memory_space<vmem>>, %arg43: memref<4x16x4xf32, #tpu.memory_space<vmem>>, %arg44: memref<4x4x16xf32, #tpu.memory_space<vmem>>, %arg45: memref<4x16x4xf32, #tpu.memory_space<vmem>>, %arg46: memref<4x16x4xf32, #tpu.memory_space<vmem>>, %arg47: memref<1x16xf32, #tpu.memory_space<vmem>>, %arg48: memref<3x1x16xf32, #tpu.memory_space<vmem>>, %arg49: memref<1x16xf32, #tpu.memory_space<vmem>>, %arg50: memref<1x16xf32, #tpu.memory_space<vmem>>, %arg51: memref<1x16xf32, #tpu.memory_space<vmem>>, %arg52: memref<1x16xf32, #tpu.memory_space<vmem>>, %arg53: memref<16x16xf32, #tpu.memory_space<vmem>>, %arg54: memref<16x16xf32, #tpu.memory_space<vmem>>, %arg55: memref<1x16xf32, #tpu.memory_space<vmem>>, %arg56: memref<16x16xf32, #tpu.memory_space<vmem>>, %arg57: memref<1x32xf32, #tpu.memory_space<vmem>>, %arg58: memref<1x16xf32, #tpu.memory_space<vmem>>, %arg59: memref<1x16xf32, #tpu.memory_space<vmem>>, %arg60: memref<1x16xf32, #tpu.memory_space<vmem>>, %arg61: memref<16x32xf32, #tpu.memory_space<vmem>>, %arg62: memref<32x16xf32, #tpu.memory_space<vmem>>, %arg63: memref<1x32xf32, #tpu.memory_space<vmem>>, %arg64: memref<1x16xf32, #tpu.memory_space<vmem>>, %arg65: memref<1x16xf32, #tpu.memory_space<vmem>>, %arg66: memref<1x16xf32, #tpu.memory_space<vmem>>, %arg67: memref<16x32xf32, #tpu.memory_space<vmem>>, %arg68: memref<32x16xf32, #tpu.memory_space<vmem>>, %arg69: memref<1x16xf32, #tpu.memory_space<vmem>>, %arg70: memref<1x16xf32, #tpu.memory_space<vmem>>, %arg71: memref<1x16xf32, #tpu.memory_space<vmem>>, %arg72: memref<16x16xf32, #tpu.memory_space<vmem>>, %arg73: memref<1x128xf32, #tpu.memory_space<vmem>>, %arg74: memref<16x128xf32, #tpu.memory_space<vmem>>, %arg75: memref<1x16xf32, #tpu.memory_space<vmem>>, %arg76: memref<3x8x16xf32, #tpu.memory_space<vmem>>, %arg77: memref<32x128xf32, #tpu.memory_space<vmem>>) attributes {dimension_semantics = [], scalar_prefetch = 0 : i64, scratch_operands = 0 : i64, tpu.core_type = #tpu.core_type<tc>} {
    %c0 = arith.constant 0 : index
    %c0_0 = arith.constant 0 : index
    %0 = vector.load %arg0[%c0, %c0_0] : memref<32x8xf32, #tpu.memory_space<vmem>>, vector<32x8xf32>
    %c0_1 = arith.constant 0 : index
    %c0_2 = arith.constant 0 : index
    %1 = vector.load %arg1[%c0_1, %c0_2] : memref<32x32xf32, #tpu.memory_space<vmem>>, vector<32x32xf32>
    %c0_3 = arith.constant 0 : index
    %c0_4 = arith.constant 0 : index
    %c0_5 = arith.constant 0 : index
    %2 = vector.load %arg2[%c0_3, %c0_4, %c0_5] : memref<3x32x32xf32, #tpu.memory_space<vmem>>, vector<1x32x32xf32>
    %3 = vector.shape_cast %2 : vector<1x32x32xf32> to vector<32x32xf32>
    %c1 = arith.constant 1 : index
    %c0_6 = arith.constant 0 : index
    %c0_7 = arith.constant 0 : index
    %4 = vector.load %arg2[%c1, %c0_6, %c0_7] : memref<3x32x32xf32, #tpu.memory_space<vmem>>, vector<1x32x32xf32>
    %5 = vector.shape_cast %4 : vector<1x32x32xf32> to vector<32x32xf32>
    %c2 = arith.constant 2 : index
    %c0_8 = arith.constant 0 : index
    %c0_9 = arith.constant 0 : index
    %6 = vector.load %arg2[%c2, %c0_8, %c0_9] : memref<3x32x32xf32, #tpu.memory_space<vmem>>, vector<1x32x32xf32>
    %7 = vector.shape_cast %6 : vector<1x32x32xf32> to vector<32x32xf32>
    %cst = arith.constant dense<0.000000e+00> : vector<32x8xf32>
    %8 = tpu.matmul %3, %0, %cst {dimension_numbers = #tpu.dot_dimension_numbers<[1], [0], [0], [1], [0, 0, 1, 1], [], []>} : vector<32x32xf32>, vector<32x8xf32>, vector<32x8xf32> -> vector<32x8xf32>
    %c0_10 = arith.constant 0 : index
    %c0_11 = arith.constant 0 : index
    %c0_12 = arith.constant 0 : index
    %9 = vector.load %arg76[%c0_10, %c0_11, %c0_12] : memref<3x8x16xf32, #tpu.memory_space<vmem>>, vector<1x8x16xf32>
    %10 = vector.shape_cast %9 : vector<1x8x16xf32> to vector<8x16xf32>
    %cst_13 = arith.constant dense<0.000000e+00> : vector<32x16xf32>
    %11 = tpu.matmul %8, %10, %cst_13 {dimension_numbers = #tpu.dot_dimension_numbers<[1], [0], [0], [1], [0, 0, 1, 1], [], []>} : vector<32x8xf32>, vector<8x16xf32>, vector<32x16xf32> -> vector<32x16xf32>
    %cst_14 = arith.constant dense<0.000000e+00> : vector<32x8xf32>
    %12 = tpu.matmul %5, %0, %cst_14 {dimension_numbers = #tpu.dot_dimension_numbers<[1], [0], [0], [1], [0, 0, 1, 1], [], []>} : vector<32x32xf32>, vector<32x8xf32>, vector<32x8xf32> -> vector<32x8xf32>
    %c1_15 = arith.constant 1 : index
    %c0_16 = arith.constant 0 : index
    %c0_17 = arith.constant 0 : index
    %13 = vector.load %arg76[%c1_15, %c0_16, %c0_17] : memref<3x8x16xf32, #tpu.memory_space<vmem>>, vector<1x8x16xf32>
    %14 = vector.shape_cast %13 : vector<1x8x16xf32> to vector<8x16xf32>
    %cst_18 = arith.constant dense<0.000000e+00> : vector<32x16xf32>
    %15 = tpu.matmul %12, %14, %cst_18 {dimension_numbers = #tpu.dot_dimension_numbers<[1], [0], [0], [1], [0, 0, 1, 1], [], []>} : vector<32x8xf32>, vector<8x16xf32>, vector<32x16xf32> -> vector<32x16xf32>
    %16 = arith.addf %11, %15 : vector<32x16xf32>
    %cst_19 = arith.constant dense<0.000000e+00> : vector<32x8xf32>
    %17 = tpu.matmul %7, %0, %cst_19 {dimension_numbers = #tpu.dot_dimension_numbers<[1], [0], [0], [1], [0, 0, 1, 1], [], []>} : vector<32x32xf32>, vector<32x8xf32>, vector<32x8xf32> -> vector<32x8xf32>
    %c2_20 = arith.constant 2 : index
    %c0_21 = arith.constant 0 : index
    %c0_22 = arith.constant 0 : index
    %18 = vector.load %arg76[%c2_20, %c0_21, %c0_22] : memref<3x8x16xf32, #tpu.memory_space<vmem>>, vector<1x8x16xf32>
    %19 = vector.shape_cast %18 : vector<1x8x16xf32> to vector<8x16xf32>
    %cst_23 = arith.constant dense<0.000000e+00> : vector<32x16xf32>
    %20 = tpu.matmul %17, %19, %cst_23 {dimension_numbers = #tpu.dot_dimension_numbers<[1], [0], [0], [1], [0, 0, 1, 1], [], []>} : vector<32x8xf32>, vector<8x16xf32>, vector<32x16xf32> -> vector<32x16xf32>
    %21 = arith.addf %16, %20 : vector<32x16xf32>
    %c0_24 = arith.constant 0 : index
    %c0_25 = arith.constant 0 : index
    %22 = vector.load %arg75[%c0_24, %c0_25] : memref<1x16xf32, #tpu.memory_space<vmem>>, vector<1x16xf32>
    %23 = vector.broadcast %22 : vector<1x16xf32> to vector<32x16xf32>
    %24 = arith.addf %21, %23 : vector<32x16xf32>
    %c0_26 = arith.constant 0 : index
    %c0_27 = arith.constant 0 : index
    %25 = vector.load %arg72[%c0_26, %c0_27] : memref<16x16xf32, #tpu.memory_space<vmem>>, vector<16x16xf32>
    %cst_28 = arith.constant dense<0.000000e+00> : vector<32x16xf32>
    %26 = tpu.matmul %24, %25, %cst_28 {dimension_numbers = #tpu.dot_dimension_numbers<[1], [0], [0], [1], [0, 0, 1, 1], [], []>} : vector<32x16xf32>, vector<16x16xf32>, vector<32x16xf32> -> vector<32x16xf32>
    %c0_29 = arith.constant 0 : index
    %c0_30 = arith.constant 0 : index
    %27 = vector.load %arg71[%c0_29, %c0_30] : memref<1x16xf32, #tpu.memory_space<vmem>>, vector<1x16xf32>
    %28 = vector.broadcast %27 : vector<1x16xf32> to vector<32x16xf32>
    %29 = arith.addf %26, %28 : vector<32x16xf32>
    %cst_31 = arith.constant dense<0.000000e+00> : vector<32xf32>
    %30 = vector.multi_reduction <add>, %29, %cst_31 [1] : vector<32x16xf32> to vector<32xf32>
    %31 = vector.shape_cast %30 : vector<32xf32> to vector<32x1xf32>
    %cst_32 = arith.constant 1.600000e+01 : f32
    %32 = vector.broadcast %cst_32 : f32 to vector<32x1xf32>
    %33 = arith.divf %31, %32 : vector<32x1xf32>
    %34 = vector.broadcast %33 : vector<32x1xf32> to vector<32x16xf32>
    %35 = arith.subf %29, %34 : vector<32x16xf32>
    %36 = arith.mulf %35, %35 : vector<32x16xf32>
    %cst_33 = arith.constant dense<0.000000e+00> : vector<32xf32>
    %37 = vector.multi_reduction <add>, %36, %cst_33 [1] : vector<32x16xf32> to vector<32xf32>
    %38 = vector.shape_cast %37 : vector<32xf32> to vector<32x1xf32>
    %cst_34 = arith.constant 1.600000e+01 : f32
    %39 = vector.broadcast %cst_34 : f32 to vector<32x1xf32>
    %40 = arith.divf %38, %39 : vector<32x1xf32>
    %41 = vector.broadcast %33 : vector<32x1xf32> to vector<32x16xf32>
    %42 = arith.subf %29, %41 : vector<32x16xf32>
    %cst_35 = arith.constant 9.99999974E-6 : f32
    %43 = vector.broadcast %cst_35 : f32 to vector<32x1xf32>
    %44 = arith.addf %40, %43 : vector<32x1xf32>
    %45 = math.rsqrt %44 : vector<32x1xf32>
    %46 = vector.broadcast %45 : vector<32x1xf32> to vector<32x16xf32>
    %47 = arith.mulf %42, %46 : vector<32x16xf32>
    %c0_36 = arith.constant 0 : index
    %c0_37 = arith.constant 0 : index
    %48 = vector.load %arg26[%c0_36, %c0_37] : memref<1x16xf32, #tpu.memory_space<vmem>>, vector<1x16xf32>
    %49 = vector.broadcast %48 : vector<1x16xf32> to vector<32x16xf32>
    %50 = arith.mulf %47, %49 : vector<32x16xf32>
    %c0_38 = arith.constant 0 : index
    %c0_39 = arith.constant 0 : index
    %51 = vector.load %arg25[%c0_38, %c0_39] : memref<1x16xf32, #tpu.memory_space<vmem>>, vector<1x16xf32>
    %52 = vector.broadcast %51 : vector<1x16xf32> to vector<32x16xf32>
    %53 = arith.addf %50, %52 : vector<32x16xf32>
    %c0_40 = arith.constant 0 : index
    %c0_41 = arith.constant 0 : index
    %54 = vector.load %arg27[%c0_40, %c0_41] : memref<16x32xf32, #tpu.memory_space<vmem>>, vector<16x32xf32>
    %cst_42 = arith.constant dense<0.000000e+00> : vector<32x32xf32>
    %55 = tpu.matmul %53, %54, %cst_42 {dimension_numbers = #tpu.dot_dimension_numbers<[1], [0], [0], [1], [0, 0, 1, 1], [], []>} : vector<32x16xf32>, vector<16x32xf32>, vector<32x32xf32> -> vector<32x32xf32>
    %c0_43 = arith.constant 0 : index
    %c0_44 = arith.constant 0 : index
    %56 = vector.load %arg23[%c0_43, %c0_44] : memref<1x32xf32, #tpu.memory_space<vmem>>, vector<1x32xf32>
    %57 = vector.broadcast %56 : vector<1x32xf32> to vector<32x32xf32>
    %58 = arith.addf %55, %57 : vector<32x32xf32>
    %59 = arith.negf %58 : vector<32x32xf32>
    %60 = math.exp %59 : vector<32x32xf32>
    %cst_45 = arith.constant 1.000000e+00 : f32
    %61 = vector.broadcast %cst_45 : f32 to vector<32x32xf32>
    %62 = arith.addf %61, %60 : vector<32x32xf32>
    %63 = arith.divf %61, %62 : vector<32x32xf32>
    %64 = arith.mulf %58, %63 : vector<32x32xf32>
    %c0_46 = arith.constant 0 : index
    %c0_47 = arith.constant 0 : index
    %65 = vector.load %arg28[%c0_46, %c0_47] : memref<32x16xf32, #tpu.memory_space<vmem>>, vector<32x16xf32>
    %cst_48 = arith.constant dense<0.000000e+00> : vector<32x16xf32>
    %66 = tpu.matmul %64, %65, %cst_48 {dimension_numbers = #tpu.dot_dimension_numbers<[1], [0], [0], [1], [0, 0, 1, 1], [], []>} : vector<32x32xf32>, vector<32x16xf32>, vector<32x16xf32> -> vector<32x16xf32>
    %c0_49 = arith.constant 0 : index
    %c0_50 = arith.constant 0 : index
    %67 = vector.load %arg24[%c0_49, %c0_50] : memref<1x16xf32, #tpu.memory_space<vmem>>, vector<1x16xf32>
    %68 = vector.broadcast %67 : vector<1x16xf32> to vector<32x16xf32>
    %69 = arith.addf %66, %68 : vector<32x16xf32>
    %cst_51 = arith.constant 5.000000e-01 : f32
    %70 = vector.broadcast %cst_51 : f32 to vector<32x16xf32>
    %71 = arith.mulf %70, %69 : vector<32x16xf32>
    %72 = arith.addf %29, %71 : vector<32x16xf32>
    %cst_52 = arith.constant dense<0.000000e+00> : vector<32xf32>
    %73 = vector.multi_reduction <add>, %72, %cst_52 [1] : vector<32x16xf32> to vector<32xf32>
    %74 = vector.shape_cast %73 : vector<32xf32> to vector<32x1xf32>
    %cst_53 = arith.constant 1.600000e+01 : f32
    %75 = vector.broadcast %cst_53 : f32 to vector<32x1xf32>
    %76 = arith.divf %74, %75 : vector<32x1xf32>
    %77 = vector.broadcast %76 : vector<32x1xf32> to vector<32x16xf32>
    %78 = arith.subf %72, %77 : vector<32x16xf32>
    %79 = arith.mulf %78, %78 : vector<32x16xf32>
    %cst_54 = arith.constant dense<0.000000e+00> : vector<32xf32>
    %80 = vector.multi_reduction <add>, %79, %cst_54 [1] : vector<32x16xf32> to vector<32xf32>
    %81 = vector.shape_cast %80 : vector<32xf32> to vector<32x1xf32>
    %cst_55 = arith.constant 1.600000e+01 : f32
    %82 = vector.broadcast %cst_55 : f32 to vector<32x1xf32>
    %83 = arith.divf %81, %82 : vector<32x1xf32>
    %84 = vector.broadcast %76 : vector<32x1xf32> to vector<32x16xf32>
    %85 = arith.subf %72, %84 : vector<32x16xf32>
    %cst_56 = arith.constant 9.99999974E-6 : f32
    %86 = vector.broadcast %cst_56 : f32 to vector<32x1xf32>
    %87 = arith.addf %83, %86 : vector<32x1xf32>
    %88 = math.rsqrt %87 : vector<32x1xf32>
    %89 = vector.broadcast %88 : vector<32x1xf32> to vector<32x16xf32>
    %90 = arith.mulf %85, %89 : vector<32x16xf32>
    %c0_57 = arith.constant 0 : index
    %c0_58 = arith.constant 0 : index
    %91 = vector.load %arg7[%c0_57, %c0_58] : memref<1x16xf32, #tpu.memory_space<vmem>>, vector<1x16xf32>
    %92 = vector.broadcast %91 : vector<1x16xf32> to vector<32x16xf32>
    %93 = arith.mulf %90, %92 : vector<32x16xf32>
    %c0_59 = arith.constant 0 : index
    %c0_60 = arith.constant 0 : index
    %94 = vector.load %arg6[%c0_59, %c0_60] : memref<1x16xf32, #tpu.memory_space<vmem>>, vector<1x16xf32>
    %95 = vector.broadcast %94 : vector<1x16xf32> to vector<32x16xf32>
    %96 = arith.addf %93, %95 : vector<32x16xf32>
    %c0_61 = arith.constant 0 : index
    %c0_62 = arith.constant 0 : index
    %c0_63 = arith.constant 0 : index
    %97 = vector.load %arg11[%c0_61, %c0_62, %c0_63] : memref<4x16x4xf32, #tpu.memory_space<vmem>>, vector<1x16x4xf32>
    %98 = vector.shape_cast %97 : vector<1x16x4xf32> to vector<16x4xf32>
    %cst_64 = arith.constant dense<0.000000e+00> : vector<32x4xf32>
    %99 = tpu.matmul %96, %98, %cst_64 {dimension_numbers = #tpu.dot_dimension_numbers<[1], [0], [0], [1], [0, 0, 1, 1], [], []>} : vector<32x16xf32>, vector<16x4xf32>, vector<32x4xf32> -> vector<32x4xf32>
    %c0_65 = arith.constant 0 : index
    %c0_66 = arith.constant 0 : index
    %c0_67 = arith.constant 0 : index
    %100 = vector.load %arg4[%c0_65, %c0_66, %c0_67] : memref<4x1x4xf32, #tpu.memory_space<vmem>>, vector<1x1x4xf32>
    %101 = vector.shape_cast %100 : vector<1x1x4xf32> to vector<1x4xf32>
    %102 = vector.broadcast %101 : vector<1x4xf32> to vector<32x4xf32>
    %103 = arith.addf %99, %102 : vector<32x4xf32>
    %c0_68 = arith.constant 0 : index
    %c0_69 = arith.constant 0 : index
    %c0_70 = arith.constant 0 : index
    %104 = vector.load %arg9[%c0_68, %c0_69, %c0_70] : memref<4x16x4xf32, #tpu.memory_space<vmem>>, vector<1x16x4xf32>
    %105 = vector.shape_cast %104 : vector<1x16x4xf32> to vector<16x4xf32>
    %cst_71 = arith.constant dense<0.000000e+00> : vector<32x4xf32>
    %106 = tpu.matmul %96, %105, %cst_71 {dimension_numbers = #tpu.dot_dimension_numbers<[1], [0], [0], [1], [0, 0, 1, 1], [], []>} : vector<32x16xf32>, vector<16x4xf32>, vector<32x4xf32> -> vector<32x4xf32>
    %c0_72 = arith.constant 0 : index
    %c0_73 = arith.constant 0 : index
    %c0_74 = arith.constant 0 : index
    %107 = vector.load %arg3[%c0_72, %c0_73, %c0_74] : memref<4x1x4xf32, #tpu.memory_space<vmem>>, vector<1x1x4xf32>
    %108 = vector.shape_cast %107 : vector<1x1x4xf32> to vector<1x4xf32>
    %109 = vector.broadcast %108 : vector<1x4xf32> to vector<32x4xf32>
    %110 = arith.addf %106, %109 : vector<32x4xf32>
    %c0_75 = arith.constant 0 : index
    %c0_76 = arith.constant 0 : index
    %c0_77 = arith.constant 0 : index
    %111 = vector.load %arg12[%c0_75, %c0_76, %c0_77] : memref<4x16x4xf32, #tpu.memory_space<vmem>>, vector<1x16x4xf32>
    %112 = vector.shape_cast %111 : vector<1x16x4xf32> to vector<16x4xf32>
    %cst_78 = arith.constant dense<0.000000e+00> : vector<32x4xf32>
    %113 = tpu.matmul %96, %112, %cst_78 {dimension_numbers = #tpu.dot_dimension_numbers<[1], [0], [0], [1], [0, 0, 1, 1], [], []>} : vector<32x16xf32>, vector<16x4xf32>, vector<32x4xf32> -> vector<32x4xf32>
    %c0_79 = arith.constant 0 : index
    %c0_80 = arith.constant 0 : index
    %c0_81 = arith.constant 0 : index
    %114 = vector.load %arg5[%c0_79, %c0_80, %c0_81] : memref<4x1x4xf32, #tpu.memory_space<vmem>>, vector<1x1x4xf32>
    %115 = vector.shape_cast %114 : vector<1x1x4xf32> to vector<1x4xf32>
    %116 = vector.broadcast %115 : vector<1x4xf32> to vector<32x4xf32>
    %117 = arith.addf %113, %116 : vector<32x4xf32>
    %118 = tpu.transpose %110, [1, 0] : vector<32x4xf32> -> vector<4x32xf32>
    %cst_82 = arith.constant dense<0.000000e+00> : vector<32x32xf32>
    %119 = tpu.matmul %103, %118, %cst_82 {dimension_numbers = #tpu.dot_dimension_numbers<[1], [0], [0], [1], [0, 0, 1, 1], [], []>} : vector<32x4xf32>, vector<4x32xf32>, vector<32x32xf32> -> vector<32x32xf32>
    %cst_83 = arith.constant 5.000000e-01 : f32
    %120 = vector.broadcast %cst_83 : f32 to vector<32x32xf32>
    %121 = arith.mulf %119, %120 : vector<32x32xf32>
    %122 = arith.addf %121, %1 : vector<32x32xf32>
    %cst_84 = arith.constant dense<0xFF800000> : vector<32xf32>
    %123 = vector.multi_reduction <maximumf>, %122, %cst_84 [1] : vector<32x32xf32> to vector<32xf32>
    %124 = vector.shape_cast %123 : vector<32xf32> to vector<32x1xf32>
    %125 = vector.broadcast %124 : vector<32x1xf32> to vector<32x32xf32>
    %126 = arith.subf %122, %125 : vector<32x32xf32>
    %127 = math.exp %126 : vector<32x32xf32>
    %cst_85 = arith.constant dense<0.000000e+00> : vector<32xf32>
    %128 = vector.multi_reduction <add>, %127, %cst_85 [1] : vector<32x32xf32> to vector<32xf32>
    %129 = vector.shape_cast %128 : vector<32xf32> to vector<32x1xf32>
    %130 = tpu.reciprocal %129 {approx = true} : vector<32x1xf32> -> vector<32x1xf32>
    %131 = vector.broadcast %130 : vector<32x1xf32> to vector<32x32xf32>
    %132 = arith.mulf %127, %131 : vector<32x32xf32>
    %cst_86 = arith.constant dense<0.000000e+00> : vector<32x4xf32>
    %133 = tpu.matmul %132, %117, %cst_86 {dimension_numbers = #tpu.dot_dimension_numbers<[1], [0], [0], [1], [0, 0, 1, 1], [], []>} : vector<32x32xf32>, vector<32x4xf32>, vector<32x4xf32> -> vector<32x4xf32>
    %c0_87 = arith.constant 0 : index
    %c0_88 = arith.constant 0 : index
    %c0_89 = arith.constant 0 : index
    %134 = vector.load %arg10[%c0_87, %c0_88, %c0_89] : memref<4x4x16xf32, #tpu.memory_space<vmem>>, vector<1x4x16xf32>
    %135 = vector.shape_cast %134 : vector<1x4x16xf32> to vector<4x16xf32>
    %cst_90 = arith.constant dense<0.000000e+00> : vector<32x16xf32>
    %136 = tpu.matmul %133, %135, %cst_90 {dimension_numbers = #tpu.dot_dimension_numbers<[1], [0], [0], [1], [0, 0, 1, 1], [], []>} : vector<32x4xf32>, vector<4x16xf32>, vector<32x16xf32> -> vector<32x16xf32>
    %c1_91 = arith.constant 1 : index
    %c0_92 = arith.constant 0 : index
    %c0_93 = arith.constant 0 : index
    %137 = vector.load %arg11[%c1_91, %c0_92, %c0_93] : memref<4x16x4xf32, #tpu.memory_space<vmem>>, vector<1x16x4xf32>
    %138 = vector.shape_cast %137 : vector<1x16x4xf32> to vector<16x4xf32>
    %cst_94 = arith.constant dense<0.000000e+00> : vector<32x4xf32>
    %139 = tpu.matmul %96, %138, %cst_94 {dimension_numbers = #tpu.dot_dimension_numbers<[1], [0], [0], [1], [0, 0, 1, 1], [], []>} : vector<32x16xf32>, vector<16x4xf32>, vector<32x4xf32> -> vector<32x4xf32>
    %c1_95 = arith.constant 1 : index
    %c0_96 = arith.constant 0 : index
    %c0_97 = arith.constant 0 : index
    %140 = vector.load %arg4[%c1_95, %c0_96, %c0_97] : memref<4x1x4xf32, #tpu.memory_space<vmem>>, vector<1x1x4xf32>
    %141 = vector.shape_cast %140 : vector<1x1x4xf32> to vector<1x4xf32>
    %142 = vector.broadcast %141 : vector<1x4xf32> to vector<32x4xf32>
    %143 = arith.addf %139, %142 : vector<32x4xf32>
    %c1_98 = arith.constant 1 : index
    %c0_99 = arith.constant 0 : index
    %c0_100 = arith.constant 0 : index
    %144 = vector.load %arg9[%c1_98, %c0_99, %c0_100] : memref<4x16x4xf32, #tpu.memory_space<vmem>>, vector<1x16x4xf32>
    %145 = vector.shape_cast %144 : vector<1x16x4xf32> to vector<16x4xf32>
    %cst_101 = arith.constant dense<0.000000e+00> : vector<32x4xf32>
    %146 = tpu.matmul %96, %145, %cst_101 {dimension_numbers = #tpu.dot_dimension_numbers<[1], [0], [0], [1], [0, 0, 1, 1], [], []>} : vector<32x16xf32>, vector<16x4xf32>, vector<32x4xf32> -> vector<32x4xf32>
    %c1_102 = arith.constant 1 : index
    %c0_103 = arith.constant 0 : index
    %c0_104 = arith.constant 0 : index
    %147 = vector.load %arg3[%c1_102, %c0_103, %c0_104] : memref<4x1x4xf32, #tpu.memory_space<vmem>>, vector<1x1x4xf32>
    %148 = vector.shape_cast %147 : vector<1x1x4xf32> to vector<1x4xf32>
    %149 = vector.broadcast %148 : vector<1x4xf32> to vector<32x4xf32>
    %150 = arith.addf %146, %149 : vector<32x4xf32>
    %c1_105 = arith.constant 1 : index
    %c0_106 = arith.constant 0 : index
    %c0_107 = arith.constant 0 : index
    %151 = vector.load %arg12[%c1_105, %c0_106, %c0_107] : memref<4x16x4xf32, #tpu.memory_space<vmem>>, vector<1x16x4xf32>
    %152 = vector.shape_cast %151 : vector<1x16x4xf32> to vector<16x4xf32>
    %cst_108 = arith.constant dense<0.000000e+00> : vector<32x4xf32>
    %153 = tpu.matmul %96, %152, %cst_108 {dimension_numbers = #tpu.dot_dimension_numbers<[1], [0], [0], [1], [0, 0, 1, 1], [], []>} : vector<32x16xf32>, vector<16x4xf32>, vector<32x4xf32> -> vector<32x4xf32>
    %c1_109 = arith.constant 1 : index
    %c0_110 = arith.constant 0 : index
    %c0_111 = arith.constant 0 : index
    %154 = vector.load %arg5[%c1_109, %c0_110, %c0_111] : memref<4x1x4xf32, #tpu.memory_space<vmem>>, vector<1x1x4xf32>
    %155 = vector.shape_cast %154 : vector<1x1x4xf32> to vector<1x4xf32>
    %156 = vector.broadcast %155 : vector<1x4xf32> to vector<32x4xf32>
    %157 = arith.addf %153, %156 : vector<32x4xf32>
    %158 = tpu.transpose %150, [1, 0] : vector<32x4xf32> -> vector<4x32xf32>
    %cst_112 = arith.constant dense<0.000000e+00> : vector<32x32xf32>
    %159 = tpu.matmul %143, %158, %cst_112 {dimension_numbers = #tpu.dot_dimension_numbers<[1], [0], [0], [1], [0, 0, 1, 1], [], []>} : vector<32x4xf32>, vector<4x32xf32>, vector<32x32xf32> -> vector<32x32xf32>
    %cst_113 = arith.constant 5.000000e-01 : f32
    %160 = vector.broadcast %cst_113 : f32 to vector<32x32xf32>
    %161 = arith.mulf %159, %160 : vector<32x32xf32>
    %162 = arith.addf %161, %1 : vector<32x32xf32>
    %cst_114 = arith.constant dense<0xFF800000> : vector<32xf32>
    %163 = vector.multi_reduction <maximumf>, %162, %cst_114 [1] : vector<32x32xf32> to vector<32xf32>
    %164 = vector.shape_cast %163 : vector<32xf32> to vector<32x1xf32>
    %165 = vector.broadcast %164 : vector<32x1xf32> to vector<32x32xf32>
    %166 = arith.subf %162, %165 : vector<32x32xf32>
    %167 = math.exp %166 : vector<32x32xf32>
    %cst_115 = arith.constant dense<0.000000e+00> : vector<32xf32>
    %168 = vector.multi_reduction <add>, %167, %cst_115 [1] : vector<32x32xf32> to vector<32xf32>
    %169 = vector.shape_cast %168 : vector<32xf32> to vector<32x1xf32>
    %170 = tpu.reciprocal %169 {approx = true} : vector<32x1xf32> -> vector<32x1xf32>
    %171 = vector.broadcast %170 : vector<32x1xf32> to vector<32x32xf32>
    %172 = arith.mulf %167, %171 : vector<32x32xf32>
    %cst_116 = arith.constant dense<0.000000e+00> : vector<32x4xf32>
    %173 = tpu.matmul %172, %157, %cst_116 {dimension_numbers = #tpu.dot_dimension_numbers<[1], [0], [0], [1], [0, 0, 1, 1], [], []>} : vector<32x32xf32>, vector<32x4xf32>, vector<32x4xf32> -> vector<32x4xf32>
    %c1_117 = arith.constant 1 : index
    %c0_118 = arith.constant 0 : index
    %c0_119 = arith.constant 0 : index
    %174 = vector.load %arg10[%c1_117, %c0_118, %c0_119] : memref<4x4x16xf32, #tpu.memory_space<vmem>>, vector<1x4x16xf32>
    %175 = vector.shape_cast %174 : vector<1x4x16xf32> to vector<4x16xf32>
    %cst_120 = arith.constant dense<0.000000e+00> : vector<32x16xf32>
    %176 = tpu.matmul %173, %175, %cst_120 {dimension_numbers = #tpu.dot_dimension_numbers<[1], [0], [0], [1], [0, 0, 1, 1], [], []>} : vector<32x4xf32>, vector<4x16xf32>, vector<32x16xf32> -> vector<32x16xf32>
    %177 = arith.addf %136, %176 : vector<32x16xf32>
    %c2_121 = arith.constant 2 : index
    %c0_122 = arith.constant 0 : index
    %c0_123 = arith.constant 0 : index
    %178 = vector.load %arg11[%c2_121, %c0_122, %c0_123] : memref<4x16x4xf32, #tpu.memory_space<vmem>>, vector<1x16x4xf32>
    %179 = vector.shape_cast %178 : vector<1x16x4xf32> to vector<16x4xf32>
    %cst_124 = arith.constant dense<0.000000e+00> : vector<32x4xf32>
    %180 = tpu.matmul %96, %179, %cst_124 {dimension_numbers = #tpu.dot_dimension_numbers<[1], [0], [0], [1], [0, 0, 1, 1], [], []>} : vector<32x16xf32>, vector<16x4xf32>, vector<32x4xf32> -> vector<32x4xf32>
    %c2_125 = arith.constant 2 : index
    %c0_126 = arith.constant 0 : index
    %c0_127 = arith.constant 0 : index
    %181 = vector.load %arg4[%c2_125, %c0_126, %c0_127] : memref<4x1x4xf32, #tpu.memory_space<vmem>>, vector<1x1x4xf32>
    %182 = vector.shape_cast %181 : vector<1x1x4xf32> to vector<1x4xf32>
    %183 = vector.broadcast %182 : vector<1x4xf32> to vector<32x4xf32>
    %184 = arith.addf %180, %183 : vector<32x4xf32>
    %c2_128 = arith.constant 2 : index
    %c0_129 = arith.constant 0 : index
    %c0_130 = arith.constant 0 : index
    %185 = vector.load %arg9[%c2_128, %c0_129, %c0_130] : memref<4x16x4xf32, #tpu.memory_space<vmem>>, vector<1x16x4xf32>
    %186 = vector.shape_cast %185 : vector<1x16x4xf32> to vector<16x4xf32>
    %cst_131 = arith.constant dense<0.000000e+00> : vector<32x4xf32>
    %187 = tpu.matmul %96, %186, %cst_131 {dimension_numbers = #tpu.dot_dimension_numbers<[1], [0], [0], [1], [0, 0, 1, 1], [], []>} : vector<32x16xf32>, vector<16x4xf32>, vector<32x4xf32> -> vector<32x4xf32>
    %c2_132 = arith.constant 2 : index
    %c0_133 = arith.constant 0 : index
    %c0_134 = arith.constant 0 : index
    %188 = vector.load %arg3[%c2_132, %c0_133, %c0_134] : memref<4x1x4xf32, #tpu.memory_space<vmem>>, vector<1x1x4xf32>
    %189 = vector.shape_cast %188 : vector<1x1x4xf32> to vector<1x4xf32>
    %190 = vector.broadcast %189 : vector<1x4xf32> to vector<32x4xf32>
    %191 = arith.addf %187, %190 : vector<32x4xf32>
    %c2_135 = arith.constant 2 : index
    %c0_136 = arith.constant 0 : index
    %c0_137 = arith.constant 0 : index
    %192 = vector.load %arg12[%c2_135, %c0_136, %c0_137] : memref<4x16x4xf32, #tpu.memory_space<vmem>>, vector<1x16x4xf32>
    %193 = vector.shape_cast %192 : vector<1x16x4xf32> to vector<16x4xf32>
    %cst_138 = arith.constant dense<0.000000e+00> : vector<32x4xf32>
    %194 = tpu.matmul %96, %193, %cst_138 {dimension_numbers = #tpu.dot_dimension_numbers<[1], [0], [0], [1], [0, 0, 1, 1], [], []>} : vector<32x16xf32>, vector<16x4xf32>, vector<32x4xf32> -> vector<32x4xf32>
    %c2_139 = arith.constant 2 : index
    %c0_140 = arith.constant 0 : index
    %c0_141 = arith.constant 0 : index
    %195 = vector.load %arg5[%c2_139, %c0_140, %c0_141] : memref<4x1x4xf32, #tpu.memory_space<vmem>>, vector<1x1x4xf32>
    %196 = vector.shape_cast %195 : vector<1x1x4xf32> to vector<1x4xf32>
    %197 = vector.broadcast %196 : vector<1x4xf32> to vector<32x4xf32>
    %198 = arith.addf %194, %197 : vector<32x4xf32>
    %199 = tpu.transpose %191, [1, 0] : vector<32x4xf32> -> vector<4x32xf32>
    %cst_142 = arith.constant dense<0.000000e+00> : vector<32x32xf32>
    %200 = tpu.matmul %184, %199, %cst_142 {dimension_numbers = #tpu.dot_dimension_numbers<[1], [0], [0], [1], [0, 0, 1, 1], [], []>} : vector<32x4xf32>, vector<4x32xf32>, vector<32x32xf32> -> vector<32x32xf32>
    %cst_143 = arith.constant 5.000000e-01 : f32
    %201 = vector.broadcast %cst_143 : f32 to vector<32x32xf32>
    %202 = arith.mulf %200, %201 : vector<32x32xf32>
    %203 = arith.addf %202, %1 : vector<32x32xf32>
    %cst_144 = arith.constant dense<0xFF800000> : vector<32xf32>
    %204 = vector.multi_reduction <maximumf>, %203, %cst_144 [1] : vector<32x32xf32> to vector<32xf32>
    %205 = vector.shape_cast %204 : vector<32xf32> to vector<32x1xf32>
    %206 = vector.broadcast %205 : vector<32x1xf32> to vector<32x32xf32>
    %207 = arith.subf %203, %206 : vector<32x32xf32>
    %208 = math.exp %207 : vector<32x32xf32>
    %cst_145 = arith.constant dense<0.000000e+00> : vector<32xf32>
    %209 = vector.multi_reduction <add>, %208, %cst_145 [1] : vector<32x32xf32> to vector<32xf32>
    %210 = vector.shape_cast %209 : vector<32xf32> to vector<32x1xf32>
    %211 = tpu.reciprocal %210 {approx = true} : vector<32x1xf32> -> vector<32x1xf32>
    %212 = vector.broadcast %211 : vector<32x1xf32> to vector<32x32xf32>
    %213 = arith.mulf %208, %212 : vector<32x32xf32>
    %cst_146 = arith.constant dense<0.000000e+00> : vector<32x4xf32>
    %214 = tpu.matmul %213, %198, %cst_146 {dimension_numbers = #tpu.dot_dimension_numbers<[1], [0], [0], [1], [0, 0, 1, 1], [], []>} : vector<32x32xf32>, vector<32x4xf32>, vector<32x4xf32> -> vector<32x4xf32>
    %c2_147 = arith.constant 2 : index
    %c0_148 = arith.constant 0 : index
    %c0_149 = arith.constant 0 : index
    %215 = vector.load %arg10[%c2_147, %c0_148, %c0_149] : memref<4x4x16xf32, #tpu.memory_space<vmem>>, vector<1x4x16xf32>
    %216 = vector.shape_cast %215 : vector<1x4x16xf32> to vector<4x16xf32>
    %cst_150 = arith.constant dense<0.000000e+00> : vector<32x16xf32>
    %217 = tpu.matmul %214, %216, %cst_150 {dimension_numbers = #tpu.dot_dimension_numbers<[1], [0], [0], [1], [0, 0, 1, 1], [], []>} : vector<32x4xf32>, vector<4x16xf32>, vector<32x16xf32> -> vector<32x16xf32>
    %218 = arith.addf %177, %217 : vector<32x16xf32>
    %c3 = arith.constant 3 : index
    %c0_151 = arith.constant 0 : index
    %c0_152 = arith.constant 0 : index
    %219 = vector.load %arg11[%c3, %c0_151, %c0_152] : memref<4x16x4xf32, #tpu.memory_space<vmem>>, vector<1x16x4xf32>
    %220 = vector.shape_cast %219 : vector<1x16x4xf32> to vector<16x4xf32>
    %cst_153 = arith.constant dense<0.000000e+00> : vector<32x4xf32>
    %221 = tpu.matmul %96, %220, %cst_153 {dimension_numbers = #tpu.dot_dimension_numbers<[1], [0], [0], [1], [0, 0, 1, 1], [], []>} : vector<32x16xf32>, vector<16x4xf32>, vector<32x4xf32> -> vector<32x4xf32>
    %c3_154 = arith.constant 3 : index
    %c0_155 = arith.constant 0 : index
    %c0_156 = arith.constant 0 : index
    %222 = vector.load %arg4[%c3_154, %c0_155, %c0_156] : memref<4x1x4xf32, #tpu.memory_space<vmem>>, vector<1x1x4xf32>
    %223 = vector.shape_cast %222 : vector<1x1x4xf32> to vector<1x4xf32>
    %224 = vector.broadcast %223 : vector<1x4xf32> to vector<32x4xf32>
    %225 = arith.addf %221, %224 : vector<32x4xf32>
    %c3_157 = arith.constant 3 : index
    %c0_158 = arith.constant 0 : index
    %c0_159 = arith.constant 0 : index
    %226 = vector.load %arg9[%c3_157, %c0_158, %c0_159] : memref<4x16x4xf32, #tpu.memory_space<vmem>>, vector<1x16x4xf32>
    %227 = vector.shape_cast %226 : vector<1x16x4xf32> to vector<16x4xf32>
    %cst_160 = arith.constant dense<0.000000e+00> : vector<32x4xf32>
    %228 = tpu.matmul %96, %227, %cst_160 {dimension_numbers = #tpu.dot_dimension_numbers<[1], [0], [0], [1], [0, 0, 1, 1], [], []>} : vector<32x16xf32>, vector<16x4xf32>, vector<32x4xf32> -> vector<32x4xf32>
    %c3_161 = arith.constant 3 : index
    %c0_162 = arith.constant 0 : index
    %c0_163 = arith.constant 0 : index
    %229 = vector.load %arg3[%c3_161, %c0_162, %c0_163] : memref<4x1x4xf32, #tpu.memory_space<vmem>>, vector<1x1x4xf32>
    %230 = vector.shape_cast %229 : vector<1x1x4xf32> to vector<1x4xf32>
    %231 = vector.broadcast %230 : vector<1x4xf32> to vector<32x4xf32>
    %232 = arith.addf %228, %231 : vector<32x4xf32>
    %c3_164 = arith.constant 3 : index
    %c0_165 = arith.constant 0 : index
    %c0_166 = arith.constant 0 : index
    %233 = vector.load %arg12[%c3_164, %c0_165, %c0_166] : memref<4x16x4xf32, #tpu.memory_space<vmem>>, vector<1x16x4xf32>
    %234 = vector.shape_cast %233 : vector<1x16x4xf32> to vector<16x4xf32>
    %cst_167 = arith.constant dense<0.000000e+00> : vector<32x4xf32>
    %235 = tpu.matmul %96, %234, %cst_167 {dimension_numbers = #tpu.dot_dimension_numbers<[1], [0], [0], [1], [0, 0, 1, 1], [], []>} : vector<32x16xf32>, vector<16x4xf32>, vector<32x4xf32> -> vector<32x4xf32>
    %c3_168 = arith.constant 3 : index
    %c0_169 = arith.constant 0 : index
    %c0_170 = arith.constant 0 : index
    %236 = vector.load %arg5[%c3_168, %c0_169, %c0_170] : memref<4x1x4xf32, #tpu.memory_space<vmem>>, vector<1x1x4xf32>
    %237 = vector.shape_cast %236 : vector<1x1x4xf32> to vector<1x4xf32>
    %238 = vector.broadcast %237 : vector<1x4xf32> to vector<32x4xf32>
    %239 = arith.addf %235, %238 : vector<32x4xf32>
    %240 = tpu.transpose %232, [1, 0] : vector<32x4xf32> -> vector<4x32xf32>
    %cst_171 = arith.constant dense<0.000000e+00> : vector<32x32xf32>
    %241 = tpu.matmul %225, %240, %cst_171 {dimension_numbers = #tpu.dot_dimension_numbers<[1], [0], [0], [1], [0, 0, 1, 1], [], []>} : vector<32x4xf32>, vector<4x32xf32>, vector<32x32xf32> -> vector<32x32xf32>
    %cst_172 = arith.constant 5.000000e-01 : f32
    %242 = vector.broadcast %cst_172 : f32 to vector<32x32xf32>
    %243 = arith.mulf %241, %242 : vector<32x32xf32>
    %244 = arith.addf %243, %1 : vector<32x32xf32>
    %cst_173 = arith.constant dense<0xFF800000> : vector<32xf32>
    %245 = vector.multi_reduction <maximumf>, %244, %cst_173 [1] : vector<32x32xf32> to vector<32xf32>
    %246 = vector.shape_cast %245 : vector<32xf32> to vector<32x1xf32>
    %247 = vector.broadcast %246 : vector<32x1xf32> to vector<32x32xf32>
    %248 = arith.subf %244, %247 : vector<32x32xf32>
    %249 = math.exp %248 : vector<32x32xf32>
    %cst_174 = arith.constant dense<0.000000e+00> : vector<32xf32>
    %250 = vector.multi_reduction <add>, %249, %cst_174 [1] : vector<32x32xf32> to vector<32xf32>
    %251 = vector.shape_cast %250 : vector<32xf32> to vector<32x1xf32>
    %252 = tpu.reciprocal %251 {approx = true} : vector<32x1xf32> -> vector<32x1xf32>
    %253 = vector.broadcast %252 : vector<32x1xf32> to vector<32x32xf32>
    %254 = arith.mulf %249, %253 : vector<32x32xf32>
    %cst_175 = arith.constant dense<0.000000e+00> : vector<32x4xf32>
    %255 = tpu.matmul %254, %239, %cst_175 {dimension_numbers = #tpu.dot_dimension_numbers<[1], [0], [0], [1], [0, 0, 1, 1], [], []>} : vector<32x32xf32>, vector<32x4xf32>, vector<32x4xf32> -> vector<32x4xf32>
    %c3_176 = arith.constant 3 : index
    %c0_177 = arith.constant 0 : index
    %c0_178 = arith.constant 0 : index
    %256 = vector.load %arg10[%c3_176, %c0_177, %c0_178] : memref<4x4x16xf32, #tpu.memory_space<vmem>>, vector<1x4x16xf32>
    %257 = vector.shape_cast %256 : vector<1x4x16xf32> to vector<4x16xf32>
    %cst_179 = arith.constant dense<0.000000e+00> : vector<32x16xf32>
    %258 = tpu.matmul %255, %257, %cst_179 {dimension_numbers = #tpu.dot_dimension_numbers<[1], [0], [0], [1], [0, 0, 1, 1], [], []>} : vector<32x4xf32>, vector<4x16xf32>, vector<32x16xf32> -> vector<32x16xf32>
    %259 = arith.addf %218, %258 : vector<32x16xf32>
    %c0_180 = arith.constant 0 : index
    %c0_181 = arith.constant 0 : index
    %260 = vector.load %arg8[%c0_180, %c0_181] : memref<1x16xf32, #tpu.memory_space<vmem>>, vector<1x16xf32>
    %261 = vector.broadcast %260 : vector<1x16xf32> to vector<32x16xf32>
    %262 = arith.addf %259, %261 : vector<32x16xf32>
    %263 = arith.addf %72, %262 : vector<32x16xf32>
    %cst_182 = arith.constant dense<0.000000e+00> : vector<32xf32>
    %264 = vector.multi_reduction <add>, %263, %cst_182 [1] : vector<32x16xf32> to vector<32xf32>
    %265 = vector.shape_cast %264 : vector<32xf32> to vector<32x1xf32>
    %cst_183 = arith.constant 1.600000e+01 : f32
    %266 = vector.broadcast %cst_183 : f32 to vector<32x1xf32>
    %267 = arith.divf %265, %266 : vector<32x1xf32>
    %268 = vector.broadcast %267 : vector<32x1xf32> to vector<32x16xf32>
    %269 = arith.subf %263, %268 : vector<32x16xf32>
    %270 = arith.mulf %269, %269 : vector<32x16xf32>
    %cst_184 = arith.constant dense<0.000000e+00> : vector<32xf32>
    %271 = vector.multi_reduction <add>, %270, %cst_184 [1] : vector<32x16xf32> to vector<32xf32>
    %272 = vector.shape_cast %271 : vector<32xf32> to vector<32x1xf32>
    %cst_185 = arith.constant 1.600000e+01 : f32
    %273 = vector.broadcast %cst_185 : f32 to vector<32x1xf32>
    %274 = arith.divf %272, %273 : vector<32x1xf32>
    %275 = vector.broadcast %267 : vector<32x1xf32> to vector<32x16xf32>
    %276 = arith.subf %263, %275 : vector<32x16xf32>
    %cst_186 = arith.constant 9.99999974E-6 : f32
    %277 = vector.broadcast %cst_186 : f32 to vector<32x1xf32>
    %278 = arith.addf %274, %277 : vector<32x1xf32>
    %279 = math.rsqrt %278 : vector<32x1xf32>
    %280 = vector.broadcast %279 : vector<32x1xf32> to vector<32x16xf32>
    %281 = arith.mulf %276, %280 : vector<32x16xf32>
    %c0_187 = arith.constant 0 : index
    %c0_188 = arith.constant 0 : index
    %282 = vector.load %arg16[%c0_187, %c0_188] : memref<1x16xf32, #tpu.memory_space<vmem>>, vector<1x16xf32>
    %283 = vector.broadcast %282 : vector<1x16xf32> to vector<32x16xf32>
    %284 = arith.mulf %281, %283 : vector<32x16xf32>
    %c0_189 = arith.constant 0 : index
    %c0_190 = arith.constant 0 : index
    %285 = vector.load %arg15[%c0_189, %c0_190] : memref<1x16xf32, #tpu.memory_space<vmem>>, vector<1x16xf32>
    %286 = vector.broadcast %285 : vector<1x16xf32> to vector<32x16xf32>
    %287 = arith.addf %284, %286 : vector<32x16xf32>
    %c0_191 = arith.constant 0 : index
    %c0_192 = arith.constant 0 : index
    %288 = vector.load %arg19[%c0_191, %c0_192] : memref<16x16xf32, #tpu.memory_space<vmem>>, vector<16x16xf32>
    %cst_193 = arith.constant dense<0.000000e+00> : vector<32x16xf32>
    %289 = tpu.matmul %287, %288, %cst_193 {dimension_numbers = #tpu.dot_dimension_numbers<[1], [0], [0], [1], [0, 0, 1, 1], [], []>} : vector<32x16xf32>, vector<16x16xf32>, vector<32x16xf32> -> vector<32x16xf32>
    %c0_194 = arith.constant 0 : index
    %c0_195 = arith.constant 0 : index
    %290 = vector.load %arg17[%c0_194, %c0_195] : memref<1x16xf32, #tpu.memory_space<vmem>>, vector<1x16xf32>
    %291 = vector.broadcast %290 : vector<1x16xf32> to vector<32x16xf32>
    %292 = arith.addf %289, %291 : vector<32x16xf32>
    %c0_196 = arith.constant 0 : index
    %c0_197 = arith.constant 0 : index
    %293 = vector.load %arg20[%c0_196, %c0_197] : memref<16x16xf32, #tpu.memory_space<vmem>>, vector<16x16xf32>
    %cst_198 = arith.constant dense<0.000000e+00> : vector<32x16xf32>
    %294 = tpu.matmul %287, %293, %cst_198 {dimension_numbers = #tpu.dot_dimension_numbers<[1], [0], [0], [1], [0, 0, 1, 1], [], []>} : vector<32x16xf32>, vector<16x16xf32>, vector<32x16xf32> -> vector<32x16xf32>
    %c0_199 = arith.constant 0 : index
    %c0_200 = arith.constant 0 : index
    %295 = vector.load %arg18[%c0_199, %c0_200] : memref<1x16xf32, #tpu.memory_space<vmem>>, vector<1x16xf32>
    %296 = vector.broadcast %295 : vector<1x16xf32> to vector<32x16xf32>
    %297 = arith.addf %294, %296 : vector<32x16xf32>
    %298 = arith.negf %297 : vector<32x16xf32>
    %299 = math.exp %298 : vector<32x16xf32>
    %cst_201 = arith.constant 1.000000e+00 : f32
    %300 = vector.broadcast %cst_201 : f32 to vector<32x16xf32>
    %301 = arith.addf %300, %299 : vector<32x16xf32>
    %302 = arith.divf %300, %301 : vector<32x16xf32>
    %303 = arith.mulf %292, %302 : vector<32x16xf32>
    %cst_202 = arith.constant dense<0.000000e+00> : vector<32x16xf32>
    %304 = tpu.matmul %3, %303, %cst_202 {dimension_numbers = #tpu.dot_dimension_numbers<[1], [0], [0], [1], [0, 0, 1, 1], [], []>} : vector<32x32xf32>, vector<32x16xf32>, vector<32x16xf32> -> vector<32x16xf32>
    %c0_203 = arith.constant 0 : index
    %c0_204 = arith.constant 0 : index
    %c0_205 = arith.constant 0 : index
    %305 = vector.load %arg14[%c0_203, %c0_204, %c0_205] : memref<3x1x16xf32, #tpu.memory_space<vmem>>, vector<1x1x16xf32>
    %306 = vector.shape_cast %305 : vector<1x1x16xf32> to vector<1x16xf32>
    %307 = vector.broadcast %306 : vector<1x16xf32> to vector<32x16xf32>
    %308 = arith.mulf %304, %307 : vector<32x16xf32>
    %cst_206 = arith.constant dense<0.000000e+00> : vector<32x16xf32>
    %309 = tpu.matmul %5, %303, %cst_206 {dimension_numbers = #tpu.dot_dimension_numbers<[1], [0], [0], [1], [0, 0, 1, 1], [], []>} : vector<32x32xf32>, vector<32x16xf32>, vector<32x16xf32> -> vector<32x16xf32>
    %c1_207 = arith.constant 1 : index
    %c0_208 = arith.constant 0 : index
    %c0_209 = arith.constant 0 : index
    %310 = vector.load %arg14[%c1_207, %c0_208, %c0_209] : memref<3x1x16xf32, #tpu.memory_space<vmem>>, vector<1x1x16xf32>
    %311 = vector.shape_cast %310 : vector<1x1x16xf32> to vector<1x16xf32>
    %312 = vector.broadcast %311 : vector<1x16xf32> to vector<32x16xf32>
    %313 = arith.mulf %309, %312 : vector<32x16xf32>
    %314 = arith.addf %308, %313 : vector<32x16xf32>
    %cst_210 = arith.constant dense<0.000000e+00> : vector<32x16xf32>
    %315 = tpu.matmul %7, %303, %cst_210 {dimension_numbers = #tpu.dot_dimension_numbers<[1], [0], [0], [1], [0, 0, 1, 1], [], []>} : vector<32x32xf32>, vector<32x16xf32>, vector<32x16xf32> -> vector<32x16xf32>
    %c2_211 = arith.constant 2 : index
    %c0_212 = arith.constant 0 : index
    %c0_213 = arith.constant 0 : index
    %316 = vector.load %arg14[%c2_211, %c0_212, %c0_213] : memref<3x1x16xf32, #tpu.memory_space<vmem>>, vector<1x1x16xf32>
    %317 = vector.shape_cast %316 : vector<1x1x16xf32> to vector<1x16xf32>
    %318 = vector.broadcast %317 : vector<1x16xf32> to vector<32x16xf32>
    %319 = arith.mulf %315, %318 : vector<32x16xf32>
    %320 = arith.addf %314, %319 : vector<32x16xf32>
    %c0_214 = arith.constant 0 : index
    %c0_215 = arith.constant 0 : index
    %321 = vector.load %arg13[%c0_214, %c0_215] : memref<1x16xf32, #tpu.memory_space<vmem>>, vector<1x16xf32>
    %322 = vector.broadcast %321 : vector<1x16xf32> to vector<32x16xf32>
    %323 = arith.addf %320, %322 : vector<32x16xf32>
    %324 = arith.negf %323 : vector<32x16xf32>
    %325 = math.exp %324 : vector<32x16xf32>
    %cst_216 = arith.constant 1.000000e+00 : f32
    %326 = vector.broadcast %cst_216 : f32 to vector<32x16xf32>
    %327 = arith.addf %326, %325 : vector<32x16xf32>
    %328 = arith.divf %326, %327 : vector<32x16xf32>
    %329 = arith.mulf %323, %328 : vector<32x16xf32>
    %c0_217 = arith.constant 0 : index
    %c0_218 = arith.constant 0 : index
    %330 = vector.load %arg22[%c0_217, %c0_218] : memref<16x16xf32, #tpu.memory_space<vmem>>, vector<16x16xf32>
    %cst_219 = arith.constant dense<0.000000e+00> : vector<32x16xf32>
    %331 = tpu.matmul %329, %330, %cst_219 {dimension_numbers = #tpu.dot_dimension_numbers<[1], [0], [0], [1], [0, 0, 1, 1], [], []>} : vector<32x16xf32>, vector<16x16xf32>, vector<32x16xf32> -> vector<32x16xf32>
    %c0_220 = arith.constant 0 : index
    %c0_221 = arith.constant 0 : index
    %332 = vector.load %arg21[%c0_220, %c0_221] : memref<1x16xf32, #tpu.memory_space<vmem>>, vector<1x16xf32>
    %333 = vector.broadcast %332 : vector<1x16xf32> to vector<32x16xf32>
    %334 = arith.addf %331, %333 : vector<32x16xf32>
    %335 = arith.addf %263, %334 : vector<32x16xf32>
    %cst_222 = arith.constant dense<0.000000e+00> : vector<32xf32>
    %336 = vector.multi_reduction <add>, %335, %cst_222 [1] : vector<32x16xf32> to vector<32xf32>
    %337 = vector.shape_cast %336 : vector<32xf32> to vector<32x1xf32>
    %cst_223 = arith.constant 1.600000e+01 : f32
    %338 = vector.broadcast %cst_223 : f32 to vector<32x1xf32>
    %339 = arith.divf %337, %338 : vector<32x1xf32>
    %340 = vector.broadcast %339 : vector<32x1xf32> to vector<32x16xf32>
    %341 = arith.subf %335, %340 : vector<32x16xf32>
    %342 = arith.mulf %341, %341 : vector<32x16xf32>
    %cst_224 = arith.constant dense<0.000000e+00> : vector<32xf32>
    %343 = vector.multi_reduction <add>, %342, %cst_224 [1] : vector<32x16xf32> to vector<32xf32>
    %344 = vector.shape_cast %343 : vector<32xf32> to vector<32x1xf32>
    %cst_225 = arith.constant 1.600000e+01 : f32
    %345 = vector.broadcast %cst_225 : f32 to vector<32x1xf32>
    %346 = arith.divf %344, %345 : vector<32x1xf32>
    %347 = vector.broadcast %339 : vector<32x1xf32> to vector<32x16xf32>
    %348 = arith.subf %335, %347 : vector<32x16xf32>
    %cst_226 = arith.constant 9.99999974E-6 : f32
    %349 = vector.broadcast %cst_226 : f32 to vector<32x1xf32>
    %350 = arith.addf %346, %349 : vector<32x1xf32>
    %351 = math.rsqrt %350 : vector<32x1xf32>
    %352 = vector.broadcast %351 : vector<32x1xf32> to vector<32x16xf32>
    %353 = arith.mulf %348, %352 : vector<32x16xf32>
    %c0_227 = arith.constant 0 : index
    %c0_228 = arith.constant 0 : index
    %354 = vector.load %arg32[%c0_227, %c0_228] : memref<1x16xf32, #tpu.memory_space<vmem>>, vector<1x16xf32>
    %355 = vector.broadcast %354 : vector<1x16xf32> to vector<32x16xf32>
    %356 = arith.mulf %353, %355 : vector<32x16xf32>
    %c0_229 = arith.constant 0 : index
    %c0_230 = arith.constant 0 : index
    %357 = vector.load %arg31[%c0_229, %c0_230] : memref<1x16xf32, #tpu.memory_space<vmem>>, vector<1x16xf32>
    %358 = vector.broadcast %357 : vector<1x16xf32> to vector<32x16xf32>
    %359 = arith.addf %356, %358 : vector<32x16xf32>
    %c0_231 = arith.constant 0 : index
    %c0_232 = arith.constant 0 : index
    %360 = vector.load %arg33[%c0_231, %c0_232] : memref<16x32xf32, #tpu.memory_space<vmem>>, vector<16x32xf32>
    %cst_233 = arith.constant dense<0.000000e+00> : vector<32x32xf32>
    %361 = tpu.matmul %359, %360, %cst_233 {dimension_numbers = #tpu.dot_dimension_numbers<[1], [0], [0], [1], [0, 0, 1, 1], [], []>} : vector<32x16xf32>, vector<16x32xf32>, vector<32x32xf32> -> vector<32x32xf32>
    %c0_234 = arith.constant 0 : index
    %c0_235 = arith.constant 0 : index
    %362 = vector.load %arg29[%c0_234, %c0_235] : memref<1x32xf32, #tpu.memory_space<vmem>>, vector<1x32xf32>
    %363 = vector.broadcast %362 : vector<1x32xf32> to vector<32x32xf32>
    %364 = arith.addf %361, %363 : vector<32x32xf32>
    %365 = arith.negf %364 : vector<32x32xf32>
    %366 = math.exp %365 : vector<32x32xf32>
    %cst_236 = arith.constant 1.000000e+00 : f32
    %367 = vector.broadcast %cst_236 : f32 to vector<32x32xf32>
    %368 = arith.addf %367, %366 : vector<32x32xf32>
    %369 = arith.divf %367, %368 : vector<32x32xf32>
    %370 = arith.mulf %364, %369 : vector<32x32xf32>
    %c0_237 = arith.constant 0 : index
    %c0_238 = arith.constant 0 : index
    %371 = vector.load %arg34[%c0_237, %c0_238] : memref<32x16xf32, #tpu.memory_space<vmem>>, vector<32x16xf32>
    %cst_239 = arith.constant dense<0.000000e+00> : vector<32x16xf32>
    %372 = tpu.matmul %370, %371, %cst_239 {dimension_numbers = #tpu.dot_dimension_numbers<[1], [0], [0], [1], [0, 0, 1, 1], [], []>} : vector<32x32xf32>, vector<32x16xf32>, vector<32x16xf32> -> vector<32x16xf32>
    %c0_240 = arith.constant 0 : index
    %c0_241 = arith.constant 0 : index
    %373 = vector.load %arg30[%c0_240, %c0_241] : memref<1x16xf32, #tpu.memory_space<vmem>>, vector<1x16xf32>
    %374 = vector.broadcast %373 : vector<1x16xf32> to vector<32x16xf32>
    %375 = arith.addf %372, %374 : vector<32x16xf32>
    %cst_242 = arith.constant 5.000000e-01 : f32
    %376 = vector.broadcast %cst_242 : f32 to vector<32x16xf32>
    %377 = arith.mulf %376, %375 : vector<32x16xf32>
    %378 = arith.addf %335, %377 : vector<32x16xf32>
    %cst_243 = arith.constant dense<0.000000e+00> : vector<32xf32>
    %379 = vector.multi_reduction <add>, %378, %cst_243 [1] : vector<32x16xf32> to vector<32xf32>
    %380 = vector.shape_cast %379 : vector<32xf32> to vector<32x1xf32>
    %cst_244 = arith.constant 1.600000e+01 : f32
    %381 = vector.broadcast %cst_244 : f32 to vector<32x1xf32>
    %382 = arith.divf %380, %381 : vector<32x1xf32>
    %383 = vector.broadcast %382 : vector<32x1xf32> to vector<32x16xf32>
    %384 = arith.subf %378, %383 : vector<32x16xf32>
    %385 = arith.mulf %384, %384 : vector<32x16xf32>
    %cst_245 = arith.constant dense<0.000000e+00> : vector<32xf32>
    %386 = vector.multi_reduction <add>, %385, %cst_245 [1] : vector<32x16xf32> to vector<32xf32>
    %387 = vector.shape_cast %386 : vector<32xf32> to vector<32x1xf32>
    %cst_246 = arith.constant 1.600000e+01 : f32
    %388 = vector.broadcast %cst_246 : f32 to vector<32x1xf32>
    %389 = arith.divf %387, %388 : vector<32x1xf32>
    %390 = vector.broadcast %382 : vector<32x1xf32> to vector<32x16xf32>
    %391 = arith.subf %378, %390 : vector<32x16xf32>
    %cst_247 = arith.constant 9.99999974E-6 : f32
    %392 = vector.broadcast %cst_247 : f32 to vector<32x1xf32>
    %393 = arith.addf %389, %392 : vector<32x1xf32>
    %394 = math.rsqrt %393 : vector<32x1xf32>
    %395 = vector.broadcast %394 : vector<32x1xf32> to vector<32x16xf32>
    %396 = arith.mulf %391, %395 : vector<32x16xf32>
    %c0_248 = arith.constant 0 : index
    %c0_249 = arith.constant 0 : index
    %397 = vector.load %arg36[%c0_248, %c0_249] : memref<1x16xf32, #tpu.memory_space<vmem>>, vector<1x16xf32>
    %398 = vector.broadcast %397 : vector<1x16xf32> to vector<32x16xf32>
    %399 = arith.mulf %396, %398 : vector<32x16xf32>
    %c0_250 = arith.constant 0 : index
    %c0_251 = arith.constant 0 : index
    %400 = vector.load %arg35[%c0_250, %c0_251] : memref<1x16xf32, #tpu.memory_space<vmem>>, vector<1x16xf32>
    %401 = vector.broadcast %400 : vector<1x16xf32> to vector<32x16xf32>
    %402 = arith.addf %399, %401 : vector<32x16xf32>
    %cst_252 = arith.constant dense<0.000000e+00> : vector<32xf32>
    %403 = vector.multi_reduction <add>, %402, %cst_252 [1] : vector<32x16xf32> to vector<32xf32>
    %404 = vector.shape_cast %403 : vector<32xf32> to vector<32x1xf32>
    %cst_253 = arith.constant 1.600000e+01 : f32
    %405 = vector.broadcast %cst_253 : f32 to vector<32x1xf32>
    %406 = arith.divf %404, %405 : vector<32x1xf32>
    %407 = vector.broadcast %406 : vector<32x1xf32> to vector<32x16xf32>
    %408 = arith.subf %402, %407 : vector<32x16xf32>
    %409 = arith.mulf %408, %408 : vector<32x16xf32>
    %cst_254 = arith.constant dense<0.000000e+00> : vector<32xf32>
    %410 = vector.multi_reduction <add>, %409, %cst_254 [1] : vector<32x16xf32> to vector<32xf32>
    %411 = vector.shape_cast %410 : vector<32xf32> to vector<32x1xf32>
    %cst_255 = arith.constant 1.600000e+01 : f32
    %412 = vector.broadcast %cst_255 : f32 to vector<32x1xf32>
    %413 = arith.divf %411, %412 : vector<32x1xf32>
    %414 = vector.broadcast %406 : vector<32x1xf32> to vector<32x16xf32>
    %415 = arith.subf %402, %414 : vector<32x16xf32>
    %cst_256 = arith.constant 9.99999974E-6 : f32
    %416 = vector.broadcast %cst_256 : f32 to vector<32x1xf32>
    %417 = arith.addf %413, %416 : vector<32x1xf32>
    %418 = math.rsqrt %417 : vector<32x1xf32>
    %419 = vector.broadcast %418 : vector<32x1xf32> to vector<32x16xf32>
    %420 = arith.mulf %415, %419 : vector<32x16xf32>
    %c0_257 = arith.constant 0 : index
    %c0_258 = arith.constant 0 : index
    %421 = vector.load %arg60[%c0_257, %c0_258] : memref<1x16xf32, #tpu.memory_space<vmem>>, vector<1x16xf32>
    %422 = vector.broadcast %421 : vector<1x16xf32> to vector<32x16xf32>
    %423 = arith.mulf %420, %422 : vector<32x16xf32>
    %c0_259 = arith.constant 0 : index
    %c0_260 = arith.constant 0 : index
    %424 = vector.load %arg59[%c0_259, %c0_260] : memref<1x16xf32, #tpu.memory_space<vmem>>, vector<1x16xf32>
    %425 = vector.broadcast %424 : vector<1x16xf32> to vector<32x16xf32>
    %426 = arith.addf %423, %425 : vector<32x16xf32>
    %c0_261 = arith.constant 0 : index
    %c0_262 = arith.constant 0 : index
    %427 = vector.load %arg61[%c0_261, %c0_262] : memref<16x32xf32, #tpu.memory_space<vmem>>, vector<16x32xf32>
    %cst_263 = arith.constant dense<0.000000e+00> : vector<32x32xf32>
    %428 = tpu.matmul %426, %427, %cst_263 {dimension_numbers = #tpu.dot_dimension_numbers<[1], [0], [0], [1], [0, 0, 1, 1], [], []>} : vector<32x16xf32>, vector<16x32xf32>, vector<32x32xf32> -> vector<32x32xf32>
    %c0_264 = arith.constant 0 : index
    %c0_265 = arith.constant 0 : index
    %429 = vector.load %arg57[%c0_264, %c0_265] : memref<1x32xf32, #tpu.memory_space<vmem>>, vector<1x32xf32>
    %430 = vector.broadcast %429 : vector<1x32xf32> to vector<32x32xf32>
    %431 = arith.addf %428, %430 : vector<32x32xf32>
    %432 = arith.negf %431 : vector<32x32xf32>
    %433 = math.exp %432 : vector<32x32xf32>
    %cst_266 = arith.constant 1.000000e+00 : f32
    %434 = vector.broadcast %cst_266 : f32 to vector<32x32xf32>
    %435 = arith.addf %434, %433 : vector<32x32xf32>
    %436 = arith.divf %434, %435 : vector<32x32xf32>
    %437 = arith.mulf %431, %436 : vector<32x32xf32>
    %c0_267 = arith.constant 0 : index
    %c0_268 = arith.constant 0 : index
    %438 = vector.load %arg62[%c0_267, %c0_268] : memref<32x16xf32, #tpu.memory_space<vmem>>, vector<32x16xf32>
    %cst_269 = arith.constant dense<0.000000e+00> : vector<32x16xf32>
    %439 = tpu.matmul %437, %438, %cst_269 {dimension_numbers = #tpu.dot_dimension_numbers<[1], [0], [0], [1], [0, 0, 1, 1], [], []>} : vector<32x32xf32>, vector<32x16xf32>, vector<32x16xf32> -> vector<32x16xf32>
    %c0_270 = arith.constant 0 : index
    %c0_271 = arith.constant 0 : index
    %440 = vector.load %arg58[%c0_270, %c0_271] : memref<1x16xf32, #tpu.memory_space<vmem>>, vector<1x16xf32>
    %441 = vector.broadcast %440 : vector<1x16xf32> to vector<32x16xf32>
    %442 = arith.addf %439, %441 : vector<32x16xf32>
    %cst_272 = arith.constant 5.000000e-01 : f32
    %443 = vector.broadcast %cst_272 : f32 to vector<32x16xf32>
    %444 = arith.mulf %443, %442 : vector<32x16xf32>
    %445 = arith.addf %402, %444 : vector<32x16xf32>
    %cst_273 = arith.constant dense<0.000000e+00> : vector<32xf32>
    %446 = vector.multi_reduction <add>, %445, %cst_273 [1] : vector<32x16xf32> to vector<32xf32>
    %447 = vector.shape_cast %446 : vector<32xf32> to vector<32x1xf32>
    %cst_274 = arith.constant 1.600000e+01 : f32
    %448 = vector.broadcast %cst_274 : f32 to vector<32x1xf32>
    %449 = arith.divf %447, %448 : vector<32x1xf32>
    %450 = vector.broadcast %449 : vector<32x1xf32> to vector<32x16xf32>
    %451 = arith.subf %445, %450 : vector<32x16xf32>
    %452 = arith.mulf %451, %451 : vector<32x16xf32>
    %cst_275 = arith.constant dense<0.000000e+00> : vector<32xf32>
    %453 = vector.multi_reduction <add>, %452, %cst_275 [1] : vector<32x16xf32> to vector<32xf32>
    %454 = vector.shape_cast %453 : vector<32xf32> to vector<32x1xf32>
    %cst_276 = arith.constant 1.600000e+01 : f32
    %455 = vector.broadcast %cst_276 : f32 to vector<32x1xf32>
    %456 = arith.divf %454, %455 : vector<32x1xf32>
    %457 = vector.broadcast %449 : vector<32x1xf32> to vector<32x16xf32>
    %458 = arith.subf %445, %457 : vector<32x16xf32>
    %cst_277 = arith.constant 9.99999974E-6 : f32
    %459 = vector.broadcast %cst_277 : f32 to vector<32x1xf32>
    %460 = arith.addf %456, %459 : vector<32x1xf32>
    %461 = math.rsqrt %460 : vector<32x1xf32>
    %462 = vector.broadcast %461 : vector<32x1xf32> to vector<32x16xf32>
    %463 = arith.mulf %458, %462 : vector<32x16xf32>
    %c0_278 = arith.constant 0 : index
    %c0_279 = arith.constant 0 : index
    %464 = vector.load %arg41[%c0_278, %c0_279] : memref<1x16xf32, #tpu.memory_space<vmem>>, vector<1x16xf32>
    %465 = vector.broadcast %464 : vector<1x16xf32> to vector<32x16xf32>
    %466 = arith.mulf %463, %465 : vector<32x16xf32>
    %c0_280 = arith.constant 0 : index
    %c0_281 = arith.constant 0 : index
    %467 = vector.load %arg40[%c0_280, %c0_281] : memref<1x16xf32, #tpu.memory_space<vmem>>, vector<1x16xf32>
    %468 = vector.broadcast %467 : vector<1x16xf32> to vector<32x16xf32>
    %469 = arith.addf %466, %468 : vector<32x16xf32>
    %c0_282 = arith.constant 0 : index
    %c0_283 = arith.constant 0 : index
    %c0_284 = arith.constant 0 : index
    %470 = vector.load %arg45[%c0_282, %c0_283, %c0_284] : memref<4x16x4xf32, #tpu.memory_space<vmem>>, vector<1x16x4xf32>
    %471 = vector.shape_cast %470 : vector<1x16x4xf32> to vector<16x4xf32>
    %cst_285 = arith.constant dense<0.000000e+00> : vector<32x4xf32>
    %472 = tpu.matmul %469, %471, %cst_285 {dimension_numbers = #tpu.dot_dimension_numbers<[1], [0], [0], [1], [0, 0, 1, 1], [], []>} : vector<32x16xf32>, vector<16x4xf32>, vector<32x4xf32> -> vector<32x4xf32>
    %c0_286 = arith.constant 0 : index
    %c0_287 = arith.constant 0 : index
    %c0_288 = arith.constant 0 : index
    %473 = vector.load %arg38[%c0_286, %c0_287, %c0_288] : memref<4x1x4xf32, #tpu.memory_space<vmem>>, vector<1x1x4xf32>
    %474 = vector.shape_cast %473 : vector<1x1x4xf32> to vector<1x4xf32>
    %475 = vector.broadcast %474 : vector<1x4xf32> to vector<32x4xf32>
    %476 = arith.addf %472, %475 : vector<32x4xf32>
    %c0_289 = arith.constant 0 : index
    %c0_290 = arith.constant 0 : index
    %c0_291 = arith.constant 0 : index
    %477 = vector.load %arg43[%c0_289, %c0_290, %c0_291] : memref<4x16x4xf32, #tpu.memory_space<vmem>>, vector<1x16x4xf32>
    %478 = vector.shape_cast %477 : vector<1x16x4xf32> to vector<16x4xf32>
    %cst_292 = arith.constant dense<0.000000e+00> : vector<32x4xf32>
    %479 = tpu.matmul %469, %478, %cst_292 {dimension_numbers = #tpu.dot_dimension_numbers<[1], [0], [0], [1], [0, 0, 1, 1], [], []>} : vector<32x16xf32>, vector<16x4xf32>, vector<32x4xf32> -> vector<32x4xf32>
    %c0_293 = arith.constant 0 : index
    %c0_294 = arith.constant 0 : index
    %c0_295 = arith.constant 0 : index
    %480 = vector.load %arg37[%c0_293, %c0_294, %c0_295] : memref<4x1x4xf32, #tpu.memory_space<vmem>>, vector<1x1x4xf32>
    %481 = vector.shape_cast %480 : vector<1x1x4xf32> to vector<1x4xf32>
    %482 = vector.broadcast %481 : vector<1x4xf32> to vector<32x4xf32>
    %483 = arith.addf %479, %482 : vector<32x4xf32>
    %c0_296 = arith.constant 0 : index
    %c0_297 = arith.constant 0 : index
    %c0_298 = arith.constant 0 : index
    %484 = vector.load %arg46[%c0_296, %c0_297, %c0_298] : memref<4x16x4xf32, #tpu.memory_space<vmem>>, vector<1x16x4xf32>
    %485 = vector.shape_cast %484 : vector<1x16x4xf32> to vector<16x4xf32>
    %cst_299 = arith.constant dense<0.000000e+00> : vector<32x4xf32>
    %486 = tpu.matmul %469, %485, %cst_299 {dimension_numbers = #tpu.dot_dimension_numbers<[1], [0], [0], [1], [0, 0, 1, 1], [], []>} : vector<32x16xf32>, vector<16x4xf32>, vector<32x4xf32> -> vector<32x4xf32>
    %c0_300 = arith.constant 0 : index
    %c0_301 = arith.constant 0 : index
    %c0_302 = arith.constant 0 : index
    %487 = vector.load %arg39[%c0_300, %c0_301, %c0_302] : memref<4x1x4xf32, #tpu.memory_space<vmem>>, vector<1x1x4xf32>
    %488 = vector.shape_cast %487 : vector<1x1x4xf32> to vector<1x4xf32>
    %489 = vector.broadcast %488 : vector<1x4xf32> to vector<32x4xf32>
    %490 = arith.addf %486, %489 : vector<32x4xf32>
    %491 = tpu.transpose %483, [1, 0] : vector<32x4xf32> -> vector<4x32xf32>
    %cst_303 = arith.constant dense<0.000000e+00> : vector<32x32xf32>
    %492 = tpu.matmul %476, %491, %cst_303 {dimension_numbers = #tpu.dot_dimension_numbers<[1], [0], [0], [1], [0, 0, 1, 1], [], []>} : vector<32x4xf32>, vector<4x32xf32>, vector<32x32xf32> -> vector<32x32xf32>
    %cst_304 = arith.constant 5.000000e-01 : f32
    %493 = vector.broadcast %cst_304 : f32 to vector<32x32xf32>
    %494 = arith.mulf %492, %493 : vector<32x32xf32>
    %495 = arith.addf %494, %1 : vector<32x32xf32>
    %cst_305 = arith.constant dense<0xFF800000> : vector<32xf32>
    %496 = vector.multi_reduction <maximumf>, %495, %cst_305 [1] : vector<32x32xf32> to vector<32xf32>
    %497 = vector.shape_cast %496 : vector<32xf32> to vector<32x1xf32>
    %498 = vector.broadcast %497 : vector<32x1xf32> to vector<32x32xf32>
    %499 = arith.subf %495, %498 : vector<32x32xf32>
    %500 = math.exp %499 : vector<32x32xf32>
    %cst_306 = arith.constant dense<0.000000e+00> : vector<32xf32>
    %501 = vector.multi_reduction <add>, %500, %cst_306 [1] : vector<32x32xf32> to vector<32xf32>
    %502 = vector.shape_cast %501 : vector<32xf32> to vector<32x1xf32>
    %503 = tpu.reciprocal %502 {approx = true} : vector<32x1xf32> -> vector<32x1xf32>
    %504 = vector.broadcast %503 : vector<32x1xf32> to vector<32x32xf32>
    %505 = arith.mulf %500, %504 : vector<32x32xf32>
    %cst_307 = arith.constant dense<0.000000e+00> : vector<32x4xf32>
    %506 = tpu.matmul %505, %490, %cst_307 {dimension_numbers = #tpu.dot_dimension_numbers<[1], [0], [0], [1], [0, 0, 1, 1], [], []>} : vector<32x32xf32>, vector<32x4xf32>, vector<32x4xf32> -> vector<32x4xf32>
    %c0_308 = arith.constant 0 : index
    %c0_309 = arith.constant 0 : index
    %c0_310 = arith.constant 0 : index
    %507 = vector.load %arg44[%c0_308, %c0_309, %c0_310] : memref<4x4x16xf32, #tpu.memory_space<vmem>>, vector<1x4x16xf32>
    %508 = vector.shape_cast %507 : vector<1x4x16xf32> to vector<4x16xf32>
    %cst_311 = arith.constant dense<0.000000e+00> : vector<32x16xf32>
    %509 = tpu.matmul %506, %508, %cst_311 {dimension_numbers = #tpu.dot_dimension_numbers<[1], [0], [0], [1], [0, 0, 1, 1], [], []>} : vector<32x4xf32>, vector<4x16xf32>, vector<32x16xf32> -> vector<32x16xf32>
    %c1_312 = arith.constant 1 : index
    %c0_313 = arith.constant 0 : index
    %c0_314 = arith.constant 0 : index
    %510 = vector.load %arg45[%c1_312, %c0_313, %c0_314] : memref<4x16x4xf32, #tpu.memory_space<vmem>>, vector<1x16x4xf32>
    %511 = vector.shape_cast %510 : vector<1x16x4xf32> to vector<16x4xf32>
    %cst_315 = arith.constant dense<0.000000e+00> : vector<32x4xf32>
    %512 = tpu.matmul %469, %511, %cst_315 {dimension_numbers = #tpu.dot_dimension_numbers<[1], [0], [0], [1], [0, 0, 1, 1], [], []>} : vector<32x16xf32>, vector<16x4xf32>, vector<32x4xf32> -> vector<32x4xf32>
    %c1_316 = arith.constant 1 : index
    %c0_317 = arith.constant 0 : index
    %c0_318 = arith.constant 0 : index
    %513 = vector.load %arg38[%c1_316, %c0_317, %c0_318] : memref<4x1x4xf32, #tpu.memory_space<vmem>>, vector<1x1x4xf32>
    %514 = vector.shape_cast %513 : vector<1x1x4xf32> to vector<1x4xf32>
    %515 = vector.broadcast %514 : vector<1x4xf32> to vector<32x4xf32>
    %516 = arith.addf %512, %515 : vector<32x4xf32>
    %c1_319 = arith.constant 1 : index
    %c0_320 = arith.constant 0 : index
    %c0_321 = arith.constant 0 : index
    %517 = vector.load %arg43[%c1_319, %c0_320, %c0_321] : memref<4x16x4xf32, #tpu.memory_space<vmem>>, vector<1x16x4xf32>
    %518 = vector.shape_cast %517 : vector<1x16x4xf32> to vector<16x4xf32>
    %cst_322 = arith.constant dense<0.000000e+00> : vector<32x4xf32>
    %519 = tpu.matmul %469, %518, %cst_322 {dimension_numbers = #tpu.dot_dimension_numbers<[1], [0], [0], [1], [0, 0, 1, 1], [], []>} : vector<32x16xf32>, vector<16x4xf32>, vector<32x4xf32> -> vector<32x4xf32>
    %c1_323 = arith.constant 1 : index
    %c0_324 = arith.constant 0 : index
    %c0_325 = arith.constant 0 : index
    %520 = vector.load %arg37[%c1_323, %c0_324, %c0_325] : memref<4x1x4xf32, #tpu.memory_space<vmem>>, vector<1x1x4xf32>
    %521 = vector.shape_cast %520 : vector<1x1x4xf32> to vector<1x4xf32>
    %522 = vector.broadcast %521 : vector<1x4xf32> to vector<32x4xf32>
    %523 = arith.addf %519, %522 : vector<32x4xf32>
    %c1_326 = arith.constant 1 : index
    %c0_327 = arith.constant 0 : index
    %c0_328 = arith.constant 0 : index
    %524 = vector.load %arg46[%c1_326, %c0_327, %c0_328] : memref<4x16x4xf32, #tpu.memory_space<vmem>>, vector<1x16x4xf32>
    %525 = vector.shape_cast %524 : vector<1x16x4xf32> to vector<16x4xf32>
    %cst_329 = arith.constant dense<0.000000e+00> : vector<32x4xf32>
    %526 = tpu.matmul %469, %525, %cst_329 {dimension_numbers = #tpu.dot_dimension_numbers<[1], [0], [0], [1], [0, 0, 1, 1], [], []>} : vector<32x16xf32>, vector<16x4xf32>, vector<32x4xf32> -> vector<32x4xf32>
    %c1_330 = arith.constant 1 : index
    %c0_331 = arith.constant 0 : index
    %c0_332 = arith.constant 0 : index
    %527 = vector.load %arg39[%c1_330, %c0_331, %c0_332] : memref<4x1x4xf32, #tpu.memory_space<vmem>>, vector<1x1x4xf32>
    %528 = vector.shape_cast %527 : vector<1x1x4xf32> to vector<1x4xf32>
    %529 = vector.broadcast %528 : vector<1x4xf32> to vector<32x4xf32>
    %530 = arith.addf %526, %529 : vector<32x4xf32>
    %531 = tpu.transpose %523, [1, 0] : vector<32x4xf32> -> vector<4x32xf32>
    %cst_333 = arith.constant dense<0.000000e+00> : vector<32x32xf32>
    %532 = tpu.matmul %516, %531, %cst_333 {dimension_numbers = #tpu.dot_dimension_numbers<[1], [0], [0], [1], [0, 0, 1, 1], [], []>} : vector<32x4xf32>, vector<4x32xf32>, vector<32x32xf32> -> vector<32x32xf32>
    %cst_334 = arith.constant 5.000000e-01 : f32
    %533 = vector.broadcast %cst_334 : f32 to vector<32x32xf32>
    %534 = arith.mulf %532, %533 : vector<32x32xf32>
    %535 = arith.addf %534, %1 : vector<32x32xf32>
    %cst_335 = arith.constant dense<0xFF800000> : vector<32xf32>
    %536 = vector.multi_reduction <maximumf>, %535, %cst_335 [1] : vector<32x32xf32> to vector<32xf32>
    %537 = vector.shape_cast %536 : vector<32xf32> to vector<32x1xf32>
    %538 = vector.broadcast %537 : vector<32x1xf32> to vector<32x32xf32>
    %539 = arith.subf %535, %538 : vector<32x32xf32>
    %540 = math.exp %539 : vector<32x32xf32>
    %cst_336 = arith.constant dense<0.000000e+00> : vector<32xf32>
    %541 = vector.multi_reduction <add>, %540, %cst_336 [1] : vector<32x32xf32> to vector<32xf32>
    %542 = vector.shape_cast %541 : vector<32xf32> to vector<32x1xf32>
    %543 = tpu.reciprocal %542 {approx = true} : vector<32x1xf32> -> vector<32x1xf32>
    %544 = vector.broadcast %543 : vector<32x1xf32> to vector<32x32xf32>
    %545 = arith.mulf %540, %544 : vector<32x32xf32>
    %cst_337 = arith.constant dense<0.000000e+00> : vector<32x4xf32>
    %546 = tpu.matmul %545, %530, %cst_337 {dimension_numbers = #tpu.dot_dimension_numbers<[1], [0], [0], [1], [0, 0, 1, 1], [], []>} : vector<32x32xf32>, vector<32x4xf32>, vector<32x4xf32> -> vector<32x4xf32>
    %c1_338 = arith.constant 1 : index
    %c0_339 = arith.constant 0 : index
    %c0_340 = arith.constant 0 : index
    %547 = vector.load %arg44[%c1_338, %c0_339, %c0_340] : memref<4x4x16xf32, #tpu.memory_space<vmem>>, vector<1x4x16xf32>
    %548 = vector.shape_cast %547 : vector<1x4x16xf32> to vector<4x16xf32>
    %cst_341 = arith.constant dense<0.000000e+00> : vector<32x16xf32>
    %549 = tpu.matmul %546, %548, %cst_341 {dimension_numbers = #tpu.dot_dimension_numbers<[1], [0], [0], [1], [0, 0, 1, 1], [], []>} : vector<32x4xf32>, vector<4x16xf32>, vector<32x16xf32> -> vector<32x16xf32>
    %550 = arith.addf %509, %549 : vector<32x16xf32>
    %c2_342 = arith.constant 2 : index
    %c0_343 = arith.constant 0 : index
    %c0_344 = arith.constant 0 : index
    %551 = vector.load %arg45[%c2_342, %c0_343, %c0_344] : memref<4x16x4xf32, #tpu.memory_space<vmem>>, vector<1x16x4xf32>
    %552 = vector.shape_cast %551 : vector<1x16x4xf32> to vector<16x4xf32>
    %cst_345 = arith.constant dense<0.000000e+00> : vector<32x4xf32>
    %553 = tpu.matmul %469, %552, %cst_345 {dimension_numbers = #tpu.dot_dimension_numbers<[1], [0], [0], [1], [0, 0, 1, 1], [], []>} : vector<32x16xf32>, vector<16x4xf32>, vector<32x4xf32> -> vector<32x4xf32>
    %c2_346 = arith.constant 2 : index
    %c0_347 = arith.constant 0 : index
    %c0_348 = arith.constant 0 : index
    %554 = vector.load %arg38[%c2_346, %c0_347, %c0_348] : memref<4x1x4xf32, #tpu.memory_space<vmem>>, vector<1x1x4xf32>
    %555 = vector.shape_cast %554 : vector<1x1x4xf32> to vector<1x4xf32>
    %556 = vector.broadcast %555 : vector<1x4xf32> to vector<32x4xf32>
    %557 = arith.addf %553, %556 : vector<32x4xf32>
    %c2_349 = arith.constant 2 : index
    %c0_350 = arith.constant 0 : index
    %c0_351 = arith.constant 0 : index
    %558 = vector.load %arg43[%c2_349, %c0_350, %c0_351] : memref<4x16x4xf32, #tpu.memory_space<vmem>>, vector<1x16x4xf32>
    %559 = vector.shape_cast %558 : vector<1x16x4xf32> to vector<16x4xf32>
    %cst_352 = arith.constant dense<0.000000e+00> : vector<32x4xf32>
    %560 = tpu.matmul %469, %559, %cst_352 {dimension_numbers = #tpu.dot_dimension_numbers<[1], [0], [0], [1], [0, 0, 1, 1], [], []>} : vector<32x16xf32>, vector<16x4xf32>, vector<32x4xf32> -> vector<32x4xf32>
    %c2_353 = arith.constant 2 : index
    %c0_354 = arith.constant 0 : index
    %c0_355 = arith.constant 0 : index
    %561 = vector.load %arg37[%c2_353, %c0_354, %c0_355] : memref<4x1x4xf32, #tpu.memory_space<vmem>>, vector<1x1x4xf32>
    %562 = vector.shape_cast %561 : vector<1x1x4xf32> to vector<1x4xf32>
    %563 = vector.broadcast %562 : vector<1x4xf32> to vector<32x4xf32>
    %564 = arith.addf %560, %563 : vector<32x4xf32>
    %c2_356 = arith.constant 2 : index
    %c0_357 = arith.constant 0 : index
    %c0_358 = arith.constant 0 : index
    %565 = vector.load %arg46[%c2_356, %c0_357, %c0_358] : memref<4x16x4xf32, #tpu.memory_space<vmem>>, vector<1x16x4xf32>
    %566 = vector.shape_cast %565 : vector<1x16x4xf32> to vector<16x4xf32>
    %cst_359 = arith.constant dense<0.000000e+00> : vector<32x4xf32>
    %567 = tpu.matmul %469, %566, %cst_359 {dimension_numbers = #tpu.dot_dimension_numbers<[1], [0], [0], [1], [0, 0, 1, 1], [], []>} : vector<32x16xf32>, vector<16x4xf32>, vector<32x4xf32> -> vector<32x4xf32>
    %c2_360 = arith.constant 2 : index
    %c0_361 = arith.constant 0 : index
    %c0_362 = arith.constant 0 : index
    %568 = vector.load %arg39[%c2_360, %c0_361, %c0_362] : memref<4x1x4xf32, #tpu.memory_space<vmem>>, vector<1x1x4xf32>
    %569 = vector.shape_cast %568 : vector<1x1x4xf32> to vector<1x4xf32>
    %570 = vector.broadcast %569 : vector<1x4xf32> to vector<32x4xf32>
    %571 = arith.addf %567, %570 : vector<32x4xf32>
    %572 = tpu.transpose %564, [1, 0] : vector<32x4xf32> -> vector<4x32xf32>
    %cst_363 = arith.constant dense<0.000000e+00> : vector<32x32xf32>
    %573 = tpu.matmul %557, %572, %cst_363 {dimension_numbers = #tpu.dot_dimension_numbers<[1], [0], [0], [1], [0, 0, 1, 1], [], []>} : vector<32x4xf32>, vector<4x32xf32>, vector<32x32xf32> -> vector<32x32xf32>
    %cst_364 = arith.constant 5.000000e-01 : f32
    %574 = vector.broadcast %cst_364 : f32 to vector<32x32xf32>
    %575 = arith.mulf %573, %574 : vector<32x32xf32>
    %576 = arith.addf %575, %1 : vector<32x32xf32>
    %cst_365 = arith.constant dense<0xFF800000> : vector<32xf32>
    %577 = vector.multi_reduction <maximumf>, %576, %cst_365 [1] : vector<32x32xf32> to vector<32xf32>
    %578 = vector.shape_cast %577 : vector<32xf32> to vector<32x1xf32>
    %579 = vector.broadcast %578 : vector<32x1xf32> to vector<32x32xf32>
    %580 = arith.subf %576, %579 : vector<32x32xf32>
    %581 = math.exp %580 : vector<32x32xf32>
    %cst_366 = arith.constant dense<0.000000e+00> : vector<32xf32>
    %582 = vector.multi_reduction <add>, %581, %cst_366 [1] : vector<32x32xf32> to vector<32xf32>
    %583 = vector.shape_cast %582 : vector<32xf32> to vector<32x1xf32>
    %584 = tpu.reciprocal %583 {approx = true} : vector<32x1xf32> -> vector<32x1xf32>
    %585 = vector.broadcast %584 : vector<32x1xf32> to vector<32x32xf32>
    %586 = arith.mulf %581, %585 : vector<32x32xf32>
    %cst_367 = arith.constant dense<0.000000e+00> : vector<32x4xf32>
    %587 = tpu.matmul %586, %571, %cst_367 {dimension_numbers = #tpu.dot_dimension_numbers<[1], [0], [0], [1], [0, 0, 1, 1], [], []>} : vector<32x32xf32>, vector<32x4xf32>, vector<32x4xf32> -> vector<32x4xf32>
    %c2_368 = arith.constant 2 : index
    %c0_369 = arith.constant 0 : index
    %c0_370 = arith.constant 0 : index
    %588 = vector.load %arg44[%c2_368, %c0_369, %c0_370] : memref<4x4x16xf32, #tpu.memory_space<vmem>>, vector<1x4x16xf32>
    %589 = vector.shape_cast %588 : vector<1x4x16xf32> to vector<4x16xf32>
    %cst_371 = arith.constant dense<0.000000e+00> : vector<32x16xf32>
    %590 = tpu.matmul %587, %589, %cst_371 {dimension_numbers = #tpu.dot_dimension_numbers<[1], [0], [0], [1], [0, 0, 1, 1], [], []>} : vector<32x4xf32>, vector<4x16xf32>, vector<32x16xf32> -> vector<32x16xf32>
    %591 = arith.addf %550, %590 : vector<32x16xf32>
    %c3_372 = arith.constant 3 : index
    %c0_373 = arith.constant 0 : index
    %c0_374 = arith.constant 0 : index
    %592 = vector.load %arg45[%c3_372, %c0_373, %c0_374] : memref<4x16x4xf32, #tpu.memory_space<vmem>>, vector<1x16x4xf32>
    %593 = vector.shape_cast %592 : vector<1x16x4xf32> to vector<16x4xf32>
    %cst_375 = arith.constant dense<0.000000e+00> : vector<32x4xf32>
    %594 = tpu.matmul %469, %593, %cst_375 {dimension_numbers = #tpu.dot_dimension_numbers<[1], [0], [0], [1], [0, 0, 1, 1], [], []>} : vector<32x16xf32>, vector<16x4xf32>, vector<32x4xf32> -> vector<32x4xf32>
    %c3_376 = arith.constant 3 : index
    %c0_377 = arith.constant 0 : index
    %c0_378 = arith.constant 0 : index
    %595 = vector.load %arg38[%c3_376, %c0_377, %c0_378] : memref<4x1x4xf32, #tpu.memory_space<vmem>>, vector<1x1x4xf32>
    %596 = vector.shape_cast %595 : vector<1x1x4xf32> to vector<1x4xf32>
    %597 = vector.broadcast %596 : vector<1x4xf32> to vector<32x4xf32>
    %598 = arith.addf %594, %597 : vector<32x4xf32>
    %c3_379 = arith.constant 3 : index
    %c0_380 = arith.constant 0 : index
    %c0_381 = arith.constant 0 : index
    %599 = vector.load %arg43[%c3_379, %c0_380, %c0_381] : memref<4x16x4xf32, #tpu.memory_space<vmem>>, vector<1x16x4xf32>
    %600 = vector.shape_cast %599 : vector<1x16x4xf32> to vector<16x4xf32>
    %cst_382 = arith.constant dense<0.000000e+00> : vector<32x4xf32>
    %601 = tpu.matmul %469, %600, %cst_382 {dimension_numbers = #tpu.dot_dimension_numbers<[1], [0], [0], [1], [0, 0, 1, 1], [], []>} : vector<32x16xf32>, vector<16x4xf32>, vector<32x4xf32> -> vector<32x4xf32>
    %c3_383 = arith.constant 3 : index
    %c0_384 = arith.constant 0 : index
    %c0_385 = arith.constant 0 : index
    %602 = vector.load %arg37[%c3_383, %c0_384, %c0_385] : memref<4x1x4xf32, #tpu.memory_space<vmem>>, vector<1x1x4xf32>
    %603 = vector.shape_cast %602 : vector<1x1x4xf32> to vector<1x4xf32>
    %604 = vector.broadcast %603 : vector<1x4xf32> to vector<32x4xf32>
    %605 = arith.addf %601, %604 : vector<32x4xf32>
    %c3_386 = arith.constant 3 : index
    %c0_387 = arith.constant 0 : index
    %c0_388 = arith.constant 0 : index
    %606 = vector.load %arg46[%c3_386, %c0_387, %c0_388] : memref<4x16x4xf32, #tpu.memory_space<vmem>>, vector<1x16x4xf32>
    %607 = vector.shape_cast %606 : vector<1x16x4xf32> to vector<16x4xf32>
    %cst_389 = arith.constant dense<0.000000e+00> : vector<32x4xf32>
    %608 = tpu.matmul %469, %607, %cst_389 {dimension_numbers = #tpu.dot_dimension_numbers<[1], [0], [0], [1], [0, 0, 1, 1], [], []>} : vector<32x16xf32>, vector<16x4xf32>, vector<32x4xf32> -> vector<32x4xf32>
    %c3_390 = arith.constant 3 : index
    %c0_391 = arith.constant 0 : index
    %c0_392 = arith.constant 0 : index
    %609 = vector.load %arg39[%c3_390, %c0_391, %c0_392] : memref<4x1x4xf32, #tpu.memory_space<vmem>>, vector<1x1x4xf32>
    %610 = vector.shape_cast %609 : vector<1x1x4xf32> to vector<1x4xf32>
    %611 = vector.broadcast %610 : vector<1x4xf32> to vector<32x4xf32>
    %612 = arith.addf %608, %611 : vector<32x4xf32>
    %613 = tpu.transpose %605, [1, 0] : vector<32x4xf32> -> vector<4x32xf32>
    %cst_393 = arith.constant dense<0.000000e+00> : vector<32x32xf32>
    %614 = tpu.matmul %598, %613, %cst_393 {dimension_numbers = #tpu.dot_dimension_numbers<[1], [0], [0], [1], [0, 0, 1, 1], [], []>} : vector<32x4xf32>, vector<4x32xf32>, vector<32x32xf32> -> vector<32x32xf32>
    %cst_394 = arith.constant 5.000000e-01 : f32
    %615 = vector.broadcast %cst_394 : f32 to vector<32x32xf32>
    %616 = arith.mulf %614, %615 : vector<32x32xf32>
    %617 = arith.addf %616, %1 : vector<32x32xf32>
    %cst_395 = arith.constant dense<0xFF800000> : vector<32xf32>
    %618 = vector.multi_reduction <maximumf>, %617, %cst_395 [1] : vector<32x32xf32> to vector<32xf32>
    %619 = vector.shape_cast %618 : vector<32xf32> to vector<32x1xf32>
    %620 = vector.broadcast %619 : vector<32x1xf32> to vector<32x32xf32>
    %621 = arith.subf %617, %620 : vector<32x32xf32>
    %622 = math.exp %621 : vector<32x32xf32>
    %cst_396 = arith.constant dense<0.000000e+00> : vector<32xf32>
    %623 = vector.multi_reduction <add>, %622, %cst_396 [1] : vector<32x32xf32> to vector<32xf32>
    %624 = vector.shape_cast %623 : vector<32xf32> to vector<32x1xf32>
    %625 = tpu.reciprocal %624 {approx = true} : vector<32x1xf32> -> vector<32x1xf32>
    %626 = vector.broadcast %625 : vector<32x1xf32> to vector<32x32xf32>
    %627 = arith.mulf %622, %626 : vector<32x32xf32>
    %cst_397 = arith.constant dense<0.000000e+00> : vector<32x4xf32>
    %628 = tpu.matmul %627, %612, %cst_397 {dimension_numbers = #tpu.dot_dimension_numbers<[1], [0], [0], [1], [0, 0, 1, 1], [], []>} : vector<32x32xf32>, vector<32x4xf32>, vector<32x4xf32> -> vector<32x4xf32>
    %c3_398 = arith.constant 3 : index
    %c0_399 = arith.constant 0 : index
    %c0_400 = arith.constant 0 : index
    %629 = vector.load %arg44[%c3_398, %c0_399, %c0_400] : memref<4x4x16xf32, #tpu.memory_space<vmem>>, vector<1x4x16xf32>
    %630 = vector.shape_cast %629 : vector<1x4x16xf32> to vector<4x16xf32>
    %cst_401 = arith.constant dense<0.000000e+00> : vector<32x16xf32>
    %631 = tpu.matmul %628, %630, %cst_401 {dimension_numbers = #tpu.dot_dimension_numbers<[1], [0], [0], [1], [0, 0, 1, 1], [], []>} : vector<32x4xf32>, vector<4x16xf32>, vector<32x16xf32> -> vector<32x16xf32>
    %632 = arith.addf %591, %631 : vector<32x16xf32>
    %c0_402 = arith.constant 0 : index
    %c0_403 = arith.constant 0 : index
    %633 = vector.load %arg42[%c0_402, %c0_403] : memref<1x16xf32, #tpu.memory_space<vmem>>, vector<1x16xf32>
    %634 = vector.broadcast %633 : vector<1x16xf32> to vector<32x16xf32>
    %635 = arith.addf %632, %634 : vector<32x16xf32>
    %636 = arith.addf %445, %635 : vector<32x16xf32>
    %cst_404 = arith.constant dense<0.000000e+00> : vector<32xf32>
    %637 = vector.multi_reduction <add>, %636, %cst_404 [1] : vector<32x16xf32> to vector<32xf32>
    %638 = vector.shape_cast %637 : vector<32xf32> to vector<32x1xf32>
    %cst_405 = arith.constant 1.600000e+01 : f32
    %639 = vector.broadcast %cst_405 : f32 to vector<32x1xf32>
    %640 = arith.divf %638, %639 : vector<32x1xf32>
    %641 = vector.broadcast %640 : vector<32x1xf32> to vector<32x16xf32>
    %642 = arith.subf %636, %641 : vector<32x16xf32>
    %643 = arith.mulf %642, %642 : vector<32x16xf32>
    %cst_406 = arith.constant dense<0.000000e+00> : vector<32xf32>
    %644 = vector.multi_reduction <add>, %643, %cst_406 [1] : vector<32x16xf32> to vector<32xf32>
    %645 = vector.shape_cast %644 : vector<32xf32> to vector<32x1xf32>
    %cst_407 = arith.constant 1.600000e+01 : f32
    %646 = vector.broadcast %cst_407 : f32 to vector<32x1xf32>
    %647 = arith.divf %645, %646 : vector<32x1xf32>
    %648 = vector.broadcast %640 : vector<32x1xf32> to vector<32x16xf32>
    %649 = arith.subf %636, %648 : vector<32x16xf32>
    %cst_408 = arith.constant 9.99999974E-6 : f32
    %650 = vector.broadcast %cst_408 : f32 to vector<32x1xf32>
    %651 = arith.addf %647, %650 : vector<32x1xf32>
    %652 = math.rsqrt %651 : vector<32x1xf32>
    %653 = vector.broadcast %652 : vector<32x1xf32> to vector<32x16xf32>
    %654 = arith.mulf %649, %653 : vector<32x16xf32>
    %c0_409 = arith.constant 0 : index
    %c0_410 = arith.constant 0 : index
    %655 = vector.load %arg50[%c0_409, %c0_410] : memref<1x16xf32, #tpu.memory_space<vmem>>, vector<1x16xf32>
    %656 = vector.broadcast %655 : vector<1x16xf32> to vector<32x16xf32>
    %657 = arith.mulf %654, %656 : vector<32x16xf32>
    %c0_411 = arith.constant 0 : index
    %c0_412 = arith.constant 0 : index
    %658 = vector.load %arg49[%c0_411, %c0_412] : memref<1x16xf32, #tpu.memory_space<vmem>>, vector<1x16xf32>
    %659 = vector.broadcast %658 : vector<1x16xf32> to vector<32x16xf32>
    %660 = arith.addf %657, %659 : vector<32x16xf32>
    %c0_413 = arith.constant 0 : index
    %c0_414 = arith.constant 0 : index
    %661 = vector.load %arg53[%c0_413, %c0_414] : memref<16x16xf32, #tpu.memory_space<vmem>>, vector<16x16xf32>
    %cst_415 = arith.constant dense<0.000000e+00> : vector<32x16xf32>
    %662 = tpu.matmul %660, %661, %cst_415 {dimension_numbers = #tpu.dot_dimension_numbers<[1], [0], [0], [1], [0, 0, 1, 1], [], []>} : vector<32x16xf32>, vector<16x16xf32>, vector<32x16xf32> -> vector<32x16xf32>
    %c0_416 = arith.constant 0 : index
    %c0_417 = arith.constant 0 : index
    %663 = vector.load %arg51[%c0_416, %c0_417] : memref<1x16xf32, #tpu.memory_space<vmem>>, vector<1x16xf32>
    %664 = vector.broadcast %663 : vector<1x16xf32> to vector<32x16xf32>
    %665 = arith.addf %662, %664 : vector<32x16xf32>
    %c0_418 = arith.constant 0 : index
    %c0_419 = arith.constant 0 : index
    %666 = vector.load %arg54[%c0_418, %c0_419] : memref<16x16xf32, #tpu.memory_space<vmem>>, vector<16x16xf32>
    %cst_420 = arith.constant dense<0.000000e+00> : vector<32x16xf32>
    %667 = tpu.matmul %660, %666, %cst_420 {dimension_numbers = #tpu.dot_dimension_numbers<[1], [0], [0], [1], [0, 0, 1, 1], [], []>} : vector<32x16xf32>, vector<16x16xf32>, vector<32x16xf32> -> vector<32x16xf32>
    %c0_421 = arith.constant 0 : index
    %c0_422 = arith.constant 0 : index
    %668 = vector.load %arg52[%c0_421, %c0_422] : memref<1x16xf32, #tpu.memory_space<vmem>>, vector<1x16xf32>
    %669 = vector.broadcast %668 : vector<1x16xf32> to vector<32x16xf32>
    %670 = arith.addf %667, %669 : vector<32x16xf32>
    %671 = arith.negf %670 : vector<32x16xf32>
    %672 = math.exp %671 : vector<32x16xf32>
    %cst_423 = arith.constant 1.000000e+00 : f32
    %673 = vector.broadcast %cst_423 : f32 to vector<32x16xf32>
    %674 = arith.addf %673, %672 : vector<32x16xf32>
    %675 = arith.divf %673, %674 : vector<32x16xf32>
    %676 = arith.mulf %665, %675 : vector<32x16xf32>
    %cst_424 = arith.constant dense<0.000000e+00> : vector<32x16xf32>
    %677 = tpu.matmul %3, %676, %cst_424 {dimension_numbers = #tpu.dot_dimension_numbers<[1], [0], [0], [1], [0, 0, 1, 1], [], []>} : vector<32x32xf32>, vector<32x16xf32>, vector<32x16xf32> -> vector<32x16xf32>
    %c0_425 = arith.constant 0 : index
    %c0_426 = arith.constant 0 : index
    %c0_427 = arith.constant 0 : index
    %678 = vector.load %arg48[%c0_425, %c0_426, %c0_427] : memref<3x1x16xf32, #tpu.memory_space<vmem>>, vector<1x1x16xf32>
    %679 = vector.shape_cast %678 : vector<1x1x16xf32> to vector<1x16xf32>
    %680 = vector.broadcast %679 : vector<1x16xf32> to vector<32x16xf32>
    %681 = arith.mulf %677, %680 : vector<32x16xf32>
    %cst_428 = arith.constant dense<0.000000e+00> : vector<32x16xf32>
    %682 = tpu.matmul %5, %676, %cst_428 {dimension_numbers = #tpu.dot_dimension_numbers<[1], [0], [0], [1], [0, 0, 1, 1], [], []>} : vector<32x32xf32>, vector<32x16xf32>, vector<32x16xf32> -> vector<32x16xf32>
    %c1_429 = arith.constant 1 : index
    %c0_430 = arith.constant 0 : index
    %c0_431 = arith.constant 0 : index
    %683 = vector.load %arg48[%c1_429, %c0_430, %c0_431] : memref<3x1x16xf32, #tpu.memory_space<vmem>>, vector<1x1x16xf32>
    %684 = vector.shape_cast %683 : vector<1x1x16xf32> to vector<1x16xf32>
    %685 = vector.broadcast %684 : vector<1x16xf32> to vector<32x16xf32>
    %686 = arith.mulf %682, %685 : vector<32x16xf32>
    %687 = arith.addf %681, %686 : vector<32x16xf32>
    %cst_432 = arith.constant dense<0.000000e+00> : vector<32x16xf32>
    %688 = tpu.matmul %7, %676, %cst_432 {dimension_numbers = #tpu.dot_dimension_numbers<[1], [0], [0], [1], [0, 0, 1, 1], [], []>} : vector<32x32xf32>, vector<32x16xf32>, vector<32x16xf32> -> vector<32x16xf32>
    %c2_433 = arith.constant 2 : index
    %c0_434 = arith.constant 0 : index
    %c0_435 = arith.constant 0 : index
    %689 = vector.load %arg48[%c2_433, %c0_434, %c0_435] : memref<3x1x16xf32, #tpu.memory_space<vmem>>, vector<1x1x16xf32>
    %690 = vector.shape_cast %689 : vector<1x1x16xf32> to vector<1x16xf32>
    %691 = vector.broadcast %690 : vector<1x16xf32> to vector<32x16xf32>
    %692 = arith.mulf %688, %691 : vector<32x16xf32>
    %693 = arith.addf %687, %692 : vector<32x16xf32>
    %c0_436 = arith.constant 0 : index
    %c0_437 = arith.constant 0 : index
    %694 = vector.load %arg47[%c0_436, %c0_437] : memref<1x16xf32, #tpu.memory_space<vmem>>, vector<1x16xf32>
    %695 = vector.broadcast %694 : vector<1x16xf32> to vector<32x16xf32>
    %696 = arith.addf %693, %695 : vector<32x16xf32>
    %697 = arith.negf %696 : vector<32x16xf32>
    %698 = math.exp %697 : vector<32x16xf32>
    %cst_438 = arith.constant 1.000000e+00 : f32
    %699 = vector.broadcast %cst_438 : f32 to vector<32x16xf32>
    %700 = arith.addf %699, %698 : vector<32x16xf32>
    %701 = arith.divf %699, %700 : vector<32x16xf32>
    %702 = arith.mulf %696, %701 : vector<32x16xf32>
    %c0_439 = arith.constant 0 : index
    %c0_440 = arith.constant 0 : index
    %703 = vector.load %arg56[%c0_439, %c0_440] : memref<16x16xf32, #tpu.memory_space<vmem>>, vector<16x16xf32>
    %cst_441 = arith.constant dense<0.000000e+00> : vector<32x16xf32>
    %704 = tpu.matmul %702, %703, %cst_441 {dimension_numbers = #tpu.dot_dimension_numbers<[1], [0], [0], [1], [0, 0, 1, 1], [], []>} : vector<32x16xf32>, vector<16x16xf32>, vector<32x16xf32> -> vector<32x16xf32>
    %c0_442 = arith.constant 0 : index
    %c0_443 = arith.constant 0 : index
    %705 = vector.load %arg55[%c0_442, %c0_443] : memref<1x16xf32, #tpu.memory_space<vmem>>, vector<1x16xf32>
    %706 = vector.broadcast %705 : vector<1x16xf32> to vector<32x16xf32>
    %707 = arith.addf %704, %706 : vector<32x16xf32>
    %708 = arith.addf %636, %707 : vector<32x16xf32>
    %cst_444 = arith.constant dense<0.000000e+00> : vector<32xf32>
    %709 = vector.multi_reduction <add>, %708, %cst_444 [1] : vector<32x16xf32> to vector<32xf32>
    %710 = vector.shape_cast %709 : vector<32xf32> to vector<32x1xf32>
    %cst_445 = arith.constant 1.600000e+01 : f32
    %711 = vector.broadcast %cst_445 : f32 to vector<32x1xf32>
    %712 = arith.divf %710, %711 : vector<32x1xf32>
    %713 = vector.broadcast %712 : vector<32x1xf32> to vector<32x16xf32>
    %714 = arith.subf %708, %713 : vector<32x16xf32>
    %715 = arith.mulf %714, %714 : vector<32x16xf32>
    %cst_446 = arith.constant dense<0.000000e+00> : vector<32xf32>
    %716 = vector.multi_reduction <add>, %715, %cst_446 [1] : vector<32x16xf32> to vector<32xf32>
    %717 = vector.shape_cast %716 : vector<32xf32> to vector<32x1xf32>
    %cst_447 = arith.constant 1.600000e+01 : f32
    %718 = vector.broadcast %cst_447 : f32 to vector<32x1xf32>
    %719 = arith.divf %717, %718 : vector<32x1xf32>
    %720 = vector.broadcast %712 : vector<32x1xf32> to vector<32x16xf32>
    %721 = arith.subf %708, %720 : vector<32x16xf32>
    %cst_448 = arith.constant 9.99999974E-6 : f32
    %722 = vector.broadcast %cst_448 : f32 to vector<32x1xf32>
    %723 = arith.addf %719, %722 : vector<32x1xf32>
    %724 = math.rsqrt %723 : vector<32x1xf32>
    %725 = vector.broadcast %724 : vector<32x1xf32> to vector<32x16xf32>
    %726 = arith.mulf %721, %725 : vector<32x16xf32>
    %c0_449 = arith.constant 0 : index
    %c0_450 = arith.constant 0 : index
    %727 = vector.load %arg66[%c0_449, %c0_450] : memref<1x16xf32, #tpu.memory_space<vmem>>, vector<1x16xf32>
    %728 = vector.broadcast %727 : vector<1x16xf32> to vector<32x16xf32>
    %729 = arith.mulf %726, %728 : vector<32x16xf32>
    %c0_451 = arith.constant 0 : index
    %c0_452 = arith.constant 0 : index
    %730 = vector.load %arg65[%c0_451, %c0_452] : memref<1x16xf32, #tpu.memory_space<vmem>>, vector<1x16xf32>
    %731 = vector.broadcast %730 : vector<1x16xf32> to vector<32x16xf32>
    %732 = arith.addf %729, %731 : vector<32x16xf32>
    %c0_453 = arith.constant 0 : index
    %c0_454 = arith.constant 0 : index
    %733 = vector.load %arg67[%c0_453, %c0_454] : memref<16x32xf32, #tpu.memory_space<vmem>>, vector<16x32xf32>
    %cst_455 = arith.constant dense<0.000000e+00> : vector<32x32xf32>
    %734 = tpu.matmul %732, %733, %cst_455 {dimension_numbers = #tpu.dot_dimension_numbers<[1], [0], [0], [1], [0, 0, 1, 1], [], []>} : vector<32x16xf32>, vector<16x32xf32>, vector<32x32xf32> -> vector<32x32xf32>
    %c0_456 = arith.constant 0 : index
    %c0_457 = arith.constant 0 : index
    %735 = vector.load %arg63[%c0_456, %c0_457] : memref<1x32xf32, #tpu.memory_space<vmem>>, vector<1x32xf32>
    %736 = vector.broadcast %735 : vector<1x32xf32> to vector<32x32xf32>
    %737 = arith.addf %734, %736 : vector<32x32xf32>
    %738 = arith.negf %737 : vector<32x32xf32>
    %739 = math.exp %738 : vector<32x32xf32>
    %cst_458 = arith.constant 1.000000e+00 : f32
    %740 = vector.broadcast %cst_458 : f32 to vector<32x32xf32>
    %741 = arith.addf %740, %739 : vector<32x32xf32>
    %742 = arith.divf %740, %741 : vector<32x32xf32>
    %743 = arith.mulf %737, %742 : vector<32x32xf32>
    %c0_459 = arith.constant 0 : index
    %c0_460 = arith.constant 0 : index
    %744 = vector.load %arg68[%c0_459, %c0_460] : memref<32x16xf32, #tpu.memory_space<vmem>>, vector<32x16xf32>
    %cst_461 = arith.constant dense<0.000000e+00> : vector<32x16xf32>
    %745 = tpu.matmul %743, %744, %cst_461 {dimension_numbers = #tpu.dot_dimension_numbers<[1], [0], [0], [1], [0, 0, 1, 1], [], []>} : vector<32x32xf32>, vector<32x16xf32>, vector<32x16xf32> -> vector<32x16xf32>
    %c0_462 = arith.constant 0 : index
    %c0_463 = arith.constant 0 : index
    %746 = vector.load %arg64[%c0_462, %c0_463] : memref<1x16xf32, #tpu.memory_space<vmem>>, vector<1x16xf32>
    %747 = vector.broadcast %746 : vector<1x16xf32> to vector<32x16xf32>
    %748 = arith.addf %745, %747 : vector<32x16xf32>
    %cst_464 = arith.constant 5.000000e-01 : f32
    %749 = vector.broadcast %cst_464 : f32 to vector<32x16xf32>
    %750 = arith.mulf %749, %748 : vector<32x16xf32>
    %751 = arith.addf %708, %750 : vector<32x16xf32>
    %cst_465 = arith.constant dense<0.000000e+00> : vector<32xf32>
    %752 = vector.multi_reduction <add>, %751, %cst_465 [1] : vector<32x16xf32> to vector<32xf32>
    %753 = vector.shape_cast %752 : vector<32xf32> to vector<32x1xf32>
    %cst_466 = arith.constant 1.600000e+01 : f32
    %754 = vector.broadcast %cst_466 : f32 to vector<32x1xf32>
    %755 = arith.divf %753, %754 : vector<32x1xf32>
    %756 = vector.broadcast %755 : vector<32x1xf32> to vector<32x16xf32>
    %757 = arith.subf %751, %756 : vector<32x16xf32>
    %758 = arith.mulf %757, %757 : vector<32x16xf32>
    %cst_467 = arith.constant dense<0.000000e+00> : vector<32xf32>
    %759 = vector.multi_reduction <add>, %758, %cst_467 [1] : vector<32x16xf32> to vector<32xf32>
    %760 = vector.shape_cast %759 : vector<32xf32> to vector<32x1xf32>
    %cst_468 = arith.constant 1.600000e+01 : f32
    %761 = vector.broadcast %cst_468 : f32 to vector<32x1xf32>
    %762 = arith.divf %760, %761 : vector<32x1xf32>
    %763 = vector.broadcast %755 : vector<32x1xf32> to vector<32x16xf32>
    %764 = arith.subf %751, %763 : vector<32x16xf32>
    %cst_469 = arith.constant 9.99999974E-6 : f32
    %765 = vector.broadcast %cst_469 : f32 to vector<32x1xf32>
    %766 = arith.addf %762, %765 : vector<32x1xf32>
    %767 = math.rsqrt %766 : vector<32x1xf32>
    %768 = vector.broadcast %767 : vector<32x1xf32> to vector<32x16xf32>
    %769 = arith.mulf %764, %768 : vector<32x16xf32>
    %c0_470 = arith.constant 0 : index
    %c0_471 = arith.constant 0 : index
    %770 = vector.load %arg70[%c0_470, %c0_471] : memref<1x16xf32, #tpu.memory_space<vmem>>, vector<1x16xf32>
    %771 = vector.broadcast %770 : vector<1x16xf32> to vector<32x16xf32>
    %772 = arith.mulf %769, %771 : vector<32x16xf32>
    %c0_472 = arith.constant 0 : index
    %c0_473 = arith.constant 0 : index
    %773 = vector.load %arg69[%c0_472, %c0_473] : memref<1x16xf32, #tpu.memory_space<vmem>>, vector<1x16xf32>
    %774 = vector.broadcast %773 : vector<1x16xf32> to vector<32x16xf32>
    %775 = arith.addf %772, %774 : vector<32x16xf32>
    %c0_474 = arith.constant 0 : index
    %c0_475 = arith.constant 0 : index
    %776 = vector.load %arg74[%c0_474, %c0_475] : memref<16x128xf32, #tpu.memory_space<vmem>>, vector<16x128xf32>
    %cst_476 = arith.constant dense<0.000000e+00> : vector<32x128xf32>
    %777 = tpu.matmul %775, %776, %cst_476 {dimension_numbers = #tpu.dot_dimension_numbers<[1], [0], [0], [1], [0, 0, 1, 1], [], []>} : vector<32x16xf32>, vector<16x128xf32>, vector<32x128xf32> -> vector<32x128xf32>
    %c0_477 = arith.constant 0 : index
    %c0_478 = arith.constant 0 : index
    %778 = vector.load %arg73[%c0_477, %c0_478] : memref<1x128xf32, #tpu.memory_space<vmem>>, vector<1x128xf32>
    %779 = vector.broadcast %778 : vector<1x128xf32> to vector<32x128xf32>
    %780 = arith.addf %777, %779 : vector<32x128xf32>
    %c0_479 = arith.constant 0 : index
    %c0_480 = arith.constant 0 : index
    %781 = vector.load %arg77[%c0_479, %c0_480] : memref<32x128xf32, #tpu.memory_space<vmem>>, vector<32x128xf32>
    tpu.vector_store %arg77[%c0_479, %c0_480], %780 {strides = array<i32>} : memref<32x128xf32, #tpu.memory_space<vmem>>, vector<32x128xf32>,
    return
  }
}

</mosaic_0001>

<llo_original>
// kernel: forward.1
$region0: #{forward.1}
  #allocation0 [shape = 'u32[]', space=smem, size = 0x4, offset = 0x4, fixed_abs, tag = 'smem constant byte address 0x4 - core index']
  #allocation1 [shape = 'u32[72,128]{1,0:T(1,128)}', space=vmem, size = 0x9000, scoped, tag = 'internal scratch']
  %s0 = inlined_call_operand.smem [shape: u32[78], index: -1, kind: input, shape index: {}]
  %s1 = sld [smem:[%s0]]
  %s2 = scalar_lea.smem %s0, 1
  %s3 = sld [smem:[%s2]]
  %s4 = scalar_lea.smem %s0, 2
  %s5 = sld [smem:[%s4]]
  %s6 = scalar_lea.smem %s0, 3
  %s7 = sld [smem:[%s6]]
  %s8 = scalar_lea.smem %s0, 4
  %s9 = sld [smem:[%s8]]
  %s10 = scalar_lea.smem %s0, 5
  %s11 = sld [smem:[%s10]]
  %s12 = scalar_lea.smem %s0, 6
  %s13 = sld [smem:[%s12]]
  %s14 = scalar_lea.smem %s0, 7
  %s15 = sld [smem:[%s14]]
  %s16 = scalar_lea.smem %s0, 8
  %s17 = sld [smem:[%s16]]
  %s18 = scalar_lea.smem %s0, 9
  %s19 = sld [smem:[%s18]]
  %s20 = scalar_lea.smem %s0, 10
  %s21 = sld [smem:[%s20]]
  %s22 = scalar_lea.smem %s0, 11
  %s23 = sld [smem:[%s22]]
  %s24 = scalar_lea.smem %s0, 12
  %s25 = sld [smem:[%s24]]
  %s26 = scalar_lea.smem %s0, 13
  %s27 = sld [smem:[%s26]]
  %s28 = scalar_lea.smem %s0, 14
  %s29 = sld [smem:[%s28]]
  %s30 = scalar_lea.smem %s0, 15
  %s31 = sld [smem:[%s30]]
  %s32 = scalar_lea.smem %s0, 16
  %s33 = sld [smem:[%s32]]
  %s34 = scalar_lea.smem %s0, 17
  %s35 = sld [smem:[%s34]]
  %s36 = scalar_lea.smem %s0, 18
  %s37 = sld [smem:[%s36]]
  %s38 = scalar_lea.smem %s0, 19
  %s39 = sld [smem:[%s38]]
  %s40 = scalar_lea.smem %s0, 20
  %s41 = sld [smem:[%s40]]
  %s42 = scalar_lea.smem %s0, 21
  %s43 = sld [smem:[%s42]]
  %s44 = scalar_lea.smem %s0, 22
  %s45 = sld [smem:[%s44]]
  %s46 = scalar_lea.smem %s0, 23
  %s47 = sld [smem:[%s46]]
  %s48 = scalar_lea.smem %s0, 24
  %s49 = sld [smem:[%s48]]
  %s50 = scalar_lea.smem %s0, 25
  %s51 = sld [smem:[%s50]]
  %s52 = scalar_lea.smem %s0, 26
  %s53 = sld [smem:[%s52]]
  %s54 = scalar_lea.smem %s0, 27
  %s55 = sld [smem:[%s54]]
  %s56 = scalar_lea.smem %s0, 28
  %s57 = sld [smem:[%s56]]
  %s58 = scalar_lea.smem %s0, 29
  %s59 = sld [smem:[%s58]]
  %s60 = scalar_lea.smem %s0, 30
  %s61 = sld [smem:[%s60]]
  %s62 = scalar_lea.smem %s0, 31
  %s63 = sld [smem:[%s62]]
  %s64 = scalar_lea.smem %s0, 32
  %s65 = sld [smem:[%s64]]
  %s66 = scalar_lea.smem %s0, 33
  %s67 = sld [smem:[%s66]]
  %s68 = scalar_lea.smem %s0, 34
  %s69 = sld [smem:[%s68]]
  %s70 = scalar_lea.smem %s0, 35
  %s71 = sld [smem:[%s70]]
  %s72 = scalar_lea.smem %s0, 36
  %s73 = sld [smem:[%s72]]
  %s74 = scalar_lea.smem %s0, 37
  %s75 = sld [smem:[%s74]]
  %s76 = scalar_lea.smem %s0, 38
  %s77 = sld [smem:[%s76]]
  %s78 = scalar_lea.smem %s0, 39
  %s79 = sld [smem:[%s78]]
  %s80 = scalar_lea.smem %s0, 40
  %s81 = sld [smem:[%s80]]
  %s82 = scalar_lea.smem %s0, 41
  %s83 = sld [smem:[%s82]]
  %s84 = scalar_lea.smem %s0, 42
  %s85 = sld [smem:[%s84]]
  %s86 = scalar_lea.smem %s0, 43
  %s87 = sld [smem:[%s86]]
  %s88 = scalar_lea.smem %s0, 44
  %s89 = sld [smem:[%s88]]
  %s90 = scalar_lea.smem %s0, 45
  %s91 = sld [smem:[%s90]]
  %s92 = scalar_lea.smem %s0, 46
  %s93 = sld [smem:[%s92]]
  %s94 = scalar_lea.smem %s0, 47
  %s95 = sld [smem:[%s94]]
  %s96 = scalar_lea.smem %s0, 48
  %s97 = sld [smem:[%s96]]
  %s98 = scalar_lea.smem %s0, 49
  %s99 = sld [smem:[%s98]]
  %s100 = scalar_lea.smem %s0, 50
  %s101 = sld [smem:[%s100]]
  %s102 = scalar_lea.smem %s0, 51
  %s103 = sld [smem:[%s102]]
  %s104 = scalar_lea.smem %s0, 52
  %s105 = sld [smem:[%s104]]
  %s106 = scalar_lea.smem %s0, 53
  %s107 = sld [smem:[%s106]]
  %s108 = scalar_lea.smem %s0, 54
  %s109 = sld [smem:[%s108]]
  %s110 = scalar_lea.smem %s0, 55
  %s111 = sld [smem:[%s110]]
  %s112 = scalar_lea.smem %s0, 56
  %s113 = sld [smem:[%s112]]
  %s114 = scalar_lea.smem %s0, 57
  %s115 = sld [smem:[%s114]]
  %s116 = scalar_lea.smem %s0, 58
  %s117 = sld [smem:[%s116]]
  %s118 = scalar_lea.smem %s0, 59
  %s119 = sld [smem:[%s118]]
  %s120 = scalar_lea.smem %s0, 60
  %s121 = sld [smem:[%s120]]
  %s122 = scalar_lea.smem %s0, 61
  %s123 = sld [smem:[%s122]]
  %s124 = scalar_lea.smem %s0, 62
  %s125 = sld [smem:[%s124]]
  %s126 = scalar_lea.smem %s0, 63
  %s127 = sld [smem:[%s126]]
  %s128 = scalar_lea.smem %s0, 64
  %s129 = sld [smem:[%s128]]
  %s130 = scalar_lea.smem %s0, 65
  %s131 = sld [smem:[%s130]]
  %s132 = scalar_lea.smem %s0, 66
  %s133 = sld [smem:[%s132]]
  %s134 = scalar_lea.smem %s0, 67
  %s135 = sld [smem:[%s134]]
  %s136 = scalar_lea.smem %s0, 68
  %s137 = sld [smem:[%s136]]
  %s138 = scalar_lea.smem %s0, 69
  %s139 = sld [smem:[%s138]]
  %s140 = scalar_lea.smem %s0, 70
  %s141 = sld [smem:[%s140]]
  %s142 = scalar_lea.smem %s0, 71
  %s143 = sld [smem:[%s142]]
  %s144 = scalar_lea.smem %s0, 72
  %s145 = sld [smem:[%s144]]
  %s146 = scalar_lea.smem %s0, 73
  %s147 = sld [smem:[%s146]]
  %s148 = scalar_lea.smem %s0, 74
  %s149 = sld [smem:[%s148]]
  %s150 = scalar_lea.smem %s0, 75
  %s151 = sld [smem:[%s150]]
  %s152 = scalar_lea.smem %s0, 76
  %s153 = sld [smem:[%s152]]
  %s154 = scalar_lea.smem %s0, 77
  %s155 = sld [smem:[%s154]]
  %s156 = sld [smem:[#allocation0]]
  $region566: #{forward.1} parent=0
    _
  %s158 = ssub.s32 1, %s156
  %s159 = scalar_select 0, %s158, %s156
  $region1: #{forward.1} parent=0
    #allocation2 [shape = 'u8[49152]{0}', space=vmem, size = 0xc000, scoped, tag = 'input window, operand 2, single buffered']
    #allocation3 [shape = 's32[1]{0}', space=sflag, size = 0x4, scoped, tag = 'scoped memory for forward.1']
    #allocation4 [shape = 'u8[2048]{0}', space=vmem, size = 0x800, scoped, tag = 'input window, operand 3, single buffered']
    #allocation5 [shape = 's32[1]{0}', space=sflag, size = 0x4, scoped, tag = 'scoped memory for forward.1']
    #allocation6 [shape = 'u8[2048]{0}', space=vmem, size = 0x800, scoped, tag = 'input window, operand 4, single buffered']
    #allocation7 [shape = 'u8[2048]{0}', space=vmem, size = 0x800, scoped, tag = 'input window, operand 5, single buffered']
    #allocation8 [shape = 's32[1]{0}', space=sflag, size = 0x4, scoped, tag = 'scoped memory for forward.1']
    #allocation9 [shape = 'u8[512]{0}', space=vmem, size = 0x400, scoped, tag = 'input window, operand 6, single buffered']
    #allocation10 [shape = 'u8[512]{0}', space=vmem, size = 0x400, scoped, tag = 'input window, operand 7, single buffered']
    #allocation11 [shape = 's32[1]{0}', space=sflag, size = 0x4, scoped, tag = 'scoped memory for forward.1']
    #allocation12 [shape = 'u8[512]{0}', space=vmem, size = 0x400, scoped, tag = 'input window, operand 8, single buffered']
    #allocation13 [shape = 'u8[32768]{0}', space=vmem, size = 0x8000, scoped, tag = 'input window, operand 9, single buffered']
    #allocation14 [shape = 's32[1]{0}', space=sflag, size = 0x4, scoped, tag = 'scoped memory for forward.1']
    #allocation15 [shape = 'u8[8192]{0}', space=vmem, size = 0x2000, scoped, tag = 'input window, operand 10, single buffered']
    #allocation16 [shape = 'u8[32768]{0}', space=vmem, size = 0x8000, scoped, tag = 'input window, operand 11, single buffered']
    #allocation17 [shape = 's32[1]{0}', space=sflag, size = 0x4, scoped, tag = 'scoped memory for forward.1']
    #allocation18 [shape = 'u8[32768]{0}', space=vmem, size = 0x8000, scoped, tag = 'input window, operand 12, single buffered']
    #allocation19 [shape = 'u8[512]{0}', space=vmem, size = 0x400, scoped, tag = 'input window, operand 13, single buffered']
    #allocation20 [shape = 's32[1]{0}', space=sflag, size = 0x4, scoped, tag = 'scoped memory for forward.1']
    #allocation21 [shape = 'u8[1536]{0}', space=vmem, size = 0x800, scoped, tag = 'input window, operand 14, single buffered']
    #allocation22 [shape = 'u8[512]{0}', space=vmem, size = 0x400, scoped, tag = 'input window, operand 15, single buffered']
    #allocation23 [shape = 's32[1]{0}', space=sflag, size = 0x4, scoped, tag = 'scoped memory for forward.1']
    #allocation24 [shape = 'u8[512]{0}', space=vmem, size = 0x400, scoped, tag = 'input window, operand 16, single buffered']
    #allocation25 [shape = 'u8[512]{0}', space=vmem, size = 0x400, scoped, tag = 'input window, operand 17, single buffered']
    #allocation26 [shape = 's32[1]{0}', space=sflag, size = 0x4, scoped, tag = 'scoped memory for forward.1']
    #allocation27 [shape = 'u8[512]{0}', space=vmem, size = 0x400, scoped, tag = 'input window, operand 18, single buffered']
    #allocation28 [shape = 'u8[8192]{0}', space=vmem, size = 0x2000, scoped, tag = 'input window, operand 19, single buffered']
    #allocation29 [shape = 's32[1]{0}', space=sflag, size = 0x4, scoped, tag = 'scoped memory for forward.1']
    #allocation30 [shape = 'u8[8192]{0}', space=vmem, size = 0x2000, scoped, tag = 'input window, operand 20, single buffered']
    #allocation31 [shape = 'u8[512]{0}', space=vmem, size = 0x400, scoped, tag = 'input window, operand 21, single buffered']
    #allocation32 [shape = 's32[1]{0}', space=sflag, size = 0x4, scoped, tag = 'scoped memory for forward.1']
    #allocation33 [shape = 'u8[8192]{0}', space=vmem, size = 0x2000, scoped, tag = 'input window, operand 22, single buffered']
    #allocation34 [shape = 'u8[512]{0}', space=vmem, size = 0x400, scoped, tag = 'input window, operand 23, single buffered']
    #allocation35 [shape = 's32[1]{0}', space=sflag, size = 0x4, scoped, tag = 'scoped memory for forward.1']
    #allocation36 [shape = 'u8[512]{0}', space=vmem, size = 0x400, scoped, tag = 'input window, operand 24, single buffered']
    #allocation37 [shape = 'u8[512]{0}', space=vmem, size = 0x400, scoped, tag = 'input window, operand 25, single buffered']
    #allocation38 [shape = 's32[1]{0}', space=sflag, size = 0x4, scoped, tag = 'scoped memory for forward.1']
    #allocation39 [shape = 'u8[512]{0}', space=vmem, size = 0x400, scoped, tag = 'input window, operand 26, single buffered']
    #allocation40 [shape = 'u8[8192]{0}', space=vmem, size = 0x2000, scoped, tag = 'input window, operand 27, single buffered']
    #allocation41 [shape = 's32[1]{0}', space=sflag, size = 0x4, scoped, tag = 'scoped memory for forward.1']
    #allocation42 [shape = 'u8[16384]{0}', space=vmem, size = 0x4000, scoped, tag = 'input window, operand 28, single buffered']
    #allocation43 [shape = 'u8[512]{0}', space=vmem, size = 0x400, scoped, tag = 'input window, operand 29, single buffered']
    #allocation44 [shape = 's32[1]{0}', space=sflag, size = 0x4, scoped, tag = 'scoped memory for forward.1']
    #allocation45 [shape = 'u8[512]{0}', space=vmem, size = 0x400, scoped, tag = 'input window, operand 30, single buffered']
    #allocation46 [shape = 'u8[512]{0}', space=vmem, size = 0x400, scoped, tag = 'input window, operand 31, single buffered']
    #allocation47 [shape = 's32[1]{0}', space=sflag, size = 0x4, scoped, tag = 'scoped memory for forward.1']
    #allocation48 [shape = 'u8[512]{0}', space=vmem, size = 0x400, scoped, tag = 'input window, operand 32, single buffered']
    #allocation49 [shape = 'u8[8192]{0}', space=vmem, size = 0x2000, scoped, tag = 'input window, operand 33, single buffered']
    #allocation50 [shape = 's32[1]{0}', space=sflag, size = 0x4, scoped, tag = 'scoped memory for forward.1']
    #allocation51 [shape = 'u8[16384]{0}', space=vmem, size = 0x4000, scoped, tag = 'input window, operand 34, single buffered']
    #allocation52 [shape = 'u8[512]{0}', space=vmem, size = 0x400, scoped, tag = 'input window, operand 35, single buffered']
    #allocation53 [shape = 's32[1]{0}', space=sflag, size = 0x4, scoped, tag = 'scoped memory for forward.1']
    #allocation54 [shape = 'u8[512]{0}', space=vmem, size = 0x400, scoped, tag = 'input window, operand 36, single buffered']
    #allocation55 [shape = 'u8[512]{0}', space=vmem, size = 0x400, scoped, tag = 'input window, operand 40, single buffered']
    #allocation56 [shape = 's32[1]{0}', space=sflag, size = 0x4, scoped, tag = 'scoped memory for forward.1']
    #allocation57 [shape = 'u8[512]{0}', space=vmem, size = 0x400, scoped, tag = 'input window, operand 41, single buffered']
    #allocation58 [shape = 'u8[512]{0}', space=vmem, size = 0x400, scoped, tag = 'input window, operand 42, single buffered']
    #allocation59 [shape = 's32[1]{0}', space=sflag, size = 0x4, scoped, tag = 'scoped memory for forward.1']
    #allocation60 [shape = 'u8[32768]{0}', space=vmem, size = 0x8000, scoped, tag = 'input window, operand 43, single buffered']
    #allocation61 [shape = 'u8[8192]{0}', space=vmem, size = 0x2000, scoped, tag = 'input window, operand 44, single buffered']
    #allocation62 [shape = 's32[1]{0}', space=sflag, size = 0x4, scoped, tag = 'scoped memory for forward.1']
    #allocation63 [shape = 'u8[32768]{0}', space=vmem, size = 0x8000, scoped, tag = 'input window, operand 45, single buffered']
    #allocation64 [shape = 'u8[512]{0}', space=vmem, size = 0x400, scoped, tag = 'input window, operand 47, single buffered']
    #allocation65 [shape = 's32[1]{0}', space=sflag, size = 0x4, scoped, tag = 'scoped memory for forward.1']
    #allocation66 [shape = 'u8[512]{0}', space=vmem, size = 0x400, scoped, tag = 'input window, operand 49, single buffered']
    #allocation67 [shape = 'u8[512]{0}', space=vmem, size = 0x400, scoped, tag = 'input window, operand 50, single buffered']
    #allocation68 [shape = 's32[1]{0}', space=sflag, size = 0x4, scoped, tag = 'scoped memory for forward.1']
    #allocation69 [shape = 'u8[512]{0}', space=vmem, size = 0x400, scoped, tag = 'input window, operand 51, single buffered']
    #allocation70 [shape = 'u8[512]{0}', space=vmem, size = 0x400, scoped, tag = 'input window, operand 52, single buffered']
    #allocation71 [shape = 's32[1]{0}', space=sflag, size = 0x4, scoped, tag = 'scoped memory for forward.1']
    #allocation72 [shape = 'u8[8192]{0}', space=vmem, size = 0x2000, scoped, tag = 'input window, operand 53, single buffered']
    #allocation73 [shape = 'u8[8192]{0}', space=vmem, size = 0x2000, scoped, tag = 'input window, operand 54, single buffered']
    #allocation74 [shape = 's32[1]{0}', space=sflag, size = 0x4, scoped, tag = 'scoped memory for forward.1']
    #allocation75 [shape = 'u8[512]{0}', space=vmem, size = 0x400, scoped, tag = 'input window, operand 55, single buffered']
    #allocation76 [shape = 'u8[8192]{0}', space=vmem, size = 0x2000, scoped, tag = 'input window, operand 56, single buffered']
    #allocation77 [shape = 's32[1]{0}', space=sflag, size = 0x4, scoped, tag = 'scoped memory for forward.1']
    #allocation78 [shape = 'u8[512]{0}', space=vmem, size = 0x400, scoped, tag = 'input window, operand 57, single buffered']
    #allocation79 [shape = 'u8[512]{0}', space=vmem, size = 0x400, scoped, tag = 'input window, operand 58, single buffered']
    #allocation80 [shape = 's32[1]{0}', space=sflag, size = 0x4, scoped, tag = 'scoped memory for forward.1']
    #allocation81 [shape = 'u8[512]{0}', space=vmem, size = 0x400, scoped, tag = 'input window, operand 59, single buffered']
    #allocation82 [shape = 'u8[512]{0}', space=vmem, size = 0x400, scoped, tag = 'input window, operand 60, single buffered']
    #allocation83 [shape = 's32[1]{0}', space=sflag, size = 0x4, scoped, tag = 'scoped memory for forward.1']
    #allocation84 [shape = 'u8[8192]{0}', space=vmem, size = 0x2000, scoped, tag = 'input window, operand 61, single buffered']
    #allocation85 [shape = 'u8[16384]{0}', space=vmem, size = 0x4000, scoped, tag = 'input window, operand 62, single buffered']
    #allocation86 [shape = 's32[1]{0}', space=sflag, size = 0x4, scoped, tag = 'scoped memory for forward.1']
    #allocation87 [shape = 'u8[512]{0}', space=vmem, size = 0x400, scoped, tag = 'input window, operand 63, single buffered']
    #allocation88 [shape = 'u8[512]{0}', space=vmem, size = 0x400, scoped, tag = 'input window, operand 64, single buffered']
    #allocation89 [shape = 's32[1]{0}', space=sflag, size = 0x4, scoped, tag = 'scoped memory for forward.1']
    #allocation90 [shape = 'u8[512]{0}', space=vmem, size = 0x400, scoped, tag = 'input window, operand 65, single buffered']
    #allocation91 [shape = 'u8[8192]{0}', space=vmem, size = 0x2000, scoped, tag = 'input window, operand 67, single buffered']
    #allocation92 [shape = 's32[1]{0}', space=sflag, size = 0x4, scoped, tag = 'scoped memory for forward.1']
    #allocation93 [shape = 'u8[8192]{0}', space=vmem, size = 0x2000, scoped, tag = 'input window, operand 72, single buffered']
    #allocation94 [shape = 'u8[8192]{0}', space=vmem, size = 0x2000, scoped, tag = 'input window, operand 74, single buffered']
    #allocation95 [shape = 's32[1]{0}', space=sflag, size = 0x4, scoped, tag = 'scoped memory for forward.1']
    %160 = vsyncpa [#allocation3], 0
    %161 = vsyncpa [#allocation5], 0
    %162 = vsyncpa [#allocation8], 0
    %163 = vsyncpa [#allocation11], 0
    %164 = vsyncpa [#allocation14], 0
    %165 = vsyncpa [#allocation17], 0
    %166 = vsyncpa [#allocation20], 0
    %167 = vsyncpa [#allocation23], 0
    %168 = vsyncpa [#allocation26], 0
    %169 = vsyncpa [#allocation29], 0
    %170 = vsyncpa [#allocation32], 0
    %171 = vsyncpa [#allocation35], 0
    %172 = vsyncpa [#allocation38], 0
    %173 = vsyncpa [#allocation41], 0
    %174 = vsyncpa [#allocation44], 0
    %175 = vsyncpa [#allocation47], 0
    %176 = vsyncpa [#allocation50], 0
    %177 = vsyncpa [#allocation53], 0
    %178 = vsyncpa [#allocation56], 0
    %179 = vsyncpa [#allocation59], 0
    %180 = vsyncpa [#allocation62], 0
    %181 = vsyncpa [#allocation65], 0
    %182 = vsyncpa [#allocation68], 0
    %183 = vsyncpa [#allocation71], 0
    %184 = vsyncpa [#allocation74], 0
    %185 = vsyncpa [#allocation77], 0
    %186 = vsyncpa [#allocation80], 0
    %187 = vsyncpa [#allocation83], 0
    %188 = vsyncpa [#allocation86], 0
    %189 = vsyncpa [#allocation89], 0
    %190 = vsyncpa [#allocation92], 0
    %191 = vsyncpa [#allocation95], 0
    // Predicated region
    $region2: #{forward.1} parent=1 // pred_check
      _
    $region3: #{forward.1} parent=1 // pred_check_branch
      %193 = sbr.rel (0) target = $region5
    $region4: #{forward.1} parent=1 // pred_region
      _
    $region5: #{forward.1} parent=1 // pred_fallthru
      _
    // Predicated region
    $region6: #{forward.1} parent=1 // pred_check
      _
    $region7: #{forward.1} parent=1 // pred_check_branch
      %195 = sbr.rel (0) target = $region9
    $region8: #{forward.1} parent=1 // pred_region
      _
    $region9: #{forward.1} parent=1 // pred_fallthru
      _
    // Predicated region
    $region10: #{forward.1} parent=1 // pred_check
      _
    $region11: #{forward.1} parent=1 // pred_check_branch
      %197 = sbr.rel (0) target = $region13
    $region12: #{forward.1} parent=1 // pred_region
      %199 = vsyncadd [#allocation3], 0
      %s200 = sshll.u32 %s5, 4
      %s201 = int_to_ptr.hbm [resolvable:$true] %s200
      %s202 = sshll.u32 [#allocation2], 4
      %s203 = int_to_ptr.vmem [resolvable:$true] %s202
      %208 = dma.hbm_to_vmem [thread:$0]  %s201, 1536, %s203, [#allocation3], 128, 128, 8
    $region13: #{forward.1} parent=1 // pred_fallthru
      _
    // Predicated region
    $region14: #{forward.1} parent=1 // pred_check
      _
    $region15: #{forward.1} parent=1 // pred_check_branch
      %210 = sbr.rel (0) target = $region17
    $region16: #{forward.1} parent=1 // pred_region
      %212 = vsyncadd [#allocation5], 0
      %s213 = sshll.u32 %s7, 4
      %s214 = int_to_ptr.hbm [resolvable:$true] %s213
      %s215 = sshll.u32 [#allocation4], 4
      %s216 = int_to_ptr.vmem [resolvable:$true] %s215
      %221 = dma.hbm_to_vmem [thread:$0]  %s214, 64, %s216, [#allocation5], 16, 16, 1
    $region17: #{forward.1} parent=1 // pred_fallthru
      _
    // Predicated region
    $region18: #{forward.1} parent=1 // pred_check
      _
    $region19: #{forward.1} parent=1 // pred_check_branch
      %223 = sbr.rel (0) target = $region21
    $region20: #{forward.1} parent=1 // pred_region
      %225 = vsyncadd [#allocation5], 0
      %s226 = sshll.u32 %s9, 4
      %s227 = int_to_ptr.hbm [resolvable:$true] %s226
      %s228 = sshll.u32 [#allocation6], 4
      %s229 = int_to_ptr.vmem [resolvable:$true] %s228
      %234 = dma.hbm_to_vmem [thread:$0]  %s227, 64, %s229, [#allocation5], 16, 16, 1
    $region21: #{forward.1} parent=1 // pred_fallthru
      _
    // Predicated region
    $region22: #{forward.1} parent=1 // pred_check
      _
    $region23: #{forward.1} parent=1 // pred_check_branch
      %236 = sbr.rel (0) target = $region25
    $region24: #{forward.1} parent=1 // pred_region
      %238 = vsyncadd [#allocation8], 0
      %s239 = sshll.u32 %s11, 4
      %s240 = int_to_ptr.hbm [resolvable:$true] %s239
      %s241 = sshll.u32 [#allocation7], 4
      %s242 = int_to_ptr.vmem [resolvable:$true] %s241
      %247 = dma.hbm_to_vmem [thread:$0]  %s240, 64, %s242, [#allocation8], 16, 16, 1
    $region25: #{forward.1} parent=1 // pred_fallthru
      _
    // Predicated region
    $region26: #{forward.1} parent=1 // pred_check
      _
    $region27: #{forward.1} parent=1 // pred_check_branch
      %249 = sbr.rel (0) target = $region29
    $region28: #{forward.1} parent=1 // pred_region
      %251 = vsyncadd [#allocation8], 0
      %s253 = sshll.u32 %s13, 4
      %s254 = int_to_ptr.hbm [resolvable:$true] %s253
      %s255 = sshll.u32 [#allocation9], 4
      %s256 = int_to_ptr.vmem [resolvable:$true] %s255
      %258 = dma.hbm_to_vmem [thread:$0]  %s254, 16, %s256, [#allocation8]
    $region29: #{forward.1} parent=1 // pred_fallthru
      _
    // Predicated region
    $region30: #{forward.1} parent=1 // pred_check
      _
    $region31: #{forward.1} parent=1 // pred_check_branch
      %260 = sbr.rel (0) target = $region33
    $region32: #{forward.1} parent=1 // pred_region
      %262 = vsyncadd [#allocation11], 0
      %s264 = sshll.u32 %s15, 4
      %s265 = int_to_ptr.hbm [resolvable:$true] %s264
      %s266 = sshll.u32 [#allocation10], 4
      %s267 = int_to_ptr.vmem [resolvable:$true] %s266
      %269 = dma.hbm_to_vmem [thread:$0]  %s265, 16, %s267, [#allocation11]
    $region33: #{forward.1} parent=1 // pred_fallthru
      _
    // Predicated region
    $region34: #{forward.1} parent=1 // pred_check
      _
    $region35: #{forward.1} parent=1 // pred_check_branch
      %271 = sbr.rel (0) target = $region37
    $region36: #{forward.1} parent=1 // pred_region
      %273 = vsyncadd [#allocation11], 0
      %s275 = sshll.u32 %s17, 4
      %s276 = int_to_ptr.hbm [resolvable:$true] %s275
      %s277 = sshll.u32 [#allocation12], 4
      %s278 = int_to_ptr.vmem [resolvable:$true] %s277
      %280 = dma.hbm_to_vmem [thread:$0]  %s276, 16, %s278, [#allocation11]
    $region37: #{forward.1} parent=1 // pred_fallthru
      _
    // Predicated region
    $region38: #{forward.1} parent=1 // pred_check
      _
    $region39: #{forward.1} parent=1 // pred_check_branch
      %282 = sbr.rel (0) target = $region41
    $region40: #{forward.1} parent=1 // pred_region
      %284 = vsyncadd [#allocation14], 0
      %s285 = sshll.u32 %s19, 4
      %s286 = int_to_ptr.hbm [resolvable:$true] %s285
      %s287 = sshll.u32 [#allocation13], 4
      %s288 = int_to_ptr.vmem [resolvable:$true] %s287
      %293 = dma.hbm_to_vmem [thread:$0]  %s286, 1024, %s288, [#allocation14], 128, 128, 8
    $region41: #{forward.1} parent=1 // pred_fallthru
      _
    // Predicated region
    $region42: #{forward.1} parent=1 // pred_check
      _
    $region43: #{forward.1} parent=1 // pred_check_branch
      %295 = sbr.rel (0) target = $region45
    $region44: #{forward.1} parent=1 // pred_region
      %297 = vsyncadd [#allocation14], 0
      %s298 = sshll.u32 %s21, 4
      %s299 = int_to_ptr.hbm [resolvable:$true] %s298
      %s300 = sshll.u32 [#allocation15], 4
      %s301 = int_to_ptr.vmem [resolvable:$true] %s300
      %306 = dma.hbm_to_vmem [thread:$0]  %s299, 256, %s301, [#allocation14], 64, 64, 4
    $region45: #{forward.1} parent=1 // pred_fallthru
      _
    // Predicated region
    $region46: #{forward.1} parent=1 // pred_check
      _
    $region47: #{forward.1} parent=1 // pred_check_branch
      %308 = sbr.rel (0) target = $region49
    $region48: #{forward.1} parent=1 // pred_region
      %310 = vsyncadd [#allocation17], 0
      %s311 = sshll.u32 %s23, 4
      %s312 = int_to_ptr.hbm [resolvable:$true] %s311
      %s313 = sshll.u32 [#allocation16], 4
      %s314 = int_to_ptr.vmem [resolvable:$true] %s313
      %319 = dma.hbm_to_vmem [thread:$0]  %s312, 1024, %s314, [#allocation17], 128, 128, 8
    $region49: #{forward.1} parent=1 // pred_fallthru
      _
    // Predicated region
    $region50: #{forward.1} parent=1 // pred_check
      _
    $region51: #{forward.1} parent=1 // pred_check_branch
      %321 = sbr.rel (0) target = $region53
    $region52: #{forward.1} parent=1 // pred_region
      %323 = vsyncadd [#allocation17], 0
      %s324 = sshll.u32 %s25, 4
      %s325 = int_to_ptr.hbm [resolvable:$true] %s324
      %s326 = sshll.u32 [#allocation18], 4
      %s327 = int_to_ptr.vmem [resolvable:$true] %s326
      %332 = dma.hbm_to_vmem [thread:$0]  %s325, 1024, %s327, [#allocation17], 128, 128, 8
    $region53: #{forward.1} parent=1 // pred_fallthru
      _
    // Predicated region
    $region54: #{forward.1} parent=1 // pred_check
      _
    $region55: #{forward.1} parent=1 // pred_check_branch
      %334 = sbr.rel (0) target = $region57
    $region56: #{forward.1} parent=1 // pred_region
      %336 = vsyncadd [#allocation20], 0
      %s338 = sshll.u32 %s27, 4
      %s339 = int_to_ptr.hbm [resolvable:$true] %s338
      %s340 = sshll.u32 [#allocation19], 4
      %s341 = int_to_ptr.vmem [resolvable:$true] %s340
      %343 = dma.hbm_to_vmem [thread:$0]  %s339, 16, %s341, [#allocation20]
    $region57: #{forward.1} parent=1 // pred_fallthru
      _
    // Predicated region
    $region58: #{forward.1} parent=1 // pred_check
      _
    $region59: #{forward.1} parent=1 // pred_check_branch
      %345 = sbr.rel (0) target = $region61
    $region60: #{forward.1} parent=1 // pred_region
      %347 = vsyncadd [#allocation20], 0
      %s348 = sshll.u32 %s29, 4
      %s349 = int_to_ptr.hbm [resolvable:$true] %s348
      %s350 = sshll.u32 [#allocation21], 4
      %s351 = int_to_ptr.vmem [resolvable:$true] %s350
      %356 = dma.hbm_to_vmem [thread:$0]  %s349, 48, %s351, [#allocation20], 16, 16, 1
    $region61: #{forward.1} parent=1 // pred_fallthru
      _
    // Predicated region
    $region62: #{forward.1} parent=1 // pred_check
      _
    $region63: #{forward.1} parent=1 // pred_check_branch
      %358 = sbr.rel (0) target = $region65
    $region64: #{forward.1} parent=1 // pred_region
      %360 = vsyncadd [#allocation23], 0
      %s362 = sshll.u32 %s31, 4
      %s363 = int_to_ptr.hbm [resolvable:$true] %s362
      %s364 = sshll.u32 [#allocation22], 4
      %s365 = int_to_ptr.vmem [resolvable:$true] %s364
      %367 = dma.hbm_to_vmem [thread:$0]  %s363, 16, %s365, [#allocation23]
    $region65: #{forward.1} parent=1 // pred_fallthru
      _
    // Predicated region
    $region66: #{forward.1} parent=1 // pred_check
      _
    $region67: #{forward.1} parent=1 // pred_check_branch
      %369 = sbr.rel (0) target = $region69
    $region68: #{forward.1} parent=1 // pred_region
      %371 = vsyncadd [#allocation23], 0
      %s373 = sshll.u32 %s33, 4
      %s374 = int_to_ptr.hbm [resolvable:$true] %s373
      %s375 = sshll.u32 [#allocation24], 4
      %s376 = int_to_ptr.vmem [resolvable:$true] %s375
      %378 = dma.hbm_to_vmem [thread:$0]  %s374, 16, %s376, [#allocation23]
    $region69: #{forward.1} parent=1 // pred_fallthru
      _
    // Predicated region
    $region70: #{forward.1} parent=1 // pred_check
      _
    $region71: #{forward.1} parent=1 // pred_check_branch
      %380 = sbr.rel (0) target = $region73
    $region72: #{forward.1} parent=1 // pred_region
      %382 = vsyncadd [#allocation26], 0
      %s384 = sshll.u32 %s35, 4
      %s385 = int_to_ptr.hbm [resolvable:$true] %s384
      %s386 = sshll.u32 [#allocation25], 4
      %s387 = int_to_ptr.vmem [resolvable:$true] %s386
      %389 = dma.hbm_to_vmem [thread:$0]  %s385, 16, %s387, [#allocation26]
    $region73: #{forward.1} parent=1 // pred_fallthru
      _
    // Predicated region
    $region74: #{forward.1} parent=1 // pred_check
      _
    $region75: #{forward.1} parent=1 // pred_check_branch
      %391 = sbr.rel (0) target = $region77
    $region76: #{forward.1} parent=1 // pred_region
      %393 = vsyncadd [#allocation26], 0
      %s395 = sshll.u32 %s37, 4
      %s396 = int_to_ptr.hbm [resolvable:$true] %s395
      %s397 = sshll.u32 [#allocation27], 4
      %s398 = int_to_ptr.vmem [resolvable:$true] %s397
      %400 = dma.hbm_to_vmem [thread:$0]  %s396, 16, %s398, [#allocation26]
    $region77: #{forward.1} parent=1 // pred_fallthru
      _
    // Predicated region
    $region78: #{forward.1} parent=1 // pred_check
      _
    $region79: #{forward.1} parent=1 // pred_check_branch
      %402 = sbr.rel (0) target = $region81
    $region80: #{forward.1} parent=1 // pred_region
      %404 = vsyncadd [#allocation29], 0
      %s405 = sshll.u32 %s39, 4
      %s406 = int_to_ptr.hbm [resolvable:$true] %s405
      %s407 = sshll.u32 [#allocation28], 4
      %s408 = int_to_ptr.vmem [resolvable:$true] %s407
      %413 = dma.hbm_to_vmem [thread:$0]  %s406, 256, %s408, [#allocation29], 128, 128, 8
    $region81: #{forward.1} parent=1 // pred_fallthru
      _
    // Predicated region
    $region82: #{forward.1} parent=1 // pred_check
      _
    $region83: #{forward.1} parent=1 // pred_check_branch
      %415 = sbr.rel (0) target = $region85
    $region84: #{forward.1} parent=1 // pred_region
      %417 = vsyncadd [#allocation29], 0
      %s418 = sshll.u32 %s41, 4
      %s419 = int_to_ptr.hbm [resolvable:$true] %s418
      %s420 = sshll.u32 [#allocation30], 4
      %s421 = int_to_ptr.vmem [resolvable:$true] %s420
      %426 = dma.hbm_to_vmem [thread:$0]  %s419, 256, %s421, [#allocation29], 128, 128, 8
    $region85: #{forward.1} parent=1 // pred_fallthru
      _
    // Predicated region
    $region86: #{forward.1} parent=1 // pred_check
      _
    $region87: #{forward.1} parent=1 // pred_check_branch
      %428 = sbr.rel (0) target = $region89
    $region88: #{forward.1} parent=1 // pred_region
      %430 = vsyncadd [#allocation32], 0
      %s432 = sshll.u32 %s43, 4
      %s433 = int_to_ptr.hbm [resolvable:$true] %s432
      %s434 = sshll.u32 [#allocation31], 4
      %s435 = int_to_ptr.vmem [resolvable:$true] %s434
      %437 = dma.hbm_to_vmem [thread:$0]  %s433, 16, %s435, [#allocation32]
    $region89: #{forward.1} parent=1 // pred_fallthru
      _
    // Predicated region
    $region90: #{forward.1} parent=1 // pred_check
      _
    $region91: #{forward.1} parent=1 // pred_check_branch
      %439 = sbr.rel (0) target = $region93
    $region92: #{forward.1} parent=1 // pred_region
      %441 = vsyncadd [#allocation32], 0
      %s442 = sshll.u32 %s45, 4
      %s443 = int_to_ptr.hbm [resolvable:$true] %s442
      %s444 = sshll.u32 [#allocation33], 4
      %s445 = int_to_ptr.vmem [resolvable:$true] %s444
      %450 = dma.hbm_to_vmem [thread:$0]  %s443, 256, %s445, [#allocation32], 128, 128, 8
    $region93: #{forward.1} parent=1 // pred_fallthru
      _
    // Predicated region
    $region94: #{forward.1} parent=1 // pred_check
      _
    $region95: #{forward.1} parent=1 // pred_check_branch
      %452 = sbr.rel (0) target = $region97
    $region96: #{forward.1} parent=1 // pred_region
      %454 = vsyncadd [#allocation35], 0
      %s456 = sshll.u32 %s47, 4
      %s457 = int_to_ptr.hbm [resolvable:$true] %s456
      %s458 = sshll.u32 [#allocation34], 4
      %s459 = int_to_ptr.vmem [resolvable:$true] %s458
      %461 = dma.hbm_to_vmem [thread:$0]  %s457, 16, %s459, [#allocation35]
    $region97: #{forward.1} parent=1 // pred_fallthru
      _
    // Predicated region
    $region98: #{forward.1} parent=1 // pred_check
      _
    $region99: #{forward.1} parent=1 // pred_check_branch
      %463 = sbr.rel (0) target = $region101
    $region100: #{forward.1} parent=1 // pred_region
      %465 = vsyncadd [#allocation35], 0
      %s467 = sshll.u32 %s49, 4
      %s468 = int_to_ptr.hbm [resolvable:$true] %s467
      %s469 = sshll.u32 [#allocation36], 4
      %s470 = int_to_ptr.vmem [resolvable:$true] %s469
      %472 = dma.hbm_to_vmem [thread:$0]  %s468, 16, %s470, [#allocation35]
    $region101: #{forward.1} parent=1 // pred_fallthru
      _
    // Predicated region
    $region102: #{forward.1} parent=1 // pred_check
      _
    $region103: #{forward.1} parent=1 // pred_check_branch
      %474 = sbr.rel (0) target = $region105
    $region104: #{forward.1} parent=1 // pred_region
      %476 = vsyncadd [#allocation38], 0
      %s478 = sshll.u32 %s51, 4
      %s479 = int_to_ptr.hbm [resolvable:$true] %s478
      %s480 = sshll.u32 [#allocation37], 4
      %s481 = int_to_ptr.vmem [resolvable:$true] %s480
      %483 = dma.hbm_to_vmem [thread:$0]  %s479, 16, %s481, [#allocation38]
    $region105: #{forward.1} parent=1 // pred_fallthru
      _
    // Predicated region
    $region106: #{forward.1} parent=1 // pred_check
      _
    $region107: #{forward.1} parent=1 // pred_check_branch
      %485 = sbr.rel (0) target = $region109
    $region108: #{forward.1} parent=1 // pred_region
      %487 = vsyncadd [#allocation38], 0
      %s489 = sshll.u32 %s53, 4
      %s490 = int_to_ptr.hbm [resolvable:$true] %s489
      %s491 = sshll.u32 [#allocation39], 4
      %s492 = int_to_ptr.vmem [resolvable:$true] %s491
      %494 = dma.hbm_to_vmem [thread:$0]  %s490, 16, %s492, [#allocation38]
    $region109: #{forward.1} parent=1 // pred_fallthru
      _
    // Predicated region
    $region110: #{forward.1} parent=1 // pred_check
      _
    $region111: #{forward.1} parent=1 // pred_check_branch
      %496 = sbr.rel (0) target = $region113
    $region112: #{forward.1} parent=1 // pred_region
      %498 = vsyncadd [#allocation41], 0
      %s499 = sshll.u32 %s55, 4
      %s500 = int_to_ptr.hbm [resolvable:$true] %s499
      %s501 = sshll.u32 [#allocation40], 4
      %s502 = int_to_ptr.vmem [resolvable:$true] %s501
      %507 = dma.hbm_to_vmem [thread:$0]  %s500, 256, %s502, [#allocation41], 128, 128, 8
    $region113: #{forward.1} parent=1 // pred_fallthru
      _
    // Predicated region
    $region114: #{forward.1} parent=1 // pred_check
      _
    $region115: #{forward.1} parent=1 // pred_check_branch
      %509 = sbr.rel (0) target = $region117
    $region116: #{forward.1} parent=1 // pred_region
      %511 = vsyncadd [#allocation41], 0
      %s512 = sshll.u32 %s57, 4
      %s513 = int_to_ptr.hbm [resolvable:$true] %s512
      %s514 = sshll.u32 [#allocation42], 4
      %s515 = int_to_ptr.vmem [resolvable:$true] %s514
      %520 = dma.hbm_to_vmem [thread:$0]  %s513, 512, %s515, [#allocation41], 128, 128, 8
    $region117: #{forward.1} parent=1 // pred_fallthru
      _
    // Predicated region
    $region118: #{forward.1} parent=1 // pred_check
      _
    $region119: #{forward.1} parent=1 // pred_check_branch
      %522 = sbr.rel (0) target = $region121
    $region120: #{forward.1} parent=1 // pred_region
      %524 = vsyncadd [#allocation44], 0
      %s526 = sshll.u32 %s59, 4
      %s527 = int_to_ptr.hbm [resolvable:$true] %s526
      %s528 = sshll.u32 [#allocation43], 4
      %s529 = int_to_ptr.vmem [resolvable:$true] %s528
      %531 = dma.hbm_to_vmem [thread:$0]  %s527, 16, %s529, [#allocation44]
    $region121: #{forward.1} parent=1 // pred_fallthru
      _
    // Predicated region
    $region122: #{forward.1} parent=1 // pred_check
      _
    $region123: #{forward.1} parent=1 // pred_check_branch
      %533 = sbr.rel (0) target = $region125
    $region124: #{forward.1} parent=1 // pred_region
      %535 = vsyncadd [#allocation44], 0
      %s537 = sshll.u32 %s61, 4
      %s538 = int_to_ptr.hbm [resolvable:$true] %s537
      %s539 = sshll.u32 [#allocation45], 4
      %s540 = int_to_ptr.vmem [resolvable:$true] %s539
      %542 = dma.hbm_to_vmem [thread:$0]  %s538, 16, %s540, [#allocation44]
    $region125: #{forward.1} parent=1 // pred_fallthru
      _
    // Predicated region
    $region126: #{forward.1} parent=1 // pred_check
      _
    $region127: #{forward.1} parent=1 // pred_check_branch
      %544 = sbr.rel (0) target = $region129
    $region128: #{forward.1} parent=1 // pred_region
      %546 = vsyncadd [#allocation47], 0
      %s548 = sshll.u32 %s63, 4
      %s549 = int_to_ptr.hbm [resolvable:$true] %s548
      %s550 = sshll.u32 [#allocation46], 4
      %s551 = int_to_ptr.vmem [resolvable:$true] %s550
      %553 = dma.hbm_to_vmem [thread:$0]  %s549, 16, %s551, [#allocation47]
    $region129: #{forward.1} parent=1 // pred_fallthru
      _
    // Predicated region
    $region130: #{forward.1} parent=1 // pred_check
      _
    $region131: #{forward.1} parent=1 // pred_check_branch
      %555 = sbr.rel (0) target = $region133
    $region132: #{forward.1} parent=1 // pred_region
      %557 = vsyncadd [#allocation47], 0
      %s559 = sshll.u32 %s65, 4
      %s560 = int_to_ptr.hbm [resolvable:$true] %s559
      %s561 = sshll.u32 [#allocation48], 4
      %s562 = int_to_ptr.vmem [resolvable:$true] %s561
      %564 = dma.hbm_to_vmem [thread:$0]  %s560, 16, %s562, [#allocation47]
    $region133: #{forward.1} parent=1 // pred_fallthru
      _
    // Predicated region
    $region134: #{forward.1} parent=1 // pred_check
      _
    $region135: #{forward.1} parent=1 // pred_check_branch
      %566 = sbr.rel (0) target = $region137
    $region136: #{forward.1} parent=1 // pred_region
      %568 = vsyncadd [#allocation50], 0
      %s569 = sshll.u32 %s67, 4
      %s570 = int_to_ptr.hbm [resolvable:$true] %s569
      %s571 = sshll.u32 [#allocation49], 4
      %s572 = int_to_ptr.vmem [resolvable:$true] %s571
      %577 = dma.hbm_to_vmem [thread:$0]  %s570, 256, %s572, [#allocation50], 128, 128, 8
    $region137: #{forward.1} parent=1 // pred_fallthru
      _
    // Predicated region
    $region138: #{forward.1} parent=1 // pred_check
      _
    $region139: #{forward.1} parent=1 // pred_check_branch
      %579 = sbr.rel (0) target = $region141
    $region140: #{forward.1} parent=1 // pred_region
      %581 = vsyncadd [#allocation50], 0
      %s582 = sshll.u32 %s69, 4
      %s583 = int_to_ptr.hbm [resolvable:$true] %s582
      %s584 = sshll.u32 [#allocation51], 4
      %s585 = int_to_ptr.vmem [resolvable:$true] %s584
      %590 = dma.hbm_to_vmem [thread:$0]  %s583, 512, %s585, [#allocation50], 128, 128, 8
    $region141: #{forward.1} parent=1 // pred_fallthru
      _
    // Predicated region
    $region142: #{forward.1} parent=1 // pred_check
      _
    $region143: #{forward.1} parent=1 // pred_check_branch
      %592 = sbr.rel (0) target = $region145
    $region144: #{forward.1} parent=1 // pred_region
      %594 = vsyncadd [#allocation53], 0
      %s596 = sshll.u32 %s71, 4
      %s597 = int_to_ptr.hbm [resolvable:$true] %s596
      %s598 = sshll.u32 [#allocation52], 4
      %s599 = int_to_ptr.vmem [resolvable:$true] %s598
      %601 = dma.hbm_to_vmem [thread:$0]  %s597, 16, %s599, [#allocation53]
    $region145: #{forward.1} parent=1 // pred_fallthru
      _
    // Predicated region
    $region146: #{forward.1} parent=1 // pred_check
      _
    $region147: #{forward.1} parent=1 // pred_check_branch
      %603 = sbr.rel (0) target = $region149
    $region148: #{forward.1} parent=1 // pred_region
      %605 = vsyncadd [#allocation53], 0
      %s607 = sshll.u32 %s73, 4
      %s608 = int_to_ptr.hbm [resolvable:$true] %s607
      %s609 = sshll.u32 [#allocation54], 4
      %s610 = int_to_ptr.vmem [resolvable:$true] %s609
      %612 = dma.hbm_to_vmem [thread:$0]  %s608, 16, %s610, [#allocation53]
    $region149: #{forward.1} parent=1 // pred_fallthru
      _
    // Predicated region
    $region150: #{forward.1} parent=1 // pred_check
      _
    $region151: #{forward.1} parent=1 // pred_check_branch
      %614 = sbr.rel (0) target = $region153
    $region152: #{forward.1} parent=1 // pred_region
      _
    $region153: #{forward.1} parent=1 // pred_fallthru
      _
    // Predicated region
    $region154: #{forward.1} parent=1 // pred_check
      _
    $region155: #{forward.1} parent=1 // pred_check_branch
      %616 = sbr.rel (0) target = $region157
    $region156: #{forward.1} parent=1 // pred_region
      _
    $region157: #{forward.1} parent=1 // pred_fallthru
      _
    // Predicated region
    $region158: #{forward.1} parent=1 // pred_check
      _
    $region159: #{forward.1} parent=1 // pred_check_branch
      %618 = sbr.rel (0) target = $region161
    $region160: #{forward.1} parent=1 // pred_region
      _
    $region161: #{forward.1} parent=1 // pred_fallthru
      _
    // Predicated region
    $region162: #{forward.1} parent=1 // pred_check
      _
    $region163: #{forward.1} parent=1 // pred_check_branch
      %620 = sbr.rel (0) target = $region165
    $region164: #{forward.1} parent=1 // pred_region
      %622 = vsyncadd [#allocation56], 0
      %s624 = sshll.u32 %s81, 4
      %s625 = int_to_ptr.hbm [resolvable:$true] %s624
      %s626 = sshll.u32 [#allocation55], 4
      %s627 = int_to_ptr.vmem [resolvable:$true] %s626
      %629 = dma.hbm_to_vmem [thread:$0]  %s625, 16, %s627, [#allocation56]
    $region165: #{forward.1} parent=1 // pred_fallthru
      _
    // Predicated region
    $region166: #{forward.1} parent=1 // pred_check
      _
    $region167: #{forward.1} parent=1 // pred_check_branch
      %631 = sbr.rel (0) target = $region169
    $region168: #{forward.1} parent=1 // pred_region
      %633 = vsyncadd [#allocation56], 0
      %s635 = sshll.u32 %s83, 4
      %s636 = int_to_ptr.hbm [resolvable:$true] %s635
      %s637 = sshll.u32 [#allocation57], 4
      %s638 = int_to_ptr.vmem [resolvable:$true] %s637
      %640 = dma.hbm_to_vmem [thread:$0]  %s636, 16, %s638, [#allocation56]
    $region169: #{forward.1} parent=1 // pred_fallthru
      _
    // Predicated region
    $region170: #{forward.1} parent=1 // pred_check
      _
    $region171: #{forward.1} parent=1 // pred_check_branch
      %642 = sbr.rel (0) target = $region173
    $region172: #{forward.1} parent=1 // pred_region
      %644 = vsyncadd [#allocation59], 0
      %s646 = sshll.u32 %s85, 4
      %s647 = int_to_ptr.hbm [resolvable:$true] %s646
      %s648 = sshll.u32 [#allocation58], 4
      %s649 = int_to_ptr.vmem [resolvable:$true] %s648
      %651 = dma.hbm_to_vmem [thread:$0]  %s647, 16, %s649, [#allocation59]
    $region173: #{forward.1} parent=1 // pred_fallthru
      _
    // Predicated region
    $region174: #{forward.1} parent=1 // pred_check
      _
    $region175: #{forward.1} parent=1 // pred_check_branch
      %653 = sbr.rel (0) target = $region177
    $region176: #{forward.1} parent=1 // pred_region
      %655 = vsyncadd [#allocation59], 0
      %s656 = sshll.u32 %s87, 4
      %s657 = int_to_ptr.hbm [resolvable:$true] %s656
      %s658 = sshll.u32 [#allocation60], 4
      %s659 = int_to_ptr.vmem [resolvable:$true] %s658
      %664 = dma.hbm_to_vmem [thread:$0]  %s657, 1024, %s659, [#allocation59], 128, 128, 8
    $region177: #{forward.1} parent=1 // pred_fallthru
      _
    // Predicated region
    $region178: #{forward.1} parent=1 // pred_check
      _
    $region179: #{forward.1} parent=1 // pred_check_branch
      %666 = sbr.rel (0) target = $region181
    $region180: #{forward.1} parent=1 // pred_region
      %668 = vsyncadd [#allocation62], 0
      %s669 = sshll.u32 %s89, 4
      %s670 = int_to_ptr.hbm [resolvable:$true] %s669
      %s671 = sshll.u32 [#allocation61], 4
      %s672 = int_to_ptr.vmem [resolvable:$true] %s671
      %677 = dma.hbm_to_vmem [thread:$0]  %s670, 256, %s672, [#allocation62], 64, 64, 4
    $region181: #{forward.1} parent=1 // pred_fallthru
      _
    // Predicated region
    $region182: #{forward.1} parent=1 // pred_check
      _
    $region183: #{forward.1} parent=1 // pred_check_branch
      %679 = sbr.rel (0) target = $region185
    $region184: #{forward.1} parent=1 // pred_region
      %681 = vsyncadd [#allocation62], 0
      %s682 = sshll.u32 %s91, 4
      %s683 = int_to_ptr.hbm [resolvable:$true] %s682
      %s684 = sshll.u32 [#allocation63], 4
      %s685 = int_to_ptr.vmem [resolvable:$true] %s684
      %690 = dma.hbm_to_vmem [thread:$0]  %s683, 1024, %s685, [#allocation62], 128, 128, 8
    $region185: #{forward.1} parent=1 // pred_fallthru
      _
    // Predicated region
    $region186: #{forward.1} parent=1 // pred_check
      _
    $region187: #{forward.1} parent=1 // pred_check_branch
      %692 = sbr.rel (0) target = $region189
    $region188: #{forward.1} parent=1 // pred_region
      _
    $region189: #{forward.1} parent=1 // pred_fallthru
      _
    // Predicated region
    $region190: #{forward.1} parent=1 // pred_check
      _
    $region191: #{forward.1} parent=1 // pred_check_branch
      %694 = sbr.rel (0) target = $region193
    $region192: #{forward.1} parent=1 // pred_region
      %696 = vsyncadd [#allocation65], 0
      %s698 = sshll.u32 %s95, 4
      %s699 = int_to_ptr.hbm [resolvable:$true] %s698
      %s700 = sshll.u32 [#allocation64], 4
      %s701 = int_to_ptr.vmem [resolvable:$true] %s700
      %703 = dma.hbm_to_vmem [thread:$0]  %s699, 16, %s701, [#allocation65]
    $region193: #{forward.1} parent=1 // pred_fallthru
      _
    // Predicated region
    $region194: #{forward.1} parent=1 // pred_check
      _
    $region195: #{forward.1} parent=1 // pred_check_branch
      %705 = sbr.rel (0) target = $region197
    $region196: #{forward.1} parent=1 // pred_region
      _
    $region197: #{forward.1} parent=1 // pred_fallthru
      _
    // Predicated region
    $region198: #{forward.1} parent=1 // pred_check
      _
    $region199: #{forward.1} parent=1 // pred_check_branch
      %707 = sbr.rel (0) target = $region201
    $region200: #{forward.1} parent=1 // pred_region
      %709 = vsyncadd [#allocation65], 0
      %s711 = sshll.u32 %s99, 4
      %s712 = int_to_ptr.hbm [resolvable:$true] %s711
      %s713 = sshll.u32 [#allocation66], 4
      %s714 = int_to_ptr.vmem [resolvable:$true] %s713
      %716 = dma.hbm_to_vmem [thread:$0]  %s712, 16, %s714, [#allocation65]
    $region201: #{forward.1} parent=1 // pred_fallthru
      _
    // Predicated region
    $region202: #{forward.1} parent=1 // pred_check
      _
    $region203: #{forward.1} parent=1 // pred_check_branch
      %718 = sbr.rel (0) target = $region205
    $region204: #{forward.1} parent=1 // pred_region
      %720 = vsyncadd [#allocation68], 0
      %s722 = sshll.u32 %s101, 4
      %s723 = int_to_ptr.hbm [resolvable:$true] %s722
      %s724 = sshll.u32 [#allocation67], 4
      %s725 = int_to_ptr.vmem [resolvable:$true] %s724
      %727 = dma.hbm_to_vmem [thread:$0]  %s723, 16, %s725, [#allocation68]
    $region205: #{forward.1} parent=1 // pred_fallthru
      _
    // Predicated region
    $region206: #{forward.1} parent=1 // pred_check
      _
    $region207: #{forward.1} parent=1 // pred_check_branch
      %729 = sbr.rel (0) target = $region209
    $region208: #{forward.1} parent=1 // pred_region
      %731 = vsyncadd [#allocation68], 0
      %s733 = sshll.u32 %s103, 4
      %s734 = int_to_ptr.hbm [resolvable:$true] %s733
      %s735 = sshll.u32 [#allocation69], 4
      %s736 = int_to_ptr.vmem [resolvable:$true] %s735
      %738 = dma.hbm_to_vmem [thread:$0]  %s734, 16, %s736, [#allocation68]
    $region209: #{forward.1} parent=1 // pred_fallthru
      _
    // Predicated region
    $region210: #{forward.1} parent=1 // pred_check
      _
    $region211: #{forward.1} parent=1 // pred_check_branch
      %740 = sbr.rel (0) target = $region213
    $region212: #{forward.1} parent=1 // pred_region
      %742 = vsyncadd [#allocation71], 0
      %s744 = sshll.u32 %s105, 4
      %s745 = int_to_ptr.hbm [resolvable:$true] %s744
      %s746 = sshll.u32 [#allocation70], 4
      %s747 = int_to_ptr.vmem [resolvable:$true] %s746
      %749 = dma.hbm_to_vmem [thread:$0]  %s745, 16, %s747, [#allocation71]
    $region213: #{forward.1} parent=1 // pred_fallthru
      _
    // Predicated region
    $region214: #{forward.1} parent=1 // pred_check
      _
    $region215: #{forward.1} parent=1 // pred_check_branch
      %751 = sbr.rel (0) target = $region217
    $region216: #{forward.1} parent=1 // pred_region
      %753 = vsyncadd [#allocation71], 0
      %s754 = sshll.u32 %s107, 4
      %s755 = int_to_ptr.hbm [resolvable:$true] %s754
      %s756 = sshll.u32 [#allocation72], 4
      %s757 = int_to_ptr.vmem [resolvable:$true] %s756
      %762 = dma.hbm_to_vmem [thread:$0]  %s755, 256, %s757, [#allocation71], 128, 128, 8
    $region217: #{forward.1} parent=1 // pred_fallthru
      _
    // Predicated region
    $region218: #{forward.1} parent=1 // pred_check
      _
    $region219: #{forward.1} parent=1 // pred_check_branch
      %764 = sbr.rel (0) target = $region221
    $region220: #{forward.1} parent=1 // pred_region
      %766 = vsyncadd [#allocation74], 0
      %s767 = sshll.u32 %s109, 4
      %s768 = int_to_ptr.hbm [resolvable:$true] %s767
      %s769 = sshll.u32 [#allocation73], 4
      %s770 = int_to_ptr.vmem [resolvable:$true] %s769
      %775 = dma.hbm_to_vmem [thread:$0]  %s768, 256, %s770, [#allocation74], 128, 128, 8
    $region221: #{forward.1} parent=1 // pred_fallthru
      _
    // Predicated region
    $region222: #{forward.1} parent=1 // pred_check
      _
    $region223: #{forward.1} parent=1 // pred_check_branch
      %777 = sbr.rel (0) target = $region225
    $region224: #{forward.1} parent=1 // pred_region
      %779 = vsyncadd [#allocation74], 0
      %s781 = sshll.u32 %s111, 4
      %s782 = int_to_ptr.hbm [resolvable:$true] %s781
      %s783 = sshll.u32 [#allocation75], 4
      %s784 = int_to_ptr.vmem [resolvable:$true] %s783
      %786 = dma.hbm_to_vmem [thread:$0]  %s782, 16, %s784, [#allocation74]
    $region225: #{forward.1} parent=1 // pred_fallthru
      _
    // Predicated region
    $region226: #{forward.1} parent=1 // pred_check
      _
    $region227: #{forward.1} parent=1 // pred_check_branch
      %788 = sbr.rel (0) target = $region229
    $region228: #{forward.1} parent=1 // pred_region
      %790 = vsyncadd [#allocation77], 0
      %s791 = sshll.u32 %s113, 4
      %s792 = int_to_ptr.hbm [resolvable:$true] %s791
      %s793 = sshll.u32 [#allocation76], 4
      %s794 = int_to_ptr.vmem [resolvable:$true] %s793
      %799 = dma.hbm_to_vmem [thread:$0]  %s792, 256, %s794, [#allocation77], 128, 128, 8
    $region229: #{forward.1} parent=1 // pred_fallthru
      _
    // Predicated region
    $region230: #{forward.1} parent=1 // pred_check
      _
    $region231: #{forward.1} parent=1 // pred_check_branch
      %801 = sbr.rel (0) target = $region233
    $region232: #{forward.1} parent=1 // pred_region
      %803 = vsyncadd [#allocation77], 0
      %s805 = sshll.u32 %s115, 4
      %s806 = int_to_ptr.hbm [resolvable:$true] %s805
      %s807 = sshll.u32 [#allocation78], 4
      %s808 = int_to_ptr.vmem [resolvable:$true] %s807
      %810 = dma.hbm_to_vmem [thread:$0]  %s806, 16, %s808, [#allocation77]
    $region233: #{forward.1} parent=1 // pred_fallthru
      _
    // Predicated region
    $region234: #{forward.1} parent=1 // pred_check
      _
    $region235: #{forward.1} parent=1 // pred_check_branch
      %812 = sbr.rel (0) target = $region237
    $region236: #{forward.1} parent=1 // pred_region
      %814 = vsyncadd [#allocation80], 0
      %s816 = sshll.u32 %s117, 4
      %s817 = int_to_ptr.hbm [resolvable:$true] %s816
      %s818 = sshll.u32 [#allocation79], 4
      %s819 = int_to_ptr.vmem [resolvable:$true] %s818
      %821 = dma.hbm_to_vmem [thread:$0]  %s817, 16, %s819, [#allocation80]
    $region237: #{forward.1} parent=1 // pred_fallthru
      _
    // Predicated region
    $region238: #{forward.1} parent=1 // pred_check
      _
    $region239: #{forward.1} parent=1 // pred_check_branch
      %823 = sbr.rel (0) target = $region241
    $region240: #{forward.1} parent=1 // pred_region
      %825 = vsyncadd [#allocation80], 0
      %s827 = sshll.u32 %s119, 4
      %s828 = int_to_ptr.hbm [resolvable:$true] %s827
      %s829 = sshll.u32 [#allocation81], 4
      %s830 = int_to_ptr.vmem [resolvable:$true] %s829
      %832 = dma.hbm_to_vmem [thread:$0]  %s828, 16, %s830, [#allocation80]
    $region241: #{forward.1} parent=1 // pred_fallthru
      _
    // Predicated region
    $region242: #{forward.1} parent=1 // pred_check
      _
    $region243: #{forward.1} parent=1 // pred_check_branch
      %834 = sbr.rel (0) target = $region245
    $region244: #{forward.1} parent=1 // pred_region
      %836 = vsyncadd [#allocation83], 0
      %s838 = sshll.u32 %s121, 4
      %s839 = int_to_ptr.hbm [resolvable:$true] %s838
      %s840 = sshll.u32 [#allocation82], 4
      %s841 = int_to_ptr.vmem [resolvable:$true] %s840
      %843 = dma.hbm_to_vmem [thread:$0]  %s839, 16, %s841, [#allocation83]
    $region245: #{forward.1} parent=1 // pred_fallthru
      _
    // Predicated region
    $region246: #{forward.1} parent=1 // pred_check
      _
    $region247: #{forward.1} parent=1 // pred_check_branch
      %845 = sbr.rel (0) target = $region249
    $region248: #{forward.1} parent=1 // pred_region
      %847 = vsyncadd [#allocation83], 0
      %s848 = sshll.u32 %s123, 4
      %s849 = int_to_ptr.hbm [resolvable:$true] %s848
      %s850 = sshll.u32 [#allocation84], 4
      %s851 = int_to_ptr.vmem [resolvable:$true] %s850
      %856 = dma.hbm_to_vmem [thread:$0]  %s849, 256, %s851, [#allocation83], 128, 128, 8
    $region249: #{forward.1} parent=1 // pred_fallthru
      _
    // Predicated region
    $region250: #{forward.1} parent=1 // pred_check
      _
    $region251: #{forward.1} parent=1 // pred_check_branch
      %858 = sbr.rel (0) target = $region253
    $region252: #{forward.1} parent=1 // pred_region
      %860 = vsyncadd [#allocation86], 0
      %s861 = sshll.u32 %s125, 4
      %s862 = int_to_ptr.hbm [resolvable:$true] %s861
      %s863 = sshll.u32 [#allocation85], 4
      %s864 = int_to_ptr.vmem [resolvable:$true] %s863
      %869 = dma.hbm_to_vmem [thread:$0]  %s862, 512, %s864, [#allocation86], 128, 128, 8
    $region253: #{forward.1} parent=1 // pred_fallthru
      _
    // Predicated region
    $region254: #{forward.1} parent=1 // pred_check
      _
    $region255: #{forward.1} parent=1 // pred_check_branch
      %871 = sbr.rel (0) target = $region257
    $region256: #{forward.1} parent=1 // pred_region
      %873 = vsyncadd [#allocation86], 0
      %s875 = sshll.u32 %s127, 4
      %s876 = int_to_ptr.hbm [resolvable:$true] %s875
      %s877 = sshll.u32 [#allocation87], 4
      %s878 = int_to_ptr.vmem [resolvable:$true] %s877
      %880 = dma.hbm_to_vmem [thread:$0]  %s876, 16, %s878, [#allocation86]
    $region257: #{forward.1} parent=1 // pred_fallthru
      _
    // Predicated region
    $region258: #{forward.1} parent=1 // pred_check
      _
    $region259: #{forward.1} parent=1 // pred_check_branch
      %882 = sbr.rel (0) target = $region261
    $region260: #{forward.1} parent=1 // pred_region
      %884 = vsyncadd [#allocation89], 0
      %s886 = sshll.u32 %s129, 4
      %s887 = int_to_ptr.hbm [resolvable:$true] %s886
      %s888 = sshll.u32 [#allocation88], 4
      %s889 = int_to_ptr.vmem [resolvable:$true] %s888
      %891 = dma.hbm_to_vmem [thread:$0]  %s887, 16, %s889, [#allocation89]
    $region261: #{forward.1} parent=1 // pred_fallthru
      _
    // Predicated region
    $region262: #{forward.1} parent=1 // pred_check
      _
    $region263: #{forward.1} parent=1 // pred_check_branch
      %893 = sbr.rel (0) target = $region265
    $region264: #{forward.1} parent=1 // pred_region
      %895 = vsyncadd [#allocation89], 0
      %s897 = sshll.u32 %s131, 4
      %s898 = int_to_ptr.hbm [resolvable:$true] %s897
      %s899 = sshll.u32 [#allocation90], 4
      %s900 = int_to_ptr.vmem [resolvable:$true] %s899
      %902 = dma.hbm_to_vmem [thread:$0]  %s898, 16, %s900, [#allocation89]
    $region265: #{forward.1} parent=1 // pred_fallthru
      _
    // Predicated region
    $region266: #{forward.1} parent=1 // pred_check
      _
    $region267: #{forward.1} parent=1 // pred_check_branch
      %904 = sbr.rel (0) target = $region269
    $region268: #{forward.1} parent=1 // pred_region
      _
    $region269: #{forward.1} parent=1 // pred_fallthru
      _
    // Predicated region
    $region270: #{forward.1} parent=1 // pred_check
      _
    $region271: #{forward.1} parent=1 // pred_check_branch
      %906 = sbr.rel (0) target = $region273
    $region272: #{forward.1} parent=1 // pred_region
      %908 = vsyncadd [#allocation92], 0
      %s909 = sshll.u32 %s135, 4
      %s910 = int_to_ptr.hbm [resolvable:$true] %s909
      %s911 = sshll.u32 [#allocation91], 4
      %s912 = int_to_ptr.vmem [resolvable:$true] %s911
      %917 = dma.hbm_to_vmem [thread:$0]  %s910, 256, %s912, [#allocation92], 128, 128, 8
    $region273: #{forward.1} parent=1 // pred_fallthru
      _
    // Predicated region
    $region274: #{forward.1} parent=1 // pred_check
      _
    $region275: #{forward.1} parent=1 // pred_check_branch
      %919 = sbr.rel (0) target = $region277
    $region276: #{forward.1} parent=1 // pred_region
      _
    $region277: #{forward.1} parent=1 // pred_fallthru
      _
    // Predicated region
    $region278: #{forward.1} parent=1 // pred_check
      _
    $region279: #{forward.1} parent=1 // pred_check_branch
      %921 = sbr.rel (0) target = $region281
    $region280: #{forward.1} parent=1 // pred_region
      _
    $region281: #{forward.1} parent=1 // pred_fallthru
      _
    // Predicated region
    $region282: #{forward.1} parent=1 // pred_check
      _
    $region283: #{forward.1} parent=1 // pred_check_branch
      %923 = sbr.rel (0) target = $region285
    $region284: #{forward.1} parent=1 // pred_region
      _
    $region285: #{forward.1} parent=1 // pred_fallthru
      _
    // Predicated region
    $region286: #{forward.1} parent=1 // pred_check
      _
    $region287: #{forward.1} parent=1 // pred_check_branch
      %925 = sbr.rel (0) target = $region289
    $region288: #{forward.1} parent=1 // pred_region
      _
    $region289: #{forward.1} parent=1 // pred_fallthru
      _
    // Predicated region
    $region290: #{forward.1} parent=1 // pred_check
      _
    $region291: #{forward.1} parent=1 // pred_check_branch
      %927 = sbr.rel (0) target = $region293
    $region292: #{forward.1} parent=1 // pred_region
      %929 = vsyncadd [#allocation92], 0
      %s930 = sshll.u32 %s145, 4
      %s931 = int_to_ptr.hbm [resolvable:$true] %s930
      %s932 = sshll.u32 [#allocation93], 4
      %s933 = int_to_ptr.vmem [resolvable:$true] %s932
      %938 = dma.hbm_to_vmem [thread:$0]  %s931, 256, %s933, [#allocation92], 128, 128, 8
    $region293: #{forward.1} parent=1 // pred_fallthru
      _
    // Predicated region
    $region294: #{forward.1} parent=1 // pred_check
      _
    $region295: #{forward.1} parent=1 // pred_check_branch
      %940 = sbr.rel (0) target = $region297
    $region296: #{forward.1} parent=1 // pred_region
      _
    $region297: #{forward.1} parent=1 // pred_fallthru
      _
    // Predicated region
    $region298: #{forward.1} parent=1 // pred_check
      _
    $region299: #{forward.1} parent=1 // pred_check_branch
      %942 = sbr.rel (0) target = $region301
    $region300: #{forward.1} parent=1 // pred_region
      %944 = vsyncadd [#allocation95], 0
      %s945 = sshll.u32 %s149, 4
      %s946 = int_to_ptr.hbm [resolvable:$true] %s945
      %s947 = sshll.u32 [#allocation94], 4
      %s948 = int_to_ptr.vmem [resolvable:$true] %s947
      %953 = dma.hbm_to_vmem [thread:$0]  %s946, 256, %s948, [#allocation95], 128, 128, 8
    $region301: #{forward.1} parent=1 // pred_fallthru
      _
    // Predicated region
    $region302: #{forward.1} parent=1 // pred_check
      _
    $region303: #{forward.1} parent=1 // pred_check_branch
      %955 = sbr.rel (0) target = $region305
    $region304: #{forward.1} parent=1 // pred_region
      _
    $region305: #{forward.1} parent=1 // pred_fallthru
      _
    // Predicated region
    $region306: #{forward.1} parent=1 // pred_check
      _
    $region307: #{forward.1} parent=1 // pred_check_branch
      %957 = sbr.rel (0) target = $region309
    $region308: #{forward.1} parent=1 // pred_region
      _
    $region309: #{forward.1} parent=1 // pred_fallthru
      _
    // Predicated region
    $region310: #{forward.1} parent=1 // pred_check
      _
    $region311: #{forward.1} parent=1 // pred_check_branch
      %959 = sbr.rel (0) target = $region313
    $region312: #{forward.1} parent=1 // pred_region
      %961 = dma.done [#allocation3], 1536
    $region313: #{forward.1} parent=1 // pred_fallthru
      _
    // Predicated region
    $region314: #{forward.1} parent=1 // pred_check
      _
    $region315: #{forward.1} parent=1 // pred_check_branch
      %963 = sbr.rel (0) target = $region317
    $region316: #{forward.1} parent=1 // pred_region
      %965 = dma.done [#allocation5], 64
    $region317: #{forward.1} parent=1 // pred_fallthru
      _
    // Predicated region
    $region318: #{forward.1} parent=1 // pred_check
      _
    $region319: #{forward.1} parent=1 // pred_check_branch
      %967 = sbr.rel (0) target = $region321
    $region320: #{forward.1} parent=1 // pred_region
      %969 = dma.done [#allocation5], 64
    $region321: #{forward.1} parent=1 // pred_fallthru
      _
    // Predicated region
    $region322: #{forward.1} parent=1 // pred_check
      _
    $region323: #{forward.1} parent=1 // pred_check_branch
      %971 = sbr.rel (0) target = $region325
    $region324: #{forward.1} parent=1 // pred_region
      %973 = dma.done [#allocation8], 64
    $region325: #{forward.1} parent=1 // pred_fallthru
      _
    // Predicated region
    $region326: #{forward.1} parent=1 // pred_check
      _
    $region327: #{forward.1} parent=1 // pred_check_branch
      %975 = sbr.rel (0) target = $region329
    $region328: #{forward.1} parent=1 // pred_region
      %977 = dma.done [#allocation8], 16
    $region329: #{forward.1} parent=1 // pred_fallthru
      _
    // Predicated region
    $region330: #{forward.1} parent=1 // pred_check
      _
    $region331: #{forward.1} parent=1 // pred_check_branch
      %979 = sbr.rel (0) target = $region333
    $region332: #{forward.1} parent=1 // pred_region
      %981 = dma.done [#allocation11], 16
    $region333: #{forward.1} parent=1 // pred_fallthru
      _
    // Predicated region
    $region334: #{forward.1} parent=1 // pred_check
      _
    $region335: #{forward.1} parent=1 // pred_check_branch
      %983 = sbr.rel (0) target = $region337
    $region336: #{forward.1} parent=1 // pred_region
      %985 = dma.done [#allocation11], 16
    $region337: #{forward.1} parent=1 // pred_fallthru
      _
    // Predicated region
    $region338: #{forward.1} parent=1 // pred_check
      _
    $region339: #{forward.1} parent=1 // pred_check_branch
      %987 = sbr.rel (0) target = $region341
    $region340: #{forward.1} parent=1 // pred_region
      %989 = dma.done [#allocation14], 1024
    $region341: #{forward.1} parent=1 // pred_fallthru
      _
    // Predicated region
    $region342: #{forward.1} parent=1 // pred_check
      _
    $region343: #{forward.1} parent=1 // pred_check_branch
      %991 = sbr.rel (0) target = $region345
    $region344: #{forward.1} parent=1 // pred_region
      %993 = dma.done [#allocation14], 256
    $region345: #{forward.1} parent=1 // pred_fallthru
      _
    // Predicated region
    $region346: #{forward.1} parent=1 // pred_check
      _
    $region347: #{forward.1} parent=1 // pred_check_branch
      %995 = sbr.rel (0) target = $region349
    $region348: #{forward.1} parent=1 // pred_region
      %997 = dma.done [#allocation17], 1024
    $region349: #{forward.1} parent=1 // pred_fallthru
      _
    // Predicated region
    $region350: #{forward.1} parent=1 // pred_check
      _
    $region351: #{forward.1} parent=1 // pred_check_branch
      %999 = sbr.rel (0) target = $region353
    $region352: #{forward.1} parent=1 // pred_region
      %1001 = dma.done [#allocation17], 1024
    $region353: #{forward.1} parent=1 // pred_fallthru
      _
    // Predicated region
    $region354: #{forward.1} parent=1 // pred_check
      _
    $region355: #{forward.1} parent=1 // pred_check_branch
      %1003 = sbr.rel (0) target = $region357
    $region356: #{forward.1} parent=1 // pred_region
      %1005 = dma.done [#allocation20], 16
    $region357: #{forward.1} parent=1 // pred_fallthru
      _
    // Predicated region
    $region358: #{forward.1} parent=1 // pred_check
      _
    $region359: #{forward.1} parent=1 // pred_check_branch
      %1007 = sbr.rel (0) target = $region361
    $region360: #{forward.1} parent=1 // pred_region
      %1009 = dma.done [#allocation20], 48
    $region361: #{forward.1} parent=1 // pred_fallthru
      _
    // Predicated region
    $region362: #{forward.1} parent=1 // pred_check
      _
    $region363: #{forward.1} parent=1 // pred_check_branch
      %1011 = sbr.rel (0) target = $region365
    $region364: #{forward.1} parent=1 // pred_region
      %1013 = dma.done [#allocation23], 16
    $region365: #{forward.1} parent=1 // pred_fallthru
      _
    // Predicated region
    $region366: #{forward.1} parent=1 // pred_check
      _
    $region367: #{forward.1} parent=1 // pred_check_branch
      %1015 = sbr.rel (0) target = $region369
    $region368: #{forward.1} parent=1 // pred_region
      %1017 = dma.done [#allocation23], 16
    $region369: #{forward.1} parent=1 // pred_fallthru
      _
    // Predicated region
    $region370: #{forward.1} parent=1 // pred_check
      _
    $region371: #{forward.1} parent=1 // pred_check_branch
      %1019 = sbr.rel (0) target = $region373
    $region372: #{forward.1} parent=1 // pred_region
      %1021 = dma.done [#allocation26], 16
    $region373: #{forward.1} parent=1 // pred_fallthru
      _
    // Predicated region
    $region374: #{forward.1} parent=1 // pred_check
      _
    $region375: #{forward.1} parent=1 // pred_check_branch
      %1023 = sbr.rel (0) target = $region377
    $region376: #{forward.1} parent=1 // pred_region
      %1025 = dma.done [#allocation26], 16
    $region377: #{forward.1} parent=1 // pred_fallthru
      _
    // Predicated region
    $region378: #{forward.1} parent=1 // pred_check
      _
    $region379: #{forward.1} parent=1 // pred_check_branch
      %1027 = sbr.rel (0) target = $region381
    $region380: #{forward.1} parent=1 // pred_region
      %1029 = dma.done [#allocation29], 256
    $region381: #{forward.1} parent=1 // pred_fallthru
      _
    // Predicated region
    $region382: #{forward.1} parent=1 // pred_check
      _
    $region383: #{forward.1} parent=1 // pred_check_branch
      %1031 = sbr.rel (0) target = $region385
    $region384: #{forward.1} parent=1 // pred_region
      %1033 = dma.done [#allocation29], 256
    $region385: #{forward.1} parent=1 // pred_fallthru
      _
    // Predicated region
    $region386: #{forward.1} parent=1 // pred_check
      _
    $region387: #{forward.1} parent=1 // pred_check_branch
      %1035 = sbr.rel (0) target = $region389
    $region388: #{forward.1} parent=1 // pred_region
      %1037 = dma.done [#allocation32], 16
    $region389: #{forward.1} parent=1 // pred_fallthru
      _
    // Predicated region
    $region390: #{forward.1} parent=1 // pred_check
      _
    $region391: #{forward.1} parent=1 // pred_check_branch
      %1039 = sbr.rel (0) target = $region393
    $region392: #{forward.1} parent=1 // pred_region
      %1041 = dma.done [#allocation32], 256
    $region393: #{forward.1} parent=1 // pred_fallthru
      _
    // Predicated region
    $region394: #{forward.1} parent=1 // pred_check
      _
    $region395: #{forward.1} parent=1 // pred_check_branch
      %1043 = sbr.rel (0) target = $region397
    $region396: #{forward.1} parent=1 // pred_region
      %1045 = dma.done [#allocation35], 16
    $region397: #{forward.1} parent=1 // pred_fallthru
      _
    // Predicated region
    $region398: #{forward.1} parent=1 // pred_check
      _
    $region399: #{forward.1} parent=1 // pred_check_branch
      %1047 = sbr.rel (0) target = $region401
    $region400: #{forward.1} parent=1 // pred_region
      %1049 = dma.done [#allocation35], 16
    $region401: #{forward.1} parent=1 // pred_fallthru
      _
    // Predicated region
    $region402: #{forward.1} parent=1 // pred_check
      _
    $region403: #{forward.1} parent=1 // pred_check_branch
      %1051 = sbr.rel (0) target = $region405
    $region404: #{forward.1} parent=1 // pred_region
      %1053 = dma.done [#allocation38], 16
    $region405: #{forward.1} parent=1 // pred_fallthru
      _
    // Predicated region
    $region406: #{forward.1} parent=1 // pred_check
      _
    $region407: #{forward.1} parent=1 // pred_check_branch
      %1055 = sbr.rel (0) target = $region409
    $region408: #{forward.1} parent=1 // pred_region
      %1057 = dma.done [#allocation38], 16
    $region409: #{forward.1} parent=1 // pred_fallthru
      _
    // Predicated region
    $region410: #{forward.1} parent=1 // pred_check
      _
    $region411: #{forward.1} parent=1 // pred_check_branch
      %1059 = sbr.rel (0) target = $region413
    $region412: #{forward.1} parent=1 // pred_region
      %1061 = dma.done [#allocation41], 256
    $region413: #{forward.1} parent=1 // pred_fallthru
      _
    // Predicated region
    $region414: #{forward.1} parent=1 // pred_check
      _
    $region415: #{forward.1} parent=1 // pred_check_branch
      %1063 = sbr.rel (0) target = $region417
    $region416: #{forward.1} parent=1 // pred_region
      %1065 = dma.done [#allocation41], 512
    $region417: #{forward.1} parent=1 // pred_fallthru
      _
    // Predicated region
    $region418: #{forward.1} parent=1 // pred_check
      _
    $region419: #{forward.1} parent=1 // pred_check_branch
      %1067 = sbr.rel (0) target = $region421
    $region420: #{forward.1} parent=1 // pred_region
      %1069 = dma.done [#allocation44], 16
    $region421: #{forward.1} parent=1 // pred_fallthru
      _
    // Predicated region
    $region422: #{forward.1} parent=1 // pred_check
      _
    $region423: #{forward.1} parent=1 // pred_check_branch
      %1071 = sbr.rel (0) target = $region425
    $region424: #{forward.1} parent=1 // pred_region
      %1073 = dma.done [#allocation44], 16
    $region425: #{forward.1} parent=1 // pred_fallthru
      _
    // Predicated region
    $region426: #{forward.1} parent=1 // pred_check
      _
    $region427: #{forward.1} parent=1 // pred_check_branch
      %1075 = sbr.rel (0) target = $region429
    $region428: #{forward.1} parent=1 // pred_region
      %1077 = dma.done [#allocation47], 16
    $region429: #{forward.1} parent=1 // pred_fallthru
      _
    // Predicated region
    $region430: #{forward.1} parent=1 // pred_check
      _
    $region431: #{forward.1} parent=1 // pred_check_branch
      %1079 = sbr.rel (0) target = $region433
    $region432: #{forward.1} parent=1 // pred_region
      %1081 = dma.done [#allocation47], 16
    $region433: #{forward.1} parent=1 // pred_fallthru
      _
    // Predicated region
    $region434: #{forward.1} parent=1 // pred_check
      _
    $region435: #{forward.1} parent=1 // pred_check_branch
      %1083 = sbr.rel (0) target = $region437
    $region436: #{forward.1} parent=1 // pred_region
      %1085 = dma.done [#allocation50], 256
    $region437: #{forward.1} parent=1 // pred_fallthru
      _
    // Predicated region
    $region438: #{forward.1} parent=1 // pred_check
      _
    $region439: #{forward.1} parent=1 // pred_check_branch
      %1087 = sbr.rel (0) target = $region441
    $region440: #{forward.1} parent=1 // pred_region
      %1089 = dma.done [#allocation50], 512
    $region441: #{forward.1} parent=1 // pred_fallthru
      _
    // Predicated region
    $region442: #{forward.1} parent=1 // pred_check
      _
    $region443: #{forward.1} parent=1 // pred_check_branch
      %1091 = sbr.rel (0) target = $region445
    $region444: #{forward.1} parent=1 // pred_region
      %1093 = dma.done [#allocation53], 16
    $region445: #{forward.1} parent=1 // pred_fallthru
      _
    // Predicated region
    $region446: #{forward.1} parent=1 // pred_check
      _
    $region447: #{forward.1} parent=1 // pred_check_branch
      %1095 = sbr.rel (0) target = $region449
    $region448: #{forward.1} parent=1 // pred_region
      %1097 = dma.done [#allocation53], 16
    $region449: #{forward.1} parent=1 // pred_fallthru
      _
    // Predicated region
    $region450: #{forward.1} parent=1 // pred_check
      _
    $region451: #{forward.1} parent=1 // pred_check_branch
      %1099 = sbr.rel (0) target = $region453
    $region452: #{forward.1} parent=1 // pred_region
      %1101 = dma.done [#allocation56], 16
    $region453: #{forward.1} parent=1 // pred_fallthru
      _
    // Predicated region
    $region454: #{forward.1} parent=1 // pred_check
      _
    $region455: #{forward.1} parent=1 // pred_check_branch
      %1103 = sbr.rel (0) target = $region457
    $region456: #{forward.1} parent=1 // pred_region
      %1105 = dma.done [#allocation56], 16
    $region457: #{forward.1} parent=1 // pred_fallthru
      _
    // Predicated region
    $region458: #{forward.1} parent=1 // pred_check
      _
    $region459: #{forward.1} parent=1 // pred_check_branch
      %1107 = sbr.rel (0) target = $region461
    $region460: #{forward.1} parent=1 // pred_region
      %1109 = dma.done [#allocation59], 16
    $region461: #{forward.1} parent=1 // pred_fallthru
      _
    // Predicated region
    $region462: #{forward.1} parent=1 // pred_check
      _
    $region463: #{forward.1} parent=1 // pred_check_branch
      %1111 = sbr.rel (0) target = $region465
    $region464: #{forward.1} parent=1 // pred_region
      %1113 = dma.done [#allocation59], 1024
    $region465: #{forward.1} parent=1 // pred_fallthru
      _
    // Predicated region
    $region466: #{forward.1} parent=1 // pred_check
      _
    $region467: #{forward.1} parent=1 // pred_check_branch
      %1115 = sbr.rel (0) target = $region469
    $region468: #{forward.1} parent=1 // pred_region
      %1117 = dma.done [#allocation62], 256
    $region469: #{forward.1} parent=1 // pred_fallthru
      _
    // Predicated region
    $region470: #{forward.1} parent=1 // pred_check
      _
    $region471: #{forward.1} parent=1 // pred_check_branch
      %1119 = sbr.rel (0) target = $region473
    $region472: #{forward.1} parent=1 // pred_region
      %1121 = dma.done [#allocation62], 1024
    $region473: #{forward.1} parent=1 // pred_fallthru
      _
    // Predicated region
    $region474: #{forward.1} parent=1 // pred_check
      _
    $region475: #{forward.1} parent=1 // pred_check_branch
      %1123 = sbr.rel (0) target = $region477
    $region476: #{forward.1} parent=1 // pred_region
      %1125 = dma.done [#allocation65], 16
    $region477: #{forward.1} parent=1 // pred_fallthru
      _
    // Predicated region
    $region478: #{forward.1} parent=1 // pred_check
      _
    $region479: #{forward.1} parent=1 // pred_check_branch
      %1127 = sbr.rel (0) target = $region481
    $region480: #{forward.1} parent=1 // pred_region
      %1129 = dma.done [#allocation65], 16
    $region481: #{forward.1} parent=1 // pred_fallthru
      _
    // Predicated region
    $region482: #{forward.1} parent=1 // pred_check
      _
    $region483: #{forward.1} parent=1 // pred_check_branch
      %1131 = sbr.rel (0) target = $region485
    $region484: #{forward.1} parent=1 // pred_region
      %1133 = dma.done [#allocation68], 16
    $region485: #{forward.1} parent=1 // pred_fallthru
      _
    // Predicated region
    $region486: #{forward.1} parent=1 // pred_check
      _
    $region487: #{forward.1} parent=1 // pred_check_branch
      %1135 = sbr.rel (0) target = $region489
    $region488: #{forward.1} parent=1 // pred_region
      %1137 = dma.done [#allocation68], 16
    $region489: #{forward.1} parent=1 // pred_fallthru
      _
    // Predicated region
    $region490: #{forward.1} parent=1 // pred_check
      _
    $region491: #{forward.1} parent=1 // pred_check_branch
      %1139 = sbr.rel (0) target = $region493
    $region492: #{forward.1} parent=1 // pred_region
      %1141 = dma.done [#allocation71], 16
    $region493: #{forward.1} parent=1 // pred_fallthru
      _
    // Predicated region
    $region494: #{forward.1} parent=1 // pred_check
      _
    $region495: #{forward.1} parent=1 // pred_check_branch
      %1143 = sbr.rel (0) target = $region497
    $region496: #{forward.1} parent=1 // pred_region
      %1145 = dma.done [#allocation71], 256
    $region497: #{forward.1} parent=1 // pred_fallthru
      _
    // Predicated region
    $region498: #{forward.1} parent=1 // pred_check
      _
    $region499: #{forward.1} parent=1 // pred_check_branch
      %1147 = sbr.rel (0) target = $region501
    $region500: #{forward.1} parent=1 // pred_region
      %1149 = dma.done [#allocation74], 256
    $region501: #{forward.1} parent=1 // pred_fallthru
      _
    // Predicated region
    $region502: #{forward.1} parent=1 // pred_check
      _
    $region503: #{forward.1} parent=1 // pred_check_branch
      %1151 = sbr.rel (0) target = $region505
    $region504: #{forward.1} parent=1 // pred_region
      %1153 = dma.done [#allocation74], 16
    $region505: #{forward.1} parent=1 // pred_fallthru
      _
    // Predicated region
    $region506: #{forward.1} parent=1 // pred_check
      _
    $region507: #{forward.1} parent=1 // pred_check_branch
      %1155 = sbr.rel (0) target = $region509
    $region508: #{forward.1} parent=1 // pred_region
      %1157 = dma.done [#allocation77], 256
    $region509: #{forward.1} parent=1 // pred_fallthru
      _
    // Predicated region
    $region510: #{forward.1} parent=1 // pred_check
      _
    $region511: #{forward.1} parent=1 // pred_check_branch
      %1159 = sbr.rel (0) target = $region513
    $region512: #{forward.1} parent=1 // pred_region
      %1161 = dma.done [#allocation77], 16
    $region513: #{forward.1} parent=1 // pred_fallthru
      _
    // Predicated region
    $region514: #{forward.1} parent=1 // pred_check
      _
    $region515: #{forward.1} parent=1 // pred_check_branch
      %1163 = sbr.rel (0) target = $region517
    $region516: #{forward.1} parent=1 // pred_region
      %1165 = dma.done [#allocation80], 16
    $region517: #{forward.1} parent=1 // pred_fallthru
      _
    // Predicated region
    $region518: #{forward.1} parent=1 // pred_check
      _
    $region519: #{forward.1} parent=1 // pred_check_branch
      %1167 = sbr.rel (0) target = $region521
    $region520: #{forward.1} parent=1 // pred_region
      %1169 = dma.done [#allocation80], 16
    $region521: #{forward.1} parent=1 // pred_fallthru
      _
    // Predicated region
    $region522: #{forward.1} parent=1 // pred_check
      _
    $region523: #{forward.1} parent=1 // pred_check_branch
      %1171 = sbr.rel (0) target = $region525
    $region524: #{forward.1} parent=1 // pred_region
      %1173 = dma.done [#allocation83], 16
    $region525: #{forward.1} parent=1 // pred_fallthru
      _
    // Predicated region
    $region526: #{forward.1} parent=1 // pred_check
      _
    $region527: #{forward.1} parent=1 // pred_check_branch
      %1175 = sbr.rel (0) target = $region529
    $region528: #{forward.1} parent=1 // pred_region
      %1177 = dma.done [#allocation83], 256
    $region529: #{forward.1} parent=1 // pred_fallthru
      _
    // Predicated region
    $region530: #{forward.1} parent=1 // pred_check
      _
    $region531: #{forward.1} parent=1 // pred_check_branch
      %1179 = sbr.rel (0) target = $region533
    $region532: #{forward.1} parent=1 // pred_region
      %1181 = dma.done [#allocation86], 512
    $region533: #{forward.1} parent=1 // pred_fallthru
      _
    // Predicated region
    $region534: #{forward.1} parent=1 // pred_check
      _
    $region535: #{forward.1} parent=1 // pred_check_branch
      %1183 = sbr.rel (0) target = $region537
    $region536: #{forward.1} parent=1 // pred_region
      %1185 = dma.done [#allocation86], 16
    $region537: #{forward.1} parent=1 // pred_fallthru
      _
    // Predicated region
    $region538: #{forward.1} parent=1 // pred_check
      _
    $region539: #{forward.1} parent=1 // pred_check_branch
      %1187 = sbr.rel (0) target = $region541
    $region540: #{forward.1} parent=1 // pred_region
      %1189 = dma.done [#allocation89], 16
    $region541: #{forward.1} parent=1 // pred_fallthru
      _
    // Predicated region
    $region542: #{forward.1} parent=1 // pred_check
      _
    $region543: #{forward.1} parent=1 // pred_check_branch
      %1191 = sbr.rel (0) target = $region545
    $region544: #{forward.1} parent=1 // pred_region
      %1193 = dma.done [#allocation89], 16
    $region545: #{forward.1} parent=1 // pred_fallthru
      _
    // Predicated region
    $region546: #{forward.1} parent=1 // pred_check
      _
    $region547: #{forward.1} parent=1 // pred_check_branch
      %1195 = sbr.rel (0) target = $region549
    $region548: #{forward.1} parent=1 // pred_region
      %1197 = dma.done [#allocation92], 256
    $region549: #{forward.1} parent=1 // pred_fallthru
      _
    // Predicated region
    $region550: #{forward.1} parent=1 // pred_check
      _
    $region551: #{forward.1} parent=1 // pred_check_branch
      %1199 = sbr.rel (0) target = $region553
    $region552: #{forward.1} parent=1 // pred_region
      %1201 = dma.done [#allocation92], 256
    $region553: #{forward.1} parent=1 // pred_fallthru
      _
    // Predicated region
    $region554: #{forward.1} parent=1 // pred_check
      _
    $region555: #{forward.1} parent=1 // pred_check_branch
      %1203 = sbr.rel (0) target = $region557
    $region556: #{forward.1} parent=1 // pred_region
      %1205 = dma.done [#allocation95], 256
    $region557: #{forward.1} parent=1 // pred_fallthru
      _
    %v1206 = vld [vmem:[%s1] sm:$0xff]
    %v1207 = vld [vmem:[%s1 + $0x8] sm:$0xff]
    %v1208 = vld [vmem:[%s1 + $0x10] sm:$0xff]
    %v1209 = vld [vmem:[%s1 + $0x18] sm:$0xff]
    %v1210 = vld [vmem:[%s3] sm:$0xff]
    %v1211 = vld [vmem:[%s3 + $0x8] sm:$0xff]
    %v1212 = vld [vmem:[%s3 + $0x10] sm:$0xff]
    %v1213 = vld [vmem:[%s3 + $0x18] sm:$0xff]
    %v1214 = vld [vmem:[#allocation2] sm:$0xff]
    %v1215 = vld [vmem:[#allocation2 + $0x8] sm:$0xff]
    %v1216 = vld [vmem:[#allocation2 + $0x10] sm:$0xff]
    %v1217 = vld [vmem:[#allocation2 + $0x18] sm:$0xff]
    %s1218 = scalar_lea.vmem [#allocation2], 32
    %v1219 = vld [vmem:[%s1218] sm:$0xff]
    %v1220 = vld [vmem:[%s1218 + $0x8] sm:$0xff]
    %v1221 = vld [vmem:[%s1218 + $0x10] sm:$0xff]
    %v1222 = vld [vmem:[%s1218 + $0x18] sm:$0xff]
    %s1223 = scalar_lea.vmem [#allocation2], 64
    %v1224 = vld [vmem:[%s1223] sm:$0xff]
    %v1225 = vld [vmem:[%s1223 + $0x8] sm:$0xff]
    %v1226 = vld [vmem:[%s1223 + $0x10] sm:$0xff]
    %v1227 = vld [vmem:[%s1223 + $0x18] sm:$0xff]
    %vm1228 = vcmask 261120
    %v1230 = vsel %vm1228, %v1214, 0
    %v1233 = vsel %vm1228, %v1215, 0
    %v1236 = vsel %vm1228, %v1216, 0
    %v1239 = vsel %vm1228, %v1217, 0
    %1241 = vmatpush.msra.mxu0 0.0
    %1242 = vmatpush.msra.mxu0 0.0
    %1243 = vmatpush.msra.mxu0 0.0
    %1244 = vmatpush.msra.mxu0 0.0
    %1245 = vmatpush.msra.mxu0 0.0
    %1246 = vmatpush.msra.mxu0 0.0
    %1247 = vmatpush.msra.mxu0 0.0
    %1248 = vmatpush.msra.mxu0 0.0
    %1249 = vmatpush.msra.mxu0 0.0
    %1250 = vmatpush.msra.mxu0 0.0
    %1251 = vmatpush.msra.mxu0 0.0
    %1252 = vmatpush.msra.mxu0 0.0
    %1253 = vmatpush.msra.mxu0 %v1209
    %1254 = vmatpush.msra.mxu0 %v1208
    %1255 = vmatpush.msra.mxu0 %v1207
    %1256 = vmatpush.msra.mxu0 %v1206
    %1257 = vmatmul.f32.gmra.mxu0 %v1230
    %v1258 = vpop.f32.mrf.mxu0
    %v1259 = vadd.f32 0.0, %v1258
    %1260 = vmatmul.f32.gmra.mxu0 %v1233
    %v1261 = vpop.f32.mrf.mxu0
    %v1262 = vadd.f32 0.0, %v1261
    %1263 = vmatmul.f32.gmra.mxu0 %v1236
    %v1264 = vpop.f32.mrf.mxu0
    %v1265 = vadd.f32 0.0, %v1264
    %1266 = vmatmul.f32.gmra.mxu0 %v1239
    %v1267 = vpop.f32.mrf.mxu0
    %v1268 = vadd.f32 0.0, %v1267
    %1269 = vdwg.mxu0
    %v1270 = vld [vmem:[%s153] sm:$0xff]
    %v1272 = vsel %vm1228, %v1219, 0
    %v1275 = vsel %vm1228, %v1220, 0
    %v1278 = vsel %vm1228, %v1221, 0
    %v1281 = vsel %vm1228, %v1222, 0
    %1283 = vmatpush.msra.mxu0 0.0
    %1284 = vmatpush.msra.mxu0 0.0
    %1285 = vmatpush.msra.mxu0 0.0
    %1286 = vmatpush.msra.mxu0 0.0
    %1287 = vmatpush.msra.mxu0 0.0
    %1288 = vmatpush.msra.mxu0 0.0
    %1289 = vmatpush.msra.mxu0 0.0
    %1290 = vmatpush.msra.mxu0 0.0
    %1291 = vmatpush.msra.mxu0 0.0
    %1292 = vmatpush.msra.mxu0 0.0
    %1293 = vmatpush.msra.mxu0 0.0
    %1294 = vmatpush.msra.mxu0 0.0
    %1295 = vmatpush.msra.mxu0 %v1209
    %1296 = vmatpush.msra.mxu0 %v1208
    %1297 = vmatpush.msra.mxu0 %v1207
    %1298 = vmatpush.msra.mxu0 %v1206
    %1299 = vmatmul.f32.gmra.mxu0 %v1272
    %v1300 = vpop.f32.mrf.mxu0
    %v1301 = vadd.f32 0.0, %v1300
    %1302 = vmatmul.f32.gmra.mxu0 %v1275
    %v1303 = vpop.f32.mrf.mxu0
    %v1304 = vadd.f32 0.0, %v1303
    %1305 = vmatmul.f32.gmra.mxu0 %v1278
    %v1306 = vpop.f32.mrf.mxu0
    %v1307 = vadd.f32 0.0, %v1306
    %1308 = vmatmul.f32.gmra.mxu0 %v1281
    %v1309 = vpop.f32.mrf.mxu0
    %v1310 = vadd.f32 0.0, %v1309
    %1311 = vdwg.mxu0
    %s1312 = scalar_lea.vmem %s153, 8
    %v1313 = vld [vmem:[%s1312] sm:$0xff]
    %vm1314 = vcmask 64512
    %v1316 = vsel %vm1314, %v1301, 0
    %v1319 = vsel %vm1314, %v1304, 0
    %v1322 = vsel %vm1314, %v1307, 0
    %v1325 = vsel %vm1314, %v1310, 0
    %1327 = vmatpush.msra.mxu0 0.0
    %1328 = vmatpush.msra.mxu0 0.0
    %1329 = vmatpush.msra.mxu0 0.0
    %1330 = vmatpush.msra.mxu0 0.0
    %1331 = vmatpush.msra.mxu0 0.0
    %1332 = vmatpush.msra.mxu0 0.0
    %1333 = vmatpush.msra.mxu0 0.0
    %1334 = vmatpush.msra.mxu0 0.0
    %1335 = vmatpush.msra.mxu0 0.0
    %1336 = vmatpush.msra.mxu0 0.0
    %1337 = vmatpush.msra.mxu0 0.0
    %1338 = vmatpush.msra.mxu0 0.0
    %1339 = vmatpush.msra.mxu0 0.0
    %1340 = vmatpush.msra.mxu0 0.0
    %1341 = vmatpush.msra.mxu0 0.0
    %1342 = vmatpush.msra.mxu0 %v1313
    %1343 = vmatmul.f32.gmra.mxu0 %v1316
    %v1344 = vpop.f32.mrf.mxu0
    %v1345 = vadd.f32 0.0, %v1344
    %1346 = vmatmul.f32.gmra.mxu0 %v1319
    %v1347 = vpop.f32.mrf.mxu0
    %v1348 = vadd.f32 0.0, %v1347
    %1349 = vmatmul.f32.gmra.mxu0 %v1322
    %v1350 = vpop.f32.mrf.mxu0
    %v1351 = vadd.f32 0.0, %v1350
    %1352 = vmatmul.f32.gmra.mxu0 %v1325
    %v1353 = vpop.f32.mrf.mxu0
    %v1354 = vadd.f32 0.0, %v1353
    %1355 = vdwg.mxu0
    %v1357 = vsel %vm1314, %v1259, 0
    %v1360 = vsel %vm1314, %v1262, 0
    %v1363 = vsel %vm1314, %v1265, 0
    %v1366 = vsel %vm1314, %v1268, 0
    %1368 = vmatpush.msra.mxu0 0.0
    %1369 = vmatpush.msra.mxu0 0.0
    %1370 = vmatpush.msra.mxu0 0.0
    %1371 = vmatpush.msra.mxu0 0.0
    %1372 = vmatpush.msra.mxu0 0.0
    %1373 = vmatpush.msra.mxu0 0.0
    %1374 = vmatpush.msra.mxu0 0.0
    %1375 = vmatpush.msra.mxu0 0.0
    %1376 = vmatpush.msra.mxu0 0.0
    %1377 = vmatpush.msra.mxu0 0.0
    %1378 = vmatpush.msra.mxu0 0.0
    %1379 = vmatpush.msra.mxu0 0.0
    %1380 = vmatpush.msra.mxu0 0.0
    %1381 = vmatpush.msra.mxu0 0.0
    %1382 = vmatpush.msra.mxu0 0.0
    %1383 = vmatpush.msra.mxu0 %v1270
    %1384 = vmatmul.f32.gmra.mxu0 %v1357
    %v1385 = vpop.f32.mrf.mxu0
    %v1386 = vadd.f32 %v1345, %v1385
    %1387 = vmatmul.f32.gmra.mxu0 %v1360
    %v1388 = vpop.f32.mrf.mxu0
    %v1389 = vadd.f32 %v1348, %v1388
    %1390 = vmatmul.f32.gmra.mxu0 %v1363
    %v1391 = vpop.f32.mrf.mxu0
    %v1392 = vadd.f32 %v1351, %v1391
    %1393 = vmatmul.f32.gmra.mxu0 %v1366
    %v1394 = vpop.f32.mrf.mxu0
    %v1395 = vadd.f32 %v1354, %v1394
    %1396 = vdwg.mxu0
    %v1398 = vsel %vm1228, %v1224, 0
    %v1401 = vsel %vm1228, %v1225, 0
    %v1404 = vsel %vm1228, %v1226, 0
    %v1407 = vsel %vm1228, %v1227, 0
    %1409 = vmatpush.msra.mxu0 0.0
    %1410 = vmatpush.msra.mxu0 0.0
    %1411 = vmatpush.msra.mxu0 0.0
    %1412 = vmatpush.msra.mxu0 0.0
    %1413 = vmatpush.msra.mxu0 0.0
    %1414 = vmatpush.msra.mxu0 0.0
    %1415 = vmatpush.msra.mxu0 0.0
    %1416 = vmatpush.msra.mxu0 0.0
    %1417 = vmatpush.msra.mxu0 0.0
    %1418 = vmatpush.msra.mxu0 0.0
    %1419 = vmatpush.msra.mxu0 0.0
    %1420 = vmatpush.msra.mxu0 0.0
    %1421 = vmatpush.msra.mxu0 %v1209
    %1422 = vmatpush.msra.mxu0 %v1208
    %1423 = vmatpush.msra.mxu0 %v1207
    %1424 = vmatpush.msra.mxu0 %v1206
    %1425 = vmatmul.f32.gmra.mxu0 %v1398
    %v1426 = vpop.f32.mrf.mxu0
    %v1427 = vadd.f32 0.0, %v1426
    %1428 = vmatmul.f32.gmra.mxu0 %v1401
    %v1429 = vpop.f32.mrf.mxu0
    %v1430 = vadd.f32 0.0, %v1429
    %1431 = vmatmul.f32.gmra.mxu0 %v1404
    %v1432 = vpop.f32.mrf.mxu0
    %v1433 = vadd.f32 0.0, %v1432
    %1434 = vmatmul.f32.gmra.mxu0 %v1407
    %v1435 = vpop.f32.mrf.mxu0
    %v1436 = vadd.f32 0.0, %v1435
    %1437 = vdwg.mxu0
    %s1438 = scalar_lea.vmem %s153, 16
    %v1439 = vld [vmem:[%s1438] sm:$0xff]
    %v1441 = vsel %vm1314, %v1427, 0
    %v1444 = vsel %vm1314, %v1430, 0
    %v1447 = vsel %vm1314, %v1433, 0
    %v1450 = vsel %vm1314, %v1436, 0
    %1452 = vmatpush.msra.mxu0 0.0
    %1453 = vmatpush.msra.mxu0 0.0
    %1454 = vmatpush.msra.mxu0 0.0
    %1455 = vmatpush.msra.mxu0 0.0
    %1456 = vmatpush.msra.mxu0 0.0
    %1457 = vmatpush.msra.mxu0 0.0
    %1458 = vmatpush.msra.mxu0 0.0
    %1459 = vmatpush.msra.mxu0 0.0
    %1460 = vmatpush.msra.mxu0 0.0
    %1461 = vmatpush.msra.mxu0 0.0
    %1462 = vmatpush.msra.mxu0 0.0
    %1463 = vmatpush.msra.mxu0 0.0
    %1464 = vmatpush.msra.mxu0 0.0
    %1465 = vmatpush.msra.mxu0 0.0
    %1466 = vmatpush.msra.mxu0 0.0
    %1467 = vmatpush.msra.mxu0 %v1439
    %1468 = vmatmul.f32.gmra.mxu0 %v1441
    %v1469 = vpop.f32.mrf.mxu0
    %v1470 = vadd.f32 0.0, %v1469
    %1471 = vmatmul.f32.gmra.mxu0 %v1444
    %v1472 = vpop.f32.mrf.mxu0
    %v1473 = vadd.f32 0.0, %v1472
    %1474 = vmatmul.f32.gmra.mxu0 %v1447
    %v1475 = vpop.f32.mrf.mxu0
    %v1476 = vadd.f32 0.0, %v1475
    %1477 = vmatmul.f32.gmra.mxu0 %v1450
    %v1478 = vpop.f32.mrf.mxu0
    %v1479 = vadd.f32 0.0, %v1478
    %1480 = vdwg.mxu0
    %v1481 = vadd.f32 %v1386, %v1470
    %v1482 = vadd.f32 %v1389, %v1473
    %v1483 = vadd.f32 %v1392, %v1476
    %v1484 = vadd.f32 %v1395, %v1479
    %v1485 = vld [vmem:[%s151] sm:$0x1]
    %v1487 = vperm.slane %v1485, 0
    %v1489 = vadd.f32 %v1481, %v1487
    %v1490 = vadd.f32 %v1482, %v1487
    %v1491 = vadd.f32 %v1483, %v1487
    %v1492 = vadd.f32 %v1484, %v1487
    %v1493 = vld [vmem:[#allocation93] sm:$0xff]
    %v1494 = vld [vmem:[#allocation93 + $0x8] sm:$0xff]
    %v1495 = vld [vmem:[%s143] sm:$0x1]
    %v1497 = vperm.slane %v1495, 0
    %vm1499 = vcmask 130048
    %v1501 = vsel %vm1499, %v1489, 0
    %v1504 = vsel %vm1499, %v1490, 0
    %v1507 = vsel %vm1499, %v1491, 0
    %v1510 = vsel %vm1499, %v1492, 0
    %1512 = vmatpush.msra.mxu0 0.0
    %1513 = vmatpush.msra.mxu0 0.0
    %1514 = vmatpush.msra.mxu0 0.0
    %1515 = vmatpush.msra.mxu0 0.0
    %1516 = vmatpush.msra.mxu0 0.0
    %1517 = vmatpush.msra.mxu0 0.0
    %1518 = vmatpush.msra.mxu0 0.0
    %1519 = vmatpush.msra.mxu0 0.0
    %1520 = vmatpush.msra.mxu0 0.0
    %1521 = vmatpush.msra.mxu0 0.0
    %1522 = vmatpush.msra.mxu0 0.0
    %1523 = vmatpush.msra.mxu0 0.0
    %1524 = vmatpush.msra.mxu0 0.0
    %1525 = vmatpush.msra.mxu0 0.0
    %1526 = vmatpush.msra.mxu0 %v1494
    %1527 = vmatpush.msra.mxu0 %v1493
    %1528 = vmatmul.f32.gmra.mxu0 %v1501
    %v1529 = vpop.f32.mrf.mxu0
    %v1530 = vadd.f32 %v1497, %v1529
    %1531 = vmatmul.f32.gmra.mxu0 %v1504
    %v1532 = vpop.f32.mrf.mxu0
    %v1533 = vadd.f32 %v1497, %v1532
    %1534 = vmatmul.f32.gmra.mxu0 %v1507
    %v1535 = vpop.f32.mrf.mxu0
    %v1536 = vadd.f32 %v1497, %v1535
    %1537 = vmatmul.f32.gmra.mxu0 %v1510
    %v1538 = vpop.f32.mrf.mxu0
    %v1539 = vadd.f32 %v1497, %v1538
    %1540 = vdwg.mxu0
    %v1541 = vsel %vm1499, %v1530, 0.0
    %1542 = vadd.xlane.f32.xlu0 %v1541
    %v1543 = vpop.xlane.xlu0 %1542
    %v1544 = vsel %vm1499, %v1533, 0.0
    %1545 = vadd.xlane.f32.xlu0 %v1544
    %v1546 = vpop.xlane.xlu0 %1545
    %v1547 = vsel %vm1499, %v1536, 0.0
    %1548 = vadd.xlane.f32.xlu0 %v1547
    %v1549 = vpop.xlane.xlu0 %1548
    %v1550 = vsel %vm1499, %v1539, 0.0
    %1551 = vadd.xlane.f32.xlu0 %v1550
    %v1552 = vpop.xlane.xlu0 %1551
    %v1553 = vrcp.pop 16.0
    %v1554 = vmul.f32 16.0, %v1553
    %v1555 = vsub.f32 1.0, %v1554
    %v1556 = vmul.f32 %v1553, %v1555
    %v1557 = vadd.f32 %v1553, %v1556
    %vm1558 = vweird.f32 %v1553
    %v1559 = vsel %vm1558, %v1553, %v1557
    %v1560 = vmul.f32 %v1543, %v1559
    %v1561 = vmul.f32 %v1546, %v1559
    %v1562 = vmul.f32 %v1549, %v1559
    %v1563 = vmul.f32 %v1552, %v1559
    %v1564 = vsub.f32 %v1530, %v1560
    %v1565 = vsub.f32 %v1533, %v1561
    %v1566 = vsub.f32 %v1536, %v1562
    %v1567 = vsub.f32 %v1539, %v1563
    %v1568 = vmul.f32 %v1564, %v1564
    %v1569 = vmul.f32 %v1565, %v1565
    %v1570 = vmul.f32 %v1566, %v1566
    %v1571 = vmul.f32 %v1567, %v1567
    %v1572 = vsel %vm1499, %v1568, 0.0
    %1573 = vadd.xlane.f32.xlu0 %v1572
    %v1574 = vpop.xlane.xlu0 %1573
    %v1575 = vsel %vm1499, %v1569, 0.0
    %1576 = vadd.xlane.f32.xlu0 %v1575
    %v1577 = vpop.xlane.xlu0 %1576
    %v1578 = vsel %vm1499, %v1570, 0.0
    %1579 = vadd.xlane.f32.xlu0 %v1578
    %v1580 = vpop.xlane.xlu0 %1579
    %v1581 = vsel %vm1499, %v1571, 0.0
    %1582 = vadd.xlane.f32.xlu0 %v1581
    %v1583 = vpop.xlane.xlu0 %1582
    %v1584 = vmul.f32 %v1574, %v1559
    %v1585 = vmul.f32 %v1577, %v1559
    %v1586 = vmul.f32 %v1580, %v1559
    %v1587 = vmul.f32 %v1583, %v1559
    %v1588 = vadd.f32 %v1584, 1e-05
    %v1589 = vadd.f32 %v1585, 1e-05
    %v1590 = vadd.f32 %v1586, 1e-05
    %v1591 = vadd.f32 %v1587, 1e-05
    %v1592 = vrsqrt.pop %v1588
    %v1593 = vmul.f32 %v1592, %v1588
    %v1594 = vmul.f32 %v1593, %v1592
    %v1595 = vmul.f32 0.5, %v1594
    %v1596 = vsub.f32 1.5, %v1595
    %v1597 = vmul.f32 %v1592, %v1596
    %vm1598 = vweird.f32 %v1588
    %vm1599 = vweird.f32 %v1592
    %vm1600 = vmor %vm1598, %vm1599
    %v1601 = vsel %vm1600, %v1592, %v1597
    %v1602 = vrsqrt.pop %v1589
    %v1603 = vmul.f32 %v1602, %v1589
    %v1604 = vmul.f32 %v1603, %v1602
    %v1605 = vmul.f32 0.5, %v1604
    %v1606 = vsub.f32 1.5, %v1605
    %v1607 = vmul.f32 %v1602, %v1606
    %vm1608 = vweird.f32 %v1589
    %vm1609 = vweird.f32 %v1602
    %vm1610 = vmor %vm1608, %vm1609
    %v1611 = vsel %vm1610, %v1602, %v1607
    %v1612 = vrsqrt.pop %v1590
    %v1613 = vmul.f32 %v1612, %v1590
    %v1614 = vmul.f32 %v1613, %v1612
    %v1615 = vmul.f32 0.5, %v1614
    %v1616 = vsub.f32 1.5, %v1615
    %v1617 = vmul.f32 %v1612, %v1616
    %vm1618 = vweird.f32 %v1590
    %vm1619 = vweird.f32 %v1612
    %vm1620 = vmor %vm1618, %vm1619
    %v1621 = vsel %vm1620, %v1612, %v1617
    %v1622 = vrsqrt.pop %v1591
    %v1623 = vmul.f32 %v1622, %v1591
    %v1624 = vmul.f32 %v1623, %v1622
    %v1625 = vmul.f32 0.5, %v1624
    %v1626 = vsub.f32 1.5, %v1625
    %v1627 = vmul.f32 %v1622, %v1626
    %vm1628 = vweird.f32 %v1591
    %vm1629 = vweird.f32 %v1622
    %vm1630 = vmor %vm1628, %vm1629
    %v1631 = vsel %vm1630, %v1622, %v1627
    %v1632 = vmul.f32 %v1564, %v1601
    %v1633 = vmul.f32 %v1565, %v1611
    %v1634 = vmul.f32 %v1566, %v1621
    %v1635 = vmul.f32 %v1567, %v1631
    %v1636 = vld [vmem:[#allocation39] sm:$0x1]
    %v1638 = vperm.slane %v1636, 0
    %v1640 = vmul.f32 %v1632, %v1638
    %v1641 = vmul.f32 %v1633, %v1638
    %v1642 = vmul.f32 %v1634, %v1638
    %v1643 = vmul.f32 %v1635, %v1638
    %v1644 = vld [vmem:[#allocation37] sm:$0x1]
    %v1646 = vperm.slane %v1644, 0
    %v1648 = vadd.f32 %v1640, %v1646
    %v1649 = vadd.f32 %v1641, %v1646
    %v1650 = vadd.f32 %v1642, %v1646
    %v1651 = vadd.f32 %v1643, %v1646
    %v1652 = vld [vmem:[#allocation40] sm:$0xff]
    %v1653 = vld [vmem:[#allocation40 + $0x8] sm:$0xff]
    %v1654 = vld [vmem:[#allocation34] sm:$0x1]
    %v1656 = vperm.slane %v1654, 0
    %v1659 = vsel %vm1499, %v1648, 0
    %v1662 = vsel %vm1499, %v1649, 0
    %v1665 = vsel %vm1499, %v1650, 0
    %v1668 = vsel %vm1499, %v1651, 0
    %1670 = vmatpush.msra.mxu0 0.0
    %1671 = vmatpush.msra.mxu0 0.0
    %1672 = vmatpush.msra.mxu0 0.0
    %1673 = vmatpush.msra.mxu0 0.0
    %1674 = vmatpush.msra.mxu0 0.0
    %1675 = vmatpush.msra.mxu0 0.0
    %1676 = vmatpush.msra.mxu0 0.0
    %1677 = vmatpush.msra.mxu0 0.0
    %1678 = vmatpush.msra.mxu0 0.0
    %1679 = vmatpush.msra.mxu0 0.0
    %1680 = vmatpush.msra.mxu0 0.0
    %1681 = vmatpush.msra.mxu0 0.0
    %1682 = vmatpush.msra.mxu0 0.0
    %1683 = vmatpush.msra.mxu0 0.0
    %1684 = vmatpush.msra.mxu0 %v1653
    %1685 = vmatpush.msra.mxu0 %v1652
    %1686 = vmatmul.f32.gmra.mxu0 %v1659
    %v1687 = vpop.f32.mrf.mxu0
    %v1688 = vadd.f32 %v1656, %v1687
    %1689 = vmatmul.f32.gmra.mxu0 %v1662
    %v1690 = vpop.f32.mrf.mxu0
    %v1691 = vadd.f32 %v1656, %v1690
    %1692 = vmatmul.f32.gmra.mxu0 %v1665
    %v1693 = vpop.f32.mrf.mxu0
    %v1694 = vadd.f32 %v1656, %v1693
    %1695 = vmatmul.f32.gmra.mxu0 %v1668
    %v1696 = vpop.f32.mrf.mxu0
    %v1697 = vadd.f32 %v1656, %v1696
    %1698 = vdwg.mxu0
    %v1699 = vxor.u32 %v1688, 2147483648
    %v1700 = vxor.u32 %v1691, 2147483648
    %v1701 = vxor.u32 %v1694, 2147483648
    %v1702 = vxor.u32 %v1697, 2147483648
    %v1703 = vmul.f32 %v1699, 1.442695
    %v1704 = vpow.pop %v1703
    %v1705 = vmul.f32 %v1700, 1.442695
    %v1706 = vpow.pop %v1705
    %v1707 = vmul.f32 %v1701, 1.442695
    %v1708 = vpow.pop %v1707
    %v1709 = vmul.f32 %v1702, 1.442695
    %v1710 = vpow.pop %v1709
    %v1711 = vadd.f32 %v1704, 1.0
    %v1712 = vadd.f32 %v1706, 1.0
    %v1713 = vadd.f32 %v1708, 1.0
    %v1714 = vadd.f32 %v1710, 1.0
    %v1715 = vrcp.pop %v1711
    %v1716 = vmul.f32 %v1711, %v1715
    %v1717 = vsub.f32 1.0, %v1716
    %v1718 = vmul.f32 %v1715, %v1717
    %v1719 = vadd.f32 %v1715, %v1718
    %vm1720 = vweird.f32 %v1711
    %vm1721 = vweird.f32 %v1715
    %vm1722 = vmor %vm1720, %vm1721
    %v1723 = vsel %vm1722, %v1715, %v1719
    %v1724 = vand.u32 2147483647, %v1711
    %vm1725 = vcmp.eq.f32.partialorder %v1724, 8.507059e+37
    %v1726 = vand.u32 %v1711, 2147483648
    %v1727 = vor.u32 1.1754944e-38, %v1726
    %v1728 = vsel %vm1725, %v1727, %v1723
    %v1729 = vmul.f32 1.0, %v1728
    %v1730 = vrcp.pop %v1712
    %v1731 = vmul.f32 %v1712, %v1730
    %v1732 = vsub.f32 1.0, %v1731
    %v1733 = vmul.f32 %v1730, %v1732
    %v1734 = vadd.f32 %v1730, %v1733
    %vm1735 = vweird.f32 %v1712
    %vm1736 = vweird.f32 %v1730
    %vm1737 = vmor %vm1735, %vm1736
    %v1738 = vsel %vm1737, %v1730, %v1734
    %v1739 = vand.u32 2147483647, %v1712
    %vm1740 = vcmp.eq.f32.partialorder %v1739, 8.507059e+37
    %v1741 = vand.u32 %v1712, 2147483648
    %v1742 = vor.u32 1.1754944e-38, %v1741
    %v1743 = vsel %vm1740, %v1742, %v1738
    %v1744 = vmul.f32 1.0, %v1743
    %v1745 = vrcp.pop %v1713
    %v1746 = vmul.f32 %v1713, %v1745
    %v1747 = vsub.f32 1.0, %v1746
    %v1748 = vmul.f32 %v1745, %v1747
    %v1749 = vadd.f32 %v1745, %v1748
    %vm1750 = vweird.f32 %v1713
    %vm1751 = vweird.f32 %v1745
    %vm1752 = vmor %vm1750, %vm1751
    %v1753 = vsel %vm1752, %v1745, %v1749
    %v1754 = vand.u32 2147483647, %v1713
    %vm1755 = vcmp.eq.f32.partialorder %v1754, 8.507059e+37
    %v1756 = vand.u32 %v1713, 2147483648
    %v1757 = vor.u32 1.1754944e-38, %v1756
    %v1758 = vsel %vm1755, %v1757, %v1753
    %v1759 = vmul.f32 1.0, %v1758
    %v1760 = vrcp.pop %v1714
    %v1761 = vmul.f32 %v1714, %v1760
    %v1762 = vsub.f32 1.0, %v1761
    %v1763 = vmul.f32 %v1760, %v1762
    %v1764 = vadd.f32 %v1760, %v1763
    %vm1765 = vweird.f32 %v1714
    %vm1766 = vweird.f32 %v1760
    %vm1767 = vmor %vm1765, %vm1766
    %v1768 = vsel %vm1767, %v1760, %v1764
    %v1769 = vand.u32 2147483647, %v1714
    %vm1770 = vcmp.eq.f32.partialorder %v1769, 8.507059e+37
    %v1771 = vand.u32 %v1714, 2147483648
    %v1772 = vor.u32 1.1754944e-38, %v1771
    %v1773 = vsel %vm1770, %v1772, %v1768
    %v1774 = vmul.f32 1.0, %v1773
    %v1775 = vmul.f32 %v1688, %v1729
    %v1776 = vmul.f32 %v1691, %v1744
    %v1777 = vmul.f32 %v1694, %v1759
    %v1778 = vmul.f32 %v1697, %v1774
    %v1779 = vld [vmem:[#allocation42] sm:$0xff]
    %v1780 = vld [vmem:[#allocation42 + $0x8] sm:$0xff]
    %v1781 = vld [vmem:[#allocation42 + $0x10] sm:$0xff]
    %v1782 = vld [vmem:[#allocation42 + $0x18] sm:$0xff]
    %v1783 = vld [vmem:[#allocation36] sm:$0x1]
    %v1785 = vperm.slane %v1783, 0
    %v1788 = vsel %vm1228, %v1775, 0
    %v1791 = vsel %vm1228, %v1776, 0
    %v1794 = vsel %vm1228, %v1777, 0
    %v1797 = vsel %vm1228, %v1778, 0
    %1799 = vmatpush.msra.mxu0 0.0
    %1800 = vmatpush.msra.mxu0 0.0
    %1801 = vmatpush.msra.mxu0 0.0
    %1802 = vmatpush.msra.mxu0 0.0
    %1803 = vmatpush.msra.mxu0 0.0
    %1804 = vmatpush.msra.mxu0 0.0
    %1805 = vmatpush.msra.mxu0 0.0
    %1806 = vmatpush.msra.mxu0 0.0
    %1807 = vmatpush.msra.mxu0 0.0
    %1808 = vmatpush.msra.mxu0 0.0
    %1809 = vmatpush.msra.mxu0 0.0
    %1810 = vmatpush.msra.mxu0 0.0
    %1811 = vmatpush.msra.mxu0 %v1782
    %1812 = vmatpush.msra.mxu0 %v1781
    %1813 = vmatpush.msra.mxu0 %v1780
    %1814 = vmatpush.msra.mxu0 %v1779
    %1815 = vmatmul.f32.gmra.mxu0 %v1788
    %v1816 = vpop.f32.mrf.mxu0
    %v1817 = vadd.f32 %v1785, %v1816
    %1818 = vmatmul.f32.gmra.mxu0 %v1791
    %v1819 = vpop.f32.mrf.mxu0
    %v1820 = vadd.f32 %v1785, %v1819
    %1821 = vmatmul.f32.gmra.mxu0 %v1794
    %v1822 = vpop.f32.mrf.mxu0
    %v1823 = vadd.f32 %v1785, %v1822
    %1824 = vmatmul.f32.gmra.mxu0 %v1797
    %v1825 = vpop.f32.mrf.mxu0
    %v1826 = vadd.f32 %v1785, %v1825
    %1827 = vdwg.mxu0
    %v1828 = vmul.f32 %v1817, 0.5
    %v1829 = vmul.f32 %v1820, 0.5
    %v1830 = vmul.f32 %v1823, 0.5
    %v1831 = vmul.f32 %v1826, 0.5
    %v1832 = vadd.f32 %v1530, %v1828
    %v1833 = vadd.f32 %v1533, %v1829
    %v1834 = vadd.f32 %v1536, %v1830
    %v1835 = vadd.f32 %v1539, %v1831
    %v1836 = vsel %vm1499, %v1832, 0.0
    %1837 = vadd.xlane.f32.xlu0 %v1836
    %v1838 = vpop.xlane.xlu0 %1837
    %v1839 = vsel %vm1499, %v1833, 0.0
    %1840 = vadd.xlane.f32.xlu0 %v1839
    %v1841 = vpop.xlane.xlu0 %1840
    %v1842 = vsel %vm1499, %v1834, 0.0
    %1843 = vadd.xlane.f32.xlu0 %v1842
    %v1844 = vpop.xlane.xlu0 %1843
    %v1845 = vsel %vm1499, %v1835, 0.0
    %1846 = vadd.xlane.f32.xlu0 %v1845
    %v1847 = vpop.xlane.xlu0 %1846
    %v1848 = vmul.f32 %v1838, %v1559
    %v1849 = vmul.f32 %v1841, %v1559
    %v1850 = vmul.f32 %v1844, %v1559
    %v1851 = vmul.f32 %v1847, %v1559
    %v1852 = vsub.f32 %v1832, %v1848
    %v1853 = vsub.f32 %v1833, %v1849
    %v1854 = vsub.f32 %v1834, %v1850
    %v1855 = vsub.f32 %v1835, %v1851
    %v1856 = vmul.f32 %v1852, %v1852
    %v1857 = vmul.f32 %v1853, %v1853
    %v1858 = vmul.f32 %v1854, %v1854
    %v1859 = vmul.f32 %v1855, %v1855
    %v1860 = vsel %vm1499, %v1856, 0.0
    %1861 = vadd.xlane.f32.xlu0 %v1860
    %v1862 = vpop.xlane.xlu0 %1861
    %v1863 = vsel %vm1499, %v1857, 0.0
    %1864 = vadd.xlane.f32.xlu0 %v1863
    %v1865 = vpop.xlane.xlu0 %1864
    %v1866 = vsel %vm1499, %v1858, 0.0
    %1867 = vadd.xlane.f32.xlu0 %v1866
    %v1868 = vpop.xlane.xlu0 %1867
    %v1869 = vsel %vm1499, %v1859, 0.0
    %1870 = vadd.xlane.f32.xlu0 %v1869
    %v1871 = vpop.xlane.xlu0 %1870
    %v1872 = vmul.f32 %v1862, %v1559
    %v1873 = vmul.f32 %v1865, %v1559
    %v1874 = vmul.f32 %v1868, %v1559
    %v1875 = vmul.f32 %v1871, %v1559
    %v1876 = vadd.f32 %v1872, 1e-05
    %v1877 = vadd.f32 %v1873, 1e-05
    %v1878 = vadd.f32 %v1874, 1e-05
    %v1879 = vadd.f32 %v1875, 1e-05
    %v1880 = vrsqrt.pop %v1876
    %v1881 = vmul.f32 %v1880, %v1876
    %v1882 = vmul.f32 %v1881, %v1880
    %v1883 = vmul.f32 0.5, %v1882
    %v1884 = vsub.f32 1.5, %v1883
    %v1885 = vmul.f32 %v1880, %v1884
    %vm1886 = vweird.f32 %v1876
    %vm1887 = vweird.f32 %v1880
    %vm1888 = vmor %vm1886, %vm1887
    %v1889 = vsel %vm1888, %v1880, %v1885
    %v1890 = vrsqrt.pop %v1877
    %v1891 = vmul.f32 %v1890, %v1877
    %v1892 = vmul.f32 %v1891, %v1890
    %v1893 = vmul.f32 0.5, %v1892
    %v1894 = vsub.f32 1.5, %v1893
    %v1895 = vmul.f32 %v1890, %v1894
    %vm1896 = vweird.f32 %v1877
    %vm1897 = vweird.f32 %v1890
    %vm1898 = vmor %vm1896, %vm1897
    %v1899 = vsel %vm1898, %v1890, %v1895
    %v1900 = vrsqrt.pop %v1878
    %v1901 = vmul.f32 %v1900, %v1878
    %v1902 = vmul.f32 %v1901, %v1900
    %v1903 = vmul.f32 0.5, %v1902
    %v1904 = vsub.f32 1.5, %v1903
    %v1905 = vmul.f32 %v1900, %v1904
    %vm1906 = vweird.f32 %v1878
    %vm1907 = vweird.f32 %v1900
    %vm1908 = vmor %vm1906, %vm1907
    %v1909 = vsel %vm1908, %v1900, %v1905
    %v1910 = vrsqrt.pop %v1879
    %v1911 = vmul.f32 %v1910, %v1879
    %v1912 = vmul.f32 %v1911, %v1910
    %v1913 = vmul.f32 0.5, %v1912
    %v1914 = vsub.f32 1.5, %v1913
    %v1915 = vmul.f32 %v1910, %v1914
    %vm1916 = vweird.f32 %v1879
    %vm1917 = vweird.f32 %v1910
    %vm1918 = vmor %vm1916, %vm1917
    %v1919 = vsel %vm1918, %v1910, %v1915
    %v1920 = vmul.f32 %v1852, %v1889
    %v1921 = vmul.f32 %v1853, %v1899
    %v1922 = vmul.f32 %v1854, %v1909
    %v1923 = vmul.f32 %v1855, %v1919
    %v1924 = vld [vmem:[#allocation10] sm:$0x1]
    %v1926 = vperm.slane %v1924, 0
    %v1928 = vmul.f32 %v1920, %v1926
    %v1929 = vmul.f32 %v1921, %v1926
    %v1930 = vmul.f32 %v1922, %v1926
    %v1931 = vmul.f32 %v1923, %v1926
    %v1932 = vld [vmem:[#allocation9] sm:$0x1]
    %v1934 = vperm.slane %v1932, 0
    %v1936 = vadd.f32 %v1928, %v1934
    %v1937 = vadd.f32 %v1929, %v1934
    %v1938 = vadd.f32 %v1930, %v1934
    %v1939 = vadd.f32 %v1931, %v1934
    %v1940 = vld [vmem:[#allocation16] sm:$0xff]
    %v1941 = vld [vmem:[#allocation16 + $0x8] sm:$0xff]
    %v1942 = vld [vmem:[#allocation6] sm:$0x1]
    %v1944 = vperm.slane %v1942, 0
    %v1947 = vsel %vm1499, %v1936, 0
    %v1950 = vsel %vm1499, %v1937, 0
    %v1953 = vsel %vm1499, %v1938, 0
    %v1956 = vsel %vm1499, %v1939, 0
    %1958 = vmatpush.msra.mxu0 0.0
    %1959 = vmatpush.msra.mxu0 0.0
    %1960 = vmatpush.msra.mxu0 0.0
    %1961 = vmatpush.msra.mxu0 0.0
    %1962 = vmatpush.msra.mxu0 0.0
    %1963 = vmatpush.msra.mxu0 0.0
    %1964 = vmatpush.msra.mxu0 0.0
    %1965 = vmatpush.msra.mxu0 0.0
    %1966 = vmatpush.msra.mxu0 0.0
    %1967 = vmatpush.msra.mxu0 0.0
    %1968 = vmatpush.msra.mxu0 0.0
    %1969 = vmatpush.msra.mxu0 0.0
    %1970 = vmatpush.msra.mxu0 0.0
    %1971 = vmatpush.msra.mxu0 0.0
    %1972 = vmatpush.msra.mxu0 %v1941
    %1973 = vmatpush.msra.mxu0 %v1940
    %1974 = vmatmul.f32.gmra.mxu0 %v1947
    %v1975 = vpop.f32.mrf.mxu0
    %v1976 = vadd.f32 %v1944, %v1975
    %1977 = vmatmul.f32.gmra.mxu0 %v1950
    %v1978 = vpop.f32.mrf.mxu0
    %v1979 = vadd.f32 %v1944, %v1978
    %1980 = vmatmul.f32.gmra.mxu0 %v1953
    %v1981 = vpop.f32.mrf.mxu0
    %v1982 = vadd.f32 %v1944, %v1981
    %1983 = vmatmul.f32.gmra.mxu0 %v1956
    %v1984 = vpop.f32.mrf.mxu0
    %v1985 = vadd.f32 %v1944, %v1984
    %1986 = vdwg.mxu0
    %v1987 = vld [vmem:[#allocation13] sm:$0xff]
    %v1988 = vld [vmem:[#allocation13 + $0x8] sm:$0xff]
    %v1989 = vld [vmem:[#allocation4] sm:$0x1]
    %v1991 = vperm.slane %v1989, 0
    %1993 = vmatpush.msra.mxu0 0.0
    %1994 = vmatpush.msra.mxu0 0.0
    %1995 = vmatpush.msra.mxu0 0.0
    %1996 = vmatpush.msra.mxu0 0.0
    %1997 = vmatpush.msra.mxu0 0.0
    %1998 = vmatpush.msra.mxu0 0.0
    %1999 = vmatpush.msra.mxu0 0.0
    %2000 = vmatpush.msra.mxu0 0.0
    %2001 = vmatpush.msra.mxu0 0.0
    %2002 = vmatpush.msra.mxu0 0.0
    %2003 = vmatpush.msra.mxu0 0.0
    %2004 = vmatpush.msra.mxu0 0.0
    %2005 = vmatpush.msra.mxu0 0.0
    %2006 = vmatpush.msra.mxu0 0.0
    %2007 = vmatpush.msra.mxu0 %v1988
    %2008 = vmatpush.msra.mxu0 %v1987
    %2009 = vmatmul.f32.gmra.mxu0 %v1947
    %v2010 = vpop.f32.mrf.mxu0
    %v2011 = vadd.f32 %v1991, %v2010
    %2012 = vmatmul.f32.gmra.mxu0 %v1950
    %v2013 = vpop.f32.mrf.mxu0
    %v2014 = vadd.f32 %v1991, %v2013
    %2015 = vmatmul.f32.gmra.mxu0 %v1953
    %v2016 = vpop.f32.mrf.mxu0
    %v2017 = vadd.f32 %v1991, %v2016
    %2018 = vmatmul.f32.gmra.mxu0 %v1956
    %v2019 = vpop.f32.mrf.mxu0
    %v2020 = vadd.f32 %v1991, %v2019
    %2021 = vdwg.mxu0
    %v2022 = vld [vmem:[#allocation18] sm:$0xff]
    %v2023 = vld [vmem:[#allocation18 + $0x8] sm:$0xff]
    %v2024 = vld [vmem:[#allocation7] sm:$0x1]
    %v2026 = vperm.slane %v2024, 0
    %2028 = vmatpush.msra.mxu0 0.0
    %2029 = vmatpush.msra.mxu0 0.0
    %2030 = vmatpush.msra.mxu0 0.0
    %2031 = vmatpush.msra.mxu0 0.0
    %2032 = vmatpush.msra.mxu0 0.0
    %2033 = vmatpush.msra.mxu0 0.0
    %2034 = vmatpush.msra.mxu0 0.0
    %2035 = vmatpush.msra.mxu0 0.0
    %2036 = vmatpush.msra.mxu0 0.0
    %2037 = vmatpush.msra.mxu0 0.0
    %2038 = vmatpush.msra.mxu0 0.0
    %2039 = vmatpush.msra.mxu0 0.0
    %2040 = vmatpush.msra.mxu0 0.0
    %2041 = vmatpush.msra.mxu0 0.0
    %2042 = vmatpush.msra.mxu0 %v2023
    %2043 = vmatpush.msra.mxu0 %v2022
    %2044 = vmatmul.f32.gmra.mxu0 %v1947
    %v2045 = vpop.f32.mrf.mxu0
    %v2046 = vadd.f32 %v2026, %v2045
    %2047 = vmatmul.f32.gmra.mxu0 %v1950
    %v2048 = vpop.f32.mrf.mxu0
    %v2049 = vadd.f32 %v2026, %v2048
    %2050 = vmatmul.f32.gmra.mxu0 %v1953
    %v2051 = vpop.f32.mrf.mxu0
    %v2052 = vadd.f32 %v2026, %v2051
    %2053 = vmatmul.f32.gmra.mxu0 %v1956
    %v2054 = vpop.f32.mrf.mxu0
    %v2055 = vadd.f32 %v2026, %v2054
    %2056 = vdwg.mxu0
    %vm2057 = vcmask 31744
    %v2059 = vsel %vm2057, %v1976, 0
    %v2062 = vsel %vm2057, %v1979, 0
    %v2065 = vsel %vm2057, %v1982, 0
    %v2068 = vsel %vm2057, %v1985, 0
    %v2071 = vsel %vm2057, %v2011, 0
    %v2074 = vsel %vm2057, %v2014, 0
    %v2077 = vsel %vm2057, %v2017, 0
    %v2080 = vsel %vm2057, %v2020, 0
    %2082 = vmatpush.xpose.msra.mxu0 0.0
    %2083 = vmatpush.xpose.msra.mxu0 0.0
    %2084 = vmatpush.xpose.msra.mxu0 0.0
    %2085 = vmatpush.xpose.msra.mxu0 0.0
    %2086 = vmatpush.xpose.msra.mxu0 0.0
    %2087 = vmatpush.xpose.msra.mxu0 0.0
    %2088 = vmatpush.xpose.msra.mxu0 0.0
    %2089 = vmatpush.xpose.msra.mxu0 0.0
    %2090 = vmatpush.xpose.msra.mxu0 0.0
    %2091 = vmatpush.xpose.msra.mxu0 0.0
    %2092 = vmatpush.xpose.msra.mxu0 0.0
    %2093 = vmatpush.xpose.msra.mxu0 0.0
    %2094 = vmatpush.xpose.msra.mxu0 %v2080
    %2095 = vmatpush.xpose.msra.mxu0 %v2077
    %2096 = vmatpush.xpose.msra.mxu0 %v2074
    %2097 = vmatpush.xpose.msra.mxu0 %v2071
    %2098 = vmatmul.f32.gmra.mxu0 %v2059
    %v2099 = vpop.f32.mrf.mxu0
    %v2100 = vadd.f32 0.0, %v2099
    %2101 = vmatmul.f32.gmra.mxu0 %v2062
    %v2102 = vpop.f32.mrf.mxu0
    %v2103 = vadd.f32 0.0, %v2102
    %2104 = vmatmul.f32.gmra.mxu0 %v2065
    %v2105 = vpop.f32.mrf.mxu0
    %v2106 = vadd.f32 0.0, %v2105
    %2107 = vmatmul.f32.gmra.mxu0 %v2068
    %v2108 = vpop.f32.mrf.mxu0
    %v2109 = vadd.f32 0.0, %v2108
    %2110 = vdwg.mxu0
    %v2111 = vmul.f32 %v2100, 0.5
    %v2112 = vmul.f32 %v2103, 0.5
    %v2113 = vmul.f32 %v2106, 0.5
    %v2114 = vmul.f32 %v2109, 0.5
    %v2115 = vadd.f32 %v2111, %v1210
    %v2116 = vadd.f32 %v2112, %v1211
    %v2117 = vadd.f32 %v2113, %v1212
    %v2118 = vadd.f32 %v2114, %v1213
    %v2119 = vsel %vm1228, %v2115, -inf
    %2120 = vmax.xlane.f32.xlu0 %v2119
    %v2121 = vpop.xlane.xlu0 %2120
    %v2122 = vsel %vm1228, %v2116, -inf
    %2123 = vmax.xlane.f32.xlu0 %v2122
    %v2124 = vpop.xlane.xlu0 %2123
    %v2125 = vsel %vm1228, %v2117, -inf
    %2126 = vmax.xlane.f32.xlu0 %v2125
    %v2127 = vpop.xlane.xlu0 %2126
    %v2128 = vsel %vm1228, %v2118, -inf
    %2129 = vmax.xlane.f32.xlu0 %v2128
    %v2130 = vpop.xlane.xlu0 %2129
    %v2131 = vsub.f32 %v2115, %v2121
    %v2132 = vsub.f32 %v2116, %v2124
    %v2133 = vsub.f32 %v2117, %v2127
    %v2134 = vsub.f32 %v2118, %v2130
    %v2135 = vmul.f32 %v2131, 1.442695
    %v2136 = vpow.pop %v2135
    %v2137 = vmul.f32 %v2132, 1.442695
    %v2138 = vpow.pop %v2137
    %v2139 = vmul.f32 %v2133, 1.442695
    %v2140 = vpow.pop %v2139
    %v2141 = vmul.f32 %v2134, 1.442695
    %v2142 = vpow.pop %v2141
    %v2143 = vsel %vm1228, %v2136, 0.0
    %2144 = vadd.xlane.f32.xlu0 %v2143
    %v2145 = vpop.xlane.xlu0 %2144
    %v2146 = vsel %vm1228, %v2138, 0.0
    %2147 = vadd.xlane.f32.xlu0 %v2146
    %v2148 = vpop.xlane.xlu0 %2147
    %v2149 = vsel %vm1228, %v2140, 0.0
    %2150 = vadd.xlane.f32.xlu0 %v2149
    %v2151 = vpop.xlane.xlu0 %2150
    %v2152 = vsel %vm1228, %v2142, 0.0
    %2153 = vadd.xlane.f32.xlu0 %v2152
    %v2154 = vpop.xlane.xlu0 %2153
    %v2155 = vrcp.pop %v2145
    %v2156 = vrcp.pop %v2148
    %v2157 = vrcp.pop %v2151
    %v2158 = vrcp.pop %v2154
    %v2159 = vmul.f32 %v2136, %v2155
    %v2160 = vmul.f32 %v2138, %v2156
    %v2161 = vmul.f32 %v2140, %v2157
    %v2162 = vmul.f32 %v2142, %v2158
    %v2164 = vsel %vm1228, %v2159, 0
    %v2167 = vsel %vm1228, %v2160, 0
    %v2170 = vsel %vm1228, %v2161, 0
    %v2173 = vsel %vm1228, %v2162, 0
    %2175 = vmatpush.msra.mxu0 0.0
    %2176 = vmatpush.msra.mxu0 0.0
    %2177 = vmatpush.msra.mxu0 0.0
    %2178 = vmatpush.msra.mxu0 0.0
    %2179 = vmatpush.msra.mxu0 0.0
    %2180 = vmatpush.msra.mxu0 0.0
    %2181 = vmatpush.msra.mxu0 0.0
    %2182 = vmatpush.msra.mxu0 0.0
    %2183 = vmatpush.msra.mxu0 0.0
    %2184 = vmatpush.msra.mxu0 0.0
    %2185 = vmatpush.msra.mxu0 0.0
    %2186 = vmatpush.msra.mxu0 0.0
    %2187 = vmatpush.msra.mxu0 %v2055
    %2188 = vmatpush.msra.mxu0 %v2052
    %2189 = vmatpush.msra.mxu0 %v2049
    %2190 = vmatpush.msra.mxu0 %v2046
    %2191 = vmatmul.f32.gmra.mxu0 %v2164
    %v2192 = vpop.f32.mrf.mxu0
    %v2193 = vadd.f32 0.0, %v2192
    %2194 = vmatmul.f32.gmra.mxu0 %v2167
    %v2195 = vpop.f32.mrf.mxu0
    %v2196 = vadd.f32 0.0, %v2195
    %2197 = vmatmul.f32.gmra.mxu0 %v2170
    %v2198 = vpop.f32.mrf.mxu0
    %v2199 = vadd.f32 0.0, %v2198
    %2200 = vmatmul.f32.gmra.mxu0 %v2173
    %v2201 = vpop.f32.mrf.mxu0
    %v2202 = vadd.f32 0.0, %v2201
    %2203 = vdwg.mxu0
    %v2204 = vld [vmem:[#allocation15] sm:$0xf]
    %s2205 = scalar_lea.vmem [#allocation16], 16
    %v2206 = vld [vmem:[%s2205] sm:$0xff]
    %v2207 = vld [vmem:[%s2205 + $0x8] sm:$0xff]
    %s2208 = scalar_lea.vmem [#allocation6], 1
    %v2209 = vld [vmem:[%s2208] sm:$0x1]
    %v2211 = vperm.slane %v2209, 0
    %2213 = vmatpush.msra.mxu0 0.0
    %2214 = vmatpush.msra.mxu0 0.0
    %2215 = vmatpush.msra.mxu0 0.0
    %2216 = vmatpush.msra.mxu0 0.0
    %2217 = vmatpush.msra.mxu0 0.0
    %2218 = vmatpush.msra.mxu0 0.0
    %2219 = vmatpush.msra.mxu0 0.0
    %2220 = vmatpush.msra.mxu0 0.0
    %2221 = vmatpush.msra.mxu0 0.0
    %2222 = vmatpush.msra.mxu0 0.0
    %2223 = vmatpush.msra.mxu0 0.0
    %2224 = vmatpush.msra.mxu0 0.0
    %2225 = vmatpush.msra.mxu0 0.0
    %2226 = vmatpush.msra.mxu0 0.0
    %2227 = vmatpush.msra.mxu0 %v2207
    %2228 = vmatpush.msra.mxu0 %v2206
    %2229 = vmatmul.f32.gmra.mxu0 %v1947
    %v2230 = vpop.f32.mrf.mxu0
    %v2231 = vadd.f32 %v2211, %v2230
    %2232 = vmatmul.f32.gmra.mxu0 %v1950
    %v2233 = vpop.f32.mrf.mxu0
    %v2234 = vadd.f32 %v2211, %v2233
    %2235 = vmatmul.f32.gmra.mxu0 %v1953
    %v2236 = vpop.f32.mrf.mxu0
    %v2237 = vadd.f32 %v2211, %v2236
    %2238 = vmatmul.f32.gmra.mxu0 %v1956
    %v2239 = vpop.f32.mrf.mxu0
    %v2240 = vadd.f32 %v2211, %v2239
    %2241 = vdwg.mxu0
    %s2242 = scalar_lea.vmem [#allocation13], 16
    %v2243 = vld [vmem:[%s2242] sm:$0xff]
    %v2244 = vld [vmem:[%s2242 + $0x8] sm:$0xff]
    %s2245 = scalar_lea.vmem [#allocation4], 1
    %v2246 = vld [vmem:[%s2245] sm:$0x1]
    %v2248 = vperm.slane %v2246, 0
    %2250 = vmatpush.msra.mxu0 0.0
    %2251 = vmatpush.msra.mxu0 0.0
    %2252 = vmatpush.msra.mxu0 0.0
    %2253 = vmatpush.msra.mxu0 0.0
    %2254 = vmatpush.msra.mxu0 0.0
    %2255 = vmatpush.msra.mxu0 0.0
    %2256 = vmatpush.msra.mxu0 0.0
    %2257 = vmatpush.msra.mxu0 0.0
    %2258 = vmatpush.msra.mxu0 0.0
    %2259 = vmatpush.msra.mxu0 0.0
    %2260 = vmatpush.msra.mxu0 0.0
    %2261 = vmatpush.msra.mxu0 0.0
    %2262 = vmatpush.msra.mxu0 0.0
    %2263 = vmatpush.msra.mxu0 0.0
    %2264 = vmatpush.msra.mxu0 %v2244
    %2265 = vmatpush.msra.mxu0 %v2243
    %2266 = vmatmul.f32.gmra.mxu0 %v1947
    %v2267 = vpop.f32.mrf.mxu0
    %v2268 = vadd.f32 %v2248, %v2267
    %2269 = vmatmul.f32.gmra.mxu0 %v1950
    %v2270 = vpop.f32.mrf.mxu0
    %v2271 = vadd.f32 %v2248, %v2270
    %2272 = vmatmul.f32.gmra.mxu0 %v1953
    %v2273 = vpop.f32.mrf.mxu0
    %v2274 = vadd.f32 %v2248, %v2273
    %2275 = vmatmul.f32.gmra.mxu0 %v1956
    %v2276 = vpop.f32.mrf.mxu0
    %v2277 = vadd.f32 %v2248, %v2276
    %2278 = vdwg.mxu0
    %s2279 = scalar_lea.vmem [#allocation18], 16
    %v2280 = vld [vmem:[%s2279] sm:$0xff]
    %v2281 = vld [vmem:[%s2279 + $0x8] sm:$0xff]
    %s2282 = scalar_lea.vmem [#allocation7], 1
    %v2283 = vld [vmem:[%s2282] sm:$0x1]
    %v2285 = vperm.slane %v2283, 0
    %2287 = vmatpush.msra.mxu0 0.0
    %2288 = vmatpush.msra.mxu0 0.0
    %2289 = vmatpush.msra.mxu0 0.0
    %2290 = vmatpush.msra.mxu0 0.0
    %2291 = vmatpush.msra.mxu0 0.0
    %2292 = vmatpush.msra.mxu0 0.0
    %2293 = vmatpush.msra.mxu0 0.0
    %2294 = vmatpush.msra.mxu0 0.0
    %2295 = vmatpush.msra.mxu0 0.0
    %2296 = vmatpush.msra.mxu0 0.0
    %2297 = vmatpush.msra.mxu0 0.0
    %2298 = vmatpush.msra.mxu0 0.0
    %2299 = vmatpush.msra.mxu0 0.0
    %2300 = vmatpush.msra.mxu0 0.0
    %2301 = vmatpush.msra.mxu0 %v2281
    %2302 = vmatpush.msra.mxu0 %v2280
    %2303 = vmatmul.f32.gmra.mxu0 %v1947
    %v2304 = vpop.f32.mrf.mxu0
    %v2305 = vadd.f32 %v2285, %v2304
    %2306 = vmatmul.f32.gmra.mxu0 %v1950
    %v2307 = vpop.f32.mrf.mxu0
    %v2308 = vadd.f32 %v2285, %v2307
    %2309 = vmatmul.f32.gmra.mxu0 %v1953
    %v2310 = vpop.f32.mrf.mxu0
    %v2311 = vadd.f32 %v2285, %v2310
    %2312 = vmatmul.f32.gmra.mxu0 %v1956
    %v2313 = vpop.f32.mrf.mxu0
    %v2314 = vadd.f32 %v2285, %v2313
    %2315 = vdwg.mxu0
    %v2317 = vsel %vm2057, %v2231, 0
    %v2320 = vsel %vm2057, %v2234, 0
    %v2323 = vsel %vm2057, %v2237, 0
    %v2326 = vsel %vm2057, %v2240, 0
    %v2329 = vsel %vm2057, %v2268, 0
    %v2332 = vsel %vm2057, %v2271, 0
    %v2335 = vsel %vm2057, %v2274, 0
    %v2338 = vsel %vm2057, %v2277, 0
    %2340 = vmatpush.xpose.msra.mxu0 0.0
    %2341 = vmatpush.xpose.msra.mxu0 0.0
    %2342 = vmatpush.xpose.msra.mxu0 0.0
    %2343 = vmatpush.xpose.msra.mxu0 0.0
    %2344 = vmatpush.xpose.msra.mxu0 0.0
    %2345 = vmatpush.xpose.msra.mxu0 0.0
    %2346 = vmatpush.xpose.msra.mxu0 0.0
    %2347 = vmatpush.xpose.msra.mxu0 0.0
    %2348 = vmatpush.xpose.msra.mxu0 0.0
    %2349 = vmatpush.xpose.msra.mxu0 0.0
    %2350 = vmatpush.xpose.msra.mxu0 0.0
    %2351 = vmatpush.xpose.msra.mxu0 0.0
    %2352 = vmatpush.xpose.msra.mxu0 %v2338
    %2353 = vmatpush.xpose.msra.mxu0 %v2335
    %2354 = vmatpush.xpose.msra.mxu0 %v2332
    %2355 = vmatpush.xpose.msra.mxu0 %v2329
    %2356 = vmatmul.f32.gmra.mxu0 %v2317
    %v2357 = vpop.f32.mrf.mxu0
    %v2358 = vadd.f32 0.0, %v2357
    %2359 = vmatmul.f32.gmra.mxu0 %v2320
    %v2360 = vpop.f32.mrf.mxu0
    %v2361 = vadd.f32 0.0, %v2360
    %2362 = vmatmul.f32.gmra.mxu0 %v2323
    %v2363 = vpop.f32.mrf.mxu0
    %v2364 = vadd.f32 0.0, %v2363
    %2365 = vmatmul.f32.gmra.mxu0 %v2326
    %v2366 = vpop.f32.mrf.mxu0
    %v2367 = vadd.f32 0.0, %v2366
    %2368 = vdwg.mxu0
    %v2369 = vmul.f32 %v2358, 0.5
    %v2370 = vmul.f32 %v2361, 0.5
    %v2371 = vmul.f32 %v2364, 0.5
    %v2372 = vmul.f32 %v2367, 0.5
    %v2373 = vadd.f32 %v2369, %v1210
    %v2374 = vadd.f32 %v2370, %v1211
    %v2375 = vadd.f32 %v2371, %v1212
    %v2376 = vadd.f32 %v2372, %v1213
    %v2377 = vsel %vm1228, %v2373, -inf
    %2378 = vmax.xlane.f32.xlu0 %v2377
    %v2379 = vpop.xlane.xlu0 %2378
    %v2380 = vsel %vm1228, %v2374, -inf
    %2381 = vmax.xlane.f32.xlu0 %v2380
    %v2382 = vpop.xlane.xlu0 %2381
    %v2383 = vsel %vm1228, %v2375, -inf
    %2384 = vmax.xlane.f32.xlu0 %v2383
    %v2385 = vpop.xlane.xlu0 %2384
    %v2386 = vsel %vm1228, %v2376, -inf
    %2387 = vmax.xlane.f32.xlu0 %v2386
    %v2388 = vpop.xlane.xlu0 %2387
    %v2389 = vsub.f32 %v2373, %v2379
    %v2390 = vsub.f32 %v2374, %v2382
    %v2391 = vsub.f32 %v2375, %v2385
    %v2392 = vsub.f32 %v2376, %v2388
    %v2393 = vmul.f32 %v2389, 1.442695
    %v2394 = vpow.pop %v2393
    %v2395 = vmul.f32 %v2390, 1.442695
    %v2396 = vpow.pop %v2395
    %v2397 = vmul.f32 %v2391, 1.442695
    %v2398 = vpow.pop %v2397
    %v2399 = vmul.f32 %v2392, 1.442695
    %v2400 = vpow.pop %v2399
    %v2401 = vsel %vm1228, %v2394, 0.0
    %2402 = vadd.xlane.f32.xlu0 %v2401
    %v2403 = vpop.xlane.xlu0 %2402
    %v2404 = vsel %vm1228, %v2396, 0.0
    %2405 = vadd.xlane.f32.xlu0 %v2404
    %v2406 = vpop.xlane.xlu0 %2405
    %v2407 = vsel %vm1228, %v2398, 0.0
    %2408 = vadd.xlane.f32.xlu0 %v2407
    %v2409 = vpop.xlane.xlu0 %2408
    %v2410 = vsel %vm1228, %v2400, 0.0
    %2411 = vadd.xlane.f32.xlu0 %v2410
    %v2412 = vpop.xlane.xlu0 %2411
    %v2413 = vrcp.pop %v2403
    %v2414 = vrcp.pop %v2406
    %v2415 = vrcp.pop %v2409
    %v2416 = vrcp.pop %v2412
    %v2417 = vmul.f32 %v2394, %v2413
    %v2418 = vmul.f32 %v2396, %v2414
    %v2419 = vmul.f32 %v2398, %v2415
    %v2420 = vmul.f32 %v2400, %v2416
    %v2422 = vsel %vm1228, %v2417, 0
    %v2425 = vsel %vm1228, %v2418, 0
    %v2428 = vsel %vm1228, %v2419, 0
    %v2431 = vsel %vm1228, %v2420, 0
    %2433 = vmatpush.msra.mxu0 0.0
    %2434 = vmatpush.msra.mxu0 0.0
    %2435 = vmatpush.msra.mxu0 0.0
    %2436 = vmatpush.msra.mxu0 0.0
    %2437 = vmatpush.msra.mxu0 0.0
    %2438 = vmatpush.msra.mxu0 0.0
    %2439 = vmatpush.msra.mxu0 0.0
    %2440 = vmatpush.msra.mxu0 0.0
    %2441 = vmatpush.msra.mxu0 0.0
    %2442 = vmatpush.msra.mxu0 0.0
    %2443 = vmatpush.msra.mxu0 0.0
    %2444 = vmatpush.msra.mxu0 0.0
    %2445 = vmatpush.msra.mxu0 %v2314
    %2446 = vmatpush.msra.mxu0 %v2311
    %2447 = vmatpush.msra.mxu0 %v2308
    %2448 = vmatpush.msra.mxu0 %v2305
    %2449 = vmatmul.f32.gmra.mxu0 %v2422
    %v2450 = vpop.f32.mrf.mxu0
    %v2451 = vadd.f32 0.0, %v2450
    %2452 = vmatmul.f32.gmra.mxu0 %v2425
    %v2453 = vpop.f32.mrf.mxu0
    %v2454 = vadd.f32 0.0, %v2453
    %2455 = vmatmul.f32.gmra.mxu0 %v2428
    %v2456 = vpop.f32.mrf.mxu0
    %v2457 = vadd.f32 0.0, %v2456
    %2458 = vmatmul.f32.gmra.mxu0 %v2431
    %v2459 = vpop.f32.mrf.mxu0
    %v2460 = vadd.f32 0.0, %v2459
    %2461 = vdwg.mxu0
    %s2462 = scalar_lea.vmem [#allocation15], 4
    %v2463 = vld [vmem:[%s2462] sm:$0xf]
    %v2465 = vsel %vm2057, %v2451, 0
    %v2468 = vsel %vm2057, %v2454, 0
    %v2471 = vsel %vm2057, %v2457, 0
    %v2474 = vsel %vm2057, %v2460, 0
    %vm2476 = vcmask 1043456
    %v2478 = vsel %vm2476, %v2463, 0
    %2480 = vmatpush.msra.mxu0 0.0
    %2481 = vmatpush.msra.mxu0 0.0
    %2482 = vmatpush.msra.mxu0 0.0
    %2483 = vmatpush.msra.mxu0 0.0
    %2484 = vmatpush.msra.mxu0 0.0
    %2485 = vmatpush.msra.mxu0 0.0
    %2486 = vmatpush.msra.mxu0 0.0
    %2487 = vmatpush.msra.mxu0 0.0
    %2488 = vmatpush.msra.mxu0 0.0
    %2489 = vmatpush.msra.mxu0 0.0
    %2490 = vmatpush.msra.mxu0 0.0
    %2491 = vmatpush.msra.mxu0 0.0
    %2492 = vmatpush.msra.mxu0 0.0
    %2493 = vmatpush.msra.mxu0 0.0
    %2494 = vmatpush.msra.mxu0 0.0
    %2495 = vmatpush.msra.mxu0 %v2478
    %2496 = vmatmul.f32.gmra.mxu0 %v2465
    %v2497 = vpop.f32.mrf.mxu0
    %v2498 = vadd.f32 0.0, %v2497
    %2499 = vmatmul.f32.gmra.mxu0 %v2468
    %v2500 = vpop.f32.mrf.mxu0
    %v2501 = vadd.f32 0.0, %v2500
    %2502 = vmatmul.f32.gmra.mxu0 %v2471
    %v2503 = vpop.f32.mrf.mxu0
    %v2504 = vadd.f32 0.0, %v2503
    %2505 = vmatmul.f32.gmra.mxu0 %v2474
    %v2506 = vpop.f32.mrf.mxu0
    %v2507 = vadd.f32 0.0, %v2506
    %2508 = vdwg.mxu0
    %v2510 = vsel %vm2057, %v2193, 0
    %v2513 = vsel %vm2057, %v2196, 0
    %v2516 = vsel %vm2057, %v2199, 0
    %v2519 = vsel %vm2057, %v2202, 0
    %v2522 = vsel %vm2476, %v2204, 0
    %2524 = vmatpush.msra.mxu0 0.0
    %2525 = vmatpush.msra.mxu0 0.0
    %2526 = vmatpush.msra.mxu0 0.0
    %2527 = vmatpush.msra.mxu0 0.0
    %2528 = vmatpush.msra.mxu0 0.0
    %2529 = vmatpush.msra.mxu0 0.0
    %2530 = vmatpush.msra.mxu0 0.0
    %2531 = vmatpush.msra.mxu0 0.0
    %2532 = vmatpush.msra.mxu0 0.0
    %2533 = vmatpush.msra.mxu0 0.0
    %2534 = vmatpush.msra.mxu0 0.0
    %2535 = vmatpush.msra.mxu0 0.0
    %2536 = vmatpush.msra.mxu0 0.0
    %2537 = vmatpush.msra.mxu0 0.0
    %2538 = vmatpush.msra.mxu0 0.0
    %2539 = vmatpush.msra.mxu0 %v2522
    %2540 = vmatmul.f32.gmra.mxu0 %v2510
    %v2541 = vpop.f32.mrf.mxu0
    %v2542 = vadd.f32 %v2498, %v2541
    %2543 = vmatmul.f32.gmra.mxu0 %v2513
    %v2544 = vpop.f32.mrf.mxu0
    %v2545 = vadd.f32 %v2501, %v2544
    %2546 = vmatmul.f32.gmra.mxu0 %v2516
    %v2547 = vpop.f32.mrf.mxu0
    %v2548 = vadd.f32 %v2504, %v2547
    %2549 = vmatmul.f32.gmra.mxu0 %v2519
    %v2550 = vpop.f32.mrf.mxu0
    %v2551 = vadd.f32 %v2507, %v2550
    %2552 = vdwg.mxu0
    %s2553 = scalar_lea.vmem [#allocation16], 32
    %v2554 = vld [vmem:[%s2553] sm:$0xff]
    %v2555 = vld [vmem:[%s2553 + $0x8] sm:$0xff]
    %s2556 = scalar_lea.vmem [#allocation6], 2
    %v2557 = vld [vmem:[%s2556] sm:$0x1]
    %v2559 = vperm.slane %v2557, 0
    %2561 = vmatpush.msra.mxu0 0.0
    %2562 = vmatpush.msra.mxu0 0.0
    %2563 = vmatpush.msra.mxu0 0.0
    %2564 = vmatpush.msra.mxu0 0.0
    %2565 = vmatpush.msra.mxu0 0.0
    %2566 = vmatpush.msra.mxu0 0.0
    %2567 = vmatpush.msra.mxu0 0.0
    %2568 = vmatpush.msra.mxu0 0.0
    %2569 = vmatpush.msra.mxu0 0.0
    %2570 = vmatpush.msra.mxu0 0.0
    %2571 = vmatpush.msra.mxu0 0.0
    %2572 = vmatpush.msra.mxu0 0.0
    %2573 = vmatpush.msra.mxu0 0.0
    %2574 = vmatpush.msra.mxu0 0.0
    %2575 = vmatpush.msra.mxu0 %v2555
    %2576 = vmatpush.msra.mxu0 %v2554
    %2577 = vmatmul.f32.gmra.mxu0 %v1947
    %v2578 = vpop.f32.mrf.mxu0
    %v2579 = vadd.f32 %v2559, %v2578
    %2580 = vmatmul.f32.gmra.mxu0 %v1950
    %v2581 = vpop.f32.mrf.mxu0
    %v2582 = vadd.f32 %v2559, %v2581
    %2583 = vmatmul.f32.gmra.mxu0 %v1953
    %v2584 = vpop.f32.mrf.mxu0
    %v2585 = vadd.f32 %v2559, %v2584
    %2586 = vmatmul.f32.gmra.mxu0 %v1956
    %v2587 = vpop.f32.mrf.mxu0
    %v2588 = vadd.f32 %v2559, %v2587
    %2589 = vdwg.mxu0
    %s2590 = scalar_lea.vmem [#allocation13], 32
    %v2591 = vld [vmem:[%s2590] sm:$0xff]
    %v2592 = vld [vmem:[%s2590 + $0x8] sm:$0xff]
    %s2593 = scalar_lea.vmem [#allocation4], 2
    %v2594 = vld [vmem:[%s2593] sm:$0x1]
    %v2596 = vperm.slane %v2594, 0
    %2598 = vmatpush.msra.mxu0 0.0
    %2599 = vmatpush.msra.mxu0 0.0
    %2600 = vmatpush.msra.mxu0 0.0
    %2601 = vmatpush.msra.mxu0 0.0
    %2602 = vmatpush.msra.mxu0 0.0
    %2603 = vmatpush.msra.mxu0 0.0
    %2604 = vmatpush.msra.mxu0 0.0
    %2605 = vmatpush.msra.mxu0 0.0
    %2606 = vmatpush.msra.mxu0 0.0
    %2607 = vmatpush.msra.mxu0 0.0
    %2608 = vmatpush.msra.mxu0 0.0
    %2609 = vmatpush.msra.mxu0 0.0
    %2610 = vmatpush.msra.mxu0 0.0
    %2611 = vmatpush.msra.mxu0 0.0
    %2612 = vmatpush.msra.mxu0 %v2592
    %2613 = vmatpush.msra.mxu0 %v2591
    %2614 = vmatmul.f32.gmra.mxu0 %v1947
    %v2615 = vpop.f32.mrf.mxu0
    %v2616 = vadd.f32 %v2596, %v2615
    %2617 = vmatmul.f32.gmra.mxu0 %v1950
    %v2618 = vpop.f32.mrf.mxu0
    %v2619 = vadd.f32 %v2596, %v2618
    %2620 = vmatmul.f32.gmra.mxu0 %v1953
    %v2621 = vpop.f32.mrf.mxu0
    %v2622 = vadd.f32 %v2596, %v2621
    %2623 = vmatmul.f32.gmra.mxu0 %v1956
    %v2624 = vpop.f32.mrf.mxu0
    %v2625 = vadd.f32 %v2596, %v2624
    %2626 = vdwg.mxu0
    %s2627 = scalar_lea.vmem [#allocation18], 32
    %v2628 = vld [vmem:[%s2627] sm:$0xff]
    %v2629 = vld [vmem:[%s2627 + $0x8] sm:$0xff]
    %s2630 = scalar_lea.vmem [#allocation7], 2
    %v2631 = vld [vmem:[%s2630] sm:$0x1]
    %v2633 = vperm.slane %v2631, 0
    %2635 = vmatpush.msra.mxu0 0.0
    %2636 = vmatpush.msra.mxu0 0.0
    %2637 = vmatpush.msra.mxu0 0.0
    %2638 = vmatpush.msra.mxu0 0.0
    %2639 = vmatpush.msra.mxu0 0.0
    %2640 = vmatpush.msra.mxu0 0.0
    %2641 = vmatpush.msra.mxu0 0.0
    %2642 = vmatpush.msra.mxu0 0.0
    %2643 = vmatpush.msra.mxu0 0.0
    %2644 = vmatpush.msra.mxu0 0.0
    %2645 = vmatpush.msra.mxu0 0.0
    %2646 = vmatpush.msra.mxu0 0.0
    %2647 = vmatpush.msra.mxu0 0.0
    %2648 = vmatpush.msra.mxu0 0.0
    %2649 = vmatpush.msra.mxu0 %v2629
    %2650 = vmatpush.msra.mxu0 %v2628
    %2651 = vmatmul.f32.gmra.mxu0 %v1947
    %v2652 = vpop.f32.mrf.mxu0
    %v2653 = vadd.f32 %v2633, %v2652
    %2654 = vmatmul.f32.gmra.mxu0 %v1950
    %v2655 = vpop.f32.mrf.mxu0
    %v2656 = vadd.f32 %v2633, %v2655
    %2657 = vmatmul.f32.gmra.mxu0 %v1953
    %v2658 = vpop.f32.mrf.mxu0
    %v2659 = vadd.f32 %v2633, %v2658
    %2660 = vmatmul.f32.gmra.mxu0 %v1956
    %v2661 = vpop.f32.mrf.mxu0
    %v2662 = vadd.f32 %v2633, %v2661
    %2663 = vdwg.mxu0
    %v2665 = vsel %vm2057, %v2579, 0
    %v2668 = vsel %vm2057, %v2582, 0
    %v2671 = vsel %vm2057, %v2585, 0
    %v2674 = vsel %vm2057, %v2588, 0
    %v2677 = vsel %vm2057, %v2616, 0
    %v2680 = vsel %vm2057, %v2619, 0
    %v2683 = vsel %vm2057, %v2622, 0
    %v2686 = vsel %vm2057, %v2625, 0
    %2688 = vmatpush.xpose.msra.mxu0 0.0
    %2689 = vmatpush.xpose.msra.mxu0 0.0
    %2690 = vmatpush.xpose.msra.mxu0 0.0
    %2691 = vmatpush.xpose.msra.mxu0 0.0
    %2692 = vmatpush.xpose.msra.mxu0 0.0
    %2693 = vmatpush.xpose.msra.mxu0 0.0
    %2694 = vmatpush.xpose.msra.mxu0 0.0
    %2695 = vmatpush.xpose.msra.mxu0 0.0
    %2696 = vmatpush.xpose.msra.mxu0 0.0
    %2697 = vmatpush.xpose.msra.mxu0 0.0
    %2698 = vmatpush.xpose.msra.mxu0 0.0
    %2699 = vmatpush.xpose.msra.mxu0 0.0
    %2700 = vmatpush.xpose.msra.mxu0 %v2686
    %2701 = vmatpush.xpose.msra.mxu0 %v2683
    %2702 = vmatpush.xpose.msra.mxu0 %v2680
    %2703 = vmatpush.xpose.msra.mxu0 %v2677
    %2704 = vmatmul.f32.gmra.mxu0 %v2665
    %v2705 = vpop.f32.mrf.mxu0
    %v2706 = vadd.f32 0.0, %v2705
    %2707 = vmatmul.f32.gmra.mxu0 %v2668
    %v2708 = vpop.f32.mrf.mxu0
    %v2709 = vadd.f32 0.0, %v2708
    %2710 = vmatmul.f32.gmra.mxu0 %v2671
    %v2711 = vpop.f32.mrf.mxu0
    %v2712 = vadd.f32 0.0, %v2711
    %2713 = vmatmul.f32.gmra.mxu0 %v2674
    %v2714 = vpop.f32.mrf.mxu0
    %v2715 = vadd.f32 0.0, %v2714
    %2716 = vdwg.mxu0
    %v2717 = vmul.f32 %v2706, 0.5
    %v2718 = vmul.f32 %v2709, 0.5
    %v2719 = vmul.f32 %v2712, 0.5
    %v2720 = vmul.f32 %v2715, 0.5
    %v2721 = vadd.f32 %v2717, %v1210
    %v2722 = vadd.f32 %v2718, %v1211
    %v2723 = vadd.f32 %v2719, %v1212
    %v2724 = vadd.f32 %v2720, %v1213
    %v2725 = vsel %vm1228, %v2721, -inf
    %2726 = vmax.xlane.f32.xlu0 %v2725
    %v2727 = vpop.xlane.xlu0 %2726
    %v2728 = vsel %vm1228, %v2722, -inf
    %2729 = vmax.xlane.f32.xlu0 %v2728
    %v2730 = vpop.xlane.xlu0 %2729
    %v2731 = vsel %vm1228, %v2723, -inf
    %2732 = vmax.xlane.f32.xlu0 %v2731
    %v2733 = vpop.xlane.xlu0 %2732
    %v2734 = vsel %vm1228, %v2724, -inf
    %2735 = vmax.xlane.f32.xlu0 %v2734
    %v2736 = vpop.xlane.xlu0 %2735
    %v2737 = vsub.f32 %v2721, %v2727
    %v2738 = vsub.f32 %v2722, %v2730
    %v2739 = vsub.f32 %v2723, %v2733
    %v2740 = vsub.f32 %v2724, %v2736
    %v2741 = vmul.f32 %v2737, 1.442695
    %v2742 = vpow.pop %v2741
    %v2743 = vmul.f32 %v2738, 1.442695
    %v2744 = vpow.pop %v2743
    %v2745 = vmul.f32 %v2739, 1.442695
    %v2746 = vpow.pop %v2745
    %v2747 = vmul.f32 %v2740, 1.442695
    %v2748 = vpow.pop %v2747
    %v2749 = vsel %vm1228, %v2742, 0.0
    %2750 = vadd.xlane.f32.xlu0 %v2749
    %v2751 = vpop.xlane.xlu0 %2750
    %v2752 = vsel %vm1228, %v2744, 0.0
    %2753 = vadd.xlane.f32.xlu0 %v2752
    %v2754 = vpop.xlane.xlu0 %2753
    %v2755 = vsel %vm1228, %v2746, 0.0
    %2756 = vadd.xlane.f32.xlu0 %v2755
    %v2757 = vpop.xlane.xlu0 %2756
    %v2758 = vsel %vm1228, %v2748, 0.0
    %2759 = vadd.xlane.f32.xlu0 %v2758
    %v2760 = vpop.xlane.xlu0 %2759
    %v2761 = vrcp.pop %v2751
    %v2762 = vrcp.pop %v2754
    %v2763 = vrcp.pop %v2757
    %v2764 = vrcp.pop %v2760
    %v2765 = vmul.f32 %v2742, %v2761
    %v2766 = vmul.f32 %v2744, %v2762
    %v2767 = vmul.f32 %v2746, %v2763
    %v2768 = vmul.f32 %v2748, %v2764
    %v2770 = vsel %vm1228, %v2765, 0
    %v2773 = vsel %vm1228, %v2766, 0
    %v2776 = vsel %vm1228, %v2767, 0
    %v2779 = vsel %vm1228, %v2768, 0
    %2781 = vmatpush.msra.mxu0 0.0
    %2782 = vmatpush.msra.mxu0 0.0
    %2783 = vmatpush.msra.mxu0 0.0
    %2784 = vmatpush.msra.mxu0 0.0
    %2785 = vmatpush.msra.mxu0 0.0
    %2786 = vmatpush.msra.mxu0 0.0
    %2787 = vmatpush.msra.mxu0 0.0
    %2788 = vmatpush.msra.mxu0 0.0
    %2789 = vmatpush.msra.mxu0 0.0
    %2790 = vmatpush.msra.mxu0 0.0
    %2791 = vmatpush.msra.mxu0 0.0
    %2792 = vmatpush.msra.mxu0 0.0
    %2793 = vmatpush.msra.mxu0 %v2662
    %2794 = vmatpush.msra.mxu0 %v2659
    %2795 = vmatpush.msra.mxu0 %v2656
    %2796 = vmatpush.msra.mxu0 %v2653
    %2797 = vmatmul.f32.gmra.mxu0 %v2770
    %v2798 = vpop.f32.mrf.mxu0
    %v2799 = vadd.f32 0.0, %v2798
    %2800 = vmatmul.f32.gmra.mxu0 %v2773
    %v2801 = vpop.f32.mrf.mxu0
    %v2802 = vadd.f32 0.0, %v2801
    %2803 = vmatmul.f32.gmra.mxu0 %v2776
    %v2804 = vpop.f32.mrf.mxu0
    %v2805 = vadd.f32 0.0, %v2804
    %2806 = vmatmul.f32.gmra.mxu0 %v2779
    %v2807 = vpop.f32.mrf.mxu0
    %v2808 = vadd.f32 0.0, %v2807
    %2809 = vdwg.mxu0
    %s2810 = scalar_lea.vmem [#allocation15], 8
    %v2811 = vld [vmem:[%s2810] sm:$0xf]
    %v2813 = vsel %vm2057, %v2799, 0
    %v2816 = vsel %vm2057, %v2802, 0
    %v2819 = vsel %vm2057, %v2805, 0
    %v2822 = vsel %vm2057, %v2808, 0
    %v2825 = vsel %vm2476, %v2811, 0
    %2827 = vmatpush.msra.mxu0 0.0
    %2828 = vmatpush.msra.mxu0 0.0
    %2829 = vmatpush.msra.mxu0 0.0
    %2830 = vmatpush.msra.mxu0 0.0
    %2831 = vmatpush.msra.mxu0 0.0
    %2832 = vmatpush.msra.mxu0 0.0
    %2833 = vmatpush.msra.mxu0 0.0
    %2834 = vmatpush.msra.mxu0 0.0
    %2835 = vmatpush.msra.mxu0 0.0
    %2836 = vmatpush.msra.mxu0 0.0
    %2837 = vmatpush.msra.mxu0 0.0
    %2838 = vmatpush.msra.mxu0 0.0
    %2839 = vmatpush.msra.mxu0 0.0
    %2840 = vmatpush.msra.mxu0 0.0
    %2841 = vmatpush.msra.mxu0 0.0
    %2842 = vmatpush.msra.mxu0 %v2825
    %2843 = vmatmul.f32.gmra.mxu0 %v2813
    %v2844 = vpop.f32.mrf.mxu0
    %v2845 = vadd.f32 0.0, %v2844
    %2846 = vmatmul.f32.gmra.mxu0 %v2816
    %v2847 = vpop.f32.mrf.mxu0
    %v2848 = vadd.f32 0.0, %v2847
    %2849 = vmatmul.f32.gmra.mxu0 %v2819
    %v2850 = vpop.f32.mrf.mxu0
    %v2851 = vadd.f32 0.0, %v2850
    %2852 = vmatmul.f32.gmra.mxu0 %v2822
    %v2853 = vpop.f32.mrf.mxu0
    %v2854 = vadd.f32 0.0, %v2853
    %2855 = vdwg.mxu0
    %v2856 = vadd.f32 %v2542, %v2845
    %v2857 = vadd.f32 %v2545, %v2848
    %v2858 = vadd.f32 %v2548, %v2851
    %v2859 = vadd.f32 %v2551, %v2854
    %s2860 = scalar_lea.vmem [#allocation16], 48
    %v2861 = vld [vmem:[%s2860] sm:$0xff]
    %v2862 = vld [vmem:[%s2860 + $0x8] sm:$0xff]
    %s2863 = scalar_lea.vmem [#allocation6], 3
    %v2864 = vld [vmem:[%s2863] sm:$0x1]
    %v2866 = vperm.slane %v2864, 0
    %2868 = vmatpush.msra.mxu0 0.0
    %2869 = vmatpush.msra.mxu0 0.0
    %2870 = vmatpush.msra.mxu0 0.0
    %2871 = vmatpush.msra.mxu0 0.0
    %2872 = vmatpush.msra.mxu0 0.0
    %2873 = vmatpush.msra.mxu0 0.0
    %2874 = vmatpush.msra.mxu0 0.0
    %2875 = vmatpush.msra.mxu0 0.0
    %2876 = vmatpush.msra.mxu0 0.0
    %2877 = vmatpush.msra.mxu0 0.0
    %2878 = vmatpush.msra.mxu0 0.0
    %2879 = vmatpush.msra.mxu0 0.0
    %2880 = vmatpush.msra.mxu0 0.0
    %2881 = vmatpush.msra.mxu0 0.0
    %2882 = vmatpush.msra.mxu0 %v2862
    %2883 = vmatpush.msra.mxu0 %v2861
    %2884 = vmatmul.f32.gmra.mxu0 %v1947
    %v2885 = vpop.f32.mrf.mxu0
    %v2886 = vadd.f32 %v2866, %v2885
    %2887 = vmatmul.f32.gmra.mxu0 %v1950
    %v2888 = vpop.f32.mrf.mxu0
    %v2889 = vadd.f32 %v2866, %v2888
    %2890 = vmatmul.f32.gmra.mxu0 %v1953
    %v2891 = vpop.f32.mrf.mxu0
    %v2892 = vadd.f32 %v2866, %v2891
    %2893 = vmatmul.f32.gmra.mxu0 %v1956
    %v2894 = vpop.f32.mrf.mxu0
    %v2895 = vadd.f32 %v2866, %v2894
    %2896 = vdwg.mxu0
    %s2897 = scalar_lea.vmem [#allocation13], 48
    %v2898 = vld [vmem:[%s2897] sm:$0xff]
    %v2899 = vld [vmem:[%s2897 + $0x8] sm:$0xff]
    %s2900 = scalar_lea.vmem [#allocation4], 3
    %v2901 = vld [vmem:[%s2900] sm:$0x1]
    %v2903 = vperm.slane %v2901, 0
    %2905 = vmatpush.msra.mxu0 0.0
    %2906 = vmatpush.msra.mxu0 0.0
    %2907 = vmatpush.msra.mxu0 0.0
    %2908 = vmatpush.msra.mxu0 0.0
    %2909 = vmatpush.msra.mxu0 0.0
    %2910 = vmatpush.msra.mxu0 0.0
    %2911 = vmatpush.msra.mxu0 0.0
    %2912 = vmatpush.msra.mxu0 0.0
    %2913 = vmatpush.msra.mxu0 0.0
    %2914 = vmatpush.msra.mxu0 0.0
    %2915 = vmatpush.msra.mxu0 0.0
    %2916 = vmatpush.msra.mxu0 0.0
    %2917 = vmatpush.msra.mxu0 0.0
    %2918 = vmatpush.msra.mxu0 0.0
    %2919 = vmatpush.msra.mxu0 %v2899
    %2920 = vmatpush.msra.mxu0 %v2898
    %2921 = vmatmul.f32.gmra.mxu0 %v1947
    %v2922 = vpop.f32.mrf.mxu0
    %v2923 = vadd.f32 %v2903, %v2922
    %2924 = vmatmul.f32.gmra.mxu0 %v1950
    %v2925 = vpop.f32.mrf.mxu0
    %v2926 = vadd.f32 %v2903, %v2925
    %2927 = vmatmul.f32.gmra.mxu0 %v1953
    %v2928 = vpop.f32.mrf.mxu0
    %v2929 = vadd.f32 %v2903, %v2928
    %2930 = vmatmul.f32.gmra.mxu0 %v1956
    %v2931 = vpop.f32.mrf.mxu0
    %v2932 = vadd.f32 %v2903, %v2931
    %2933 = vdwg.mxu0
    %s2934 = scalar_lea.vmem [#allocation18], 48
    %v2935 = vld [vmem:[%s2934] sm:$0xff]
    %v2936 = vld [vmem:[%s2934 + $0x8] sm:$0xff]
    %s2937 = scalar_lea.vmem [#allocation7], 3
    %v2938 = vld [vmem:[%s2937] sm:$0x1]
    %v2940 = vperm.slane %v2938, 0
    %2942 = vmatpush.msra.mxu0 0.0
    %2943 = vmatpush.msra.mxu0 0.0
    %2944 = vmatpush.msra.mxu0 0.0
    %2945 = vmatpush.msra.mxu0 0.0
    %2946 = vmatpush.msra.mxu0 0.0
    %2947 = vmatpush.msra.mxu0 0.0
    %2948 = vmatpush.msra.mxu0 0.0
    %2949 = vmatpush.msra.mxu0 0.0
    %2950 = vmatpush.msra.mxu0 0.0
    %2951 = vmatpush.msra.mxu0 0.0
    %2952 = vmatpush.msra.mxu0 0.0
    %2953 = vmatpush.msra.mxu0 0.0
    %2954 = vmatpush.msra.mxu0 0.0
    %2955 = vmatpush.msra.mxu0 0.0
    %2956 = vmatpush.msra.mxu0 %v2936
    %2957 = vmatpush.msra.mxu0 %v2935
    %2958 = vmatmul.f32.gmra.mxu0 %v1947
    %v2959 = vpop.f32.mrf.mxu0
    %v2960 = vadd.f32 %v2940, %v2959
    %2961 = vmatmul.f32.gmra.mxu0 %v1950
    %v2962 = vpop.f32.mrf.mxu0
    %v2963 = vadd.f32 %v2940, %v2962
    %2964 = vmatmul.f32.gmra.mxu0 %v1953
    %v2965 = vpop.f32.mrf.mxu0
    %v2966 = vadd.f32 %v2940, %v2965
    %2967 = vmatmul.f32.gmra.mxu0 %v1956
    %v2968 = vpop.f32.mrf.mxu0
    %v2969 = vadd.f32 %v2940, %v2968
    %2970 = vdwg.mxu0
    %v2972 = vsel %vm2057, %v2886, 0
    %v2975 = vsel %vm2057, %v2889, 0
    %v2978 = vsel %vm2057, %v2892, 0
    %v2981 = vsel %vm2057, %v2895, 0
    %v2984 = vsel %vm2057, %v2923, 0
    %v2987 = vsel %vm2057, %v2926, 0
    %v2990 = vsel %vm2057, %v2929, 0
    %v2993 = vsel %vm2057, %v2932, 0
    %2995 = vmatpush.xpose.msra.mxu0 0.0
    %2996 = vmatpush.xpose.msra.mxu0 0.0
    %2997 = vmatpush.xpose.msra.mxu0 0.0
    %2998 = vmatpush.xpose.msra.mxu0 0.0
    %2999 = vmatpush.xpose.msra.mxu0 0.0
    %3000 = vmatpush.xpose.msra.mxu0 0.0
    %3001 = vmatpush.xpose.msra.mxu0 0.0
    %3002 = vmatpush.xpose.msra.mxu0 0.0
    %3003 = vmatpush.xpose.msra.mxu0 0.0
    %3004 = vmatpush.xpose.msra.mxu0 0.0
    %3005 = vmatpush.xpose.msra.mxu0 0.0
    %3006 = vmatpush.xpose.msra.mxu0 0.0
    %3007 = vmatpush.xpose.msra.mxu0 %v2993
    %3008 = vmatpush.xpose.msra.mxu0 %v2990
    %3009 = vmatpush.xpose.msra.mxu0 %v2987
    %3010 = vmatpush.xpose.msra.mxu0 %v2984
    %3011 = vmatmul.f32.gmra.mxu0 %v2972
    %v3012 = vpop.f32.mrf.mxu0
    %v3013 = vadd.f32 0.0, %v3012
    %3014 = vmatmul.f32.gmra.mxu0 %v2975
    %v3015 = vpop.f32.mrf.mxu0
    %v3016 = vadd.f32 0.0, %v3015
    %3017 = vmatmul.f32.gmra.mxu0 %v2978
    %v3018 = vpop.f32.mrf.mxu0
    %v3019 = vadd.f32 0.0, %v3018
    %3020 = vmatmul.f32.gmra.mxu0 %v2981
    %v3021 = vpop.f32.mrf.mxu0
    %v3022 = vadd.f32 0.0, %v3021
    %3023 = vdwg.mxu0
    %v3024 = vmul.f32 %v3013, 0.5
    %v3025 = vmul.f32 %v3016, 0.5
    %v3026 = vmul.f32 %v3019, 0.5
    %v3027 = vmul.f32 %v3022, 0.5
    %v3028 = vadd.f32 %v3024, %v1210
    %v3029 = vadd.f32 %v3025, %v1211
    %v3030 = vadd.f32 %v3026, %v1212
    %v3031 = vadd.f32 %v3027, %v1213
    %v3032 = vsel %vm1228, %v3028, -inf
    %3033 = vmax.xlane.f32.xlu0 %v3032
    %v3034 = vpop.xlane.xlu0 %3033
    %v3035 = vsel %vm1228, %v3029, -inf
    %3036 = vmax.xlane.f32.xlu0 %v3035
    %v3037 = vpop.xlane.xlu0 %3036
    %v3038 = vsel %vm1228, %v3030, -inf
    %3039 = vmax.xlane.f32.xlu0 %v3038
    %v3040 = vpop.xlane.xlu0 %3039
    %v3041 = vsel %vm1228, %v3031, -inf
    %3042 = vmax.xlane.f32.xlu0 %v3041
    %v3043 = vpop.xlane.xlu0 %3042
    %v3044 = vsub.f32 %v3028, %v3034
    %v3045 = vsub.f32 %v3029, %v3037
    %v3046 = vsub.f32 %v3030, %v3040
    %v3047 = vsub.f32 %v3031, %v3043
    %v3048 = vmul.f32 %v3044, 1.442695
    %v3049 = vpow.pop %v3048
    %v3050 = vmul.f32 %v3045, 1.442695
    %v3051 = vpow.pop %v3050
    %v3052 = vmul.f32 %v3046, 1.442695
    %v3053 = vpow.pop %v3052
    %v3054 = vmul.f32 %v3047, 1.442695
    %v3055 = vpow.pop %v3054
    %v3056 = vsel %vm1228, %v3049, 0.0
    %3057 = vadd.xlane.f32.xlu0 %v3056
    %v3058 = vpop.xlane.xlu0 %3057
    %v3059 = vsel %vm1228, %v3051, 0.0
    %3060 = vadd.xlane.f32.xlu0 %v3059
    %v3061 = vpop.xlane.xlu0 %3060
    %v3062 = vsel %vm1228, %v3053, 0.0
    %3063 = vadd.xlane.f32.xlu0 %v3062
    %v3064 = vpop.xlane.xlu0 %3063
    %v3065 = vsel %vm1228, %v3055, 0.0
    %3066 = vadd.xlane.f32.xlu0 %v3065
    %v3067 = vpop.xlane.xlu0 %3066
    %v3068 = vrcp.pop %v3058
    %v3069 = vrcp.pop %v3061
    %v3070 = vrcp.pop %v3064
    %v3071 = vrcp.pop %v3067
    %v3072 = vmul.f32 %v3049, %v3068
    %v3073 = vmul.f32 %v3051, %v3069
    %v3074 = vmul.f32 %v3053, %v3070
    %v3075 = vmul.f32 %v3055, %v3071
    %v3077 = vsel %vm1228, %v3072, 0
    %v3080 = vsel %vm1228, %v3073, 0
    %v3083 = vsel %vm1228, %v3074, 0
    %v3086 = vsel %vm1228, %v3075, 0
    %3088 = vmatpush.msra.mxu0 0.0
    %3089 = vmatpush.msra.mxu0 0.0
    %3090 = vmatpush.msra.mxu0 0.0
    %3091 = vmatpush.msra.mxu0 0.0
    %3092 = vmatpush.msra.mxu0 0.0
    %3093 = vmatpush.msra.mxu0 0.0
    %3094 = vmatpush.msra.mxu0 0.0
    %3095 = vmatpush.msra.mxu0 0.0
    %3096 = vmatpush.msra.mxu0 0.0
    %3097 = vmatpush.msra.mxu0 0.0
    %3098 = vmatpush.msra.mxu0 0.0
    %3099 = vmatpush.msra.mxu0 0.0
    %3100 = vmatpush.msra.mxu0 %v2969
    %3101 = vmatpush.msra.mxu0 %v2966
    %3102 = vmatpush.msra.mxu0 %v2963
    %3103 = vmatpush.msra.mxu0 %v2960
    %3104 = vmatmul.f32.gmra.mxu0 %v3077
    %v3105 = vpop.f32.mrf.mxu0
    %v3106 = vadd.f32 0.0, %v3105
    %3107 = vmatmul.f32.gmra.mxu0 %v3080
    %v3108 = vpop.f32.mrf.mxu0
    %v3109 = vadd.f32 0.0, %v3108
    %3110 = vmatmul.f32.gmra.mxu0 %v3083
    %v3111 = vpop.f32.mrf.mxu0
    %v3112 = vadd.f32 0.0, %v3111
    %3113 = vmatmul.f32.gmra.mxu0 %v3086
    %v3114 = vpop.f32.mrf.mxu0
    %v3115 = vadd.f32 0.0, %v3114
    %3116 = vdwg.mxu0
    %s3117 = scalar_lea.vmem [#allocation15], 12
    %v3118 = vld [vmem:[%s3117] sm:$0xf]
    %v3120 = vsel %vm2057, %v3106, 0
    %v3123 = vsel %vm2057, %v3109, 0
    %v3126 = vsel %vm2057, %v3112, 0
    %v3129 = vsel %vm2057, %v3115, 0
    %v3132 = vsel %vm2476, %v3118, 0
    %3134 = vmatpush.msra.mxu0 0.0
    %3135 = vmatpush.msra.mxu0 0.0
    %3136 = vmatpush.msra.mxu0 0.0
    %3137 = vmatpush.msra.mxu0 0.0
    %3138 = vmatpush.msra.mxu0 0.0
    %3139 = vmatpush.msra.mxu0 0.0
    %3140 = vmatpush.msra.mxu0 0.0
    %3141 = vmatpush.msra.mxu0 0.0
    %3142 = vmatpush.msra.mxu0 0.0
    %3143 = vmatpush.msra.mxu0 0.0
    %3144 = vmatpush.msra.mxu0 0.0
    %3145 = vmatpush.msra.mxu0 0.0
    %3146 = vmatpush.msra.mxu0 0.0
    %3147 = vmatpush.msra.mxu0 0.0
    %3148 = vmatpush.msra.mxu0 0.0
    %3149 = vmatpush.msra.mxu0 %v3132
    %3150 = vmatmul.f32.gmra.mxu0 %v3120
    %v3151 = vpop.f32.mrf.mxu0
    %v3152 = vadd.f32 0.0, %v3151
    %3153 = vmatmul.f32.gmra.mxu0 %v3123
    %v3154 = vpop.f32.mrf.mxu0
    %v3155 = vadd.f32 0.0, %v3154
    %3156 = vmatmul.f32.gmra.mxu0 %v3126
    %v3157 = vpop.f32.mrf.mxu0
    %v3158 = vadd.f32 0.0, %v3157
    %3159 = vmatmul.f32.gmra.mxu0 %v3129
    %v3160 = vpop.f32.mrf.mxu0
    %v3161 = vadd.f32 0.0, %v3160
    %3162 = vdwg.mxu0
    %v3163 = vadd.f32 %v2856, %v3152
    %v3164 = vadd.f32 %v2857, %v3155
    %v3165 = vadd.f32 %v2858, %v3158
    %v3166 = vadd.f32 %v2859, %v3161
    %v3167 = vld [vmem:[#allocation12] sm:$0x1]
    %v3169 = vperm.slane %v3167, 0
    %v3171 = vadd.f32 %v3163, %v3169
    %v3172 = vadd.f32 %v3164, %v3169
    %v3173 = vadd.f32 %v3165, %v3169
    %v3174 = vadd.f32 %v3166, %v3169
    %v3175 = vadd.f32 %v1832, %v3171
    %v3176 = vadd.f32 %v1833, %v3172
    %v3177 = vadd.f32 %v1834, %v3173
    %v3178 = vadd.f32 %v1835, %v3174
    %v3179 = vsel %vm1499, %v3175, 0.0
    %3180 = vadd.xlane.f32.xlu0 %v3179
    %v3181 = vpop.xlane.xlu0 %3180
    %v3182 = vsel %vm1499, %v3176, 0.0
    %3183 = vadd.xlane.f32.xlu0 %v3182
    %v3184 = vpop.xlane.xlu0 %3183
    %v3185 = vsel %vm1499, %v3177, 0.0
    %3186 = vadd.xlane.f32.xlu0 %v3185
    %v3187 = vpop.xlane.xlu0 %3186
    %v3188 = vsel %vm1499, %v3178, 0.0
    %3189 = vadd.xlane.f32.xlu0 %v3188
    %v3190 = vpop.xlane.xlu0 %3189
    %v3191 = vmul.f32 %v3181, %v1559
    %v3192 = vmul.f32 %v3184, %v1559
    %v3193 = vmul.f32 %v3187, %v1559
    %v3194 = vmul.f32 %v3190, %v1559
    %v3195 = vsub.f32 %v3175, %v3191
    %v3196 = vsub.f32 %v3176, %v3192
    %v3197 = vsub.f32 %v3177, %v3193
    %v3198 = vsub.f32 %v3178, %v3194
    %v3199 = vmul.f32 %v3195, %v3195
    %v3200 = vmul.f32 %v3196, %v3196
    %v3201 = vmul.f32 %v3197, %v3197
    %v3202 = vmul.f32 %v3198, %v3198
    %v3203 = vsel %vm1499, %v3199, 0.0
    %3204 = vadd.xlane.f32.xlu0 %v3203
    %v3205 = vpop.xlane.xlu0 %3204
    %v3206 = vsel %vm1499, %v3200, 0.0
    %3207 = vadd.xlane.f32.xlu0 %v3206
    %v3208 = vpop.xlane.xlu0 %3207
    %v3209 = vsel %vm1499, %v3201, 0.0
    %3210 = vadd.xlane.f32.xlu0 %v3209
    %v3211 = vpop.xlane.xlu0 %3210
    %v3212 = vsel %vm1499, %v3202, 0.0
    %3213 = vadd.xlane.f32.xlu0 %v3212
    %v3214 = vpop.xlane.xlu0 %3213
    %v3215 = vmul.f32 %v3205, %v1559
    %v3216 = vmul.f32 %v3208, %v1559
    %v3217 = vmul.f32 %v3211, %v1559
    %v3218 = vmul.f32 %v3214, %v1559
    %v3219 = vadd.f32 %v3215, 1e-05
    %v3220 = vadd.f32 %v3216, 1e-05
    %v3221 = vadd.f32 %v3217, 1e-05
    %v3222 = vadd.f32 %v3218, 1e-05
    %v3223 = vrsqrt.pop %v3219
    %v3224 = vmul.f32 %v3223, %v3219
    %v3225 = vmul.f32 %v3224, %v3223
    %v3226 = vmul.f32 0.5, %v3225
    %v3227 = vsub.f32 1.5, %v3226
    %v3228 = vmul.f32 %v3223, %v3227
    %vm3229 = vweird.f32 %v3219
    %vm3230 = vweird.f32 %v3223
    %vm3231 = vmor %vm3229, %vm3230
    %v3232 = vsel %vm3231, %v3223, %v3228
    %v3233 = vrsqrt.pop %v3220
    %v3234 = vmul.f32 %v3233, %v3220
    %v3235 = vmul.f32 %v3234, %v3233
    %v3236 = vmul.f32 0.5, %v3235
    %v3237 = vsub.f32 1.5, %v3236
    %v3238 = vmul.f32 %v3233, %v3237
    %vm3239 = vweird.f32 %v3220
    %vm3240 = vweird.f32 %v3233
    %vm3241 = vmor %vm3239, %vm3240
    %v3242 = vsel %vm3241, %v3233, %v3238
    %v3243 = vrsqrt.pop %v3221
    %v3244 = vmul.f32 %v3243, %v3221
    %v3245 = vmul.f32 %v3244, %v3243
    %v3246 = vmul.f32 0.5, %v3245
    %v3247 = vsub.f32 1.5, %v3246
    %v3248 = vmul.f32 %v3243, %v3247
    %vm3249 = vweird.f32 %v3221
    %vm3250 = vweird.f32 %v3243
    %vm3251 = vmor %vm3249, %vm3250
    %v3252 = vsel %vm3251, %v3243, %v3248
    %v3253 = vrsqrt.pop %v3222
    %v3254 = vmul.f32 %v3253, %v3222
    %v3255 = vmul.f32 %v3254, %v3253
    %v3256 = vmul.f32 0.5, %v3255
    %v3257 = vsub.f32 1.5, %v3256
    %v3258 = vmul.f32 %v3253, %v3257
    %vm3259 = vweird.f32 %v3222
    %vm3260 = vweird.f32 %v3253
    %vm3261 = vmor %vm3259, %vm3260
    %v3262 = vsel %vm3261, %v3253, %v3258
    %v3263 = vmul.f32 %v3195, %v3232
    %v3264 = vmul.f32 %v3196, %v3242
    %v3265 = vmul.f32 %v3197, %v3252
    %v3266 = vmul.f32 %v3198, %v3262
    %v3267 = vld [vmem:[#allocation24] sm:$0x1]
    %v3269 = vperm.slane %v3267, 0
    %v3271 = vmul.f32 %v3263, %v3269
    %v3272 = vmul.f32 %v3264, %v3269
    %v3273 = vmul.f32 %v3265, %v3269
    %v3274 = vmul.f32 %v3266, %v3269
    %v3275 = vld [vmem:[#allocation22] sm:$0x1]
    %v3277 = vperm.slane %v3275, 0
    %v3279 = vadd.f32 %v3271, %v3277
    %v3280 = vadd.f32 %v3272, %v3277
    %v3281 = vadd.f32 %v3273, %v3277
    %v3282 = vadd.f32 %v3274, %v3277
    %v3283 = vld [vmem:[#allocation28] sm:$0xff]
    %v3284 = vld [vmem:[#allocation28 + $0x8] sm:$0xff]
    %v3285 = vld [vmem:[#allocation25] sm:$0x1]
    %v3287 = vperm.slane %v3285, 0
    %v3290 = vsel %vm1499, %v3279, 0
    %v3293 = vsel %vm1499, %v3280, 0
    %v3296 = vsel %vm1499, %v3281, 0
    %v3299 = vsel %vm1499, %v3282, 0
    %3301 = vmatpush.msra.mxu0 0.0
    %3302 = vmatpush.msra.mxu0 0.0
    %3303 = vmatpush.msra.mxu0 0.0
    %3304 = vmatpush.msra.mxu0 0.0
    %3305 = vmatpush.msra.mxu0 0.0
    %3306 = vmatpush.msra.mxu0 0.0
    %3307 = vmatpush.msra.mxu0 0.0
    %3308 = vmatpush.msra.mxu0 0.0
    %3309 = vmatpush.msra.mxu0 0.0
    %3310 = vmatpush.msra.mxu0 0.0
    %3311 = vmatpush.msra.mxu0 0.0
    %3312 = vmatpush.msra.mxu0 0.0
    %3313 = vmatpush.msra.mxu0 0.0
    %3314 = vmatpush.msra.mxu0 0.0
    %3315 = vmatpush.msra.mxu0 %v3284
    %3316 = vmatpush.msra.mxu0 %v3283
    %3317 = vmatmul.f32.gmra.mxu0 %v3290
    %v3318 = vpop.f32.mrf.mxu0
    %v3319 = vadd.f32 %v3287, %v3318
    %3320 = vmatmul.f32.gmra.mxu0 %v3293
    %v3321 = vpop.f32.mrf.mxu0
    %v3322 = vadd.f32 %v3287, %v3321
    %3323 = vmatmul.f32.gmra.mxu0 %v3296
    %v3324 = vpop.f32.mrf.mxu0
    %v3325 = vadd.f32 %v3287, %v3324
    %3326 = vmatmul.f32.gmra.mxu0 %v3299
    %v3327 = vpop.f32.mrf.mxu0
    %v3328 = vadd.f32 %v3287, %v3327
    %3329 = vdwg.mxu0
    %v3330 = vld [vmem:[#allocation30] sm:$0xff]
    %v3331 = vld [vmem:[#allocation30 + $0x8] sm:$0xff]
    %v3332 = vld [vmem:[#allocation27] sm:$0x1]
    %v3334 = vperm.slane %v3332, 0
    %3336 = vmatpush.msra.mxu0 0.0
    %3337 = vmatpush.msra.mxu0 0.0
    %3338 = vmatpush.msra.mxu0 0.0
    %3339 = vmatpush.msra.mxu0 0.0
    %3340 = vmatpush.msra.mxu0 0.0
    %3341 = vmatpush.msra.mxu0 0.0
    %3342 = vmatpush.msra.mxu0 0.0
    %3343 = vmatpush.msra.mxu0 0.0
    %3344 = vmatpush.msra.mxu0 0.0
    %3345 = vmatpush.msra.mxu0 0.0
    %3346 = vmatpush.msra.mxu0 0.0
    %3347 = vmatpush.msra.mxu0 0.0
    %3348 = vmatpush.msra.mxu0 0.0
    %3349 = vmatpush.msra.mxu0 0.0
    %3350 = vmatpush.msra.mxu0 %v3331
    %3351 = vmatpush.msra.mxu0 %v3330
    %3352 = vmatmul.f32.gmra.mxu0 %v3290
    %v3353 = vpop.f32.mrf.mxu0
    %v3354 = vadd.f32 %v3334, %v3353
    %3355 = vmatmul.f32.gmra.mxu0 %v3293
    %v3356 = vpop.f32.mrf.mxu0
    %v3357 = vadd.f32 %v3334, %v3356
    %3358 = vmatmul.f32.gmra.mxu0 %v3296
    %v3359 = vpop.f32.mrf.mxu0
    %v3360 = vadd.f32 %v3334, %v3359
    %3361 = vmatmul.f32.gmra.mxu0 %v3299
    %v3362 = vpop.f32.mrf.mxu0
    %v3363 = vadd.f32 %v3334, %v3362
    %3364 = vdwg.mxu0
    %v3365 = vxor.u32 %v3354, 2147483648
    %v3366 = vxor.u32 %v3357, 2147483648
    %v3367 = vxor.u32 %v3360, 2147483648
    %v3368 = vxor.u32 %v3363, 2147483648
    %v3369 = vmul.f32 %v3365, 1.442695
    %v3370 = vpow.pop %v3369
    %v3371 = vmul.f32 %v3366, 1.442695
    %v3372 = vpow.pop %v3371
    %v3373 = vmul.f32 %v3367, 1.442695
    %v3374 = vpow.pop %v3373
    %v3375 = vmul.f32 %v3368, 1.442695
    %v3376 = vpow.pop %v3375
    %v3377 = vadd.f32 %v3370, 1.0
    %v3378 = vadd.f32 %v3372, 1.0
    %v3379 = vadd.f32 %v3374, 1.0
    %v3380 = vadd.f32 %v3376, 1.0
    %v3381 = vrcp.pop %v3377
    %v3382 = vmul.f32 %v3377, %v3381
    %v3383 = vsub.f32 1.0, %v3382
    %v3384 = vmul.f32 %v3381, %v3383
    %v3385 = vadd.f32 %v3381, %v3384
    %vm3386 = vweird.f32 %v3377
    %vm3387 = vweird.f32 %v3381
    %vm3388 = vmor %vm3386, %vm3387
    %v3389 = vsel %vm3388, %v3381, %v3385
    %v3390 = vand.u32 2147483647, %v3377
    %vm3391 = vcmp.eq.f32.partialorder %v3390, 8.507059e+37
    %v3392 = vand.u32 %v3377, 2147483648
    %v3393 = vor.u32 1.1754944e-38, %v3392
    %v3394 = vsel %vm3391, %v3393, %v3389
    %v3395 = vmul.f32 1.0, %v3394
    %v3396 = vrcp.pop %v3378
    %v3397 = vmul.f32 %v3378, %v3396
    %v3398 = vsub.f32 1.0, %v3397
    %v3399 = vmul.f32 %v3396, %v3398
    %v3400 = vadd.f32 %v3396, %v3399
    %vm3401 = vweird.f32 %v3378
    %vm3402 = vweird.f32 %v3396
    %vm3403 = vmor %vm3401, %vm3402
    %v3404 = vsel %vm3403, %v3396, %v3400
    %v3405 = vand.u32 2147483647, %v3378
    %vm3406 = vcmp.eq.f32.partialorder %v3405, 8.507059e+37
    %v3407 = vand.u32 %v3378, 2147483648
    %v3408 = vor.u32 1.1754944e-38, %v3407
    %v3409 = vsel %vm3406, %v3408, %v3404
    %v3410 = vmul.f32 1.0, %v3409
    %v3411 = vrcp.pop %v3379
    %v3412 = vmul.f32 %v3379, %v3411
    %v3413 = vsub.f32 1.0, %v3412
    %v3414 = vmul.f32 %v3411, %v3413
    %v3415 = vadd.f32 %v3411, %v3414
    %vm3416 = vweird.f32 %v3379
    %vm3417 = vweird.f32 %v3411
    %vm3418 = vmor %vm3416, %vm3417
    %v3419 = vsel %vm3418, %v3411, %v3415
    %v3420 = vand.u32 2147483647, %v3379
    %vm3421 = vcmp.eq.f32.partialorder %v3420, 8.507059e+37
    %v3422 = vand.u32 %v3379, 2147483648
    %v3423 = vor.u32 1.1754944e-38, %v3422
    %v3424 = vsel %vm3421, %v3423, %v3419
    %v3425 = vmul.f32 1.0, %v3424
    %v3426 = vrcp.pop %v3380
    %v3427 = vmul.f32 %v3380, %v3426
    %v3428 = vsub.f32 1.0, %v3427
    %v3429 = vmul.f32 %v3426, %v3428
    %v3430 = vadd.f32 %v3426, %v3429
    %vm3431 = vweird.f32 %v3380
    %vm3432 = vweird.f32 %v3426
    %vm3433 = vmor %vm3431, %vm3432
    %v3434 = vsel %vm3433, %v3426, %v3430
    %v3435 = vand.u32 2147483647, %v3380
    %vm3436 = vcmp.eq.f32.partialorder %v3435, 8.507059e+37
    %v3437 = vand.u32 %v3380, 2147483648
    %v3438 = vor.u32 1.1754944e-38, %v3437
    %v3439 = vsel %vm3436, %v3438, %v3434
    %v3440 = vmul.f32 1.0, %v3439
    %v3441 = vmul.f32 %v3319, %v3395
    %v3442 = vmul.f32 %v3322, %v3410
    %v3443 = vmul.f32 %v3325, %v3425
    %v3444 = vmul.f32 %v3328, %v3440
    %3445 = vmatpush.msra.mxu0 0.0
    %3446 = vmatpush.msra.mxu0 0.0
    %3447 = vmatpush.msra.mxu0 0.0
    %3448 = vmatpush.msra.mxu0 0.0
    %3449 = vmatpush.msra.mxu0 0.0
    %3450 = vmatpush.msra.mxu0 0.0
    %3451 = vmatpush.msra.mxu0 0.0
    %3452 = vmatpush.msra.mxu0 0.0
    %3453 = vmatpush.msra.mxu0 0.0
    %3454 = vmatpush.msra.mxu0 0.0
    %3455 = vmatpush.msra.mxu0 0.0
    %3456 = vmatpush.msra.mxu0 0.0
    %3457 = vmatpush.msra.mxu0 %v3444
    %3458 = vmatpush.msra.mxu0 %v3443
    %3459 = vmatpush.msra.mxu0 %v3442
    %3460 = vmatpush.msra.mxu0 %v3441
    %3461 = vmatmul.f32.gmra.mxu0 %v1230
    %v3462 = vpop.f32.mrf.mxu0
    %v3463 = vadd.f32 0.0, %v3462
    %3464 = vmatmul.f32.gmra.mxu0 %v1233
    %v3465 = vpop.f32.mrf.mxu0
    %v3466 = vadd.f32 0.0, %v3465
    %3467 = vmatmul.f32.gmra.mxu0 %v1236
    %v3468 = vpop.f32.mrf.mxu0
    %v3469 = vadd.f32 0.0, %v3468
    %3470 = vmatmul.f32.gmra.mxu0 %v1239
    %v3471 = vpop.f32.mrf.mxu0
    %v3472 = vadd.f32 0.0, %v3471
    %3473 = vdwg.mxu0
    %v3474 = vld [vmem:[#allocation21] sm:$0x1]
    %v3476 = vperm.slane %v3474, 0
    %v3478 = vmul.f32 %v3463, %v3476
    %v3479 = vmul.f32 %v3466, %v3476
    %v3480 = vmul.f32 %v3469, %v3476
    %v3481 = vmul.f32 %v3472, %v3476
    %3482 = vmatpush.msra.mxu0 0.0
    %3483 = vmatpush.msra.mxu0 0.0
    %3484 = vmatpush.msra.mxu0 0.0
    %3485 = vmatpush.msra.mxu0 0.0
    %3486 = vmatpush.msra.mxu0 0.0
    %3487 = vmatpush.msra.mxu0 0.0
    %3488 = vmatpush.msra.mxu0 0.0
    %3489 = vmatpush.msra.mxu0 0.0
    %3490 = vmatpush.msra.mxu0 0.0
    %3491 = vmatpush.msra.mxu0 0.0
    %3492 = vmatpush.msra.mxu0 0.0
    %3493 = vmatpush.msra.mxu0 0.0
    %3494 = vmatpush.msra.mxu0 %v3444
    %3495 = vmatpush.msra.mxu0 %v3443
    %3496 = vmatpush.msra.mxu0 %v3442
    %3497 = vmatpush.msra.mxu0 %v3441
    %3498 = vmatmul.f32.gmra.mxu0 %v1272
    %v3499 = vpop.f32.mrf.mxu0
    %v3500 = vadd.f32 0.0, %v3499
    %3501 = vmatmul.f32.gmra.mxu0 %v1275
    %v3502 = vpop.f32.mrf.mxu0
    %v3503 = vadd.f32 0.0, %v3502
    %3504 = vmatmul.f32.gmra.mxu0 %v1278
    %v3505 = vpop.f32.mrf.mxu0
    %v3506 = vadd.f32 0.0, %v3505
    %3507 = vmatmul.f32.gmra.mxu0 %v1281
    %v3508 = vpop.f32.mrf.mxu0
    %v3509 = vadd.f32 0.0, %v3508
    %3510 = vdwg.mxu0
    %s3511 = scalar_lea.vmem [#allocation21], 1
    %v3512 = vld [vmem:[%s3511] sm:$0x1]
    %v3514 = vperm.slane %v3512, 0
    %v3516 = vmul.f32 %v3500, %v3514
    %v3517 = vmul.f32 %v3503, %v3514
    %v3518 = vmul.f32 %v3506, %v3514
    %v3519 = vmul.f32 %v3509, %v3514
    %v3520 = vadd.f32 %v3478, %v3516
    %v3521 = vadd.f32 %v3479, %v3517
    %v3522 = vadd.f32 %v3480, %v3518
    %v3523 = vadd.f32 %v3481, %v3519
    %3524 = vmatpush.msra.mxu0 0.0
    %3525 = vmatpush.msra.mxu0 0.0
    %3526 = vmatpush.msra.mxu0 0.0
    %3527 = vmatpush.msra.mxu0 0.0
    %3528 = vmatpush.msra.mxu0 0.0
    %3529 = vmatpush.msra.mxu0 0.0
    %3530 = vmatpush.msra.mxu0 0.0
    %3531 = vmatpush.msra.mxu0 0.0
    %3532 = vmatpush.msra.mxu0 0.0
    %3533 = vmatpush.msra.mxu0 0.0
    %3534 = vmatpush.msra.mxu0 0.0
    %3535 = vmatpush.msra.mxu0 0.0
    %3536 = vmatpush.msra.mxu0 %v3444
    %3537 = vmatpush.msra.mxu0 %v3443
    %3538 = vmatpush.msra.mxu0 %v3442
    %3539 = vmatpush.msra.mxu0 %v3441
    %3540 = vmatmul.f32.gmra.mxu0 %v1398
    %v3541 = vpop.f32.mrf.mxu0
    %v3542 = vadd.f32 0.0, %v3541
    %3543 = vmatmul.f32.gmra.mxu0 %v1401
    %v3544 = vpop.f32.mrf.mxu0
    %v3545 = vadd.f32 0.0, %v3544
    %3546 = vmatmul.f32.gmra.mxu0 %v1404
    %v3547 = vpop.f32.mrf.mxu0
    %v3548 = vadd.f32 0.0, %v3547
    %3549 = vmatmul.f32.gmra.mxu0 %v1407
    %v3550 = vpop.f32.mrf.mxu0
    %v3551 = vadd.f32 0.0, %v3550
    %3552 = vdwg.mxu0
    %s3553 = scalar_lea.vmem [#allocation21], 2
    %v3554 = vld [vmem:[%s3553] sm:$0x1]
    %v3556 = vperm.slane %v3554, 0
    %v3558 = vmul.f32 %v3542, %v3556
    %v3559 = vmul.f32 %v3545, %v3556
    %v3560 = vmul.f32 %v3548, %v3556
    %v3561 = vmul.f32 %v3551, %v3556
    %v3562 = vadd.f32 %v3520, %v3558
    %v3563 = vadd.f32 %v3521, %v3559
    %v3564 = vadd.f32 %v3522, %v3560
    %v3565 = vadd.f32 %v3523, %v3561
    %v3566 = vld [vmem:[#allocation19] sm:$0x1]
    %v3568 = vperm.slane %v3566, 0
    %v3570 = vadd.f32 %v3562, %v3568
    %v3571 = vadd.f32 %v3563, %v3568
    %v3572 = vadd.f32 %v3564, %v3568
    %v3573 = vadd.f32 %v3565, %v3568
    %v3574 = vxor.u32 %v3570, 2147483648
    %v3575 = vxor.u32 %v3571, 2147483648
    %v3576 = vxor.u32 %v3572, 2147483648
    %v3577 = vxor.u32 %v3573, 2147483648
    %v3578 = vmul.f32 %v3574, 1.442695
    %v3579 = vpow.pop %v3578
    %v3580 = vmul.f32 %v3575, 1.442695
    %v3581 = vpow.pop %v3580
    %v3582 = vmul.f32 %v3576, 1.442695
    %v3583 = vpow.pop %v3582
    %v3584 = vmul.f32 %v3577, 1.442695
    %v3585 = vpow.pop %v3584
    %v3586 = vadd.f32 %v3579, 1.0
    %v3587 = vadd.f32 %v3581, 1.0
    %v3588 = vadd.f32 %v3583, 1.0
    %v3589 = vadd.f32 %v3585, 1.0
    %v3590 = vrcp.pop %v3586
    %v3591 = vmul.f32 %v3586, %v3590
    %v3592 = vsub.f32 1.0, %v3591
    %v3593 = vmul.f32 %v3590, %v3592
    %v3594 = vadd.f32 %v3590, %v3593
    %vm3595 = vweird.f32 %v3586
    %vm3596 = vweird.f32 %v3590
    %vm3597 = vmor %vm3595, %vm3596
    %v3598 = vsel %vm3597, %v3590, %v3594
    %v3599 = vand.u32 2147483647, %v3586
    %vm3600 = vcmp.eq.f32.partialorder %v3599, 8.507059e+37
    %v3601 = vand.u32 %v3586, 2147483648
    %v3602 = vor.u32 1.1754944e-38, %v3601
    %v3603 = vsel %vm3600, %v3602, %v3598
    %v3604 = vmul.f32 1.0, %v3603
    %v3605 = vrcp.pop %v3587
    %v3606 = vmul.f32 %v3587, %v3605
    %v3607 = vsub.f32 1.0, %v3606
    %v3608 = vmul.f32 %v3605, %v3607
    %v3609 = vadd.f32 %v3605, %v3608
    %vm3610 = vweird.f32 %v3587
    %vm3611 = vweird.f32 %v3605
    %vm3612 = vmor %vm3610, %vm3611
    %v3613 = vsel %vm3612, %v3605, %v3609
    %v3614 = vand.u32 2147483647, %v3587
    %vm3615 = vcmp.eq.f32.partialorder %v3614, 8.507059e+37
    %v3616 = vand.u32 %v3587, 2147483648
    %v3617 = vor.u32 1.1754944e-38, %v3616
    %v3618 = vsel %vm3615, %v3617, %v3613
    %v3619 = vmul.f32 1.0, %v3618
    %v3620 = vrcp.pop %v3588
    %v3621 = vmul.f32 %v3588, %v3620
    %v3622 = vsub.f32 1.0, %v3621
    %v3623 = vmul.f32 %v3620, %v3622
    %v3624 = vadd.f32 %v3620, %v3623
    %vm3625 = vweird.f32 %v3588
    %vm3626 = vweird.f32 %v3620
    %vm3627 = vmor %vm3625, %vm3626
    %v3628 = vsel %vm3627, %v3620, %v3624
    %v3629 = vand.u32 2147483647, %v3588
    %vm3630 = vcmp.eq.f32.partialorder %v3629, 8.507059e+37
    %v3631 = vand.u32 %v3588, 2147483648
    %v3632 = vor.u32 1.1754944e-38, %v3631
    %v3633 = vsel %vm3630, %v3632, %v3628
    %v3634 = vmul.f32 1.0, %v3633
    %v3635 = vrcp.pop %v3589
    %v3636 = vmul.f32 %v3589, %v3635
    %v3637 = vsub.f32 1.0, %v3636
    %v3638 = vmul.f32 %v3635, %v3637
    %v3639 = vadd.f32 %v3635, %v3638
    %vm3640 = vweird.f32 %v3589
    %vm3641 = vweird.f32 %v3635
    %vm3642 = vmor %vm3640, %vm3641
    %v3643 = vsel %vm3642, %v3635, %v3639
    %v3644 = vand.u32 2147483647, %v3589
    %vm3645 = vcmp.eq.f32.partialorder %v3644, 8.507059e+37
    %v3646 = vand.u32 %v3589, 2147483648
    %v3647 = vor.u32 1.1754944e-38, %v3646
    %v3648 = vsel %vm3645, %v3647, %v3643
    %v3649 = vmul.f32 1.0, %v3648
    %v3650 = vmul.f32 %v3570, %v3604
    %v3651 = vmul.f32 %v3571, %v3619
    %v3652 = vmul.f32 %v3572, %v3634
    %v3653 = vmul.f32 %v3573, %v3649
    %v3654 = vld [vmem:[#allocation33] sm:$0xff]
    %v3655 = vld [vmem:[#allocation33 + $0x8] sm:$0xff]
    %v3656 = vld [vmem:[#allocation31] sm:$0x1]
    %v3658 = vperm.slane %v3656, 0
    %v3661 = vsel %vm1499, %v3650, 0
    %v3664 = vsel %vm1499, %v3651, 0
    %v3667 = vsel %vm1499, %v3652, 0
    %v3670 = vsel %vm1499, %v3653, 0
    %3672 = vmatpush.msra.mxu0 0.0
    %3673 = vmatpush.msra.mxu0 0.0
    %3674 = vmatpush.msra.mxu0 0.0
    %3675 = vmatpush.msra.mxu0 0.0
    %3676 = vmatpush.msra.mxu0 0.0
    %3677 = vmatpush.msra.mxu0 0.0
    %3678 = vmatpush.msra.mxu0 0.0
    %3679 = vmatpush.msra.mxu0 0.0
    %3680 = vmatpush.msra.mxu0 0.0
    %3681 = vmatpush.msra.mxu0 0.0
    %3682 = vmatpush.msra.mxu0 0.0
    %3683 = vmatpush.msra.mxu0 0.0
    %3684 = vmatpush.msra.mxu0 0.0
    %3685 = vmatpush.msra.mxu0 0.0
    %3686 = vmatpush.msra.mxu0 %v3655
    %3687 = vmatpush.msra.mxu0 %v3654
    %3688 = vmatmul.f32.gmra.mxu0 %v3661
    %v3689 = vpop.f32.mrf.mxu0
    %v3690 = vadd.f32 %v3658, %v3689
    %3691 = vmatmul.f32.gmra.mxu0 %v3664
    %v3692 = vpop.f32.mrf.mxu0
    %v3693 = vadd.f32 %v3658, %v3692
    %3694 = vmatmul.f32.gmra.mxu0 %v3667
    %v3695 = vpop.f32.mrf.mxu0
    %v3696 = vadd.f32 %v3658, %v3695
    %3697 = vmatmul.f32.gmra.mxu0 %v3670
    %v3698 = vpop.f32.mrf.mxu0
    %v3699 = vadd.f32 %v3658, %v3698
    %3700 = vdwg.mxu0
    %v3701 = vadd.f32 %v3175, %v3690
    %v3702 = vadd.f32 %v3176, %v3693
    %v3703 = vadd.f32 %v3177, %v3696
    %v3704 = vadd.f32 %v3178, %v3699
    %v3705 = vsel %vm1499, %v3701, 0.0
    %3706 = vadd.xlane.f32.xlu0 %v3705
    %v3707 = vpop.xlane.xlu0 %3706
    %v3708 = vsel %vm1499, %v3702, 0.0
    %3709 = vadd.xlane.f32.xlu0 %v3708
    %v3710 = vpop.xlane.xlu0 %3709
    %v3711 = vsel %vm1499, %v3703, 0.0
    %3712 = vadd.xlane.f32.xlu0 %v3711
    %v3713 = vpop.xlane.xlu0 %3712
    %v3714 = vsel %vm1499, %v3704, 0.0
    %3715 = vadd.xlane.f32.xlu0 %v3714
    %v3716 = vpop.xlane.xlu0 %3715
    %v3717 = vmul.f32 %v3707, %v1559
    %v3718 = vmul.f32 %v3710, %v1559
    %v3719 = vmul.f32 %v3713, %v1559
    %v3720 = vmul.f32 %v3716, %v1559
    %v3721 = vsub.f32 %v3701, %v3717
    %v3722 = vsub.f32 %v3702, %v3718
    %v3723 = vsub.f32 %v3703, %v3719
    %v3724 = vsub.f32 %v3704, %v3720
    %v3725 = vmul.f32 %v3721, %v3721
    %v3726 = vmul.f32 %v3722, %v3722
    %v3727 = vmul.f32 %v3723, %v3723
    %v3728 = vmul.f32 %v3724, %v3724
    %v3729 = vsel %vm1499, %v3725, 0.0
    %3730 = vadd.xlane.f32.xlu0 %v3729
    %v3731 = vpop.xlane.xlu0 %3730
    %v3732 = vsel %vm1499, %v3726, 0.0
    %3733 = vadd.xlane.f32.xlu0 %v3732
    %v3734 = vpop.xlane.xlu0 %3733
    %v3735 = vsel %vm1499, %v3727, 0.0
    %3736 = vadd.xlane.f32.xlu0 %v3735
    %v3737 = vpop.xlane.xlu0 %3736
    %v3738 = vsel %vm1499, %v3728, 0.0
    %3739 = vadd.xlane.f32.xlu0 %v3738
    %v3740 = vpop.xlane.xlu0 %3739
    %v3741 = vmul.f32 %v3731, %v1559
    %v3742 = vmul.f32 %v3734, %v1559
    %v3743 = vmul.f32 %v3737, %v1559
    %v3744 = vmul.f32 %v3740, %v1559
    %v3745 = vadd.f32 %v3741, 1e-05
    %v3746 = vadd.f32 %v3742, 1e-05
    %v3747 = vadd.f32 %v3743, 1e-05
    %v3748 = vadd.f32 %v3744, 1e-05
    %v3749 = vrsqrt.pop %v3745
    %v3750 = vmul.f32 %v3749, %v3745
    %v3751 = vmul.f32 %v3750, %v3749
    %v3752 = vmul.f32 0.5, %v3751
    %v3753 = vsub.f32 1.5, %v3752
    %v3754 = vmul.f32 %v3749, %v3753
    %vm3755 = vweird.f32 %v3745
    %vm3756 = vweird.f32 %v3749
    %vm3757 = vmor %vm3755, %vm3756
    %v3758 = vsel %vm3757, %v3749, %v3754
    %v3759 = vrsqrt.pop %v3746
    %v3760 = vmul.f32 %v3759, %v3746
    %v3761 = vmul.f32 %v3760, %v3759
    %v3762 = vmul.f32 0.5, %v3761
    %v3763 = vsub.f32 1.5, %v3762
    %v3764 = vmul.f32 %v3759, %v3763
    %vm3765 = vweird.f32 %v3746
    %vm3766 = vweird.f32 %v3759
    %vm3767 = vmor %vm3765, %vm3766
    %v3768 = vsel %vm3767, %v3759, %v3764
    %v3769 = vrsqrt.pop %v3747
    %v3770 = vmul.f32 %v3769, %v3747
    %v3771 = vmul.f32 %v3770, %v3769
    %v3772 = vmul.f32 0.5, %v3771
    %v3773 = vsub.f32 1.5, %v3772
    %v3774 = vmul.f32 %v3769, %v3773
    %vm3775 = vweird.f32 %v3747
    %vm3776 = vweird.f32 %v3769
    %vm3777 = vmor %vm3775, %vm3776
    %v3778 = vsel %vm3777, %v3769, %v3774
    %v3779 = vrsqrt.pop %v3748
    %v3780 = vmul.f32 %v3779, %v3748
    %v3781 = vmul.f32 %v3780, %v3779
    %v3782 = vmul.f32 0.5, %v3781
    %v3783 = vsub.f32 1.5, %v3782
    %v3784 = vmul.f32 %v3779, %v3783
    %vm3785 = vweird.f32 %v3748
    %vm3786 = vweird.f32 %v3779
    %vm3787 = vmor %vm3785, %vm3786
    %v3788 = vsel %vm3787, %v3779, %v3784
    %v3789 = vmul.f32 %v3721, %v3758
    %v3790 = vmul.f32 %v3722, %v3768
    %v3791 = vmul.f32 %v3723, %v3778
    %v3792 = vmul.f32 %v3724, %v3788
    %v3793 = vld [vmem:[#allocation48] sm:$0x1]
    %v3795 = vperm.slane %v3793, 0
    %v3797 = vmul.f32 %v3789, %v3795
    %v3798 = vmul.f32 %v3790, %v3795
    %v3799 = vmul.f32 %v3791, %v3795
    %v3800 = vmul.f32 %v3792, %v3795
    %v3801 = vld [vmem:[#allocation46] sm:$0x1]
    %v3803 = vperm.slane %v3801, 0
    %v3805 = vadd.f32 %v3797, %v3803
    %v3806 = vadd.f32 %v3798, %v3803
    %v3807 = vadd.f32 %v3799, %v3803
    %v3808 = vadd.f32 %v3800, %v3803
    %v3809 = vld [vmem:[#allocation49] sm:$0xff]
    %v3810 = vld [vmem:[#allocation49 + $0x8] sm:$0xff]
    %v3811 = vld [vmem:[#allocation43] sm:$0x1]
    %v3813 = vperm.slane %v3811, 0
    %v3816 = vsel %vm1499, %v3805, 0
    %v3819 = vsel %vm1499, %v3806, 0
    %v3822 = vsel %vm1499, %v3807, 0
    %v3825 = vsel %vm1499, %v3808, 0
    %3827 = vmatpush.msra.mxu0 0.0
    %3828 = vmatpush.msra.mxu0 0.0
    %3829 = vmatpush.msra.mxu0 0.0
    %3830 = vmatpush.msra.mxu0 0.0
    %3831 = vmatpush.msra.mxu0 0.0
    %3832 = vmatpush.msra.mxu0 0.0
    %3833 = vmatpush.msra.mxu0 0.0
    %3834 = vmatpush.msra.mxu0 0.0
    %3835 = vmatpush.msra.mxu0 0.0
    %3836 = vmatpush.msra.mxu0 0.0
    %3837 = vmatpush.msra.mxu0 0.0
    %3838 = vmatpush.msra.mxu0 0.0
    %3839 = vmatpush.msra.mxu0 0.0
    %3840 = vmatpush.msra.mxu0 0.0
    %3841 = vmatpush.msra.mxu0 %v3810
    %3842 = vmatpush.msra.mxu0 %v3809
    %3843 = vmatmul.f32.gmra.mxu0 %v3816
    %v3844 = vpop.f32.mrf.mxu0
    %v3845 = vadd.f32 %v3813, %v3844
    %3846 = vmatmul.f32.gmra.mxu0 %v3819
    %v3847 = vpop.f32.mrf.mxu0
    %v3848 = vadd.f32 %v3813, %v3847
    %3849 = vmatmul.f32.gmra.mxu0 %v3822
    %v3850 = vpop.f32.mrf.mxu0
    %v3851 = vadd.f32 %v3813, %v3850
    %3852 = vmatmul.f32.gmra.mxu0 %v3825
    %v3853 = vpop.f32.mrf.mxu0
    %v3854 = vadd.f32 %v3813, %v3853
    %3855 = vdwg.mxu0
    %v3856 = vxor.u32 %v3845, 2147483648
    %v3857 = vxor.u32 %v3848, 2147483648
    %v3858 = vxor.u32 %v3851, 2147483648
    %v3859 = vxor.u32 %v3854, 2147483648
    %v3860 = vmul.f32 %v3856, 1.442695
    %v3861 = vpow.pop %v3860
    %v3862 = vmul.f32 %v3857, 1.442695
    %v3863 = vpow.pop %v3862
    %v3864 = vmul.f32 %v3858, 1.442695
    %v3865 = vpow.pop %v3864
    %v3866 = vmul.f32 %v3859, 1.442695
    %v3867 = vpow.pop %v3866
    %v3868 = vadd.f32 %v3861, 1.0
    %v3869 = vadd.f32 %v3863, 1.0
    %v3870 = vadd.f32 %v3865, 1.0
    %v3871 = vadd.f32 %v3867, 1.0
    %v3872 = vrcp.pop %v3868
    %v3873 = vmul.f32 %v3868, %v3872
    %v3874 = vsub.f32 1.0, %v3873
    %v3875 = vmul.f32 %v3872, %v3874
    %v3876 = vadd.f32 %v3872, %v3875
    %vm3877 = vweird.f32 %v3868
    %vm3878 = vweird.f32 %v3872
    %vm3879 = vmor %vm3877, %vm3878
    %v3880 = vsel %vm3879, %v3872, %v3876
    %v3881 = vand.u32 2147483647, %v3868
    %vm3882 = vcmp.eq.f32.partialorder %v3881, 8.507059e+37
    %v3883 = vand.u32 %v3868, 2147483648
    %v3884 = vor.u32 1.1754944e-38, %v3883
    %v3885 = vsel %vm3882, %v3884, %v3880
    %v3886 = vmul.f32 1.0, %v3885
    %v3887 = vrcp.pop %v3869
    %v3888 = vmul.f32 %v3869, %v3887
    %v3889 = vsub.f32 1.0, %v3888
    %v3890 = vmul.f32 %v3887, %v3889
    %v3891 = vadd.f32 %v3887, %v3890
    %vm3892 = vweird.f32 %v3869
    %vm3893 = vweird.f32 %v3887
    %vm3894 = vmor %vm3892, %vm3893
    %v3895 = vsel %vm3894, %v3887, %v3891
    %v3896 = vand.u32 2147483647, %v3869
    %vm3897 = vcmp.eq.f32.partialorder %v3896, 8.507059e+37
    %v3898 = vand.u32 %v3869, 2147483648
    %v3899 = vor.u32 1.1754944e-38, %v3898
    %v3900 = vsel %vm3897, %v3899, %v3895
    %v3901 = vmul.f32 1.0, %v3900
    %v3902 = vrcp.pop %v3870
    %v3903 = vmul.f32 %v3870, %v3902
    %v3904 = vsub.f32 1.0, %v3903
    %v3905 = vmul.f32 %v3902, %v3904
    %v3906 = vadd.f32 %v3902, %v3905
    %vm3907 = vweird.f32 %v3870
    %vm3908 = vweird.f32 %v3902
    %vm3909 = vmor %vm3907, %vm3908
    %v3910 = vsel %vm3909, %v3902, %v3906
    %v3911 = vand.u32 2147483647, %v3870
    %vm3912 = vcmp.eq.f32.partialorder %v3911, 8.507059e+37
    %v3913 = vand.u32 %v3870, 2147483648
    %v3914 = vor.u32 1.1754944e-38, %v3913
    %v3915 = vsel %vm3912, %v3914, %v3910
    %v3916 = vmul.f32 1.0, %v3915
    %v3917 = vrcp.pop %v3871
    %v3918 = vmul.f32 %v3871, %v3917
    %v3919 = vsub.f32 1.0, %v3918
    %v3920 = vmul.f32 %v3917, %v3919
    %v3921 = vadd.f32 %v3917, %v3920
    %vm3922 = vweird.f32 %v3871
    %vm3923 = vweird.f32 %v3917
    %vm3924 = vmor %vm3922, %vm3923
    %v3925 = vsel %vm3924, %v3917, %v3921
    %v3926 = vand.u32 2147483647, %v3871
    %vm3927 = vcmp.eq.f32.partialorder %v3926, 8.507059e+37
    %v3928 = vand.u32 %v3871, 2147483648
    %v3929 = vor.u32 1.1754944e-38, %v3928
    %v3930 = vsel %vm3927, %v3929, %v3925
    %v3931 = vmul.f32 1.0, %v3930
    %v3932 = vmul.f32 %v3845, %v3886
    %v3933 = vmul.f32 %v3848, %v3901
    %v3934 = vmul.f32 %v3851, %v3916
    %v3935 = vmul.f32 %v3854, %v3931
    %v3936 = vld [vmem:[#allocation51] sm:$0xff]
    %v3937 = vld [vmem:[#allocation51 + $0x8] sm:$0xff]
    %v3938 = vld [vmem:[#allocation51 + $0x10] sm:$0xff]
    %v3939 = vld [vmem:[#allocation51 + $0x18] sm:$0xff]
    %v3940 = vld [vmem:[#allocation45] sm:$0x1]
    %v3942 = vperm.slane %v3940, 0
    %v3945 = vsel %vm1228, %v3932, 0
    %v3948 = vsel %vm1228, %v3933, 0
    %v3951 = vsel %vm1228, %v3934, 0
    %v3954 = vsel %vm1228, %v3935, 0
    %3956 = vmatpush.msra.mxu0 0.0
    %3957 = vmatpush.msra.mxu0 0.0
    %3958 = vmatpush.msra.mxu0 0.0
    %3959 = vmatpush.msra.mxu0 0.0
    %3960 = vmatpush.msra.mxu0 0.0
    %3961 = vmatpush.msra.mxu0 0.0
    %3962 = vmatpush.msra.mxu0 0.0
    %3963 = vmatpush.msra.mxu0 0.0
    %3964 = vmatpush.msra.mxu0 0.0
    %3965 = vmatpush.msra.mxu0 0.0
    %3966 = vmatpush.msra.mxu0 0.0
    %3967 = vmatpush.msra.mxu0 0.0
    %3968 = vmatpush.msra.mxu0 %v3939
    %3969 = vmatpush.msra.mxu0 %v3938
    %3970 = vmatpush.msra.mxu0 %v3937
    %3971 = vmatpush.msra.mxu0 %v3936
    %3972 = vmatmul.f32.gmra.mxu0 %v3945
    %v3973 = vpop.f32.mrf.mxu0
    %v3974 = vadd.f32 %v3942, %v3973
    %3975 = vmatmul.f32.gmra.mxu0 %v3948
    %v3976 = vpop.f32.mrf.mxu0
    %v3977 = vadd.f32 %v3942, %v3976
    %3978 = vmatmul.f32.gmra.mxu0 %v3951
    %v3979 = vpop.f32.mrf.mxu0
    %v3980 = vadd.f32 %v3942, %v3979
    %3981 = vmatmul.f32.gmra.mxu0 %v3954
    %v3982 = vpop.f32.mrf.mxu0
    %v3983 = vadd.f32 %v3942, %v3982
    %3984 = vdwg.mxu0
    %v3985 = vmul.f32 %v3974, 0.5
    %v3986 = vmul.f32 %v3977, 0.5
    %v3987 = vmul.f32 %v3980, 0.5
    %v3988 = vmul.f32 %v3983, 0.5
    %v3989 = vadd.f32 %v3701, %v3985
    %v3990 = vadd.f32 %v3702, %v3986
    %v3991 = vadd.f32 %v3703, %v3987
    %v3992 = vadd.f32 %v3704, %v3988
    %v3993 = vsel %vm1499, %v3989, 0.0
    %3994 = vadd.xlane.f32.xlu0 %v3993
    %v3995 = vpop.xlane.xlu0 %3994
    %v3996 = vsel %vm1499, %v3990, 0.0
    %3997 = vadd.xlane.f32.xlu0 %v3996
    %v3998 = vpop.xlane.xlu0 %3997
    %v3999 = vsel %vm1499, %v3991, 0.0
    %4000 = vadd.xlane.f32.xlu0 %v3999
    %v4001 = vpop.xlane.xlu0 %4000
    %v4002 = vsel %vm1499, %v3992, 0.0
    %4003 = vadd.xlane.f32.xlu0 %v4002
    %v4004 = vpop.xlane.xlu0 %4003
    %v4005 = vmul.f32 %v3995, %v1559
    %v4006 = vmul.f32 %v3998, %v1559
    %v4007 = vmul.f32 %v4001, %v1559
    %v4008 = vmul.f32 %v4004, %v1559
    %v4009 = vsub.f32 %v3989, %v4005
    %v4010 = vsub.f32 %v3990, %v4006
    %v4011 = vsub.f32 %v3991, %v4007
    %v4012 = vsub.f32 %v3992, %v4008
    %v4013 = vmul.f32 %v4009, %v4009
    %v4014 = vmul.f32 %v4010, %v4010
    %v4015 = vmul.f32 %v4011, %v4011
    %v4016 = vmul.f32 %v4012, %v4012
    %v4017 = vsel %vm1499, %v4013, 0.0
    %4018 = vadd.xlane.f32.xlu0 %v4017
    %v4019 = vpop.xlane.xlu0 %4018
    %v4020 = vsel %vm1499, %v4014, 0.0
    %4021 = vadd.xlane.f32.xlu0 %v4020
    %v4022 = vpop.xlane.xlu0 %4021
    %v4023 = vsel %vm1499, %v4015, 0.0
    %4024 = vadd.xlane.f32.xlu0 %v4023
    %v4025 = vpop.xlane.xlu0 %4024
    %v4026 = vsel %vm1499, %v4016, 0.0
    %4027 = vadd.xlane.f32.xlu0 %v4026
    %v4028 = vpop.xlane.xlu0 %4027
    %v4029 = vmul.f32 %v4019, %v1559
    %v4030 = vmul.f32 %v4022, %v1559
    %v4031 = vmul.f32 %v4025, %v1559
    %v4032 = vmul.f32 %v4028, %v1559
    %v4033 = vadd.f32 %v4029, 1e-05
    %v4034 = vadd.f32 %v4030, 1e-05
    %v4035 = vadd.f32 %v4031, 1e-05
    %v4036 = vadd.f32 %v4032, 1e-05
    %v4037 = vrsqrt.pop %v4033
    %v4038 = vmul.f32 %v4037, %v4033
    %v4039 = vmul.f32 %v4038, %v4037
    %v4040 = vmul.f32 0.5, %v4039
    %v4041 = vsub.f32 1.5, %v4040
    %v4042 = vmul.f32 %v4037, %v4041
    %vm4043 = vweird.f32 %v4033
    %vm4044 = vweird.f32 %v4037
    %vm4045 = vmor %vm4043, %vm4044
    %v4046 = vsel %vm4045, %v4037, %v4042
    %v4047 = vrsqrt.pop %v4034
    %v4048 = vmul.f32 %v4047, %v4034
    %v4049 = vmul.f32 %v4048, %v4047
    %v4050 = vmul.f32 0.5, %v4049
    %v4051 = vsub.f32 1.5, %v4050
    %v4052 = vmul.f32 %v4047, %v4051
    %vm4053 = vweird.f32 %v4034
    %vm4054 = vweird.f32 %v4047
    %vm4055 = vmor %vm4053, %vm4054
    %v4056 = vsel %vm4055, %v4047, %v4052
    %v4057 = vrsqrt.pop %v4035
    %v4058 = vmul.f32 %v4057, %v4035
    %v4059 = vmul.f32 %v4058, %v4057
    %v4060 = vmul.f32 0.5, %v4059
    %v4061 = vsub.f32 1.5, %v4060
    %v4062 = vmul.f32 %v4057, %v4061
    %vm4063 = vweird.f32 %v4035
    %vm4064 = vweird.f32 %v4057
    %vm4065 = vmor %vm4063, %vm4064
    %v4066 = vsel %vm4065, %v4057, %v4062
    %v4067 = vrsqrt.pop %v4036
    %v4068 = vmul.f32 %v4067, %v4036
    %v4069 = vmul.f32 %v4068, %v4067
    %v4070 = vmul.f32 0.5, %v4069
    %v4071 = vsub.f32 1.5, %v4070
    %v4072 = vmul.f32 %v4067, %v4071
    %vm4073 = vweird.f32 %v4036
    %vm4074 = vweird.f32 %v4067
    %vm4075 = vmor %vm4073, %vm4074
    %v4076 = vsel %vm4075, %v4067, %v4072
    %v4077 = vmul.f32 %v4009, %v4046
    %v4078 = vmul.f32 %v4010, %v4056
    %v4079 = vmul.f32 %v4011, %v4066
    %v4080 = vmul.f32 %v4012, %v4076
    %v4081 = vld [vmem:[#allocation54] sm:$0x1]
    %v4083 = vperm.slane %v4081, 0
    %v4085 = vmul.f32 %v4077, %v4083
    %v4086 = vmul.f32 %v4078, %v4083
    %v4087 = vmul.f32 %v4079, %v4083
    %v4088 = vmul.f32 %v4080, %v4083
    %v4089 = vld [vmem:[#allocation52] sm:$0x1]
    %v4091 = vperm.slane %v4089, 0
    %v4093 = vadd.f32 %v4085, %v4091
    %v4094 = vadd.f32 %v4086, %v4091
    %v4095 = vadd.f32 %v4087, %v4091
    %v4096 = vadd.f32 %v4088, %v4091
    %v4097 = vsel %vm1499, %v4093, 0.0
    %4098 = vadd.xlane.f32.xlu0 %v4097
    %v4099 = vpop.xlane.xlu0 %4098
    %v4100 = vsel %vm1499, %v4094, 0.0
    %4101 = vadd.xlane.f32.xlu0 %v4100
    %v4102 = vpop.xlane.xlu0 %4101
    %v4103 = vsel %vm1499, %v4095, 0.0
    %4104 = vadd.xlane.f32.xlu0 %v4103
    %v4105 = vpop.xlane.xlu0 %4104
    %v4106 = vsel %vm1499, %v4096, 0.0
    %4107 = vadd.xlane.f32.xlu0 %v4106
    %v4108 = vpop.xlane.xlu0 %4107
    %v4109 = vmul.f32 %v4099, %v1559
    %v4110 = vmul.f32 %v4102, %v1559
    %v4111 = vmul.f32 %v4105, %v1559
    %v4112 = vmul.f32 %v4108, %v1559
    %v4113 = vsub.f32 %v4093, %v4109
    %v4114 = vsub.f32 %v4094, %v4110
    %v4115 = vsub.f32 %v4095, %v4111
    %v4116 = vsub.f32 %v4096, %v4112
    %v4117 = vmul.f32 %v4113, %v4113
    %v4118 = vmul.f32 %v4114, %v4114
    %v4119 = vmul.f32 %v4115, %v4115
    %v4120 = vmul.f32 %v4116, %v4116
    %v4121 = vsel %vm1499, %v4117, 0.0
    %4122 = vadd.xlane.f32.xlu0 %v4121
    %v4123 = vpop.xlane.xlu0 %4122
    %v4124 = vsel %vm1499, %v4118, 0.0
    %4125 = vadd.xlane.f32.xlu0 %v4124
    %v4126 = vpop.xlane.xlu0 %4125
    %v4127 = vsel %vm1499, %v4119, 0.0
    %4128 = vadd.xlane.f32.xlu0 %v4127
    %v4129 = vpop.xlane.xlu0 %4128
    %v4130 = vsel %vm1499, %v4120, 0.0
    %4131 = vadd.xlane.f32.xlu0 %v4130
    %v4132 = vpop.xlane.xlu0 %4131
    %v4133 = vmul.f32 %v4123, %v1559
    %v4134 = vmul.f32 %v4126, %v1559
    %v4135 = vmul.f32 %v4129, %v1559
    %v4136 = vmul.f32 %v4132, %v1559
    %v4137 = vadd.f32 %v4133, 1e-05
    %v4138 = vadd.f32 %v4134, 1e-05
    %v4139 = vadd.f32 %v4135, 1e-05
    %v4140 = vadd.f32 %v4136, 1e-05
    %v4141 = vrsqrt.pop %v4137
    %v4142 = vmul.f32 %v4141, %v4137
    %v4143 = vmul.f32 %v4142, %v4141
    %v4144 = vmul.f32 0.5, %v4143
    %v4145 = vsub.f32 1.5, %v4144
    %v4146 = vmul.f32 %v4141, %v4145
    %vm4147 = vweird.f32 %v4137
    %vm4148 = vweird.f32 %v4141
    %vm4149 = vmor %vm4147, %vm4148
    %v4150 = vsel %vm4149, %v4141, %v4146
    %v4151 = vrsqrt.pop %v4138
    %v4152 = vmul.f32 %v4151, %v4138
    %v4153 = vmul.f32 %v4152, %v4151
    %v4154 = vmul.f32 0.5, %v4153
    %v4155 = vsub.f32 1.5, %v4154
    %v4156 = vmul.f32 %v4151, %v4155
    %vm4157 = vweird.f32 %v4138
    %vm4158 = vweird.f32 %v4151
    %vm4159 = vmor %vm4157, %vm4158
    %v4160 = vsel %vm4159, %v4151, %v4156
    %v4161 = vrsqrt.pop %v4139
    %v4162 = vmul.f32 %v4161, %v4139
    %v4163 = vmul.f32 %v4162, %v4161
    %v4164 = vmul.f32 0.5, %v4163
    %v4165 = vsub.f32 1.5, %v4164
    %v4166 = vmul.f32 %v4161, %v4165
    %vm4167 = vweird.f32 %v4139
    %vm4168 = vweird.f32 %v4161
    %vm4169 = vmor %vm4167, %vm4168
    %v4170 = vsel %vm4169, %v4161, %v4166
    %v4171 = vrsqrt.pop %v4140
    %v4172 = vmul.f32 %v4171, %v4140
    %v4173 = vmul.f32 %v4172, %v4171
    %v4174 = vmul.f32 0.5, %v4173
    %v4175 = vsub.f32 1.5, %v4174
    %v4176 = vmul.f32 %v4171, %v4175
    %vm4177 = vweird.f32 %v4140
    %vm4178 = vweird.f32 %v4171
    %vm4179 = vmor %vm4177, %vm4178
    %v4180 = vsel %vm4179, %v4171, %v4176
    %v4181 = vmul.f32 %v4113, %v4150
    %v4182 = vmul.f32 %v4114, %v4160
    %v4183 = vmul.f32 %v4115, %v4170
    %v4184 = vmul.f32 %v4116, %v4180
    %v4185 = vld [vmem:[#allocation82] sm:$0x1]
    %v4187 = vperm.slane %v4185, 0
    %v4189 = vmul.f32 %v4181, %v4187
    %v4190 = vmul.f32 %v4182, %v4187
    %v4191 = vmul.f32 %v4183, %v4187
    %v4192 = vmul.f32 %v4184, %v4187
    %v4193 = vld [vmem:[#allocation81] sm:$0x1]
    %v4195 = vperm.slane %v4193, 0
    %v4197 = vadd.f32 %v4189, %v4195
    %v4198 = vadd.f32 %v4190, %v4195
    %v4199 = vadd.f32 %v4191, %v4195
    %v4200 = vadd.f32 %v4192, %v4195
    %v4201 = vld [vmem:[#allocation84] sm:$0xff]
    %v4202 = vld [vmem:[#allocation84 + $0x8] sm:$0xff]
    %v4203 = vld [vmem:[#allocation78] sm:$0x1]
    %v4205 = vperm.slane %v4203, 0
    %v4208 = vsel %vm1499, %v4197, 0
    %v4211 = vsel %vm1499, %v4198, 0
    %v4214 = vsel %vm1499, %v4199, 0
    %v4217 = vsel %vm1499, %v4200, 0
    %4219 = vmatpush.msra.mxu0 0.0
    %4220 = vmatpush.msra.mxu0 0.0
    %4221 = vmatpush.msra.mxu0 0.0
    %4222 = vmatpush.msra.mxu0 0.0
    %4223 = vmatpush.msra.mxu0 0.0
    %4224 = vmatpush.msra.mxu0 0.0
    %4225 = vmatpush.msra.mxu0 0.0
    %4226 = vmatpush.msra.mxu0 0.0
    %4227 = vmatpush.msra.mxu0 0.0
    %4228 = vmatpush.msra.mxu0 0.0
    %4229 = vmatpush.msra.mxu0 0.0
    %4230 = vmatpush.msra.mxu0 0.0
    %4231 = vmatpush.msra.mxu0 0.0
    %4232 = vmatpush.msra.mxu0 0.0
    %4233 = vmatpush.msra.mxu0 %v4202
    %4234 = vmatpush.msra.mxu0 %v4201
    %4235 = vmatmul.f32.gmra.mxu0 %v4208
    %v4236 = vpop.f32.mrf.mxu0
    %v4237 = vadd.f32 %v4205, %v4236
    %4238 = vmatmul.f32.gmra.mxu0 %v4211
    %v4239 = vpop.f32.mrf.mxu0
    %v4240 = vadd.f32 %v4205, %v4239
    %4241 = vmatmul.f32.gmra.mxu0 %v4214
    %v4242 = vpop.f32.mrf.mxu0
    %v4243 = vadd.f32 %v4205, %v4242
    %4244 = vmatmul.f32.gmra.mxu0 %v4217
    %v4245 = vpop.f32.mrf.mxu0
    %v4246 = vadd.f32 %v4205, %v4245
    %4247 = vdwg.mxu0
    %v4248 = vxor.u32 %v4237, 2147483648
    %v4249 = vxor.u32 %v4240, 2147483648
    %v4250 = vxor.u32 %v4243, 2147483648
    %v4251 = vxor.u32 %v4246, 2147483648
    %v4252 = vmul.f32 %v4248, 1.442695
    %v4253 = vpow.pop %v4252
    %v4254 = vmul.f32 %v4249, 1.442695
    %v4255 = vpow.pop %v4254
    %v4256 = vmul.f32 %v4250, 1.442695
    %v4257 = vpow.pop %v4256
    %v4258 = vmul.f32 %v4251, 1.442695
    %v4259 = vpow.pop %v4258
    %v4260 = vadd.f32 %v4253, 1.0
    %v4261 = vadd.f32 %v4255, 1.0
    %v4262 = vadd.f32 %v4257, 1.0
    %v4263 = vadd.f32 %v4259, 1.0
    %v4264 = vrcp.pop %v4260
    %v4265 = vmul.f32 %v4260, %v4264
    %v4266 = vsub.f32 1.0, %v4265
    %v4267 = vmul.f32 %v4264, %v4266
    %v4268 = vadd.f32 %v4264, %v4267
    %vm4269 = vweird.f32 %v4260
    %vm4270 = vweird.f32 %v4264
    %vm4271 = vmor %vm4269, %vm4270
    %v4272 = vsel %vm4271, %v4264, %v4268
    %v4273 = vand.u32 2147483647, %v4260
    %vm4274 = vcmp.eq.f32.partialorder %v4273, 8.507059e+37
    %v4275 = vand.u32 %v4260, 2147483648
    %v4276 = vor.u32 1.1754944e-38, %v4275
    %v4277 = vsel %vm4274, %v4276, %v4272
    %v4278 = vmul.f32 1.0, %v4277
    %v4279 = vrcp.pop %v4261
    %v4280 = vmul.f32 %v4261, %v4279
    %v4281 = vsub.f32 1.0, %v4280
    %v4282 = vmul.f32 %v4279, %v4281
    %v4283 = vadd.f32 %v4279, %v4282
    %vm4284 = vweird.f32 %v4261
    %vm4285 = vweird.f32 %v4279
    %vm4286 = vmor %vm4284, %vm4285
    %v4287 = vsel %vm4286, %v4279, %v4283
    %v4288 = vand.u32 2147483647, %v4261
    %vm4289 = vcmp.eq.f32.partialorder %v4288, 8.507059e+37
    %v4290 = vand.u32 %v4261, 2147483648
    %v4291 = vor.u32 1.1754944e-38, %v4290
    %v4292 = vsel %vm4289, %v4291, %v4287
    %v4293 = vmul.f32 1.0, %v4292
    %v4294 = vrcp.pop %v4262
    %v4295 = vmul.f32 %v4262, %v4294
    %v4296 = vsub.f32 1.0, %v4295
    %v4297 = vmul.f32 %v4294, %v4296
    %v4298 = vadd.f32 %v4294, %v4297
    %vm4299 = vweird.f32 %v4262
    %vm4300 = vweird.f32 %v4294
    %vm4301 = vmor %vm4299, %vm4300
    %v4302 = vsel %vm4301, %v4294, %v4298
    %v4303 = vand.u32 2147483647, %v4262
    %vm4304 = vcmp.eq.f32.partialorder %v4303, 8.507059e+37
    %v4305 = vand.u32 %v4262, 2147483648
    %v4306 = vor.u32 1.1754944e-38, %v4305
    %v4307 = vsel %vm4304, %v4306, %v4302
    %v4308 = vmul.f32 1.0, %v4307
    %v4309 = vrcp.pop %v4263
    %v4310 = vmul.f32 %v4263, %v4309
    %v4311 = vsub.f32 1.0, %v4310
    %v4312 = vmul.f32 %v4309, %v4311
    %v4313 = vadd.f32 %v4309, %v4312
    %vm4314 = vweird.f32 %v4263
    %vm4315 = vweird.f32 %v4309
    %vm4316 = vmor %vm4314, %vm4315
    %v4317 = vsel %vm4316, %v4309, %v4313
    %v4318 = vand.u32 2147483647, %v4263
    %vm4319 = vcmp.eq.f32.partialorder %v4318, 8.507059e+37
    %v4320 = vand.u32 %v4263, 2147483648
    %v4321 = vor.u32 1.1754944e-38, %v4320
    %v4322 = vsel %vm4319, %v4321, %v4317
    %v4323 = vmul.f32 1.0, %v4322
    %v4324 = vmul.f32 %v4237, %v4278
    %v4325 = vmul.f32 %v4240, %v4293
    %v4326 = vmul.f32 %v4243, %v4308
    %v4327 = vmul.f32 %v4246, %v4323
    %v4328 = vld [vmem:[#allocation85] sm:$0xff]
    %v4329 = vld [vmem:[#allocation85 + $0x8] sm:$0xff]
    %v4330 = vld [vmem:[#allocation85 + $0x10] sm:$0xff]
    %v4331 = vld [vmem:[#allocation85 + $0x18] sm:$0xff]
    %v4332 = vld [vmem:[#allocation79] sm:$0x1]
    %v4334 = vperm.slane %v4332, 0
    %v4337 = vsel %vm1228, %v4324, 0
    %v4340 = vsel %vm1228, %v4325, 0
    %v4343 = vsel %vm1228, %v4326, 0
    %v4346 = vsel %vm1228, %v4327, 0
    %4348 = vmatpush.msra.mxu0 0.0
    %4349 = vmatpush.msra.mxu0 0.0
    %4350 = vmatpush.msra.mxu0 0.0
    %4351 = vmatpush.msra.mxu0 0.0
    %4352 = vmatpush.msra.mxu0 0.0
    %4353 = vmatpush.msra.mxu0 0.0
    %4354 = vmatpush.msra.mxu0 0.0
    %4355 = vmatpush.msra.mxu0 0.0
    %4356 = vmatpush.msra.mxu0 0.0
    %4357 = vmatpush.msra.mxu0 0.0
    %4358 = vmatpush.msra.mxu0 0.0
    %4359 = vmatpush.msra.mxu0 0.0
    %4360 = vmatpush.msra.mxu0 %v4331
    %4361 = vmatpush.msra.mxu0 %v4330
    %4362 = vmatpush.msra.mxu0 %v4329
    %4363 = vmatpush.msra.mxu0 %v4328
    %4364 = vmatmul.f32.gmra.mxu0 %v4337
    %v4365 = vpop.f32.mrf.mxu0
    %v4366 = vadd.f32 %v4334, %v4365
    %4367 = vmatmul.f32.gmra.mxu0 %v4340
    %v4368 = vpop.f32.mrf.mxu0
    %v4369 = vadd.f32 %v4334, %v4368
    %4370 = vmatmul.f32.gmra.mxu0 %v4343
    %v4371 = vpop.f32.mrf.mxu0
    %v4372 = vadd.f32 %v4334, %v4371
    %4373 = vmatmul.f32.gmra.mxu0 %v4346
    %v4374 = vpop.f32.mrf.mxu0
    %v4375 = vadd.f32 %v4334, %v4374
    %4376 = vdwg.mxu0
    %v4377 = vmul.f32 %v4366, 0.5
    %v4378 = vmul.f32 %v4369, 0.5
    %v4379 = vmul.f32 %v4372, 0.5
    %v4380 = vmul.f32 %v4375, 0.5
    %v4381 = vadd.f32 %v4093, %v4377
    %v4382 = vadd.f32 %v4094, %v4378
    %v4383 = vadd.f32 %v4095, %v4379
    %v4384 = vadd.f32 %v4096, %v4380
    %v4385 = vsel %vm1499, %v4381, 0.0
    %4386 = vadd.xlane.f32.xlu0 %v4385
    %v4387 = vpop.xlane.xlu0 %4386
    %v4388 = vsel %vm1499, %v4382, 0.0
    %4389 = vadd.xlane.f32.xlu0 %v4388
    %v4390 = vpop.xlane.xlu0 %4389
    %v4391 = vsel %vm1499, %v4383, 0.0
    %4392 = vadd.xlane.f32.xlu0 %v4391
    %v4393 = vpop.xlane.xlu0 %4392
    %v4394 = vsel %vm1499, %v4384, 0.0
    %4395 = vadd.xlane.f32.xlu0 %v4394
    %v4396 = vpop.xlane.xlu0 %4395
    %v4397 = vmul.f32 %v4387, %v1559
    %v4398 = vmul.f32 %v4390, %v1559
    %v4399 = vmul.f32 %v4393, %v1559
    %v4400 = vmul.f32 %v4396, %v1559
    %v4401 = vsub.f32 %v4381, %v4397
    %v4402 = vsub.f32 %v4382, %v4398
    %v4403 = vsub.f32 %v4383, %v4399
    %v4404 = vsub.f32 %v4384, %v4400
    %v4405 = vmul.f32 %v4401, %v4401
    %v4406 = vmul.f32 %v4402, %v4402
    %v4407 = vmul.f32 %v4403, %v4403
    %v4408 = vmul.f32 %v4404, %v4404
    %v4409 = vsel %vm1499, %v4405, 0.0
    %4410 = vadd.xlane.f32.xlu0 %v4409
    %v4411 = vpop.xlane.xlu0 %4410
    %v4412 = vsel %vm1499, %v4406, 0.0
    %4413 = vadd.xlane.f32.xlu0 %v4412
    %v4414 = vpop.xlane.xlu0 %4413
    %v4415 = vsel %vm1499, %v4407, 0.0
    %4416 = vadd.xlane.f32.xlu0 %v4415
    %v4417 = vpop.xlane.xlu0 %4416
    %v4418 = vsel %vm1499, %v4408, 0.0
    %4419 = vadd.xlane.f32.xlu0 %v4418
    %v4420 = vpop.xlane.xlu0 %4419
    %v4421 = vmul.f32 %v4411, %v1559
    %v4422 = vmul.f32 %v4414, %v1559
    %v4423 = vmul.f32 %v4417, %v1559
    %v4424 = vmul.f32 %v4420, %v1559
    %v4425 = vadd.f32 %v4421, 1e-05
    %v4426 = vadd.f32 %v4422, 1e-05
    %v4427 = vadd.f32 %v4423, 1e-05
    %v4428 = vadd.f32 %v4424, 1e-05
    %v4429 = vrsqrt.pop %v4425
    %v4430 = vmul.f32 %v4429, %v4425
    %v4431 = vmul.f32 %v4430, %v4429
    %v4432 = vmul.f32 0.5, %v4431
    %v4433 = vsub.f32 1.5, %v4432
    %v4434 = vmul.f32 %v4429, %v4433
    %vm4435 = vweird.f32 %v4425
    %vm4436 = vweird.f32 %v4429
    %vm4437 = vmor %vm4435, %vm4436
    %v4438 = vsel %vm4437, %v4429, %v4434
    %v4439 = vrsqrt.pop %v4426
    %v4440 = vmul.f32 %v4439, %v4426
    %v4441 = vmul.f32 %v4440, %v4439
    %v4442 = vmul.f32 0.5, %v4441
    %v4443 = vsub.f32 1.5, %v4442
    %v4444 = vmul.f32 %v4439, %v4443
    %vm4445 = vweird.f32 %v4426
    %vm4446 = vweird.f32 %v4439
    %vm4447 = vmor %vm4445, %vm4446
    %v4448 = vsel %vm4447, %v4439, %v4444
    %v4449 = vrsqrt.pop %v4427
    %v4450 = vmul.f32 %v4449, %v4427
    %v4451 = vmul.f32 %v4450, %v4449
    %v4452 = vmul.f32 0.5, %v4451
    %v4453 = vsub.f32 1.5, %v4452
    %v4454 = vmul.f32 %v4449, %v4453
    %vm4455 = vweird.f32 %v4427
    %vm4456 = vweird.f32 %v4449
    %vm4457 = vmor %vm4455, %vm4456
    %v4458 = vsel %vm4457, %v4449, %v4454
    %v4459 = vrsqrt.pop %v4428
    %v4460 = vmul.f32 %v4459, %v4428
    %v4461 = vmul.f32 %v4460, %v4459
    %v4462 = vmul.f32 0.5, %v4461
    %v4463 = vsub.f32 1.5, %v4462
    %v4464 = vmul.f32 %v4459, %v4463
    %vm4465 = vweird.f32 %v4428
    %vm4466 = vweird.f32 %v4459
    %vm4467 = vmor %vm4465, %vm4466
    %v4468 = vsel %vm4467, %v4459, %v4464
    %v4469 = vmul.f32 %v4401, %v4438
    %v4470 = vmul.f32 %v4402, %v4448
    %v4471 = vmul.f32 %v4403, %v4458
    %v4472 = vmul.f32 %v4404, %v4468
    %v4473 = vld [vmem:[#allocation57] sm:$0x1]
    %v4475 = vperm.slane %v4473, 0
    %v4477 = vmul.f32 %v4469, %v4475
    %v4478 = vmul.f32 %v4470, %v4475
    %v4479 = vmul.f32 %v4471, %v4475
    %v4480 = vmul.f32 %v4472, %v4475
    %v4481 = vld [vmem:[#allocation55] sm:$0x1]
    %v4483 = vperm.slane %v4481, 0
    %v4485 = vadd.f32 %v4477, %v4483
    %v4486 = vadd.f32 %v4478, %v4483
    %v4487 = vadd.f32 %v4479, %v4483
    %v4488 = vadd.f32 %v4480, %v4483
    %v4489 = vld [vmem:[#allocation63] sm:$0xff]
    %v4490 = vld [vmem:[#allocation63 + $0x8] sm:$0xff]
    %v4491 = vld [vmem:[%s77] sm:$0x1]
    %v4493 = vperm.slane %v4491, 0
    %v4496 = vsel %vm1499, %v4485, 0
    %v4499 = vsel %vm1499, %v4486, 0
    %v4502 = vsel %vm1499, %v4487, 0
    %v4505 = vsel %vm1499, %v4488, 0
    %4507 = vmatpush.msra.mxu0 0.0
    %4508 = vmatpush.msra.mxu0 0.0
    %4509 = vmatpush.msra.mxu0 0.0
    %4510 = vmatpush.msra.mxu0 0.0
    %4511 = vmatpush.msra.mxu0 0.0
    %4512 = vmatpush.msra.mxu0 0.0
    %4513 = vmatpush.msra.mxu0 0.0
    %4514 = vmatpush.msra.mxu0 0.0
    %4515 = vmatpush.msra.mxu0 0.0
    %4516 = vmatpush.msra.mxu0 0.0
    %4517 = vmatpush.msra.mxu0 0.0
    %4518 = vmatpush.msra.mxu0 0.0
    %4519 = vmatpush.msra.mxu0 0.0
    %4520 = vmatpush.msra.mxu0 0.0
    %4521 = vmatpush.msra.mxu0 %v4490
    %4522 = vmatpush.msra.mxu0 %v4489
    %4523 = vmatmul.f32.gmra.mxu0 %v4496
    %v4524 = vpop.f32.mrf.mxu0
    %v4525 = vadd.f32 %v4493, %v4524
    %4526 = vmatmul.f32.gmra.mxu0 %v4499
    %v4527 = vpop.f32.mrf.mxu0
    %v4528 = vadd.f32 %v4493, %v4527
    %4529 = vmatmul.f32.gmra.mxu0 %v4502
    %v4530 = vpop.f32.mrf.mxu0
    %v4531 = vadd.f32 %v4493, %v4530
    %4532 = vmatmul.f32.gmra.mxu0 %v4505
    %v4533 = vpop.f32.mrf.mxu0
    %v4534 = vadd.f32 %v4493, %v4533
    %4535 = vdwg.mxu0
    %v4536 = vld [vmem:[#allocation60] sm:$0xff]
    %v4537 = vld [vmem:[#allocation60 + $0x8] sm:$0xff]
    %v4538 = vld [vmem:[%s75] sm:$0x1]
    %v4540 = vperm.slane %v4538, 0
    %4542 = vmatpush.msra.mxu0 0.0
    %4543 = vmatpush.msra.mxu0 0.0
    %4544 = vmatpush.msra.mxu0 0.0
    %4545 = vmatpush.msra.mxu0 0.0
    %4546 = vmatpush.msra.mxu0 0.0
    %4547 = vmatpush.msra.mxu0 0.0
    %4548 = vmatpush.msra.mxu0 0.0
    %4549 = vmatpush.msra.mxu0 0.0
    %4550 = vmatpush.msra.mxu0 0.0
    %4551 = vmatpush.msra.mxu0 0.0
    %4552 = vmatpush.msra.mxu0 0.0
    %4553 = vmatpush.msra.mxu0 0.0
    %4554 = vmatpush.msra.mxu0 0.0
    %4555 = vmatpush.msra.mxu0 0.0
    %4556 = vmatpush.msra.mxu0 %v4537
    %4557 = vmatpush.msra.mxu0 %v4536
    %4558 = vmatmul.f32.gmra.mxu0 %v4496
    %v4559 = vpop.f32.mrf.mxu0
    %v4560 = vadd.f32 %v4540, %v4559
    %4561 = vmatmul.f32.gmra.mxu0 %v4499
    %v4562 = vpop.f32.mrf.mxu0
    %v4563 = vadd.f32 %v4540, %v4562
    %4564 = vmatmul.f32.gmra.mxu0 %v4502
    %v4565 = vpop.f32.mrf.mxu0
    %v4566 = vadd.f32 %v4540, %v4565
    %4567 = vmatmul.f32.gmra.mxu0 %v4505
    %v4568 = vpop.f32.mrf.mxu0
    %v4569 = vadd.f32 %v4540, %v4568
    %4570 = vdwg.mxu0
    %v4571 = vld [vmem:[%s93] sm:$0xff]
    %v4572 = vld [vmem:[%s93 + $0x8] sm:$0xff]
    %v4573 = vld [vmem:[%s79] sm:$0x1]
    %v4575 = vperm.slane %v4573, 0
    %4577 = vmatpush.msra.mxu0 0.0
    %4578 = vmatpush.msra.mxu0 0.0
    %4579 = vmatpush.msra.mxu0 0.0
    %4580 = vmatpush.msra.mxu0 0.0
    %4581 = vmatpush.msra.mxu0 0.0
    %4582 = vmatpush.msra.mxu0 0.0
    %4583 = vmatpush.msra.mxu0 0.0
    %4584 = vmatpush.msra.mxu0 0.0
    %4585 = vmatpush.msra.mxu0 0.0
    %4586 = vmatpush.msra.mxu0 0.0
    %4587 = vmatpush.msra.mxu0 0.0
    %4588 = vmatpush.msra.mxu0 0.0
    %4589 = vmatpush.msra.mxu0 0.0
    %4590 = vmatpush.msra.mxu0 0.0
    %4591 = vmatpush.msra.mxu0 %v4572
    %4592 = vmatpush.msra.mxu0 %v4571
    %4593 = vmatmul.f32.gmra.mxu0 %v4496
    %v4594 = vpop.f32.mrf.mxu0
    %v4595 = vadd.f32 %v4575, %v4594
    %4596 = vmatmul.f32.gmra.mxu0 %v4499
    %v4597 = vpop.f32.mrf.mxu0
    %v4598 = vadd.f32 %v4575, %v4597
    %4599 = vmatmul.f32.gmra.mxu0 %v4502
    %v4600 = vpop.f32.mrf.mxu0
    %v4601 = vadd.f32 %v4575, %v4600
    %4602 = vmatmul.f32.gmra.mxu0 %v4505
    %v4603 = vpop.f32.mrf.mxu0
    %v4604 = vadd.f32 %v4575, %v4603
    %4605 = vdwg.mxu0
    %v4607 = vsel %vm2057, %v4525, 0
    %v4610 = vsel %vm2057, %v4528, 0
    %v4613 = vsel %vm2057, %v4531, 0
    %v4616 = vsel %vm2057, %v4534, 0
    %v4619 = vsel %vm2057, %v4560, 0
    %v4622 = vsel %vm2057, %v4563, 0
    %v4625 = vsel %vm2057, %v4566, 0
    %v4628 = vsel %vm2057, %v4569, 0
    %4630 = vmatpush.xpose.msra.mxu0 0.0
    %4631 = vmatpush.xpose.msra.mxu0 0.0
    %4632 = vmatpush.xpose.msra.mxu0 0.0
    %4633 = vmatpush.xpose.msra.mxu0 0.0
    %4634 = vmatpush.xpose.msra.mxu0 0.0
    %4635 = vmatpush.xpose.msra.mxu0 0.0
    %4636 = vmatpush.xpose.msra.mxu0 0.0
    %4637 = vmatpush.xpose.msra.mxu0 0.0
    %4638 = vmatpush.xpose.msra.mxu0 0.0
    %4639 = vmatpush.xpose.msra.mxu0 0.0
    %4640 = vmatpush.xpose.msra.mxu0 0.0
    %4641 = vmatpush.xpose.msra.mxu0 0.0
    %4642 = vmatpush.xpose.msra.mxu0 %v4628
    %4643 = vmatpush.xpose.msra.mxu0 %v4625
    %4644 = vmatpush.xpose.msra.mxu0 %v4622
    %4645 = vmatpush.xpose.msra.mxu0 %v4619
    %4646 = vmatmul.f32.gmra.mxu0 %v4607
    %v4647 = vpop.f32.mrf.mxu0
    %v4648 = vadd.f32 0.0, %v4647
    %4649 = vmatmul.f32.gmra.mxu0 %v4610
    %v4650 = vpop.f32.mrf.mxu0
    %v4651 = vadd.f32 0.0, %v4650
    %4652 = vmatmul.f32.gmra.mxu0 %v4613
    %v4653 = vpop.f32.mrf.mxu0
    %v4654 = vadd.f32 0.0, %v4653
    %4655 = vmatmul.f32.gmra.mxu0 %v4616
    %v4656 = vpop.f32.mrf.mxu0
    %v4657 = vadd.f32 0.0, %v4656
    %4658 = vdwg.mxu0
    %v4659 = vmul.f32 %v4648, 0.5
    %v4660 = vmul.f32 %v4651, 0.5
    %v4661 = vmul.f32 %v4654, 0.5
    %v4662 = vmul.f32 %v4657, 0.5
    %v4663 = vadd.f32 %v4659, %v1210
    %v4664 = vadd.f32 %v4660, %v1211
    %v4665 = vadd.f32 %v4661, %v1212
    %v4666 = vadd.f32 %v4662, %v1213
    %v4667 = vsel %vm1228, %v4663, -inf
    %4668 = vmax.xlane.f32.xlu0 %v4667
    %v4669 = vpop.xlane.xlu0 %4668
    %v4670 = vsel %vm1228, %v4664, -inf
    %4671 = vmax.xlane.f32.xlu0 %v4670
    %v4672 = vpop.xlane.xlu0 %4671
    %v4673 = vsel %vm1228, %v4665, -inf
    %4674 = vmax.xlane.f32.xlu0 %v4673
    %v4675 = vpop.xlane.xlu0 %4674
    %v4676 = vsel %vm1228, %v4666, -inf
    %4677 = vmax.xlane.f32.xlu0 %v4676
    %v4678 = vpop.xlane.xlu0 %4677
    %v4679 = vsub.f32 %v4663, %v4669
    %v4680 = vsub.f32 %v4664, %v4672
    %v4681 = vsub.f32 %v4665, %v4675
    %v4682 = vsub.f32 %v4666, %v4678
    %v4683 = vmul.f32 %v4679, 1.442695
    %v4684 = vpow.pop %v4683
    %v4685 = vmul.f32 %v4680, 1.442695
    %v4686 = vpow.pop %v4685
    %v4687 = vmul.f32 %v4681, 1.442695
    %v4688 = vpow.pop %v4687
    %v4689 = vmul.f32 %v4682, 1.442695
    %v4690 = vpow.pop %v4689
    %v4691 = vsel %vm1228, %v4684, 0.0
    %4692 = vadd.xlane.f32.xlu0 %v4691
    %v4693 = vpop.xlane.xlu0 %4692
    %v4694 = vsel %vm1228, %v4686, 0.0
    %4695 = vadd.xlane.f32.xlu0 %v4694
    %v4696 = vpop.xlane.xlu0 %4695
    %v4697 = vsel %vm1228, %v4688, 0.0
    %4698 = vadd.xlane.f32.xlu0 %v4697
    %v4699 = vpop.xlane.xlu0 %4698
    %v4700 = vsel %vm1228, %v4690, 0.0
    %4701 = vadd.xlane.f32.xlu0 %v4700
    %v4702 = vpop.xlane.xlu0 %4701
    %v4703 = vrcp.pop %v4693
    %v4704 = vrcp.pop %v4696
    %v4705 = vrcp.pop %v4699
    %v4706 = vrcp.pop %v4702
    %v4707 = vmul.f32 %v4684, %v4703
    %v4708 = vmul.f32 %v4686, %v4704
    %v4709 = vmul.f32 %v4688, %v4705
    %v4710 = vmul.f32 %v4690, %v4706
    %v4712 = vsel %vm1228, %v4707, 0
    %v4715 = vsel %vm1228, %v4708, 0
    %v4718 = vsel %vm1228, %v4709, 0
    %v4721 = vsel %vm1228, %v4710, 0
    %4723 = vmatpush.msra.mxu0 0.0
    %4724 = vmatpush.msra.mxu0 0.0
    %4725 = vmatpush.msra.mxu0 0.0
    %4726 = vmatpush.msra.mxu0 0.0
    %4727 = vmatpush.msra.mxu0 0.0
    %4728 = vmatpush.msra.mxu0 0.0
    %4729 = vmatpush.msra.mxu0 0.0
    %4730 = vmatpush.msra.mxu0 0.0
    %4731 = vmatpush.msra.mxu0 0.0
    %4732 = vmatpush.msra.mxu0 0.0
    %4733 = vmatpush.msra.mxu0 0.0
    %4734 = vmatpush.msra.mxu0 0.0
    %4735 = vmatpush.msra.mxu0 %v4604
    %4736 = vmatpush.msra.mxu0 %v4601
    %4737 = vmatpush.msra.mxu0 %v4598
    %4738 = vmatpush.msra.mxu0 %v4595
    %4739 = vmatmul.f32.gmra.mxu0 %v4712
    %v4740 = vpop.f32.mrf.mxu0
    %v4741 = vadd.f32 0.0, %v4740
    %4742 = vmatmul.f32.gmra.mxu0 %v4715
    %v4743 = vpop.f32.mrf.mxu0
    %v4744 = vadd.f32 0.0, %v4743
    %4745 = vmatmul.f32.gmra.mxu0 %v4718
    %v4746 = vpop.f32.mrf.mxu0
    %v4747 = vadd.f32 0.0, %v4746
    %4748 = vmatmul.f32.gmra.mxu0 %v4721
    %v4749 = vpop.f32.mrf.mxu0
    %v4750 = vadd.f32 0.0, %v4749
    %4751 = vdwg.mxu0
    %v4752 = vld [vmem:[#allocation61] sm:$0xf]
    %s4753 = scalar_lea.vmem [#allocation63], 16
    %v4754 = vld [vmem:[%s4753] sm:$0xff]
    %v4755 = vld [vmem:[%s4753 + $0x8] sm:$0xff]
    %s4756 = scalar_lea.vmem %s77, 1
    %v4757 = vld [vmem:[%s4756] sm:$0x1]
    %v4759 = vperm.slane %v4757, 0
    %4761 = vmatpush.msra.mxu0 0.0
    %4762 = vmatpush.msra.mxu0 0.0
    %4763 = vmatpush.msra.mxu0 0.0
    %4764 = vmatpush.msra.mxu0 0.0
    %4765 = vmatpush.msra.mxu0 0.0
    %4766 = vmatpush.msra.mxu0 0.0
    %4767 = vmatpush.msra.mxu0 0.0
    %4768 = vmatpush.msra.mxu0 0.0
    %4769 = vmatpush.msra.mxu0 0.0
    %4770 = vmatpush.msra.mxu0 0.0
    %4771 = vmatpush.msra.mxu0 0.0
    %4772 = vmatpush.msra.mxu0 0.0
    %4773 = vmatpush.msra.mxu0 0.0
    %4774 = vmatpush.msra.mxu0 0.0
    %4775 = vmatpush.msra.mxu0 %v4755
    %4776 = vmatpush.msra.mxu0 %v4754
    %4777 = vmatmul.f32.gmra.mxu0 %v4496
    %v4778 = vpop.f32.mrf.mxu0
    %v4779 = vadd.f32 %v4759, %v4778
    %4780 = vmatmul.f32.gmra.mxu0 %v4499
    %v4781 = vpop.f32.mrf.mxu0
    %v4782 = vadd.f32 %v4759, %v4781
    %4783 = vmatmul.f32.gmra.mxu0 %v4502
    %v4784 = vpop.f32.mrf.mxu0
    %v4785 = vadd.f32 %v4759, %v4784
    %4786 = vmatmul.f32.gmra.mxu0 %v4505
    %v4787 = vpop.f32.mrf.mxu0
    %v4788 = vadd.f32 %v4759, %v4787
    %4789 = vdwg.mxu0
    %s4790 = scalar_lea.vmem [#allocation60], 16
    %v4791 = vld [vmem:[%s4790] sm:$0xff]
    %v4792 = vld [vmem:[%s4790 + $0x8] sm:$0xff]
    %s4793 = scalar_lea.vmem %s75, 1
    %v4794 = vld [vmem:[%s4793] sm:$0x1]
    %v4796 = vperm.slane %v4794, 0
    %4798 = vmatpush.msra.mxu0 0.0
    %4799 = vmatpush.msra.mxu0 0.0
    %4800 = vmatpush.msra.mxu0 0.0
    %4801 = vmatpush.msra.mxu0 0.0
    %4802 = vmatpush.msra.mxu0 0.0
    %4803 = vmatpush.msra.mxu0 0.0
    %4804 = vmatpush.msra.mxu0 0.0
    %4805 = vmatpush.msra.mxu0 0.0
    %4806 = vmatpush.msra.mxu0 0.0
    %4807 = vmatpush.msra.mxu0 0.0
    %4808 = vmatpush.msra.mxu0 0.0
    %4809 = vmatpush.msra.mxu0 0.0
    %4810 = vmatpush.msra.mxu0 0.0
    %4811 = vmatpush.msra.mxu0 0.0
    %4812 = vmatpush.msra.mxu0 %v4792
    %4813 = vmatpush.msra.mxu0 %v4791
    %4814 = vmatmul.f32.gmra.mxu0 %v4496
    %v4815 = vpop.f32.mrf.mxu0
    %v4816 = vadd.f32 %v4796, %v4815
    %4817 = vmatmul.f32.gmra.mxu0 %v4499
    %v4818 = vpop.f32.mrf.mxu0
    %v4819 = vadd.f32 %v4796, %v4818
    %4820 = vmatmul.f32.gmra.mxu0 %v4502
    %v4821 = vpop.f32.mrf.mxu0
    %v4822 = vadd.f32 %v4796, %v4821
    %4823 = vmatmul.f32.gmra.mxu0 %v4505
    %v4824 = vpop.f32.mrf.mxu0
    %v4825 = vadd.f32 %v4796, %v4824
    %4826 = vdwg.mxu0
    %s4827 = scalar_lea.vmem %s93, 16
    %v4828 = vld [vmem:[%s4827] sm:$0xff]
    %v4829 = vld [vmem:[%s4827 + $0x8] sm:$0xff]
    %s4830 = scalar_lea.vmem %s79, 1
    %v4831 = vld [vmem:[%s4830] sm:$0x1]
    %v4833 = vperm.slane %v4831, 0
    %4835 = vmatpush.msra.mxu0 0.0
    %4836 = vmatpush.msra.mxu0 0.0
    %4837 = vmatpush.msra.mxu0 0.0
    %4838 = vmatpush.msra.mxu0 0.0
    %4839 = vmatpush.msra.mxu0 0.0
    %4840 = vmatpush.msra.mxu0 0.0
    %4841 = vmatpush.msra.mxu0 0.0
    %4842 = vmatpush.msra.mxu0 0.0
    %4843 = vmatpush.msra.mxu0 0.0
    %4844 = vmatpush.msra.mxu0 0.0
    %4845 = vmatpush.msra.mxu0 0.0
    %4846 = vmatpush.msra.mxu0 0.0
    %4847 = vmatpush.msra.mxu0 0.0
    %4848 = vmatpush.msra.mxu0 0.0
    %4849 = vmatpush.msra.mxu0 %v4829
    %4850 = vmatpush.msra.mxu0 %v4828
    %4851 = vmatmul.f32.gmra.mxu0 %v4496
    %v4852 = vpop.f32.mrf.mxu0
    %v4853 = vadd.f32 %v4833, %v4852
    %4854 = vmatmul.f32.gmra.mxu0 %v4499
    %v4855 = vpop.f32.mrf.mxu0
    %v4856 = vadd.f32 %v4833, %v4855
    %4857 = vmatmul.f32.gmra.mxu0 %v4502
    %v4858 = vpop.f32.mrf.mxu0
    %v4859 = vadd.f32 %v4833, %v4858
    %4860 = vmatmul.f32.gmra.mxu0 %v4505
    %v4861 = vpop.f32.mrf.mxu0
    %v4862 = vadd.f32 %v4833, %v4861
    %4863 = vdwg.mxu0
    %v4865 = vsel %vm2057, %v4779, 0
    %v4868 = vsel %vm2057, %v4782, 0
    %v4871 = vsel %vm2057, %v4785, 0
    %v4874 = vsel %vm2057, %v4788, 0
    %v4877 = vsel %vm2057, %v4816, 0
    %v4880 = vsel %vm2057, %v4819, 0
    %v4883 = vsel %vm2057, %v4822, 0
    %v4886 = vsel %vm2057, %v4825, 0
    %4888 = vmatpush.xpose.msra.mxu0 0.0
    %4889 = vmatpush.xpose.msra.mxu0 0.0
    %4890 = vmatpush.xpose.msra.mxu0 0.0
    %4891 = vmatpush.xpose.msra.mxu0 0.0
    %4892 = vmatpush.xpose.msra.mxu0 0.0
    %4893 = vmatpush.xpose.msra.mxu0 0.0
    %4894 = vmatpush.xpose.msra.mxu0 0.0
    %4895 = vmatpush.xpose.msra.mxu0 0.0
    %4896 = vmatpush.xpose.msra.mxu0 0.0
    %4897 = vmatpush.xpose.msra.mxu0 0.0
    %4898 = vmatpush.xpose.msra.mxu0 0.0
    %4899 = vmatpush.xpose.msra.mxu0 0.0
    %4900 = vmatpush.xpose.msra.mxu0 %v4886
    %4901 = vmatpush.xpose.msra.mxu0 %v4883
    %4902 = vmatpush.xpose.msra.mxu0 %v4880
    %4903 = vmatpush.xpose.msra.mxu0 %v4877
    %4904 = vmatmul.f32.gmra.mxu0 %v4865
    %v4905 = vpop.f32.mrf.mxu0
    %v4906 = vadd.f32 0.0, %v4905
    %4907 = vmatmul.f32.gmra.mxu0 %v4868
    %v4908 = vpop.f32.mrf.mxu0
    %v4909 = vadd.f32 0.0, %v4908
    %4910 = vmatmul.f32.gmra.mxu0 %v4871
    %v4911 = vpop.f32.mrf.mxu0
    %v4912 = vadd.f32 0.0, %v4911
    %4913 = vmatmul.f32.gmra.mxu0 %v4874
    %v4914 = vpop.f32.mrf.mxu0
    %v4915 = vadd.f32 0.0, %v4914
    %4916 = vdwg.mxu0
    %v4917 = vmul.f32 %v4906, 0.5
    %v4918 = vmul.f32 %v4909, 0.5
    %v4919 = vmul.f32 %v4912, 0.5
    %v4920 = vmul.f32 %v4915, 0.5
    %v4921 = vadd.f32 %v4917, %v1210
    %v4922 = vadd.f32 %v4918, %v1211
    %v4923 = vadd.f32 %v4919, %v1212
    %v4924 = vadd.f32 %v4920, %v1213
    %v4925 = vsel %vm1228, %v4921, -inf
    %4926 = vmax.xlane.f32.xlu0 %v4925
    %v4927 = vpop.xlane.xlu0 %4926
    %v4928 = vsel %vm1228, %v4922, -inf
    %4929 = vmax.xlane.f32.xlu0 %v4928
    %v4930 = vpop.xlane.xlu0 %4929
    %v4931 = vsel %vm1228, %v4923, -inf
    %4932 = vmax.xlane.f32.xlu0 %v4931
    %v4933 = vpop.xlane.xlu0 %4932
    %v4934 = vsel %vm1228, %v4924, -inf
    %4935 = vmax.xlane.f32.xlu0 %v4934
    %v4936 = vpop.xlane.xlu0 %4935
    %v4937 = vsub.f32 %v4921, %v4927
    %v4938 = vsub.f32 %v4922, %v4930
    %v4939 = vsub.f32 %v4923, %v4933
    %v4940 = vsub.f32 %v4924, %v4936
    %v4941 = vmul.f32 %v4937, 1.442695
    %v4942 = vpow.pop %v4941
    %v4943 = vmul.f32 %v4938, 1.442695
    %v4944 = vpow.pop %v4943
    %v4945 = vmul.f32 %v4939, 1.442695
    %v4946 = vpow.pop %v4945
    %v4947 = vmul.f32 %v4940, 1.442695
    %v4948 = vpow.pop %v4947
    %v4949 = vsel %vm1228, %v4942, 0.0
    %4950 = vadd.xlane.f32.xlu0 %v4949
    %v4951 = vpop.xlane.xlu0 %4950
    %v4952 = vsel %vm1228, %v4944, 0.0
    %4953 = vadd.xlane.f32.xlu0 %v4952
    %v4954 = vpop.xlane.xlu0 %4953
    %v4955 = vsel %vm1228, %v4946, 0.0
    %4956 = vadd.xlane.f32.xlu0 %v4955
    %v4957 = vpop.xlane.xlu0 %4956
    %v4958 = vsel %vm1228, %v4948, 0.0
    %4959 = vadd.xlane.f32.xlu0 %v4958
    %v4960 = vpop.xlane.xlu0 %4959
    %v4961 = vrcp.pop %v4951
    %v4962 = vrcp.pop %v4954
    %v4963 = vrcp.pop %v4957
    %v4964 = vrcp.pop %v4960
    %v4965 = vmul.f32 %v4942, %v4961
    %v4966 = vmul.f32 %v4944, %v4962
    %v4967 = vmul.f32 %v4946, %v4963
    %v4968 = vmul.f32 %v4948, %v4964
    %v4970 = vsel %vm1228, %v4965, 0
    %v4973 = vsel %vm1228, %v4966, 0
    %v4976 = vsel %vm1228, %v4967, 0
    %v4979 = vsel %vm1228, %v4968, 0
    %4981 = vmatpush.msra.mxu0 0.0
    %4982 = vmatpush.msra.mxu0 0.0
    %4983 = vmatpush.msra.mxu0 0.0
    %4984 = vmatpush.msra.mxu0 0.0
    %4985 = vmatpush.msra.mxu0 0.0
    %4986 = vmatpush.msra.mxu0 0.0
    %4987 = vmatpush.msra.mxu0 0.0
    %4988 = vmatpush.msra.mxu0 0.0
    %4989 = vmatpush.msra.mxu0 0.0
    %4990 = vmatpush.msra.mxu0 0.0
    %4991 = vmatpush.msra.mxu0 0.0
    %4992 = vmatpush.msra.mxu0 0.0
    %4993 = vmatpush.msra.mxu0 %v4862
    %4994 = vmatpush.msra.mxu0 %v4859
    %4995 = vmatpush.msra.mxu0 %v4856
    %4996 = vmatpush.msra.mxu0 %v4853
    %4997 = vmatmul.f32.gmra.mxu0 %v4970
    %v4998 = vpop.f32.mrf.mxu0
    %v4999 = vadd.f32 0.0, %v4998
    %5000 = vmatmul.f32.gmra.mxu0 %v4973
    %v5001 = vpop.f32.mrf.mxu0
    %v5002 = vadd.f32 0.0, %v5001
    %5003 = vmatmul.f32.gmra.mxu0 %v4976
    %v5004 = vpop.f32.mrf.mxu0
    %v5005 = vadd.f32 0.0, %v5004
    %5006 = vmatmul.f32.gmra.mxu0 %v4979
    %v5007 = vpop.f32.mrf.mxu0
    %v5008 = vadd.f32 0.0, %v5007
    %5009 = vdwg.mxu0
    %s5010 = scalar_lea.vmem [#allocation61], 4
    %v5011 = vld [vmem:[%s5010] sm:$0xf]
    %v5013 = vsel %vm2057, %v4999, 0
    %v5016 = vsel %vm2057, %v5002, 0
    %v5019 = vsel %vm2057, %v5005, 0
    %v5022 = vsel %vm2057, %v5008, 0
    %v5025 = vsel %vm2476, %v5011, 0
    %5027 = vmatpush.msra.mxu0 0.0
    %5028 = vmatpush.msra.mxu0 0.0
    %5029 = vmatpush.msra.mxu0 0.0
    %5030 = vmatpush.msra.mxu0 0.0
    %5031 = vmatpush.msra.mxu0 0.0
    %5032 = vmatpush.msra.mxu0 0.0
    %5033 = vmatpush.msra.mxu0 0.0
    %5034 = vmatpush.msra.mxu0 0.0
    %5035 = vmatpush.msra.mxu0 0.0
    %5036 = vmatpush.msra.mxu0 0.0
    %5037 = vmatpush.msra.mxu0 0.0
    %5038 = vmatpush.msra.mxu0 0.0
    %5039 = vmatpush.msra.mxu0 0.0
    %5040 = vmatpush.msra.mxu0 0.0
    %5041 = vmatpush.msra.mxu0 0.0
    %5042 = vmatpush.msra.mxu0 %v5025
    %5043 = vmatmul.f32.gmra.mxu0 %v5013
    %v5044 = vpop.f32.mrf.mxu0
    %v5045 = vadd.f32 0.0, %v5044
    %5046 = vmatmul.f32.gmra.mxu0 %v5016
    %v5047 = vpop.f32.mrf.mxu0
    %v5048 = vadd.f32 0.0, %v5047
    %5049 = vmatmul.f32.gmra.mxu0 %v5019
    %v5050 = vpop.f32.mrf.mxu0
    %v5051 = vadd.f32 0.0, %v5050
    %5052 = vmatmul.f32.gmra.mxu0 %v5022
    %v5053 = vpop.f32.mrf.mxu0
    %v5054 = vadd.f32 0.0, %v5053
    %5055 = vdwg.mxu0
    %v5057 = vsel %vm2057, %v4741, 0
    %v5060 = vsel %vm2057, %v4744, 0
    %v5063 = vsel %vm2057, %v4747, 0
    %v5066 = vsel %vm2057, %v4750, 0
    %v5069 = vsel %vm2476, %v4752, 0
    %5071 = vmatpush.msra.mxu0 0.0
    %5072 = vmatpush.msra.mxu0 0.0
    %5073 = vmatpush.msra.mxu0 0.0
    %5074 = vmatpush.msra.mxu0 0.0
    %5075 = vmatpush.msra.mxu0 0.0
    %5076 = vmatpush.msra.mxu0 0.0
    %5077 = vmatpush.msra.mxu0 0.0
    %5078 = vmatpush.msra.mxu0 0.0
    %5079 = vmatpush.msra.mxu0 0.0
    %5080 = vmatpush.msra.mxu0 0.0
    %5081 = vmatpush.msra.mxu0 0.0
    %5082 = vmatpush.msra.mxu0 0.0
    %5083 = vmatpush.msra.mxu0 0.0
    %5084 = vmatpush.msra.mxu0 0.0
    %5085 = vmatpush.msra.mxu0 0.0
    %5086 = vmatpush.msra.mxu0 %v5069
    %5087 = vmatmul.f32.gmra.mxu0 %v5057
    %v5088 = vpop.f32.mrf.mxu0
    %v5089 = vadd.f32 %v5045, %v5088
    %5090 = vmatmul.f32.gmra.mxu0 %v5060
    %v5091 = vpop.f32.mrf.mxu0
    %v5092 = vadd.f32 %v5048, %v5091
    %5093 = vmatmul.f32.gmra.mxu0 %v5063
    %v5094 = vpop.f32.mrf.mxu0
    %v5095 = vadd.f32 %v5051, %v5094
    %5096 = vmatmul.f32.gmra.mxu0 %v5066
    %v5097 = vpop.f32.mrf.mxu0
    %v5098 = vadd.f32 %v5054, %v5097
    %5099 = vdwg.mxu0
    %s5100 = scalar_lea.vmem [#allocation63], 32
    %v5101 = vld [vmem:[%s5100] sm:$0xff]
    %v5102 = vld [vmem:[%s5100 + $0x8] sm:$0xff]
    %s5103 = scalar_lea.vmem %s77, 2
    %v5104 = vld [vmem:[%s5103] sm:$0x1]
    %v5106 = vperm.slane %v5104, 0
    %5108 = vmatpush.msra.mxu0 0.0
    %5109 = vmatpush.msra.mxu0 0.0
    %5110 = vmatpush.msra.mxu0 0.0
    %5111 = vmatpush.msra.mxu0 0.0
    %5112 = vmatpush.msra.mxu0 0.0
    %5113 = vmatpush.msra.mxu0 0.0
    %5114 = vmatpush.msra.mxu0 0.0
    %5115 = vmatpush.msra.mxu0 0.0
    %5116 = vmatpush.msra.mxu0 0.0
    %5117 = vmatpush.msra.mxu0 0.0
    %5118 = vmatpush.msra.mxu0 0.0
    %5119 = vmatpush.msra.mxu0 0.0
    %5120 = vmatpush.msra.mxu0 0.0
    %5121 = vmatpush.msra.mxu0 0.0
    %5122 = vmatpush.msra.mxu0 %v5102
    %5123 = vmatpush.msra.mxu0 %v5101
    %5124 = vmatmul.f32.gmra.mxu0 %v4496
    %v5125 = vpop.f32.mrf.mxu0
    %v5126 = vadd.f32 %v5106, %v5125
    %5127 = vmatmul.f32.gmra.mxu0 %v4499
    %v5128 = vpop.f32.mrf.mxu0
    %v5129 = vadd.f32 %v5106, %v5128
    %5130 = vmatmul.f32.gmra.mxu0 %v4502
    %v5131 = vpop.f32.mrf.mxu0
    %v5132 = vadd.f32 %v5106, %v5131
    %5133 = vmatmul.f32.gmra.mxu0 %v4505
    %v5134 = vpop.f32.mrf.mxu0
    %v5135 = vadd.f32 %v5106, %v5134
    %5136 = vdwg.mxu0
    %s5137 = scalar_lea.vmem [#allocation60], 32
    %v5138 = vld [vmem:[%s5137] sm:$0xff]
    %v5139 = vld [vmem:[%s5137 + $0x8] sm:$0xff]
    %s5140 = scalar_lea.vmem %s75, 2
    %v5141 = vld [vmem:[%s5140] sm:$0x1]
    %v5143 = vperm.slane %v5141, 0
    %5145 = vmatpush.msra.mxu0 0.0
    %5146 = vmatpush.msra.mxu0 0.0
    %5147 = vmatpush.msra.mxu0 0.0
    %5148 = vmatpush.msra.mxu0 0.0
    %5149 = vmatpush.msra.mxu0 0.0
    %5150 = vmatpush.msra.mxu0 0.0
    %5151 = vmatpush.msra.mxu0 0.0
    %5152 = vmatpush.msra.mxu0 0.0
    %5153 = vmatpush.msra.mxu0 0.0
    %5154 = vmatpush.msra.mxu0 0.0
    %5155 = vmatpush.msra.mxu0 0.0
    %5156 = vmatpush.msra.mxu0 0.0
    %5157 = vmatpush.msra.mxu0 0.0
    %5158 = vmatpush.msra.mxu0 0.0
    %5159 = vmatpush.msra.mxu0 %v5139
    %5160 = vmatpush.msra.mxu0 %v5138
    %5161 = vmatmul.f32.gmra.mxu0 %v4496
    %v5162 = vpop.f32.mrf.mxu0
    %v5163 = vadd.f32 %v5143, %v5162
    %5164 = vmatmul.f32.gmra.mxu0 %v4499
    %v5165 = vpop.f32.mrf.mxu0
    %v5166 = vadd.f32 %v5143, %v5165
    %5167 = vmatmul.f32.gmra.mxu0 %v4502
    %v5168 = vpop.f32.mrf.mxu0
    %v5169 = vadd.f32 %v5143, %v5168
    %5170 = vmatmul.f32.gmra.mxu0 %v4505
    %v5171 = vpop.f32.mrf.mxu0
    %v5172 = vadd.f32 %v5143, %v5171
    %5173 = vdwg.mxu0
    %s5174 = scalar_lea.vmem %s93, 32
    %v5175 = vld [vmem:[%s5174] sm:$0xff]
    %v5176 = vld [vmem:[%s5174 + $0x8] sm:$0xff]
    %s5177 = scalar_lea.vmem %s79, 2
    %v5178 = vld [vmem:[%s5177] sm:$0x1]
    %v5180 = vperm.slane %v5178, 0
    %5182 = vmatpush.msra.mxu0 0.0
    %5183 = vmatpush.msra.mxu0 0.0
    %5184 = vmatpush.msra.mxu0 0.0
    %5185 = vmatpush.msra.mxu0 0.0
    %5186 = vmatpush.msra.mxu0 0.0
    %5187 = vmatpush.msra.mxu0 0.0
    %5188 = vmatpush.msra.mxu0 0.0
    %5189 = vmatpush.msra.mxu0 0.0
    %5190 = vmatpush.msra.mxu0 0.0
    %5191 = vmatpush.msra.mxu0 0.0
    %5192 = vmatpush.msra.mxu0 0.0
    %5193 = vmatpush.msra.mxu0 0.0
    %5194 = vmatpush.msra.mxu0 0.0
    %5195 = vmatpush.msra.mxu0 0.0
    %5196 = vmatpush.msra.mxu0 %v5176
    %5197 = vmatpush.msra.mxu0 %v5175
    %5198 = vmatmul.f32.gmra.mxu0 %v4496
    %v5199 = vpop.f32.mrf.mxu0
    %v5200 = vadd.f32 %v5180, %v5199
    %5201 = vmatmul.f32.gmra.mxu0 %v4499
    %v5202 = vpop.f32.mrf.mxu0
    %v5203 = vadd.f32 %v5180, %v5202
    %5204 = vmatmul.f32.gmra.mxu0 %v4502
    %v5205 = vpop.f32.mrf.mxu0
    %v5206 = vadd.f32 %v5180, %v5205
    %5207 = vmatmul.f32.gmra.mxu0 %v4505
    %v5208 = vpop.f32.mrf.mxu0
    %v5209 = vadd.f32 %v5180, %v5208
    %5210 = vdwg.mxu0
    %v5212 = vsel %vm2057, %v5126, 0
    %v5215 = vsel %vm2057, %v5129, 0
    %v5218 = vsel %vm2057, %v5132, 0
    %v5221 = vsel %vm2057, %v5135, 0
    %v5224 = vsel %vm2057, %v5163, 0
    %v5227 = vsel %vm2057, %v5166, 0
    %v5230 = vsel %vm2057, %v5169, 0
    %v5233 = vsel %vm2057, %v5172, 0
    %5235 = vmatpush.xpose.msra.mxu0 0.0
    %5236 = vmatpush.xpose.msra.mxu0 0.0
    %5237 = vmatpush.xpose.msra.mxu0 0.0
    %5238 = vmatpush.xpose.msra.mxu0 0.0
    %5239 = vmatpush.xpose.msra.mxu0 0.0
    %5240 = vmatpush.xpose.msra.mxu0 0.0
    %5241 = vmatpush.xpose.msra.mxu0 0.0
    %5242 = vmatpush.xpose.msra.mxu0 0.0
    %5243 = vmatpush.xpose.msra.mxu0 0.0
    %5244 = vmatpush.xpose.msra.mxu0 0.0
    %5245 = vmatpush.xpose.msra.mxu0 0.0
    %5246 = vmatpush.xpose.msra.mxu0 0.0
    %5247 = vmatpush.xpose.msra.mxu0 %v5233
    %5248 = vmatpush.xpose.msra.mxu0 %v5230
    %5249 = vmatpush.xpose.msra.mxu0 %v5227
    %5250 = vmatpush.xpose.msra.mxu0 %v5224
    %5251 = vmatmul.f32.gmra.mxu0 %v5212
    %v5252 = vpop.f32.mrf.mxu0
    %v5253 = vadd.f32 0.0, %v5252
    %5254 = vmatmul.f32.gmra.mxu0 %v5215
    %v5255 = vpop.f32.mrf.mxu0
    %v5256 = vadd.f32 0.0, %v5255
    %5257 = vmatmul.f32.gmra.mxu0 %v5218
    %v5258 = vpop.f32.mrf.mxu0
    %v5259 = vadd.f32 0.0, %v5258
    %5260 = vmatmul.f32.gmra.mxu0 %v5221
    %v5261 = vpop.f32.mrf.mxu0
    %v5262 = vadd.f32 0.0, %v5261
    %5263 = vdwg.mxu0
    %v5264 = vmul.f32 %v5253, 0.5
    %v5265 = vmul.f32 %v5256, 0.5
    %v5266 = vmul.f32 %v5259, 0.5
    %v5267 = vmul.f32 %v5262, 0.5
    %v5268 = vadd.f32 %v5264, %v1210
    %v5269 = vadd.f32 %v5265, %v1211
    %v5270 = vadd.f32 %v5266, %v1212
    %v5271 = vadd.f32 %v5267, %v1213
    %v5272 = vsel %vm1228, %v5268, -inf
    %5273 = vmax.xlane.f32.xlu0 %v5272
    %v5274 = vpop.xlane.xlu0 %5273
    %v5275 = vsel %vm1228, %v5269, -inf
    %5276 = vmax.xlane.f32.xlu0 %v5275
    %v5277 = vpop.xlane.xlu0 %5276
    %v5278 = vsel %vm1228, %v5270, -inf
    %5279 = vmax.xlane.f32.xlu0 %v5278
    %v5280 = vpop.xlane.xlu0 %5279
    %v5281 = vsel %vm1228, %v5271, -inf
    %5282 = vmax.xlane.f32.xlu0 %v5281
    %v5283 = vpop.xlane.xlu0 %5282
    %v5284 = vsub.f32 %v5268, %v5274
    %v5285 = vsub.f32 %v5269, %v5277
    %v5286 = vsub.f32 %v5270, %v5280
    %v5287 = vsub.f32 %v5271, %v5283
    %v5288 = vmul.f32 %v5284, 1.442695
    %v5289 = vpow.pop %v5288
    %v5290 = vmul.f32 %v5285, 1.442695
    %v5291 = vpow.pop %v5290
    %v5292 = vmul.f32 %v5286, 1.442695
    %v5293 = vpow.pop %v5292
    %v5294 = vmul.f32 %v5287, 1.442695
    %v5295 = vpow.pop %v5294
    %v5296 = vsel %vm1228, %v5289, 0.0
    %5297 = vadd.xlane.f32.xlu0 %v5296
    %v5298 = vpop.xlane.xlu0 %5297
    %v5299 = vsel %vm1228, %v5291, 0.0
    %5300 = vadd.xlane.f32.xlu0 %v5299
    %v5301 = vpop.xlane.xlu0 %5300
    %v5302 = vsel %vm1228, %v5293, 0.0
    %5303 = vadd.xlane.f32.xlu0 %v5302
    %v5304 = vpop.xlane.xlu0 %5303
    %v5305 = vsel %vm1228, %v5295, 0.0
    %5306 = vadd.xlane.f32.xlu0 %v5305
    %v5307 = vpop.xlane.xlu0 %5306
    %v5308 = vrcp.pop %v5298
    %v5309 = vrcp.pop %v5301
    %v5310 = vrcp.pop %v5304
    %v5311 = vrcp.pop %v5307
    %v5312 = vmul.f32 %v5289, %v5308
    %v5313 = vmul.f32 %v5291, %v5309
    %v5314 = vmul.f32 %v5293, %v5310
    %v5315 = vmul.f32 %v5295, %v5311
    %v5317 = vsel %vm1228, %v5312, 0
    %v5320 = vsel %vm1228, %v5313, 0
    %v5323 = vsel %vm1228, %v5314, 0
    %v5326 = vsel %vm1228, %v5315, 0
    %5328 = vmatpush.msra.mxu0 0.0
    %5329 = vmatpush.msra.mxu0 0.0
    %5330 = vmatpush.msra.mxu0 0.0
    %5331 = vmatpush.msra.mxu0 0.0
    %5332 = vmatpush.msra.mxu0 0.0
    %5333 = vmatpush.msra.mxu0 0.0
    %5334 = vmatpush.msra.mxu0 0.0
    %5335 = vmatpush.msra.mxu0 0.0
    %5336 = vmatpush.msra.mxu0 0.0
    %5337 = vmatpush.msra.mxu0 0.0
    %5338 = vmatpush.msra.mxu0 0.0
    %5339 = vmatpush.msra.mxu0 0.0
    %5340 = vmatpush.msra.mxu0 %v5209
    %5341 = vmatpush.msra.mxu0 %v5206
    %5342 = vmatpush.msra.mxu0 %v5203
    %5343 = vmatpush.msra.mxu0 %v5200
    %5344 = vmatmul.f32.gmra.mxu0 %v5317
    %v5345 = vpop.f32.mrf.mxu0
    %v5346 = vadd.f32 0.0, %v5345
    %5347 = vmatmul.f32.gmra.mxu0 %v5320
    %v5348 = vpop.f32.mrf.mxu0
    %v5349 = vadd.f32 0.0, %v5348
    %5350 = vmatmul.f32.gmra.mxu0 %v5323
    %v5351 = vpop.f32.mrf.mxu0
    %v5352 = vadd.f32 0.0, %v5351
    %5353 = vmatmul.f32.gmra.mxu0 %v5326
    %v5354 = vpop.f32.mrf.mxu0
    %v5355 = vadd.f32 0.0, %v5354
    %5356 = vdwg.mxu0
    %s5357 = scalar_lea.vmem [#allocation61], 8
    %v5358 = vld [vmem:[%s5357] sm:$0xf]
    %v5360 = vsel %vm2057, %v5346, 0
    %v5363 = vsel %vm2057, %v5349, 0
    %v5366 = vsel %vm2057, %v5352, 0
    %v5369 = vsel %vm2057, %v5355, 0
    %v5372 = vsel %vm2476, %v5358, 0
    %5374 = vmatpush.msra.mxu0 0.0
    %5375 = vmatpush.msra.mxu0 0.0
    %5376 = vmatpush.msra.mxu0 0.0
    %5377 = vmatpush.msra.mxu0 0.0
    %5378 = vmatpush.msra.mxu0 0.0
    %5379 = vmatpush.msra.mxu0 0.0
    %5380 = vmatpush.msra.mxu0 0.0
    %5381 = vmatpush.msra.mxu0 0.0
    %5382 = vmatpush.msra.mxu0 0.0
    %5383 = vmatpush.msra.mxu0 0.0
    %5384 = vmatpush.msra.mxu0 0.0
    %5385 = vmatpush.msra.mxu0 0.0
    %5386 = vmatpush.msra.mxu0 0.0
    %5387 = vmatpush.msra.mxu0 0.0
    %5388 = vmatpush.msra.mxu0 0.0
    %5389 = vmatpush.msra.mxu0 %v5372
    %5390 = vmatmul.f32.gmra.mxu0 %v5360
    %v5391 = vpop.f32.mrf.mxu0
    %v5392 = vadd.f32 0.0, %v5391
    %5393 = vmatmul.f32.gmra.mxu0 %v5363
    %v5394 = vpop.f32.mrf.mxu0
    %v5395 = vadd.f32 0.0, %v5394
    %5396 = vmatmul.f32.gmra.mxu0 %v5366
    %v5397 = vpop.f32.mrf.mxu0
    %v5398 = vadd.f32 0.0, %v5397
    %5399 = vmatmul.f32.gmra.mxu0 %v5369
    %v5400 = vpop.f32.mrf.mxu0
    %v5401 = vadd.f32 0.0, %v5400
    %5402 = vdwg.mxu0
    %v5403 = vadd.f32 %v5089, %v5392
    %v5404 = vadd.f32 %v5092, %v5395
    %v5405 = vadd.f32 %v5095, %v5398
    %v5406 = vadd.f32 %v5098, %v5401
    %s5407 = scalar_lea.vmem [#allocation63], 48
    %v5408 = vld [vmem:[%s5407] sm:$0xff]
    %v5409 = vld [vmem:[%s5407 + $0x8] sm:$0xff]
    %s5410 = scalar_lea.vmem %s77, 3
    %v5411 = vld [vmem:[%s5410] sm:$0x1]
    %v5413 = vperm.slane %v5411, 0
    %5415 = vmatpush.msra.mxu0 0.0
    %5416 = vmatpush.msra.mxu0 0.0
    %5417 = vmatpush.msra.mxu0 0.0
    %5418 = vmatpush.msra.mxu0 0.0
    %5419 = vmatpush.msra.mxu0 0.0
    %5420 = vmatpush.msra.mxu0 0.0
    %5421 = vmatpush.msra.mxu0 0.0
    %5422 = vmatpush.msra.mxu0 0.0
    %5423 = vmatpush.msra.mxu0 0.0
    %5424 = vmatpush.msra.mxu0 0.0
    %5425 = vmatpush.msra.mxu0 0.0
    %5426 = vmatpush.msra.mxu0 0.0
    %5427 = vmatpush.msra.mxu0 0.0
    %5428 = vmatpush.msra.mxu0 0.0
    %5429 = vmatpush.msra.mxu0 %v5409
    %5430 = vmatpush.msra.mxu0 %v5408
    %5431 = vmatmul.f32.gmra.mxu0 %v4496
    %v5432 = vpop.f32.mrf.mxu0
    %v5433 = vadd.f32 %v5413, %v5432
    %5434 = vmatmul.f32.gmra.mxu0 %v4499
    %v5435 = vpop.f32.mrf.mxu0
    %v5436 = vadd.f32 %v5413, %v5435
    %5437 = vmatmul.f32.gmra.mxu0 %v4502
    %v5438 = vpop.f32.mrf.mxu0
    %v5439 = vadd.f32 %v5413, %v5438
    %5440 = vmatmul.f32.gmra.mxu0 %v4505
    %v5441 = vpop.f32.mrf.mxu0
    %v5442 = vadd.f32 %v5413, %v5441
    %5443 = vdwg.mxu0
    %s5444 = scalar_lea.vmem [#allocation60], 48
    %v5445 = vld [vmem:[%s5444] sm:$0xff]
    %v5446 = vld [vmem:[%s5444 + $0x8] sm:$0xff]
    %s5447 = scalar_lea.vmem %s75, 3
    %v5448 = vld [vmem:[%s5447] sm:$0x1]
    %v5450 = vperm.slane %v5448, 0
    %5452 = vmatpush.msra.mxu0 0.0
    %5453 = vmatpush.msra.mxu0 0.0
    %5454 = vmatpush.msra.mxu0 0.0
    %5455 = vmatpush.msra.mxu0 0.0
    %5456 = vmatpush.msra.mxu0 0.0
    %5457 = vmatpush.msra.mxu0 0.0
    %5458 = vmatpush.msra.mxu0 0.0
    %5459 = vmatpush.msra.mxu0 0.0
    %5460 = vmatpush.msra.mxu0 0.0
    %5461 = vmatpush.msra.mxu0 0.0
    %5462 = vmatpush.msra.mxu0 0.0
    %5463 = vmatpush.msra.mxu0 0.0
    %5464 = vmatpush.msra.mxu0 0.0
    %5465 = vmatpush.msra.mxu0 0.0
    %5466 = vmatpush.msra.mxu0 %v5446
    %5467 = vmatpush.msra.mxu0 %v5445
    %5468 = vmatmul.f32.gmra.mxu0 %v4496
    %v5469 = vpop.f32.mrf.mxu0
    %v5470 = vadd.f32 %v5450, %v5469
    %5471 = vmatmul.f32.gmra.mxu0 %v4499
    %v5472 = vpop.f32.mrf.mxu0
    %v5473 = vadd.f32 %v5450, %v5472
    %5474 = vmatmul.f32.gmra.mxu0 %v4502
    %v5475 = vpop.f32.mrf.mxu0
    %v5476 = vadd.f32 %v5450, %v5475
    %5477 = vmatmul.f32.gmra.mxu0 %v4505
    %v5478 = vpop.f32.mrf.mxu0
    %v5479 = vadd.f32 %v5450, %v5478
    %5480 = vdwg.mxu0
    %s5481 = scalar_lea.vmem %s93, 48
    %v5482 = vld [vmem:[%s5481] sm:$0xff]
    %v5483 = vld [vmem:[%s5481 + $0x8] sm:$0xff]
    %s5484 = scalar_lea.vmem %s79, 3
    %v5485 = vld [vmem:[%s5484] sm:$0x1]
    %v5487 = vperm.slane %v5485, 0
    %5489 = vmatpush.msra.mxu0 0.0
    %5490 = vmatpush.msra.mxu0 0.0
    %5491 = vmatpush.msra.mxu0 0.0
    %5492 = vmatpush.msra.mxu0 0.0
    %5493 = vmatpush.msra.mxu0 0.0
    %5494 = vmatpush.msra.mxu0 0.0
    %5495 = vmatpush.msra.mxu0 0.0
    %5496 = vmatpush.msra.mxu0 0.0
    %5497 = vmatpush.msra.mxu0 0.0
    %5498 = vmatpush.msra.mxu0 0.0
    %5499 = vmatpush.msra.mxu0 0.0
    %5500 = vmatpush.msra.mxu0 0.0
    %5501 = vmatpush.msra.mxu0 0.0
    %5502 = vmatpush.msra.mxu0 0.0
    %5503 = vmatpush.msra.mxu0 %v5483
    %5504 = vmatpush.msra.mxu0 %v5482
    %5505 = vmatmul.f32.gmra.mxu0 %v4496
    %v5506 = vpop.f32.mrf.mxu0
    %v5507 = vadd.f32 %v5487, %v5506
    %5508 = vmatmul.f32.gmra.mxu0 %v4499
    %v5509 = vpop.f32.mrf.mxu0
    %v5510 = vadd.f32 %v5487, %v5509
    %5511 = vmatmul.f32.gmra.mxu0 %v4502
    %v5512 = vpop.f32.mrf.mxu0
    %v5513 = vadd.f32 %v5487, %v5512
    %5514 = vmatmul.f32.gmra.mxu0 %v4505
    %v5515 = vpop.f32.mrf.mxu0
    %v5516 = vadd.f32 %v5487, %v5515
    %5517 = vdwg.mxu0
    %v5519 = vsel %vm2057, %v5433, 0
    %v5522 = vsel %vm2057, %v5436, 0
    %v5525 = vsel %vm2057, %v5439, 0
    %v5528 = vsel %vm2057, %v5442, 0
    %v5531 = vsel %vm2057, %v5470, 0
    %v5534 = vsel %vm2057, %v5473, 0
    %v5537 = vsel %vm2057, %v5476, 0
    %v5540 = vsel %vm2057, %v5479, 0
    %5542 = vmatpush.xpose.msra.mxu0 0.0
    %5543 = vmatpush.xpose.msra.mxu0 0.0
    %5544 = vmatpush.xpose.msra.mxu0 0.0
    %5545 = vmatpush.xpose.msra.mxu0 0.0
    %5546 = vmatpush.xpose.msra.mxu0 0.0
    %5547 = vmatpush.xpose.msra.mxu0 0.0
    %5548 = vmatpush.xpose.msra.mxu0 0.0
    %5549 = vmatpush.xpose.msra.mxu0 0.0
    %5550 = vmatpush.xpose.msra.mxu0 0.0
    %5551 = vmatpush.xpose.msra.mxu0 0.0
    %5552 = vmatpush.xpose.msra.mxu0 0.0
    %5553 = vmatpush.xpose.msra.mxu0 0.0
    %5554 = vmatpush.xpose.msra.mxu0 %v5540
    %5555 = vmatpush.xpose.msra.mxu0 %v5537
    %5556 = vmatpush.xpose.msra.mxu0 %v5534
    %5557 = vmatpush.xpose.msra.mxu0 %v5531
    %5558 = vmatmul.f32.gmra.mxu0 %v5519
    %v5559 = vpop.f32.mrf.mxu0
    %v5560 = vadd.f32 0.0, %v5559
    %5561 = vmatmul.f32.gmra.mxu0 %v5522
    %v5562 = vpop.f32.mrf.mxu0
    %v5563 = vadd.f32 0.0, %v5562
    %5564 = vmatmul.f32.gmra.mxu0 %v5525
    %v5565 = vpop.f32.mrf.mxu0
    %v5566 = vadd.f32 0.0, %v5565
    %5567 = vmatmul.f32.gmra.mxu0 %v5528
    %v5568 = vpop.f32.mrf.mxu0
    %v5569 = vadd.f32 0.0, %v5568
    %5570 = vdwg.mxu0
    %v5571 = vmul.f32 %v5560, 0.5
    %v5572 = vmul.f32 %v5563, 0.5
    %v5573 = vmul.f32 %v5566, 0.5
    %v5574 = vmul.f32 %v5569, 0.5
    %v5575 = vadd.f32 %v5571, %v1210
    %v5576 = vadd.f32 %v5572, %v1211
    %v5577 = vadd.f32 %v5573, %v1212
    %v5578 = vadd.f32 %v5574, %v1213
    %v5579 = vsel %vm1228, %v5575, -inf
    %5580 = vmax.xlane.f32.xlu0 %v5579
    %v5581 = vpop.xlane.xlu0 %5580
    %v5582 = vsel %vm1228, %v5576, -inf
    %5583 = vmax.xlane.f32.xlu0 %v5582
    %v5584 = vpop.xlane.xlu0 %5583
    %v5585 = vsel %vm1228, %v5577, -inf
    %5586 = vmax.xlane.f32.xlu0 %v5585
    %v5587 = vpop.xlane.xlu0 %5586
    %v5588 = vsel %vm1228, %v5578, -inf
    %5589 = vmax.xlane.f32.xlu0 %v5588
    %v5590 = vpop.xlane.xlu0 %5589
    %v5591 = vsub.f32 %v5575, %v5581
    %v5592 = vsub.f32 %v5576, %v5584
    %v5593 = vsub.f32 %v5577, %v5587
    %v5594 = vsub.f32 %v5578, %v5590
    %v5595 = vmul.f32 %v5591, 1.442695
    %v5596 = vpow.pop %v5595
    %v5597 = vmul.f32 %v5592, 1.442695
    %v5598 = vpow.pop %v5597
    %v5599 = vmul.f32 %v5593, 1.442695
    %v5600 = vpow.pop %v5599
    %v5601 = vmul.f32 %v5594, 1.442695
    %v5602 = vpow.pop %v5601
    %v5603 = vsel %vm1228, %v5596, 0.0
    %5604 = vadd.xlane.f32.xlu0 %v5603
    %v5605 = vpop.xlane.xlu0 %5604
    %v5606 = vsel %vm1228, %v5598, 0.0
    %5607 = vadd.xlane.f32.xlu0 %v5606
    %v5608 = vpop.xlane.xlu0 %5607
    %v5609 = vsel %vm1228, %v5600, 0.0
    %5610 = vadd.xlane.f32.xlu0 %v5609
    %v5611 = vpop.xlane.xlu0 %5610
    %v5612 = vsel %vm1228, %v5602, 0.0
    %5613 = vadd.xlane.f32.xlu0 %v5612
    %v5614 = vpop.xlane.xlu0 %5613
    %v5615 = vrcp.pop %v5605
    %v5616 = vrcp.pop %v5608
    %v5617 = vrcp.pop %v5611
    %v5618 = vrcp.pop %v5614
    %v5619 = vmul.f32 %v5596, %v5615
    %v5620 = vmul.f32 %v5598, %v5616
    %v5621 = vmul.f32 %v5600, %v5617
    %v5622 = vmul.f32 %v5602, %v5618
    %v5624 = vsel %vm1228, %v5619, 0
    %v5627 = vsel %vm1228, %v5620, 0
    %v5630 = vsel %vm1228, %v5621, 0
    %v5633 = vsel %vm1228, %v5622, 0
    %5635 = vmatpush.msra.mxu0 0.0
    %5636 = vmatpush.msra.mxu0 0.0
    %5637 = vmatpush.msra.mxu0 0.0
    %5638 = vmatpush.msra.mxu0 0.0
    %5639 = vmatpush.msra.mxu0 0.0
    %5640 = vmatpush.msra.mxu0 0.0
    %5641 = vmatpush.msra.mxu0 0.0
    %5642 = vmatpush.msra.mxu0 0.0
    %5643 = vmatpush.msra.mxu0 0.0
    %5644 = vmatpush.msra.mxu0 0.0
    %5645 = vmatpush.msra.mxu0 0.0
    %5646 = vmatpush.msra.mxu0 0.0
    %5647 = vmatpush.msra.mxu0 %v5516
    %5648 = vmatpush.msra.mxu0 %v5513
    %5649 = vmatpush.msra.mxu0 %v5510
    %5650 = vmatpush.msra.mxu0 %v5507
    %5651 = vmatmul.f32.gmra.mxu0 %v5624
    %v5652 = vpop.f32.mrf.mxu0
    %v5653 = vadd.f32 0.0, %v5652
    %5654 = vmatmul.f32.gmra.mxu0 %v5627
    %v5655 = vpop.f32.mrf.mxu0
    %v5656 = vadd.f32 0.0, %v5655
    %5657 = vmatmul.f32.gmra.mxu0 %v5630
    %v5658 = vpop.f32.mrf.mxu0
    %v5659 = vadd.f32 0.0, %v5658
    %5660 = vmatmul.f32.gmra.mxu0 %v5633
    %v5661 = vpop.f32.mrf.mxu0
    %v5662 = vadd.f32 0.0, %v5661
    %5663 = vdwg.mxu0
    %s5664 = scalar_lea.vmem [#allocation61], 12
    %v5665 = vld [vmem:[%s5664] sm:$0xf]
    %v5667 = vsel %vm2057, %v5653, 0
    %v5670 = vsel %vm2057, %v5656, 0
    %v5673 = vsel %vm2057, %v5659, 0
    %v5676 = vsel %vm2057, %v5662, 0
    %v5679 = vsel %vm2476, %v5665, 0
    %5681 = vmatpush.msra.mxu0 0.0
    %5682 = vmatpush.msra.mxu0 0.0
    %5683 = vmatpush.msra.mxu0 0.0
    %5684 = vmatpush.msra.mxu0 0.0
    %5685 = vmatpush.msra.mxu0 0.0
    %5686 = vmatpush.msra.mxu0 0.0
    %5687 = vmatpush.msra.mxu0 0.0
    %5688 = vmatpush.msra.mxu0 0.0
    %5689 = vmatpush.msra.mxu0 0.0
    %5690 = vmatpush.msra.mxu0 0.0
    %5691 = vmatpush.msra.mxu0 0.0
    %5692 = vmatpush.msra.mxu0 0.0
    %5693 = vmatpush.msra.mxu0 0.0
    %5694 = vmatpush.msra.mxu0 0.0
    %5695 = vmatpush.msra.mxu0 0.0
    %5696 = vmatpush.msra.mxu0 %v5679
    %5697 = vmatmul.f32.gmra.mxu0 %v5667
    %v5698 = vpop.f32.mrf.mxu0
    %v5699 = vadd.f32 0.0, %v5698
    %5700 = vmatmul.f32.gmra.mxu0 %v5670
    %v5701 = vpop.f32.mrf.mxu0
    %v5702 = vadd.f32 0.0, %v5701
    %5703 = vmatmul.f32.gmra.mxu0 %v5673
    %v5704 = vpop.f32.mrf.mxu0
    %v5705 = vadd.f32 0.0, %v5704
    %5706 = vmatmul.f32.gmra.mxu0 %v5676
    %v5707 = vpop.f32.mrf.mxu0
    %v5708 = vadd.f32 0.0, %v5707
    %5709 = vdwg.mxu0
    %v5710 = vadd.f32 %v5403, %v5699
    %v5711 = vadd.f32 %v5404, %v5702
    %v5712 = vadd.f32 %v5405, %v5705
    %v5713 = vadd.f32 %v5406, %v5708
    %v5714 = vld [vmem:[#allocation58] sm:$0x1]
    %v5716 = vperm.slane %v5714, 0
    %v5718 = vadd.f32 %v5710, %v5716
    %v5719 = vadd.f32 %v5711, %v5716
    %v5720 = vadd.f32 %v5712, %v5716
    %v5721 = vadd.f32 %v5713, %v5716
    %v5722 = vadd.f32 %v4381, %v5718
    %v5723 = vadd.f32 %v4382, %v5719
    %v5724 = vadd.f32 %v4383, %v5720
    %v5725 = vadd.f32 %v4384, %v5721
    %v5726 = vsel %vm1499, %v5722, 0.0
    %5727 = vadd.xlane.f32.xlu0 %v5726
    %v5728 = vpop.xlane.xlu0 %5727
    %v5729 = vsel %vm1499, %v5723, 0.0
    %5730 = vadd.xlane.f32.xlu0 %v5729
    %v5731 = vpop.xlane.xlu0 %5730
    %v5732 = vsel %vm1499, %v5724, 0.0
    %5733 = vadd.xlane.f32.xlu0 %v5732
    %v5734 = vpop.xlane.xlu0 %5733
    %v5735 = vsel %vm1499, %v5725, 0.0
    %5736 = vadd.xlane.f32.xlu0 %v5735
    %v5737 = vpop.xlane.xlu0 %5736
    %v5738 = vmul.f32 %v5728, %v1559
    %v5739 = vmul.f32 %v5731, %v1559
    %v5740 = vmul.f32 %v5734, %v1559
    %v5741 = vmul.f32 %v5737, %v1559
    %v5742 = vsub.f32 %v5722, %v5738
    %v5743 = vsub.f32 %v5723, %v5739
    %v5744 = vsub.f32 %v5724, %v5740
    %v5745 = vsub.f32 %v5725, %v5741
    %v5746 = vmul.f32 %v5742, %v5742
    %v5747 = vmul.f32 %v5743, %v5743
    %v5748 = vmul.f32 %v5744, %v5744
    %v5749 = vmul.f32 %v5745, %v5745
    %v5750 = vsel %vm1499, %v5746, 0.0
    %5751 = vadd.xlane.f32.xlu0 %v5750
    %v5752 = vpop.xlane.xlu0 %5751
    %v5753 = vsel %vm1499, %v5747, 0.0
    %5754 = vadd.xlane.f32.xlu0 %v5753
    %v5755 = vpop.xlane.xlu0 %5754
    %v5756 = vsel %vm1499, %v5748, 0.0
    %5757 = vadd.xlane.f32.xlu0 %v5756
    %v5758 = vpop.xlane.xlu0 %5757
    %v5759 = vsel %vm1499, %v5749, 0.0
    %5760 = vadd.xlane.f32.xlu0 %v5759
    %v5761 = vpop.xlane.xlu0 %5760
    %v5762 = vmul.f32 %v5752, %v1559
    %v5763 = vmul.f32 %v5755, %v1559
    %v5764 = vmul.f32 %v5758, %v1559
    %v5765 = vmul.f32 %v5761, %v1559
    %v5766 = vadd.f32 %v5762, 1e-05
    %v5767 = vadd.f32 %v5763, 1e-05
    %v5768 = vadd.f32 %v5764, 1e-05
    %v5769 = vadd.f32 %v5765, 1e-05
    %v5770 = vrsqrt.pop %v5766
    %v5771 = vmul.f32 %v5770, %v5766
    %v5772 = vmul.f32 %v5771, %v5770
    %v5773 = vmul.f32 0.5, %v5772
    %v5774 = vsub.f32 1.5, %v5773
    %v5775 = vmul.f32 %v5770, %v5774
    %vm5776 = vweird.f32 %v5766
    %vm5777 = vweird.f32 %v5770
    %vm5778 = vmor %vm5776, %vm5777
    %v5779 = vsel %vm5778, %v5770, %v5775
    %v5780 = vrsqrt.pop %v5767
    %v5781 = vmul.f32 %v5780, %v5767
    %v5782 = vmul.f32 %v5781, %v5780
    %v5783 = vmul.f32 0.5, %v5782
    %v5784 = vsub.f32 1.5, %v5783
    %v5785 = vmul.f32 %v5780, %v5784
    %vm5786 = vweird.f32 %v5767
    %vm5787 = vweird.f32 %v5780
    %vm5788 = vmor %vm5786, %vm5787
    %v5789 = vsel %vm5788, %v5780, %v5785
    %v5790 = vrsqrt.pop %v5768
    %v5791 = vmul.f32 %v5790, %v5768
    %v5792 = vmul.f32 %v5791, %v5790
    %v5793 = vmul.f32 0.5, %v5792
    %v5794 = vsub.f32 1.5, %v5793
    %v5795 = vmul.f32 %v5790, %v5794
    %vm5796 = vweird.f32 %v5768
    %vm5797 = vweird.f32 %v5790
    %vm5798 = vmor %vm5796, %vm5797
    %v5799 = vsel %vm5798, %v5790, %v5795
    %v5800 = vrsqrt.pop %v5769
    %v5801 = vmul.f32 %v5800, %v5769
    %v5802 = vmul.f32 %v5801, %v5800
    %v5803 = vmul.f32 0.5, %v5802
    %v5804 = vsub.f32 1.5, %v5803
    %v5805 = vmul.f32 %v5800, %v5804
    %vm5806 = vweird.f32 %v5769
    %vm5807 = vweird.f32 %v5800
    %vm5808 = vmor %vm5806, %vm5807
    %v5809 = vsel %vm5808, %v5800, %v5805
    %v5810 = vmul.f32 %v5742, %v5779
    %v5811 = vmul.f32 %v5743, %v5789
    %v5812 = vmul.f32 %v5744, %v5799
    %v5813 = vmul.f32 %v5745, %v5809
    %v5814 = vld [vmem:[#allocation67] sm:$0x1]
    %v5816 = vperm.slane %v5814, 0
    %v5818 = vmul.f32 %v5810, %v5816
    %v5819 = vmul.f32 %v5811, %v5816
    %v5820 = vmul.f32 %v5812, %v5816
    %v5821 = vmul.f32 %v5813, %v5816
    %v5822 = vld [vmem:[#allocation66] sm:$0x1]
    %v5824 = vperm.slane %v5822, 0
    %v5826 = vadd.f32 %v5818, %v5824
    %v5827 = vadd.f32 %v5819, %v5824
    %v5828 = vadd.f32 %v5820, %v5824
    %v5829 = vadd.f32 %v5821, %v5824
    %v5830 = vld [vmem:[#allocation72] sm:$0xff]
    %v5831 = vld [vmem:[#allocation72 + $0x8] sm:$0xff]
    %v5832 = vld [vmem:[#allocation69] sm:$0x1]
    %v5834 = vperm.slane %v5832, 0
    %v5837 = vsel %vm1499, %v5826, 0
    %v5840 = vsel %vm1499, %v5827, 0
    %v5843 = vsel %vm1499, %v5828, 0
    %v5846 = vsel %vm1499, %v5829, 0
    %5848 = vmatpush.msra.mxu0 0.0
    %5849 = vmatpush.msra.mxu0 0.0
    %5850 = vmatpush.msra.mxu0 0.0
    %5851 = vmatpush.msra.mxu0 0.0
    %5852 = vmatpush.msra.mxu0 0.0
    %5853 = vmatpush.msra.mxu0 0.0
    %5854 = vmatpush.msra.mxu0 0.0
    %5855 = vmatpush.msra.mxu0 0.0
    %5856 = vmatpush.msra.mxu0 0.0
    %5857 = vmatpush.msra.mxu0 0.0
    %5858 = vmatpush.msra.mxu0 0.0
    %5859 = vmatpush.msra.mxu0 0.0
    %5860 = vmatpush.msra.mxu0 0.0
    %5861 = vmatpush.msra.mxu0 0.0
    %5862 = vmatpush.msra.mxu0 %v5831
    %5863 = vmatpush.msra.mxu0 %v5830
    %5864 = vmatmul.f32.gmra.mxu0 %v5837
    %v5865 = vpop.f32.mrf.mxu0
    %v5866 = vadd.f32 %v5834, %v5865
    %5867 = vmatmul.f32.gmra.mxu0 %v5840
    %v5868 = vpop.f32.mrf.mxu0
    %v5869 = vadd.f32 %v5834, %v5868
    %5870 = vmatmul.f32.gmra.mxu0 %v5843
    %v5871 = vpop.f32.mrf.mxu0
    %v5872 = vadd.f32 %v5834, %v5871
    %5873 = vmatmul.f32.gmra.mxu0 %v5846
    %v5874 = vpop.f32.mrf.mxu0
    %v5875 = vadd.f32 %v5834, %v5874
    %5876 = vdwg.mxu0
    %v5877 = vld [vmem:[#allocation73] sm:$0xff]
    %v5878 = vld [vmem:[#allocation73 + $0x8] sm:$0xff]
    %v5879 = vld [vmem:[#allocation70] sm:$0x1]
    %v5881 = vperm.slane %v5879, 0
    %5883 = vmatpush.msra.mxu0 0.0
    %5884 = vmatpush.msra.mxu0 0.0
    %5885 = vmatpush.msra.mxu0 0.0
    %5886 = vmatpush.msra.mxu0 0.0
    %5887 = vmatpush.msra.mxu0 0.0
    %5888 = vmatpush.msra.mxu0 0.0
    %5889 = vmatpush.msra.mxu0 0.0
    %5890 = vmatpush.msra.mxu0 0.0
    %5891 = vmatpush.msra.mxu0 0.0
    %5892 = vmatpush.msra.mxu0 0.0
    %5893 = vmatpush.msra.mxu0 0.0
    %5894 = vmatpush.msra.mxu0 0.0
    %5895 = vmatpush.msra.mxu0 0.0
    %5896 = vmatpush.msra.mxu0 0.0
    %5897 = vmatpush.msra.mxu0 %v5878
    %5898 = vmatpush.msra.mxu0 %v5877
    %5899 = vmatmul.f32.gmra.mxu0 %v5837
    %v5900 = vpop.f32.mrf.mxu0
    %v5901 = vadd.f32 %v5881, %v5900
    %5902 = vmatmul.f32.gmra.mxu0 %v5840
    %v5903 = vpop.f32.mrf.mxu0
    %v5904 = vadd.f32 %v5881, %v5903
    %5905 = vmatmul.f32.gmra.mxu0 %v5843
    %v5906 = vpop.f32.mrf.mxu0
    %v5907 = vadd.f32 %v5881, %v5906
    %5908 = vmatmul.f32.gmra.mxu0 %v5846
    %v5909 = vpop.f32.mrf.mxu0
    %v5910 = vadd.f32 %v5881, %v5909
    %5911 = vdwg.mxu0
    %v5912 = vxor.u32 %v5901, 2147483648
    %v5913 = vxor.u32 %v5904, 2147483648
    %v5914 = vxor.u32 %v5907, 2147483648
    %v5915 = vxor.u32 %v5910, 2147483648
    %v5916 = vmul.f32 %v5912, 1.442695
    %v5917 = vpow.pop %v5916
    %v5918 = vmul.f32 %v5913, 1.442695
    %v5919 = vpow.pop %v5918
    %v5920 = vmul.f32 %v5914, 1.442695
    %v5921 = vpow.pop %v5920
    %v5922 = vmul.f32 %v5915, 1.442695
    %v5923 = vpow.pop %v5922
    %v5924 = vadd.f32 %v5917, 1.0
    %v5925 = vadd.f32 %v5919, 1.0
    %v5926 = vadd.f32 %v5921, 1.0
    %v5927 = vadd.f32 %v5923, 1.0
    %v5928 = vrcp.pop %v5924
    %v5929 = vmul.f32 %v5924, %v5928
    %v5930 = vsub.f32 1.0, %v5929
    %v5931 = vmul.f32 %v5928, %v5930
    %v5932 = vadd.f32 %v5928, %v5931
    %vm5933 = vweird.f32 %v5924
    %vm5934 = vweird.f32 %v5928
    %vm5935 = vmor %vm5933, %vm5934
    %v5936 = vsel %vm5935, %v5928, %v5932
    %v5937 = vand.u32 2147483647, %v5924
    %vm5938 = vcmp.eq.f32.partialorder %v5937, 8.507059e+37
    %v5939 = vand.u32 %v5924, 2147483648
    %v5940 = vor.u32 1.1754944e-38, %v5939
    %v5941 = vsel %vm5938, %v5940, %v5936
    %v5942 = vmul.f32 1.0, %v5941
    %v5943 = vrcp.pop %v5925
    %v5944 = vmul.f32 %v5925, %v5943
    %v5945 = vsub.f32 1.0, %v5944
    %v5946 = vmul.f32 %v5943, %v5945
    %v5947 = vadd.f32 %v5943, %v5946
    %vm5948 = vweird.f32 %v5925
    %vm5949 = vweird.f32 %v5943
    %vm5950 = vmor %vm5948, %vm5949
    %v5951 = vsel %vm5950, %v5943, %v5947
    %v5952 = vand.u32 2147483647, %v5925
    %vm5953 = vcmp.eq.f32.partialorder %v5952, 8.507059e+37
    %v5954 = vand.u32 %v5925, 2147483648
    %v5955 = vor.u32 1.1754944e-38, %v5954
    %v5956 = vsel %vm5953, %v5955, %v5951
    %v5957 = vmul.f32 1.0, %v5956
    %v5958 = vrcp.pop %v5926
    %v5959 = vmul.f32 %v5926, %v5958
    %v5960 = vsub.f32 1.0, %v5959
    %v5961 = vmul.f32 %v5958, %v5960
    %v5962 = vadd.f32 %v5958, %v5961
    %vm5963 = vweird.f32 %v5926
    %vm5964 = vweird.f32 %v5958
    %vm5965 = vmor %vm5963, %vm5964
    %v5966 = vsel %vm5965, %v5958, %v5962
    %v5967 = vand.u32 2147483647, %v5926
    %vm5968 = vcmp.eq.f32.partialorder %v5967, 8.507059e+37
    %v5969 = vand.u32 %v5926, 2147483648
    %v5970 = vor.u32 1.1754944e-38, %v5969
    %v5971 = vsel %vm5968, %v5970, %v5966
    %v5972 = vmul.f32 1.0, %v5971
    %v5973 = vrcp.pop %v5927
    %v5974 = vmul.f32 %v5927, %v5973
    %v5975 = vsub.f32 1.0, %v5974
    %v5976 = vmul.f32 %v5973, %v5975
    %v5977 = vadd.f32 %v5973, %v5976
    %vm5978 = vweird.f32 %v5927
    %vm5979 = vweird.f32 %v5973
    %vm5980 = vmor %vm5978, %vm5979
    %v5981 = vsel %vm5980, %v5973, %v5977
    %v5982 = vand.u32 2147483647, %v5927
    %vm5983 = vcmp.eq.f32.partialorder %v5982, 8.507059e+37
    %v5984 = vand.u32 %v5927, 2147483648
    %v5985 = vor.u32 1.1754944e-38, %v5984
    %v5986 = vsel %vm5983, %v5985, %v5981
    %v5987 = vmul.f32 1.0, %v5986
    %v5988 = vmul.f32 %v5866, %v5942
    %v5989 = vmul.f32 %v5869, %v5957
    %v5990 = vmul.f32 %v5872, %v5972
    %v5991 = vmul.f32 %v5875, %v5987
    %5992 = vmatpush.msra.mxu0 0.0
    %5993 = vmatpush.msra.mxu0 0.0
    %5994 = vmatpush.msra.mxu0 0.0
    %5995 = vmatpush.msra.mxu0 0.0
    %5996 = vmatpush.msra.mxu0 0.0
    %5997 = vmatpush.msra.mxu0 0.0
    %5998 = vmatpush.msra.mxu0 0.0
    %5999 = vmatpush.msra.mxu0 0.0
    %6000 = vmatpush.msra.mxu0 0.0
    %6001 = vmatpush.msra.mxu0 0.0
    %6002 = vmatpush.msra.mxu0 0.0
    %6003 = vmatpush.msra.mxu0 0.0
    %6004 = vmatpush.msra.mxu0 %v5991
    %6005 = vmatpush.msra.mxu0 %v5990
    %6006 = vmatpush.msra.mxu0 %v5989
    %6007 = vmatpush.msra.mxu0 %v5988
    %6008 = vmatmul.f32.gmra.mxu0 %v1230
    %v6009 = vpop.f32.mrf.mxu0
    %v6010 = vadd.f32 0.0, %v6009
    %6011 = vmatmul.f32.gmra.mxu0 %v1233
    %v6012 = vpop.f32.mrf.mxu0
    %v6013 = vadd.f32 0.0, %v6012
    %6014 = vmatmul.f32.gmra.mxu0 %v1236
    %v6015 = vpop.f32.mrf.mxu0
    %v6016 = vadd.f32 0.0, %v6015
    %6017 = vmatmul.f32.gmra.mxu0 %v1239
    %v6018 = vpop.f32.mrf.mxu0
    %v6019 = vadd.f32 0.0, %v6018
    %6020 = vdwg.mxu0
    %v6021 = vld [vmem:[%s97] sm:$0x1]
    %v6023 = vperm.slane %v6021, 0
    %v6025 = vmul.f32 %v6010, %v6023
    %v6026 = vmul.f32 %v6013, %v6023
    %v6027 = vmul.f32 %v6016, %v6023
    %v6028 = vmul.f32 %v6019, %v6023
    %6029 = vmatpush.msra.mxu0 0.0
    %6030 = vmatpush.msra.mxu0 0.0
    %6031 = vmatpush.msra.mxu0 0.0
    %6032 = vmatpush.msra.mxu0 0.0
    %6033 = vmatpush.msra.mxu0 0.0
    %6034 = vmatpush.msra.mxu0 0.0
    %6035 = vmatpush.msra.mxu0 0.0
    %6036 = vmatpush.msra.mxu0 0.0
    %6037 = vmatpush.msra.mxu0 0.0
    %6038 = vmatpush.msra.mxu0 0.0
    %6039 = vmatpush.msra.mxu0 0.0
    %6040 = vmatpush.msra.mxu0 0.0
    %6041 = vmatpush.msra.mxu0 %v5991
    %6042 = vmatpush.msra.mxu0 %v5990
    %6043 = vmatpush.msra.mxu0 %v5989
    %6044 = vmatpush.msra.mxu0 %v5988
    %6045 = vmatmul.f32.gmra.mxu0 %v1272
    %v6046 = vpop.f32.mrf.mxu0
    %v6047 = vadd.f32 0.0, %v6046
    %6048 = vmatmul.f32.gmra.mxu0 %v1275
    %v6049 = vpop.f32.mrf.mxu0
    %v6050 = vadd.f32 0.0, %v6049
    %6051 = vmatmul.f32.gmra.mxu0 %v1278
    %v6052 = vpop.f32.mrf.mxu0
    %v6053 = vadd.f32 0.0, %v6052
    %6054 = vmatmul.f32.gmra.mxu0 %v1281
    %v6055 = vpop.f32.mrf.mxu0
    %v6056 = vadd.f32 0.0, %v6055
    %6057 = vdwg.mxu0
    %s6058 = scalar_lea.vmem %s97, 1
    %v6059 = vld [vmem:[%s6058] sm:$0x1]
    %v6061 = vperm.slane %v6059, 0
    %v6063 = vmul.f32 %v6047, %v6061
    %v6064 = vmul.f32 %v6050, %v6061
    %v6065 = vmul.f32 %v6053, %v6061
    %v6066 = vmul.f32 %v6056, %v6061
    %v6067 = vadd.f32 %v6025, %v6063
    %v6068 = vadd.f32 %v6026, %v6064
    %v6069 = vadd.f32 %v6027, %v6065
    %v6070 = vadd.f32 %v6028, %v6066
    %6071 = vmatpush.msra.mxu0 0.0
    %6072 = vmatpush.msra.mxu0 0.0
    %6073 = vmatpush.msra.mxu0 0.0
    %6074 = vmatpush.msra.mxu0 0.0
    %6075 = vmatpush.msra.mxu0 0.0
    %6076 = vmatpush.msra.mxu0 0.0
    %6077 = vmatpush.msra.mxu0 0.0
    %6078 = vmatpush.msra.mxu0 0.0
    %6079 = vmatpush.msra.mxu0 0.0
    %6080 = vmatpush.msra.mxu0 0.0
    %6081 = vmatpush.msra.mxu0 0.0
    %6082 = vmatpush.msra.mxu0 0.0
    %6083 = vmatpush.msra.mxu0 %v5991
    %6084 = vmatpush.msra.mxu0 %v5990
    %6085 = vmatpush.msra.mxu0 %v5989
    %6086 = vmatpush.msra.mxu0 %v5988
    %6087 = vmatmul.f32.gmra.mxu0 %v1398
    %v6088 = vpop.f32.mrf.mxu0
    %v6089 = vadd.f32 0.0, %v6088
    %6090 = vmatmul.f32.gmra.mxu0 %v1401
    %v6091 = vpop.f32.mrf.mxu0
    %v6092 = vadd.f32 0.0, %v6091
    %6093 = vmatmul.f32.gmra.mxu0 %v1404
    %v6094 = vpop.f32.mrf.mxu0
    %v6095 = vadd.f32 0.0, %v6094
    %6096 = vmatmul.f32.gmra.mxu0 %v1407
    %v6097 = vpop.f32.mrf.mxu0
    %v6098 = vadd.f32 0.0, %v6097
    %6099 = vdwg.mxu0
    %s6100 = scalar_lea.vmem %s97, 2
    %v6101 = vld [vmem:[%s6100] sm:$0x1]
    %v6103 = vperm.slane %v6101, 0
    %v6105 = vmul.f32 %v6089, %v6103
    %v6106 = vmul.f32 %v6092, %v6103
    %v6107 = vmul.f32 %v6095, %v6103
    %v6108 = vmul.f32 %v6098, %v6103
    %v6109 = vadd.f32 %v6067, %v6105
    %v6110 = vadd.f32 %v6068, %v6106
    %v6111 = vadd.f32 %v6069, %v6107
    %v6112 = vadd.f32 %v6070, %v6108
    %v6113 = vld [vmem:[#allocation64] sm:$0x1]
    %v6115 = vperm.slane %v6113, 0
    %v6117 = vadd.f32 %v6109, %v6115
    %v6118 = vadd.f32 %v6110, %v6115
    %v6119 = vadd.f32 %v6111, %v6115
    %v6120 = vadd.f32 %v6112, %v6115
    %v6121 = vxor.u32 %v6117, 2147483648
    %v6122 = vxor.u32 %v6118, 2147483648
    %v6123 = vxor.u32 %v6119, 2147483648
    %v6124 = vxor.u32 %v6120, 2147483648
    %v6125 = vmul.f32 %v6121, 1.442695
    %v6126 = vpow.pop %v6125
    %v6127 = vmul.f32 %v6122, 1.442695
    %v6128 = vpow.pop %v6127
    %v6129 = vmul.f32 %v6123, 1.442695
    %v6130 = vpow.pop %v6129
    %v6131 = vmul.f32 %v6124, 1.442695
    %v6132 = vpow.pop %v6131
    %v6133 = vadd.f32 %v6126, 1.0
    %v6134 = vadd.f32 %v6128, 1.0
    %v6135 = vadd.f32 %v6130, 1.0
    %v6136 = vadd.f32 %v6132, 1.0
    %v6137 = vrcp.pop %v6133
    %v6138 = vmul.f32 %v6133, %v6137
    %v6139 = vsub.f32 1.0, %v6138
    %v6140 = vmul.f32 %v6137, %v6139
    %v6141 = vadd.f32 %v6137, %v6140
    %vm6142 = vweird.f32 %v6133
    %vm6143 = vweird.f32 %v6137
    %vm6144 = vmor %vm6142, %vm6143
    %v6145 = vsel %vm6144, %v6137, %v6141
    %v6146 = vand.u32 2147483647, %v6133
    %vm6147 = vcmp.eq.f32.partialorder %v6146, 8.507059e+37
    %v6148 = vand.u32 %v6133, 2147483648
    %v6149 = vor.u32 1.1754944e-38, %v6148
    %v6150 = vsel %vm6147, %v6149, %v6145
    %v6151 = vmul.f32 1.0, %v6150
    %v6152 = vrcp.pop %v6134
    %v6153 = vmul.f32 %v6134, %v6152
    %v6154 = vsub.f32 1.0, %v6153
    %v6155 = vmul.f32 %v6152, %v6154
    %v6156 = vadd.f32 %v6152, %v6155
    %vm6157 = vweird.f32 %v6134
    %vm6158 = vweird.f32 %v6152
    %vm6159 = vmor %vm6157, %vm6158
    %v6160 = vsel %vm6159, %v6152, %v6156
    %v6161 = vand.u32 2147483647, %v6134
    %vm6162 = vcmp.eq.f32.partialorder %v6161, 8.507059e+37
    %v6163 = vand.u32 %v6134, 2147483648
    %v6164 = vor.u32 1.1754944e-38, %v6163
    %v6165 = vsel %vm6162, %v6164, %v6160
    %v6166 = vmul.f32 1.0, %v6165
    %v6167 = vrcp.pop %v6135
    %v6168 = vmul.f32 %v6135, %v6167
    %v6169 = vsub.f32 1.0, %v6168
    %v6170 = vmul.f32 %v6167, %v6169
    %v6171 = vadd.f32 %v6167, %v6170
    %vm6172 = vweird.f32 %v6135
    %vm6173 = vweird.f32 %v6167
    %vm6174 = vmor %vm6172, %vm6173
    %v6175 = vsel %vm6174, %v6167, %v6171
    %v6176 = vand.u32 2147483647, %v6135
    %vm6177 = vcmp.eq.f32.partialorder %v6176, 8.507059e+37
    %v6178 = vand.u32 %v6135, 2147483648
    %v6179 = vor.u32 1.1754944e-38, %v6178
    %v6180 = vsel %vm6177, %v6179, %v6175
    %v6181 = vmul.f32 1.0, %v6180
    %v6182 = vrcp.pop %v6136
    %v6183 = vmul.f32 %v6136, %v6182
    %v6184 = vsub.f32 1.0, %v6183
    %v6185 = vmul.f32 %v6182, %v6184
    %v6186 = vadd.f32 %v6182, %v6185
    %vm6187 = vweird.f32 %v6136
    %vm6188 = vweird.f32 %v6182
    %vm6189 = vmor %vm6187, %vm6188
    %v6190 = vsel %vm6189, %v6182, %v6186
    %v6191 = vand.u32 2147483647, %v6136
    %vm6192 = vcmp.eq.f32.partialorder %v6191, 8.507059e+37
    %v6193 = vand.u32 %v6136, 2147483648
    %v6194 = vor.u32 1.1754944e-38, %v6193
    %v6195 = vsel %vm6192, %v6194, %v6190
    %v6196 = vmul.f32 1.0, %v6195
    %v6197 = vmul.f32 %v6117, %v6151
    %v6198 = vmul.f32 %v6118, %v6166
    %v6199 = vmul.f32 %v6119, %v6181
    %v6200 = vmul.f32 %v6120, %v6196
    %v6201 = vld [vmem:[#allocation76] sm:$0xff]
    %v6202 = vld [vmem:[#allocation76 + $0x8] sm:$0xff]
    %v6203 = vld [vmem:[#allocation75] sm:$0x1]
    %v6205 = vperm.slane %v6203, 0
    %v6208 = vsel %vm1499, %v6197, 0
    %v6211 = vsel %vm1499, %v6198, 0
    %v6214 = vsel %vm1499, %v6199, 0
    %v6217 = vsel %vm1499, %v6200, 0
    %6219 = vmatpush.msra.mxu0 0.0
    %6220 = vmatpush.msra.mxu0 0.0
    %6221 = vmatpush.msra.mxu0 0.0
    %6222 = vmatpush.msra.mxu0 0.0
    %6223 = vmatpush.msra.mxu0 0.0
    %6224 = vmatpush.msra.mxu0 0.0
    %6225 = vmatpush.msra.mxu0 0.0
    %6226 = vmatpush.msra.mxu0 0.0
    %6227 = vmatpush.msra.mxu0 0.0
    %6228 = vmatpush.msra.mxu0 0.0
    %6229 = vmatpush.msra.mxu0 0.0
    %6230 = vmatpush.msra.mxu0 0.0
    %6231 = vmatpush.msra.mxu0 0.0
    %6232 = vmatpush.msra.mxu0 0.0
    %6233 = vmatpush.msra.mxu0 %v6202
    %6234 = vmatpush.msra.mxu0 %v6201
    %6235 = vmatmul.f32.gmra.mxu0 %v6208
    %v6236 = vpop.f32.mrf.mxu0
    %v6237 = vadd.f32 %v6205, %v6236
    %6238 = vmatmul.f32.gmra.mxu0 %v6211
    %v6239 = vpop.f32.mrf.mxu0
    %v6240 = vadd.f32 %v6205, %v6239
    %6241 = vmatmul.f32.gmra.mxu0 %v6214
    %v6242 = vpop.f32.mrf.mxu0
    %v6243 = vadd.f32 %v6205, %v6242
    %6244 = vmatmul.f32.gmra.mxu0 %v6217
    %v6245 = vpop.f32.mrf.mxu0
    %v6246 = vadd.f32 %v6205, %v6245
    %6247 = vdwg.mxu0
    %v6248 = vadd.f32 %v5722, %v6237
    %v6249 = vadd.f32 %v5723, %v6240
    %v6250 = vadd.f32 %v5724, %v6243
    %v6251 = vadd.f32 %v5725, %v6246
    %v6252 = vsel %vm1499, %v6248, 0.0
    %6253 = vadd.xlane.f32.xlu0 %v6252
    %v6254 = vpop.xlane.xlu0 %6253
    %v6255 = vsel %vm1499, %v6249, 0.0
    %6256 = vadd.xlane.f32.xlu0 %v6255
    %v6257 = vpop.xlane.xlu0 %6256
    %v6258 = vsel %vm1499, %v6250, 0.0
    %6259 = vadd.xlane.f32.xlu0 %v6258
    %v6260 = vpop.xlane.xlu0 %6259
    %v6261 = vsel %vm1499, %v6251, 0.0
    %6262 = vadd.xlane.f32.xlu0 %v6261
    %v6263 = vpop.xlane.xlu0 %6262
    %v6264 = vmul.f32 %v6254, %v1559
    %v6265 = vmul.f32 %v6257, %v1559
    %v6266 = vmul.f32 %v6260, %v1559
    %v6267 = vmul.f32 %v6263, %v1559
    %v6268 = vsub.f32 %v6248, %v6264
    %v6269 = vsub.f32 %v6249, %v6265
    %v6270 = vsub.f32 %v6250, %v6266
    %v6271 = vsub.f32 %v6251, %v6267
    %v6272 = vmul.f32 %v6268, %v6268
    %v6273 = vmul.f32 %v6269, %v6269
    %v6274 = vmul.f32 %v6270, %v6270
    %v6275 = vmul.f32 %v6271, %v6271
    %v6276 = vsel %vm1499, %v6272, 0.0
    %6277 = vadd.xlane.f32.xlu0 %v6276
    %v6278 = vpop.xlane.xlu0 %6277
    %v6279 = vsel %vm1499, %v6273, 0.0
    %6280 = vadd.xlane.f32.xlu0 %v6279
    %v6281 = vpop.xlane.xlu0 %6280
    %v6282 = vsel %vm1499, %v6274, 0.0
    %6283 = vadd.xlane.f32.xlu0 %v6282
    %v6284 = vpop.xlane.xlu0 %6283
    %v6285 = vsel %vm1499, %v6275, 0.0
    %6286 = vadd.xlane.f32.xlu0 %v6285
    %v6287 = vpop.xlane.xlu0 %6286
    %v6288 = vmul.f32 %v6278, %v1559
    %v6289 = vmul.f32 %v6281, %v1559
    %v6290 = vmul.f32 %v6284, %v1559
    %v6291 = vmul.f32 %v6287, %v1559
    %v6292 = vadd.f32 %v6288, 1e-05
    %v6293 = vadd.f32 %v6289, 1e-05
    %v6294 = vadd.f32 %v6290, 1e-05
    %v6295 = vadd.f32 %v6291, 1e-05
    %v6296 = vrsqrt.pop %v6292
    %v6297 = vmul.f32 %v6296, %v6292
    %v6298 = vmul.f32 %v6297, %v6296
    %v6299 = vmul.f32 0.5, %v6298
    %v6300 = vsub.f32 1.5, %v6299
    %v6301 = vmul.f32 %v6296, %v6300
    %vm6302 = vweird.f32 %v6292
    %vm6303 = vweird.f32 %v6296
    %vm6304 = vmor %vm6302, %vm6303
    %v6305 = vsel %vm6304, %v6296, %v6301
    %v6306 = vrsqrt.pop %v6293
    %v6307 = vmul.f32 %v6306, %v6293
    %v6308 = vmul.f32 %v6307, %v6306
    %v6309 = vmul.f32 0.5, %v6308
    %v6310 = vsub.f32 1.5, %v6309
    %v6311 = vmul.f32 %v6306, %v6310
    %vm6312 = vweird.f32 %v6293
    %vm6313 = vweird.f32 %v6306
    %vm6314 = vmor %vm6312, %vm6313
    %v6315 = vsel %vm6314, %v6306, %v6311
    %v6316 = vrsqrt.pop %v6294
    %v6317 = vmul.f32 %v6316, %v6294
    %v6318 = vmul.f32 %v6317, %v6316
    %v6319 = vmul.f32 0.5, %v6318
    %v6320 = vsub.f32 1.5, %v6319
    %v6321 = vmul.f32 %v6316, %v6320
    %vm6322 = vweird.f32 %v6294
    %vm6323 = vweird.f32 %v6316
    %vm6324 = vmor %vm6322, %vm6323
    %v6325 = vsel %vm6324, %v6316, %v6321
    %v6326 = vrsqrt.pop %v6295
    %v6327 = vmul.f32 %v6326, %v6295
    %v6328 = vmul.f32 %v6327, %v6326
    %v6329 = vmul.f32 0.5, %v6328
    %v6330 = vsub.f32 1.5, %v6329
    %v6331 = vmul.f32 %v6326, %v6330
    %vm6332 = vweird.f32 %v6295
    %vm6333 = vweird.f32 %v6326
    %vm6334 = vmor %vm6332, %vm6333
    %v6335 = vsel %vm6334, %v6326, %v6331
    %v6336 = vmul.f32 %v6268, %v6305
    %v6337 = vmul.f32 %v6269, %v6315
    %v6338 = vmul.f32 %v6270, %v6325
    %v6339 = vmul.f32 %v6271, %v6335
    %v6340 = vld [vmem:[%s133] sm:$0x1]
    %v6342 = vperm.slane %v6340, 0
    %v6344 = vmul.f32 %v6336, %v6342
    %v6345 = vmul.f32 %v6337, %v6342
    %v6346 = vmul.f32 %v6338, %v6342
    %v6347 = vmul.f32 %v6339, %v6342
    %v6348 = vld [vmem:[#allocation90] sm:$0x1]
    %v6350 = vperm.slane %v6348, 0
    %v6352 = vadd.f32 %v6344, %v6350
    %v6353 = vadd.f32 %v6345, %v6350
    %v6354 = vadd.f32 %v6346, %v6350
    %v6355 = vadd.f32 %v6347, %v6350
    %v6356 = vld [vmem:[#allocation91] sm:$0xff]
    %v6357 = vld [vmem:[#allocation91 + $0x8] sm:$0xff]
    %v6358 = vld [vmem:[#allocation87] sm:$0x1]
    %v6360 = vperm.slane %v6358, 0
    %v6363 = vsel %vm1499, %v6352, 0
    %v6366 = vsel %vm1499, %v6353, 0
    %v6369 = vsel %vm1499, %v6354, 0
    %v6372 = vsel %vm1499, %v6355, 0
    %6374 = vmatpush.msra.mxu0 0.0
    %6375 = vmatpush.msra.mxu0 0.0
    %6376 = vmatpush.msra.mxu0 0.0
    %6377 = vmatpush.msra.mxu0 0.0
    %6378 = vmatpush.msra.mxu0 0.0
    %6379 = vmatpush.msra.mxu0 0.0
    %6380 = vmatpush.msra.mxu0 0.0
    %6381 = vmatpush.msra.mxu0 0.0
    %6382 = vmatpush.msra.mxu0 0.0
    %6383 = vmatpush.msra.mxu0 0.0
    %6384 = vmatpush.msra.mxu0 0.0
    %6385 = vmatpush.msra.mxu0 0.0
    %6386 = vmatpush.msra.mxu0 0.0
    %6387 = vmatpush.msra.mxu0 0.0
    %6388 = vmatpush.msra.mxu0 %v6357
    %6389 = vmatpush.msra.mxu0 %v6356
    %6390 = vmatmul.f32.gmra.mxu0 %v6363
    %v6391 = vpop.f32.mrf.mxu0
    %v6392 = vadd.f32 %v6360, %v6391
    %6393 = vmatmul.f32.gmra.mxu0 %v6366
    %v6394 = vpop.f32.mrf.mxu0
    %v6395 = vadd.f32 %v6360, %v6394
    %6396 = vmatmul.f32.gmra.mxu0 %v6369
    %v6397 = vpop.f32.mrf.mxu0
    %v6398 = vadd.f32 %v6360, %v6397
    %6399 = vmatmul.f32.gmra.mxu0 %v6372
    %v6400 = vpop.f32.mrf.mxu0
    %v6401 = vadd.f32 %v6360, %v6400
    %6402 = vdwg.mxu0
    %v6403 = vxor.u32 %v6392, 2147483648
    %v6404 = vxor.u32 %v6395, 2147483648
    %v6405 = vxor.u32 %v6398, 2147483648
    %v6406 = vxor.u32 %v6401, 2147483648
    %v6407 = vmul.f32 %v6403, 1.442695
    %v6408 = vpow.pop %v6407
    %v6409 = vmul.f32 %v6404, 1.442695
    %v6410 = vpow.pop %v6409
    %v6411 = vmul.f32 %v6405, 1.442695
    %v6412 = vpow.pop %v6411
    %v6413 = vmul.f32 %v6406, 1.442695
    %v6414 = vpow.pop %v6413
    %v6415 = vadd.f32 %v6408, 1.0
    %v6416 = vadd.f32 %v6410, 1.0
    %v6417 = vadd.f32 %v6412, 1.0
    %v6418 = vadd.f32 %v6414, 1.0
    %v6419 = vrcp.pop %v6415
    %v6420 = vmul.f32 %v6415, %v6419
    %v6421 = vsub.f32 1.0, %v6420
    %v6422 = vmul.f32 %v6419, %v6421
    %v6423 = vadd.f32 %v6419, %v6422
    %vm6424 = vweird.f32 %v6415
    %vm6425 = vweird.f32 %v6419
    %vm6426 = vmor %vm6424, %vm6425
    %v6427 = vsel %vm6426, %v6419, %v6423
    %v6428 = vand.u32 2147483647, %v6415
    %vm6429 = vcmp.eq.f32.partialorder %v6428, 8.507059e+37
    %v6430 = vand.u32 %v6415, 2147483648
    %v6431 = vor.u32 1.1754944e-38, %v6430
    %v6432 = vsel %vm6429, %v6431, %v6427
    %v6433 = vmul.f32 1.0, %v6432
    %v6434 = vrcp.pop %v6416
    %v6435 = vmul.f32 %v6416, %v6434
    %v6436 = vsub.f32 1.0, %v6435
    %v6437 = vmul.f32 %v6434, %v6436
    %v6438 = vadd.f32 %v6434, %v6437
    %vm6439 = vweird.f32 %v6416
    %vm6440 = vweird.f32 %v6434
    %vm6441 = vmor %vm6439, %vm6440
    %v6442 = vsel %vm6441, %v6434, %v6438
    %v6443 = vand.u32 2147483647, %v6416
    %vm6444 = vcmp.eq.f32.partialorder %v6443, 8.507059e+37
    %v6445 = vand.u32 %v6416, 2147483648
    %v6446 = vor.u32 1.1754944e-38, %v6445
    %v6447 = vsel %vm6444, %v6446, %v6442
    %v6448 = vmul.f32 1.0, %v6447
    %v6449 = vrcp.pop %v6417
    %v6450 = vmul.f32 %v6417, %v6449
    %v6451 = vsub.f32 1.0, %v6450
    %v6452 = vmul.f32 %v6449, %v6451
    %v6453 = vadd.f32 %v6449, %v6452
    %vm6454 = vweird.f32 %v6417
    %vm6455 = vweird.f32 %v6449
    %vm6456 = vmor %vm6454, %vm6455
    %v6457 = vsel %vm6456, %v6449, %v6453
    %v6458 = vand.u32 2147483647, %v6417
    %vm6459 = vcmp.eq.f32.partialorder %v6458, 8.507059e+37
    %v6460 = vand.u32 %v6417, 2147483648
    %v6461 = vor.u32 1.1754944e-38, %v6460
    %v6462 = vsel %vm6459, %v6461, %v6457
    %v6463 = vmul.f32 1.0, %v6462
    %v6464 = vrcp.pop %v6418
    %v6465 = vmul.f32 %v6418, %v6464
    %v6466 = vsub.f32 1.0, %v6465
    %v6467 = vmul.f32 %v6464, %v6466
    %v6468 = vadd.f32 %v6464, %v6467
    %vm6469 = vweird.f32 %v6418
    %vm6470 = vweird.f32 %v6464
    %vm6471 = vmor %vm6469, %vm6470
    %v6472 = vsel %vm6471, %v6464, %v6468
    %v6473 = vand.u32 2147483647, %v6418
    %vm6474 = vcmp.eq.f32.partialorder %v6473, 8.507059e+37
    %v6475 = vand.u32 %v6418, 2147483648
    %v6476 = vor.u32 1.1754944e-38, %v6475
    %v6477 = vsel %vm6474, %v6476, %v6472
    %v6478 = vmul.f32 1.0, %v6477
    %v6479 = vmul.f32 %v6392, %v6433
    %v6480 = vmul.f32 %v6395, %v6448
    %v6481 = vmul.f32 %v6398, %v6463
    %v6482 = vmul.f32 %v6401, %v6478
    %v6483 = vld [vmem:[%s137] sm:$0xff]
    %v6484 = vld [vmem:[%s137 + $0x8] sm:$0xff]
    %v6485 = vld [vmem:[%s137 + $0x10] sm:$0xff]
    %v6486 = vld [vmem:[%s137 + $0x18] sm:$0xff]
    %v6487 = vld [vmem:[#allocation88] sm:$0x1]
    %v6489 = vperm.slane %v6487, 0
    %v6492 = vsel %vm1228, %v6479, 0
    %v6495 = vsel %vm1228, %v6480, 0
    %v6498 = vsel %vm1228, %v6481, 0
    %v6501 = vsel %vm1228, %v6482, 0
    %6503 = vmatpush.msra.mxu0 0.0
    %6504 = vmatpush.msra.mxu0 0.0
    %6505 = vmatpush.msra.mxu0 0.0
    %6506 = vmatpush.msra.mxu0 0.0
    %6507 = vmatpush.msra.mxu0 0.0
    %6508 = vmatpush.msra.mxu0 0.0
    %6509 = vmatpush.msra.mxu0 0.0
    %6510 = vmatpush.msra.mxu0 0.0
    %6511 = vmatpush.msra.mxu0 0.0
    %6512 = vmatpush.msra.mxu0 0.0
    %6513 = vmatpush.msra.mxu0 0.0
    %6514 = vmatpush.msra.mxu0 0.0
    %6515 = vmatpush.msra.mxu0 %v6486
    %6516 = vmatpush.msra.mxu0 %v6485
    %6517 = vmatpush.msra.mxu0 %v6484
    %6518 = vmatpush.msra.mxu0 %v6483
    %6519 = vmatmul.f32.gmra.mxu0 %v6492
    %v6520 = vpop.f32.mrf.mxu0
    %v6521 = vadd.f32 %v6489, %v6520
    %6522 = vmatmul.f32.gmra.mxu0 %v6495
    %v6523 = vpop.f32.mrf.mxu0
    %v6524 = vadd.f32 %v6489, %v6523
    %6525 = vmatmul.f32.gmra.mxu0 %v6498
    %v6526 = vpop.f32.mrf.mxu0
    %v6527 = vadd.f32 %v6489, %v6526
    %6528 = vmatmul.f32.gmra.mxu0 %v6501
    %v6529 = vpop.f32.mrf.mxu0
    %v6530 = vadd.f32 %v6489, %v6529
    %6531 = vdwg.mxu0
    %v6532 = vmul.f32 %v6521, 0.5
    %v6533 = vmul.f32 %v6524, 0.5
    %v6534 = vmul.f32 %v6527, 0.5
    %v6535 = vmul.f32 %v6530, 0.5
    %v6536 = vadd.f32 %v6248, %v6532
    %v6537 = vadd.f32 %v6249, %v6533
    %v6538 = vadd.f32 %v6250, %v6534
    %v6539 = vadd.f32 %v6251, %v6535
    %v6540 = vsel %vm1499, %v6536, 0.0
    %6541 = vadd.xlane.f32.xlu0 %v6540
    %v6542 = vpop.xlane.xlu0 %6541
    %v6543 = vsel %vm1499, %v6537, 0.0
    %6544 = vadd.xlane.f32.xlu0 %v6543
    %v6545 = vpop.xlane.xlu0 %6544
    %v6546 = vsel %vm1499, %v6538, 0.0
    %6547 = vadd.xlane.f32.xlu0 %v6546
    %v6548 = vpop.xlane.xlu0 %6547
    %v6549 = vsel %vm1499, %v6539, 0.0
    %6550 = vadd.xlane.f32.xlu0 %v6549
    %v6551 = vpop.xlane.xlu0 %6550
    %v6552 = vmul.f32 %v6542, %v1559
    %v6553 = vmul.f32 %v6545, %v1559
    %v6554 = vmul.f32 %v6548, %v1559
    %v6555 = vmul.f32 %v6551, %v1559
    %v6556 = vsub.f32 %v6536, %v6552
    %v6557 = vsub.f32 %v6537, %v6553
    %v6558 = vsub.f32 %v6538, %v6554
    %v6559 = vsub.f32 %v6539, %v6555
    %v6560 = vmul.f32 %v6556, %v6556
    %v6561 = vmul.f32 %v6557, %v6557
    %v6562 = vmul.f32 %v6558, %v6558
    %v6563 = vmul.f32 %v6559, %v6559
    %v6564 = vsel %vm1499, %v6560, 0.0
    %6565 = vadd.xlane.f32.xlu0 %v6564
    %v6566 = vpop.xlane.xlu0 %6565
    %v6567 = vsel %vm1499, %v6561, 0.0
    %6568 = vadd.xlane.f32.xlu0 %v6567
    %v6569 = vpop.xlane.xlu0 %6568
    %v6570 = vsel %vm1499, %v6562, 0.0
    %6571 = vadd.xlane.f32.xlu0 %v6570
    %v6572 = vpop.xlane.xlu0 %6571
    %v6573 = vsel %vm1499, %v6563, 0.0
    %6574 = vadd.xlane.f32.xlu0 %v6573
    %v6575 = vpop.xlane.xlu0 %6574
    %v6576 = vmul.f32 %v6566, %v1559
    %v6577 = vmul.f32 %v6569, %v1559
    %v6578 = vmul.f32 %v6572, %v1559
    %v6579 = vmul.f32 %v6575, %v1559
    %v6580 = vadd.f32 %v6576, 1e-05
    %v6581 = vadd.f32 %v6577, 1e-05
    %v6582 = vadd.f32 %v6578, 1e-05
    %v6583 = vadd.f32 %v6579, 1e-05
    %v6584 = vrsqrt.pop %v6580
    %v6585 = vmul.f32 %v6584, %v6580
    %v6586 = vmul.f32 %v6585, %v6584
    %v6587 = vmul.f32 0.5, %v6586
    %v6588 = vsub.f32 1.5, %v6587
    %v6589 = vmul.f32 %v6584, %v6588
    %vm6590 = vweird.f32 %v6580
    %vm6591 = vweird.f32 %v6584
    %vm6592 = vmor %vm6590, %vm6591
    %v6593 = vsel %vm6592, %v6584, %v6589
    %v6594 = vrsqrt.pop %v6581
    %v6595 = vmul.f32 %v6594, %v6581
    %v6596 = vmul.f32 %v6595, %v6594
    %v6597 = vmul.f32 0.5, %v6596
    %v6598 = vsub.f32 1.5, %v6597
    %v6599 = vmul.f32 %v6594, %v6598
    %vm6600 = vweird.f32 %v6581
    %vm6601 = vweird.f32 %v6594
    %vm6602 = vmor %vm6600, %vm6601
    %v6603 = vsel %vm6602, %v6594, %v6599
    %v6604 = vrsqrt.pop %v6582
    %v6605 = vmul.f32 %v6604, %v6582
    %v6606 = vmul.f32 %v6605, %v6604
    %v6607 = vmul.f32 0.5, %v6606
    %v6608 = vsub.f32 1.5, %v6607
    %v6609 = vmul.f32 %v6604, %v6608
    %vm6610 = vweird.f32 %v6582
    %vm6611 = vweird.f32 %v6604
    %vm6612 = vmor %vm6610, %vm6611
    %v6613 = vsel %vm6612, %v6604, %v6609
    %v6614 = vrsqrt.pop %v6583
    %v6615 = vmul.f32 %v6614, %v6583
    %v6616 = vmul.f32 %v6615, %v6614
    %v6617 = vmul.f32 0.5, %v6616
    %v6618 = vsub.f32 1.5, %v6617
    %v6619 = vmul.f32 %v6614, %v6618
    %vm6620 = vweird.f32 %v6583
    %vm6621 = vweird.f32 %v6614
    %vm6622 = vmor %vm6620, %vm6621
    %v6623 = vsel %vm6622, %v6614, %v6619
    %v6624 = vmul.f32 %v6556, %v6593
    %v6625 = vmul.f32 %v6557, %v6603
    %v6626 = vmul.f32 %v6558, %v6613
    %v6627 = vmul.f32 %v6559, %v6623
    %v6628 = vld [vmem:[%s141] sm:$0x1]
    %v6630 = vperm.slane %v6628, 0
    %v6632 = vmul.f32 %v6624, %v6630
    %v6633 = vmul.f32 %v6625, %v6630
    %v6634 = vmul.f32 %v6626, %v6630
    %v6635 = vmul.f32 %v6627, %v6630
    %v6636 = vld [vmem:[%s139] sm:$0x1]
    %v6638 = vperm.slane %v6636, 0
    %v6640 = vadd.f32 %v6632, %v6638
    %v6641 = vadd.f32 %v6633, %v6638
    %v6642 = vadd.f32 %v6634, %v6638
    %v6643 = vadd.f32 %v6635, %v6638
    %v6644 = vld [vmem:[#allocation94] sm:$0xff]
    %v6645 = vld [vmem:[#allocation94 + $0x8] sm:$0xff]
    %v6646 = vld [vmem:[%s147] sm:$0x1]
    %v6648 = vperm.slane %v6646, 0
    %v6651 = vsel %vm1499, %v6640, 0
    %v6654 = vsel %vm1499, %v6641, 0
    %v6657 = vsel %vm1499, %v6642, 0
    %v6660 = vsel %vm1499, %v6643, 0
    %6662 = vmatpush.msra.mxu0 0.0
    %6663 = vmatpush.msra.mxu0 0.0
    %6664 = vmatpush.msra.mxu0 0.0
    %6665 = vmatpush.msra.mxu0 0.0
    %6666 = vmatpush.msra.mxu0 0.0
    %6667 = vmatpush.msra.mxu0 0.0
    %6668 = vmatpush.msra.mxu0 0.0
    %6669 = vmatpush.msra.mxu0 0.0
    %6670 = vmatpush.msra.mxu0 0.0
    %6671 = vmatpush.msra.mxu0 0.0
    %6672 = vmatpush.msra.mxu0 0.0
    %6673 = vmatpush.msra.mxu0 0.0
    %6674 = vmatpush.msra.mxu0 0.0
    %6675 = vmatpush.msra.mxu0 0.0
    %6676 = vmatpush.msra.mxu0 %v6645
    %6677 = vmatpush.msra.mxu0 %v6644
    %6678 = vmatmul.f32.gmra.mxu0 %v6651
    %v6679 = vpop.f32.mrf.mxu0
    %v6680 = vadd.f32 %v6648, %v6679
    %6681 = vmatmul.f32.gmra.mxu0 %v6654
    %v6682 = vpop.f32.mrf.mxu0
    %v6683 = vadd.f32 %v6648, %v6682
    %6684 = vmatmul.f32.gmra.mxu0 %v6657
    %v6685 = vpop.f32.mrf.mxu0
    %v6686 = vadd.f32 %v6648, %v6685
    %6687 = vmatmul.f32.gmra.mxu0 %v6660
    %v6688 = vpop.f32.mrf.mxu0
    %v6689 = vadd.f32 %v6648, %v6688
    %6690 = vdwg.mxu0
    %6691 = vst [vmem:[%s155] sm:$0xff] %v6680
    %6692 = vst [vmem:[%s155 + $0x8] sm:$0xff] %v6683
    %6693 = vst [vmem:[%s155 + $0x10] sm:$0xff] %v6686
    %6694 = vst [vmem:[%s155 + $0x18] sm:$0xff] %v6689
    // Predicated region
    $region558: #{forward.1} parent=1 // pred_check
      _
    $region559: #{forward.1} parent=1 // pred_check_branch
      %6696 = sbr.rel (0) target = $region561
    $region560: #{forward.1} parent=1 // pred_region
      _
    $region561: #{forward.1} parent=1 // pred_fallthru
      _
    // Predicated region
    $region562: #{forward.1} parent=1 // pred_check
      _
    $region563: #{forward.1} parent=1 // pred_check_branch
      %6698 = sbr.rel (0) target = $region565
    $region564: #{forward.1} parent=1 // pred_region
      _
    $region565: #{forward.1} parent=1 // pred_fallthru
      _
    %6699 = vsyncpa [#allocation3], 1
    %6700 = vsyncpa [#allocation5], 1
    %6701 = vsyncpa [#allocation8], 1
    %6702 = vsyncpa [#allocation11], 1
    %6703 = vsyncpa [#allocation14], 1
    %6704 = vsyncpa [#allocation17], 1
    %6705 = vsyncpa [#allocation20], 1
    %6706 = vsyncpa [#allocation23], 1
    %6707 = vsyncpa [#allocation26], 1
    %6708 = vsyncpa [#allocation29], 1
    %6709 = vsyncpa [#allocation32], 1
    %6710 = vsyncpa [#allocation35], 1
    %6711 = vsyncpa [#allocation38], 1
    %6712 = vsyncpa [#allocation41], 1
    %6713 = vsyncpa [#allocation44], 1
    %6714 = vsyncpa [#allocation47], 1
    %6715 = vsyncpa [#allocation50], 1
    %6716 = vsyncpa [#allocation53], 1
    %6717 = vsyncpa [#allocation56], 1
    %6718 = vsyncpa [#allocation59], 1
    %6719 = vsyncpa [#allocation62], 1
    %6720 = vsyncpa [#allocation65], 1
    %6721 = vsyncpa [#allocation68], 1
    %6722 = vsyncpa [#allocation71], 1
    %6723 = vsyncpa [#allocation74], 1
    %6724 = vsyncpa [#allocation77], 1
    %6725 = vsyncpa [#allocation80], 1
    %6726 = vsyncpa [#allocation83], 1
    %6727 = vsyncpa [#allocation86], 1
    %6728 = vsyncpa [#allocation89], 1
    %6729 = vsyncpa [#allocation92], 1
    %6730 = vsyncpa [#allocation95], 1

</llo_original>
